<compile_context>
chip_gen: v7x
topology: tpu7x:2x2x1
jax: 0.10.0
libtpu: 0.0.40
codegen_flags: <defaults>
</compile_context>

<pallas_src>
import jax
import jax.numpy as jnp
from jax.experimental import pallas as pl
from jax.experimental.pallas import tpu as pltpu

BN_EPS = 1e-5
VMEM_LIMIT = 48 * 1024 * 1024   # safe on v5e/v6e (128 MiB) and v7x (64 MiB)


# ------------------------------------------------------------------ helpers --

def _round_up(x, m):
    return ((x + m - 1) // m) * m


def _pad2d(x, mp, np_):
    m, n = x.shape
    if m == mp and n == np_:
        return x
    return jnp.pad(x, ((0, mp - m), (0, np_ - n)))


def _pad1d(v, n):
    return v if v.shape[0] == n else jnp.pad(v, (0, n - v.shape[0]))


# ------------------------------------------------------------------ kernels --

def _matmul_bias_kernel(a_ref, b_ref, bias_ref, o_ref, acc_ref):
    """K-tiled GEMM with f32 accumulator; bias added at the last K step."""
    k = pl.program_id(2)

    @pl.when(k == 0)
    def _():
        acc_ref[...] = jnp.zeros_like(acc_ref)

    acc_ref[...] += jnp.dot(a_ref[...], b_ref[...],
                            preferred_element_type=jnp.float32)

    @pl.when(k == pl.num_programs(2) - 1)
    def _():
        o_ref[...] = (acc_ref[...] + bias_ref[...]).astype(o_ref.dtype)


def _conv3x3x3_kernel(xp_ref, w_ref, o_ref, acc_ref):
    """Fused 3x3x3 conv: one padded depth-slab per step, 9 shifted GEMMs,
    accumulated over the kd grid axis (reduction, "arbitrary")."""
    kd = pl.program_id(2)

    @pl.when(kd == 0)
    def _():
        acc_ref[...] = jnp.zeros_like(acc_ref)

    slab = xp_ref[...]                       # (Hp, Wp, Ci), bf16
    hp, wp, ci = slab.shape
    h, w = hp - 2, wp - 2
    acc = acc_ref[...]
    for kh in range(3):
        for kw in range(3):
            patch = slab[kh:kh + h, kw:kw + w, :].reshape(h * w, ci)
            acc += jnp.dot(patch, w_ref[kh, kw],
                           preferred_element_type=jnp.float32)
    acc_ref[...] = acc

    @pl.when(kd == pl.num_programs(2) - 1)
    def _():
        o_ref[...] = acc.astype(o_ref.dtype)


def _bn_stats_kernel(x_ref, sum_ref, ssq_ref):
    """Per-channel sum / sum-of-squares accumulated over the M grid axis."""
    @pl.when(pl.program_id(0) == 0)
    def _():
        sum_ref[...] = jnp.zeros_like(sum_ref)
        ssq_ref[...] = jnp.zeros_like(ssq_ref)

    x = x_ref[...]
    sum_ref[...] += jnp.sum(x, axis=0, keepdims=True)
    ssq_ref[...] += jnp.sum(x * x, axis=0, keepdims=True)


def _scale_shift_relu_kernel(x_ref, scale_ref, shift_ref, o_ref):
    y = x_ref[...] * scale_ref[...] + shift_ref[...]
    o_ref[...] = jnp.maximum(y, 0.0).astype(o_ref.dtype)


# ----------------------------------------------------------------- wrappers --

def matmul_bias(a, b, bias, out_dtype=jnp.float32):
    """(M, K) @ (K, N) + bias; bf16 MXU operands, f32 accumulation.
    M/K/N are zero-padded to tile multiples (N lane-dense, mult. of 128)."""
    m, k = a.shape
    k2, n = b.shape
    assert k == k2

    np_ = _round_up(n, 128)
    tn = 256 if np_ % 256 == 0 else 128
    tm = 512 if m >= 512 else _round_up(m, 8)
    mp = _round_up(m, tm)
    if k > 1024:
        tk = 512
        kp = _round_up(k, tk)
    else:
        tk = k
        kp = k

    a_p = _pad2d(a.astype(jnp.bfloat16), mp, kp)
    b_p = _pad2d(b.astype(jnp.bfloat16), kp, np_)
    bias_p = _pad2d(bias.reshape(1, n).astype(jnp.float32), 1, np_)

    grid = (mp // tm, np_ // tn, kp // tk)
    out = pl.pallas_call(
        _matmul_bias_kernel,
        out_shape=jax.ShapeDtypeStruct((mp, np_), out_dtype),
        grid=grid,
        in_specs=[
            pl.BlockSpec((tm, tk), lambda i, j, kk: (i, kk)),
            pl.BlockSpec((tk, tn), lambda i, j, kk: (kk, j)),
            pl.BlockSpec((1, tn), lambda i, j, kk: (0, j)),
        ],
        out_specs=pl.BlockSpec((tm, tn), lambda i, j, kk: (i, j)),
        scratch_shapes=[pltpu.VMEM((tm, tn), jnp.float32)],
        compiler_params=pltpu.CompilerParams(
            dimension_semantics=("parallel", "parallel", "arbitrary"),
            vmem_limit_bytes=VMEM_LIMIT),
    )(a_p, b_p, bias_p)

    if mp != m or np_ != n:
        out = out[:m, :n]
    return out


def conv3x3x3_fused(x_cl, w, cop):
    """3x3x3 conv, padding=1, stride=1, no bias (dropped: cancelled by BN).

    x_cl: (N, Do, Ho, Wo, Ci) channels-last.
    w:    PyTorch layout (Co, Ciw, 3, 3, 3) with Ciw <= Ci (zero-padded).
    Returns (N*Do*Ho*Wo, cop) float32; output channels zero-padded to `cop`.
    """
    nb, do, ho, wo, ci = x_cl.shape
    co, ciw = w.shape[0], w.shape[1]

    wt = jnp.transpose(w, (2, 3, 4, 1, 0)).astype(jnp.bfloat16)   # (3,3,3,Ciw,Co)
    wt = jnp.pad(wt, ((0, 0), (0, 0), (0, 0), (0, ci - ciw), (0, cop - co)))

    xp = jnp.pad(x_cl.astype(jnp.bfloat16),
                 ((0, 0), (1, 1), (1, 1), (1, 1), (0, 0)))
    hp, wp = ho + 2, wo + 2
    hw = ho * wo

    out = pl.pallas_call(
        _conv3x3x3_kernel,
        out_shape=jax.ShapeDtypeStruct((nb, do, hw, cop), jnp.float32),
        grid=(nb, do, 3),
        in_specs=[
            pl.BlockSpec((None, None, hp, wp, ci),
                         lambda n, d, kd: (n, d + kd, 0, 0, 0)),
            pl.BlockSpec((None, 3, 3, ci, cop),
                         lambda n, d, kd: (kd, 0, 0, 0, 0)),
        ],
        out_specs=pl.BlockSpec((None, None, hw, cop),
                               lambda n, d, kd: (n, d, 0, 0)),
        scratch_shapes=[pltpu.VMEM((hw, cop), jnp.float32)],
        compiler_params=pltpu.CompilerParams(
            dimension_semantics=("parallel", "parallel", "arbitrary"),
            vmem_limit_bytes=VMEM_LIMIT),
    )(xp, wt)
    return out.reshape(nb * do * hw, cop)


def bn_relu(x, gamma_p, beta_p, out_dtype=jnp.float32):
    """Train-mode BatchNorm (batch stats, biased var) + ReLU over (M, Cp)."""
    m, cp = x.shape
    tm = 512 if m >= 512 else _round_up(m, 8)
    mp = _round_up(m, tm)
    xp = x if mp == m else jnp.pad(x, ((0, mp - m), (0, 0)))   # zero rows: no
    grid = (mp // tm,)                                         # effect on sums

    s, ss = pl.pallas_call(
        _bn_stats_kernel,
        out_shape=(jax.ShapeDtypeStruct((1, cp), jnp.float32),
                   jax.ShapeDtypeStruct((1, cp), jnp.float32)),
        grid=grid,
        in_specs=[pl.BlockSpec((tm, cp), lambda i: (i, 0))],
        out_specs=(pl.BlockSpec((1, cp), lambda i: (0, 0)),
                   pl.BlockSpec((1, cp), lambda i: (0, 0))),
        compiler_params=pltpu.CompilerParams(
            dimension_semantics=("arbitrary",)),
    )(xp)

    mean = s / m
    var = jnp.maximum(ss / m - mean * mean, 0.0)
    inv = jax.lax.rsqrt(var + BN_EPS)
    scale = gamma_p.reshape(1, cp) * inv
    shift = beta_p.reshape(1, cp) - mean * scale

    y = pl.pallas_call(
        _scale_shift_relu_kernel,
        out_shape=jax.ShapeDtypeStruct((mp, cp), out_dtype),
        grid=grid,
        in_specs=[pl.BlockSpec((tm, cp), lambda i: (i, 0)),
                  pl.BlockSpec((1, cp), lambda i: (0, 0)),
                  pl.BlockSpec((1, cp), lambda i: (0, 0))],
        out_specs=pl.BlockSpec((tm, cp), lambda i: (i, 0)),
        compiler_params=pltpu.CompilerParams(
            dimension_semantics=("parallel",)),
    )(xp, scale.astype(jnp.float32), shift.astype(jnp.float32))

    return y[:m] if mp != m else y


# --------------------------------------------------------------------- block --

def upconv3d_block_forward(params, x_ncdhw, residual_ncdhw=None,
                           last_layer=True):
    """Forward of UpConv3DBlock; x/residual/output in PyTorch NCDHW."""
    nb, c, d, h, w = x_ncdhw.shape
    cm = c // 2
    x = jnp.transpose(x_ncdhw, (0, 2, 3, 4, 1))          # (N, D, H, W, C)

    # --- ConvTranspose3d(C -> C, kernel=2, stride=2) as one GEMM -------------
    up_w = params["up_w"]                                 # (Cin, Cout, 2, 2, 2)
    co = up_w.shape[1]
    wm = jnp.transpose(up_w, (0, 2, 3, 4, 1)).reshape(c, 8 * co)
    bias_up = jnp.tile(params["up_b"], 8)                 # b[co] per (kd,kh,kw,co)
    a = x.reshape(nb * d * h * w, c)
    y = matmul_bias(a, wm, bias_up, out_dtype=jnp.bfloat16)       # (M, 8*Co)
    y = y.reshape(nb, d, h, w, 2, 2, 2, co)
    # TODO(synk): the 2x2x2 stride-2 interleave below and the residual concat
    # remain XLA data-movement passes; they could be folded into conv1's DMA.
    y = jnp.transpose(y, (0, 1, 4, 2, 5, 3, 6, 7)).reshape(
        nb, 2 * d, 2 * h, 2 * w, co)

    # --- concat residual along channels --------------------------------------
    if residual_ncdhw is not None:
        r = jnp.transpose(residual_ncdhw, (0, 2, 3, 4, 1)).astype(jnp.bfloat16)
        y = jnp.concatenate([y, r], axis=-1)

    dd, hh, ww = 2 * d, 2 * h, 2 * w
    cp = _round_up(cm, 128)                               # lane-dense channels
    gamma_p = _pad1d(params["bn_g"], cp)
    beta_p = _pad1d(params["bn_b"], cp)

    # --- conv1 -> bn -> relu (conv bias cancelled by train-mode BN) ----------
    z = conv3x3x3_fused(y, params["c1_w"], cp)                    # (M2, Cp)
    z = bn_relu(z, gamma_p, beta_p, out_dtype=jnp.bfloat16)
    z = z.reshape(nb, dd, hh, ww, cp)

    # --- conv2 -> bn -> relu (same BN affine; batch stats recomputed) --------
    z2 = conv3x3x3_fused(z, params["c2_w"], cp)                   # (M2, Cp)
    z2 = bn_relu(z2, gamma_p, beta_p,
                 out_dtype=jnp.bfloat16 if last_layer else jnp.float32)

    if last_layer:
        w3 = params["c3_w"]                                       # (nc, Cm,1,1,1)
        nc = w3.shape[0]
        wm3 = jnp.pad(w3.reshape(nc, cm).T, ((0, cp - cm), (0, 0)))  # (Cp, nc)
        out = matmul_bias(z2, wm3, params["c3_b"], out_dtype=jnp.float32)
        out_c = nc
    else:
        out = z2[:, :cm]
        out_c = cm

    out = out.reshape(nb, dd, hh, ww, out_c)
    return jnp.transpose(out, (0, 4, 1, 2, 3))                    # back to NCDHW


def init_params(key, in_channels, res_channels, num_classes):
    c = in_channels
    cm = c // 2
    keys = jax.random.split(key, 8)

    def wini(k, shape, fan_in):
        return jax.random.normal(k, shape, jnp.float32) / jnp.sqrt(float(fan_in))

    return {
        # ConvTranspose3d weight layout: (Cin, Cout, kD, kH, kW)
        "up_w": wini(keys[0], (c, c, 2, 2, 2), c * 8),
        "up_b": wini(keys[1], (c,), c * 8),
        # Conv3d weight layout: (Cout, Cin, kD, kH, kW)
        "c1_w": wini(keys[2], (cm, c + res_channels, 3, 3, 3),
                     (c + res_channels) * 27),
        "c1_b": wini(keys[3], (cm,), (c + res_channels) * 27),  # unused: BN cancels it
        "c2_w": wini(keys[4], (cm, cm, 3, 3, 3), cm * 27),
        "c2_b": wini(keys[5], (cm,), cm * 27),                  # unused: BN cancels it
        # BatchNorm3d(Cm): fresh init gamma=1, beta=0
        "bn_g": jnp.ones((cm,), jnp.float32),
        "bn_b": jnp.zeros((cm,), jnp.float32),
        # 1x1x1 head conv
        "c3_w": wini(keys[6], (num_classes, cm, 1, 1, 1), cm),
        "c3_b": wini(keys[7], (num_classes,), cm),
    }


if __name__ == "__main__":
    key = jax.random.PRNGKey(0)
    k_x, k_r, k_p = jax.random.split(key, 3)

    N, C, D, H, W = 2, 8, 4, 4, 4
    res_channels = 8
    num_classes = 3

    x = jax.random.normal(k_x, (N, C, D, H, W), jnp.float32)
    residual = jax.random.normal(
        k_r, (N, res_channels, 2 * D, 2 * H, 2 * W), jnp.float32)

    params = init_params(k_p, C, res_channels, num_classes)

    fwd = jax.jit(upconv3d_block_forward, static_argnames=("last_layer",))
    out = fwd(params, x, residual, last_layer=True)
    out = jax.block_until_ready(out)
    assert out.shape == (N, num_classes, 2 * D, 2 * H, 2 * W), out.shape
    print("KERNEL_OK")
</pallas_src>

<mosaic_0001>
module attributes {stable_mosaic.version = 11 : i64} {
  func.func @_matmul_bias_kernel(%arg0: i32, %arg1: i32, %arg2: i32, %arg3: memref<128x8xbf16, #tpu.memory_space<vmem>>, %arg4: memref<8x128xbf16, #tpu.memory_space<vmem>>, %arg5: memref<1x128xf32, #tpu.memory_space<vmem>>, %arg6: memref<128x128xbf16, #tpu.memory_space<vmem>>, %arg7: memref<128x128xf32, #tpu.memory_space<vmem>>) attributes {dimension_semantics = [#tpu.dimension_semantics<parallel>, #tpu.dimension_semantics<parallel>, #tpu.dimension_semantics<arbitrary>], iteration_bounds = array<i64: 1, 1, 1>, scalar_prefetch = 0 : i64, scratch_operands = 1 : i64, tpu.core_type = #tpu.core_type<tc>, window_params = [{transform_indices = @transform_0, window_bounds = array<i64: 128, 8>}, {transform_indices = @transform_1, window_bounds = array<i64: 8, 128>}, {transform_indices = @transform_2, window_bounds = array<i64: 1, 128>}, {transform_indices = @transform_3, window_bounds = array<i64: 128, 128>}]} {
    %c0_i32 = arith.constant 0 : i32
    %0 = arith.cmpi eq, %arg2, %c0_i32 : i32
    %1 = arith.extui %0 : i1 to i32
    %c0_i32_0 = arith.constant 0 : i32
    %2 = arith.cmpi ne, %1, %c0_i32_0 : i32
    scf.if %2 {
      %cst_10 = arith.constant 0.000000e+00 : f32
      %12 = vector.broadcast %cst_10 : f32 to vector<128x128xf32>
      %c0_11 = arith.constant 0 : index
      %c0_12 = arith.constant 0 : index
      %13 = vector.load %arg7[%c0_11, %c0_12] : memref<128x128xf32, #tpu.memory_space<vmem>>, vector<128x128xf32>
      tpu.vector_store %arg7[%c0_11, %c0_12], %12 {strides = array<i32>} : memref<128x128xf32, #tpu.memory_space<vmem>>, vector<128x128xf32>,
    } else {
    }
    %c0 = arith.constant 0 : index
    %c0_1 = arith.constant 0 : index
    %3 = vector.load %arg7[%c0, %c0_1] : memref<128x128xf32, #tpu.memory_space<vmem>>, vector<128x128xf32>
    %c0_2 = arith.constant 0 : index
    %c0_3 = arith.constant 0 : index
    %4 = vector.load %arg3[%c0_2, %c0_3] : memref<128x8xbf16, #tpu.memory_space<vmem>>, vector<128x8xbf16>
    %c0_4 = arith.constant 0 : index
    %c0_5 = arith.constant 0 : index
    %5 = vector.load %arg4[%c0_4, %c0_5] : memref<8x128xbf16, #tpu.memory_space<vmem>>, vector<8x128xbf16>
    %cst = arith.constant dense<0.000000e+00> : vector<128x128xf32>
    %6 = tpu.matmul %4, %5, %cst {dimension_numbers = #tpu.dot_dimension_numbers<[1], [0], [0], [1], [0, 0, 1, 1], [], []>} : vector<128x8xbf16>, vector<8x128xbf16>, vector<128x128xf32> -> vector<128x128xf32>
    %7 = arith.addf %3, %6 : vector<128x128xf32>
    %c0_6 = arith.constant 0 : index
    %c0_7 = arith.constant 0 : index
    %8 = vector.load %arg7[%c0_6, %c0_7] : memref<128x128xf32, #tpu.memory_space<vmem>>, vector<128x128xf32>
    tpu.vector_store %arg7[%c0_6, %c0_7], %7 {strides = array<i32>} : memref<128x128xf32, #tpu.memory_space<vmem>>, vector<128x128xf32>,
    %c0_i32_8 = arith.constant 0 : i32
    %9 = arith.cmpi eq, %arg2, %c0_i32_8 : i32
    %10 = arith.extui %9 : i1 to i32
    %c0_i32_9 = arith.constant 0 : i32
    %11 = arith.cmpi ne, %10, %c0_i32_9 : i32
    scf.if %11 {
      %c0_10 = arith.constant 0 : index
      %c0_11 = arith.constant 0 : index
      %12 = vector.load %arg7[%c0_10, %c0_11] : memref<128x128xf32, #tpu.memory_space<vmem>>, vector<128x128xf32>
      %c0_12 = arith.constant 0 : index
      %c0_13 = arith.constant 0 : index
      %13 = vector.load %arg5[%c0_12, %c0_13] : memref<1x128xf32, #tpu.memory_space<vmem>>, vector<1x128xf32>
      %14 = vector.broadcast %13 : vector<1x128xf32> to vector<128x128xf32>
      %15 = arith.addf %12, %14 : vector<128x128xf32>
      %16 = arith.truncf %15 : vector<128x128xf32> to vector<128x128xbf16>
      %c0_14 = arith.constant 0 : index
      %c0_15 = arith.constant 0 : index
      %17 = vector.load %arg6[%c0_14, %c0_15] : memref<128x128xbf16, #tpu.memory_space<vmem>>, vector<128x128xbf16>
      tpu.vector_store %arg6[%c0_14, %c0_15], %16 {strides = array<i32>} : memref<128x128xbf16, #tpu.memory_space<vmem>>, vector<128x128xbf16>,
    } else {
    }
    return
  }
  func.func @transform_0(%arg0: i32, %arg1: i32, %arg2: i32) -> (i32, i32) {
    %c0_i32 = arith.constant 0 : i32
    return %arg0, %arg2 : i32, i32
  }
  func.func @transform_1(%arg0: i32, %arg1: i32, %arg2: i32) -> (i32, i32) {
    %c0_i32 = arith.constant 0 : i32
    return %arg2, %arg1 : i32, i32
  }
  func.func @transform_2(%arg0: i32, %arg1: i32, %arg2: i32) -> (i32, i32) {
    %c0_i32 = arith.constant 0 : i32
    %c0_i32_0 = arith.constant 0 : i32
    return %c0_i32, %arg1 : i32, i32
  }
  func.func @transform_3(%arg0: i32, %arg1: i32, %arg2: i32) -> (i32, i32) {
    %c0_i32 = arith.constant 0 : i32
    return %arg0, %arg1 : i32, i32
  }
}

module attributes {stable_mosaic.version = 11 : i64} {
  func.func @_conv3x3x3_kernel(%arg0: i32, %arg1: i32, %arg2: i32, %arg3: memref<1x1x10x10x16xbf16, #tpu.memory_space<vmem>>, %arg4: memref<1x3x3x16x128xbf16, #tpu.memory_space<vmem>>, %arg5: memref<1x1x64x128xf32, #tpu.memory_space<vmem>>, %arg6: memref<64x128xf32, #tpu.memory_space<vmem>>) attributes {dimension_semantics = [#tpu.dimension_semantics<parallel>, #tpu.dimension_semantics<parallel>, #tpu.dimension_semantics<arbitrary>], iteration_bounds = array<i64: 2, 8, 3>, scalar_prefetch = 0 : i64, scratch_operands = 1 : i64, tpu.core_type = #tpu.core_type<tc>, window_params = [{transform_indices = @transform_0, window_bounds = array<i64: 1, 1, 10, 10, 16>}, {transform_indices = @transform_1, window_bounds = array<i64: 1, 3, 3, 16, 128>}, {transform_indices = @transform_2, window_bounds = array<i64: 1, 1, 64, 128>}]} {
    %c0_i32 = arith.constant 0 : i32
    %0 = arith.cmpi eq, %arg2, %c0_i32 : i32
    %1 = arith.extui %0 : i1 to i32
    %c0_i32_0 = arith.constant 0 : i32
    %2 = arith.cmpi ne, %1, %c0_i32_0 : i32
    scf.if %2 {
      %cst_61 = arith.constant 0.000000e+00 : f32
      %64 = vector.broadcast %cst_61 : f32 to vector<64x128xf32>
      %c0_62 = arith.constant 0 : index
      %c0_63 = arith.constant 0 : index
      %65 = vector.load %arg6[%c0_62, %c0_63] : memref<64x128xf32, #tpu.memory_space<vmem>>, vector<64x128xf32>
      tpu.vector_store %arg6[%c0_62, %c0_63], %64 {strides = array<i32>} : memref<64x128xf32, #tpu.memory_space<vmem>>, vector<64x128xf32>,
    } else {
    }
    %c0 = arith.constant 0 : index
    %c0_1 = arith.constant 0 : index
    %c0_2 = arith.constant 0 : index
    %c0_3 = arith.constant 0 : index
    %c0_4 = arith.constant 0 : index
    %3 = vector.load %arg3[%c0, %c0_1, %c0_2, %c0_3, %c0_4] : memref<1x1x10x10x16xbf16, #tpu.memory_space<vmem>>, vector<1x1x10x10x16xbf16>
    %4 = vector.shape_cast %3 : vector<1x1x10x10x16xbf16> to vector<10x10x16xbf16>
    %c0_5 = arith.constant 0 : index
    %c0_6 = arith.constant 0 : index
    %5 = vector.load %arg6[%c0_5, %c0_6] : memref<64x128xf32, #tpu.memory_space<vmem>>, vector<64x128xf32>
    %6 = vector.extract_strided_slice %4 {offsets = [0, 0, 0], sizes = [8, 8, 16], strides = [1, 1, 1]} : vector<10x10x16xbf16> to vector<8x8x16xbf16>
    %7 = vector.shape_cast %6 : vector<8x8x16xbf16> to vector<64x16xbf16>
    %c0_7 = arith.constant 0 : index
    %c0_8 = arith.constant 0 : index
    %c0_9 = arith.constant 0 : index
    %c0_10 = arith.constant 0 : index
    %c0_11 = arith.constant 0 : index
    %8 = vector.load %arg4[%c0_7, %c0_8, %c0_9, %c0_10, %c0_11] : memref<1x3x3x16x128xbf16, #tpu.memory_space<vmem>>, vector<1x1x1x16x128xbf16>
    %9 = vector.shape_cast %8 : vector<1x1x1x16x128xbf16> to vector<16x128xbf16>
    %cst = arith.constant dense<0.000000e+00> : vector<64x128xf32>
    %10 = tpu.matmul %7, %9, %cst {dimension_numbers = #tpu.dot_dimension_numbers<[1], [0], [0], [1], [0, 0, 1, 1], [], []>} : vector<64x16xbf16>, vector<16x128xbf16>, vector<64x128xf32> -> vector<64x128xf32>
    %11 = arith.addf %5, %10 : vector<64x128xf32>
    %12 = vector.extract_strided_slice %4 {offsets = [0, 1, 0], sizes = [8, 8, 16], strides = [1, 1, 1]} : vector<10x10x16xbf16> to vector<8x8x16xbf16>
    %13 = vector.shape_cast %12 : vector<8x8x16xbf16> to vector<64x16xbf16>
    %c0_12 = arith.constant 0 : index
    %c0_13 = arith.constant 0 : index
    %c1 = arith.constant 1 : index
    %c0_14 = arith.constant 0 : index
    %c0_15 = arith.constant 0 : index
    %14 = vector.load %arg4[%c0_12, %c0_13, %c1, %c0_14, %c0_15] : memref<1x3x3x16x128xbf16, #tpu.memory_space<vmem>>, vector<1x1x1x16x128xbf16>
    %15 = vector.shape_cast %14 : vector<1x1x1x16x128xbf16> to vector<16x128xbf16>
    %cst_16 = arith.constant dense<0.000000e+00> : vector<64x128xf32>
    %16 = tpu.matmul %13, %15, %cst_16 {dimension_numbers = #tpu.dot_dimension_numbers<[1], [0], [0], [1], [0, 0, 1, 1], [], []>} : vector<64x16xbf16>, vector<16x128xbf16>, vector<64x128xf32> -> vector<64x128xf32>
    %17 = arith.addf %11, %16 : vector<64x128xf32>
    %18 = vector.extract_strided_slice %4 {offsets = [0, 2, 0], sizes = [8, 8, 16], strides = [1, 1, 1]} : vector<10x10x16xbf16> to vector<8x8x16xbf16>
    %19 = vector.shape_cast %18 : vector<8x8x16xbf16> to vector<64x16xbf16>
    %c0_17 = arith.constant 0 : index
    %c0_18 = arith.constant 0 : index
    %c2 = arith.constant 2 : index
    %c0_19 = arith.constant 0 : index
    %c0_20 = arith.constant 0 : index
    %20 = vector.load %arg4[%c0_17, %c0_18, %c2, %c0_19, %c0_20] : memref<1x3x3x16x128xbf16, #tpu.memory_space<vmem>>, vector<1x1x1x16x128xbf16>
    %21 = vector.shape_cast %20 : vector<1x1x1x16x128xbf16> to vector<16x128xbf16>
    %cst_21 = arith.constant dense<0.000000e+00> : vector<64x128xf32>
    %22 = tpu.matmul %19, %21, %cst_21 {dimension_numbers = #tpu.dot_dimension_numbers<[1], [0], [0], [1], [0, 0, 1, 1], [], []>} : vector<64x16xbf16>, vector<16x128xbf16>, vector<64x128xf32> -> vector<64x128xf32>
    %23 = arith.addf %17, %22 : vector<64x128xf32>
    %24 = vector.extract_strided_slice %4 {offsets = [1, 0, 0], sizes = [8, 8, 16], strides = [1, 1, 1]} : vector<10x10x16xbf16> to vector<8x8x16xbf16>
    %25 = vector.shape_cast %24 : vector<8x8x16xbf16> to vector<64x16xbf16>
    %c0_22 = arith.constant 0 : index
    %c1_23 = arith.constant 1 : index
    %c0_24 = arith.constant 0 : index
    %c0_25 = arith.constant 0 : index
    %c0_26 = arith.constant 0 : index
    %26 = vector.load %arg4[%c0_22, %c1_23, %c0_24, %c0_25, %c0_26] : memref<1x3x3x16x128xbf16, #tpu.memory_space<vmem>>, vector<1x1x1x16x128xbf16>
    %27 = vector.shape_cast %26 : vector<1x1x1x16x128xbf16> to vector<16x128xbf16>
    %cst_27 = arith.constant dense<0.000000e+00> : vector<64x128xf32>
    %28 = tpu.matmul %25, %27, %cst_27 {dimension_numbers = #tpu.dot_dimension_numbers<[1], [0], [0], [1], [0, 0, 1, 1], [], []>} : vector<64x16xbf16>, vector<16x128xbf16>, vector<64x128xf32> -> vector<64x128xf32>
    %29 = arith.addf %23, %28 : vector<64x128xf32>
    %30 = vector.extract_strided_slice %4 {offsets = [1, 1, 0], sizes = [8, 8, 16], strides = [1, 1, 1]} : vector<10x10x16xbf16> to vector<8x8x16xbf16>
    %31 = vector.shape_cast %30 : vector<8x8x16xbf16> to vector<64x16xbf16>
    %c0_28 = arith.constant 0 : index
    %c1_29 = arith.constant 1 : index
    %c1_30 = arith.constant 1 : index
    %c0_31 = arith.constant 0 : index
    %c0_32 = arith.constant 0 : index
    %32 = vector.load %arg4[%c0_28, %c1_29, %c1_30, %c0_31, %c0_32] : memref<1x3x3x16x128xbf16, #tpu.memory_space<vmem>>, vector<1x1x1x16x128xbf16>
    %33 = vector.shape_cast %32 : vector<1x1x1x16x128xbf16> to vector<16x128xbf16>
    %cst_33 = arith.constant dense<0.000000e+00> : vector<64x128xf32>
    %34 = tpu.matmul %31, %33, %cst_33 {dimension_numbers = #tpu.dot_dimension_numbers<[1], [0], [0], [1], [0, 0, 1, 1], [], []>} : vector<64x16xbf16>, vector<16x128xbf16>, vector<64x128xf32> -> vector<64x128xf32>
    %35 = arith.addf %29, %34 : vector<64x128xf32>
    %36 = vector.extract_strided_slice %4 {offsets = [1, 2, 0], sizes = [8, 8, 16], strides = [1, 1, 1]} : vector<10x10x16xbf16> to vector<8x8x16xbf16>
    %37 = vector.shape_cast %36 : vector<8x8x16xbf16> to vector<64x16xbf16>
    %c0_34 = arith.constant 0 : index
    %c1_35 = arith.constant 1 : index
    %c2_36 = arith.constant 2 : index
    %c0_37 = arith.constant 0 : index
    %c0_38 = arith.constant 0 : index
    %38 = vector.load %arg4[%c0_34, %c1_35, %c2_36, %c0_37, %c0_38] : memref<1x3x3x16x128xbf16, #tpu.memory_space<vmem>>, vector<1x1x1x16x128xbf16>
    %39 = vector.shape_cast %38 : vector<1x1x1x16x128xbf16> to vector<16x128xbf16>
    %cst_39 = arith.constant dense<0.000000e+00> : vector<64x128xf32>
    %40 = tpu.matmul %37, %39, %cst_39 {dimension_numbers = #tpu.dot_dimension_numbers<[1], [0], [0], [1], [0, 0, 1, 1], [], []>} : vector<64x16xbf16>, vector<16x128xbf16>, vector<64x128xf32> -> vector<64x128xf32>
    %41 = arith.addf %35, %40 : vector<64x128xf32>
    %42 = vector.extract_strided_slice %4 {offsets = [2, 0, 0], sizes = [8, 8, 16], strides = [1, 1, 1]} : vector<10x10x16xbf16> to vector<8x8x16xbf16>
    %43 = vector.shape_cast %42 : vector<8x8x16xbf16> to vector<64x16xbf16>
    %c0_40 = arith.constant 0 : index
    %c2_41 = arith.constant 2 : index
    %c0_42 = arith.constant 0 : index
    %c0_43 = arith.constant 0 : index
    %c0_44 = arith.constant 0 : index
    %44 = vector.load %arg4[%c0_40, %c2_41, %c0_42, %c0_43, %c0_44] : memref<1x3x3x16x128xbf16, #tpu.memory_space<vmem>>, vector<1x1x1x16x128xbf16>
    %45 = vector.shape_cast %44 : vector<1x1x1x16x128xbf16> to vector<16x128xbf16>
    %cst_45 = arith.constant dense<0.000000e+00> : vector<64x128xf32>
    %46 = tpu.matmul %43, %45, %cst_45 {dimension_numbers = #tpu.dot_dimension_numbers<[1], [0], [0], [1], [0, 0, 1, 1], [], []>} : vector<64x16xbf16>, vector<16x128xbf16>, vector<64x128xf32> -> vector<64x128xf32>
    %47 = arith.addf %41, %46 : vector<64x128xf32>
    %48 = vector.extract_strided_slice %4 {offsets = [2, 1, 0], sizes = [8, 8, 16], strides = [1, 1, 1]} : vector<10x10x16xbf16> to vector<8x8x16xbf16>
    %49 = vector.shape_cast %48 : vector<8x8x16xbf16> to vector<64x16xbf16>
    %c0_46 = arith.constant 0 : index
    %c2_47 = arith.constant 2 : index
    %c1_48 = arith.constant 1 : index
    %c0_49 = arith.constant 0 : index
    %c0_50 = arith.constant 0 : index
    %50 = vector.load %arg4[%c0_46, %c2_47, %c1_48, %c0_49, %c0_50] : memref<1x3x3x16x128xbf16, #tpu.memory_space<vmem>>, vector<1x1x1x16x128xbf16>
    %51 = vector.shape_cast %50 : vector<1x1x1x16x128xbf16> to vector<16x128xbf16>
    %cst_51 = arith.constant dense<0.000000e+00> : vector<64x128xf32>
    %52 = tpu.matmul %49, %51, %cst_51 {dimension_numbers = #tpu.dot_dimension_numbers<[1], [0], [0], [1], [0, 0, 1, 1], [], []>} : vector<64x16xbf16>, vector<16x128xbf16>, vector<64x128xf32> -> vector<64x128xf32>
    %53 = arith.addf %47, %52 : vector<64x128xf32>
    %54 = vector.extract_strided_slice %4 {offsets = [2, 2, 0], sizes = [8, 8, 16], strides = [1, 1, 1]} : vector<10x10x16xbf16> to vector<8x8x16xbf16>
    %55 = vector.shape_cast %54 : vector<8x8x16xbf16> to vector<64x16xbf16>
    %c0_52 = arith.constant 0 : index
    %c2_53 = arith.constant 2 : index
    %c2_54 = arith.constant 2 : index
    %c0_55 = arith.constant 0 : index
    %c0_56 = arith.constant 0 : index
    %56 = vector.load %arg4[%c0_52, %c2_53, %c2_54, %c0_55, %c0_56] : memref<1x3x3x16x128xbf16, #tpu.memory_space<vmem>>, vector<1x1x1x16x128xbf16>
    %57 = vector.shape_cast %56 : vector<1x1x1x16x128xbf16> to vector<16x128xbf16>
    %cst_57 = arith.constant dense<0.000000e+00> : vector<64x128xf32>
    %58 = tpu.matmul %55, %57, %cst_57 {dimension_numbers = #tpu.dot_dimension_numbers<[1], [0], [0], [1], [0, 0, 1, 1], [], []>} : vector<64x16xbf16>, vector<16x128xbf16>, vector<64x128xf32> -> vector<64x128xf32>
    %59 = arith.addf %53, %58 : vector<64x128xf32>
    %c0_58 = arith.constant 0 : index
    %c0_59 = arith.constant 0 : index
    %60 = vector.load %arg6[%c0_58, %c0_59] : memref<64x128xf32, #tpu.memory_space<vmem>>, vector<64x128xf32>
    tpu.vector_store %arg6[%c0_58, %c0_59], %59 {strides = array<i32>} : memref<64x128xf32, #tpu.memory_space<vmem>>, vector<64x128xf32>,
    %c2_i32 = arith.constant 2 : i32
    %61 = arith.cmpi eq, %arg2, %c2_i32 : i32
    %62 = arith.extui %61 : i1 to i32
    %c0_i32_60 = arith.constant 0 : i32
    %63 = arith.cmpi ne, %62, %c0_i32_60 : i32
    scf.if %63 {
      %c0_61 = arith.constant 0 : index
      %c0_62 = arith.constant 0 : index
      %c0_63 = arith.constant 0 : index
      %c0_64 = arith.constant 0 : index
      %64 = vector.load %arg5[%c0_61, %c0_62, %c0_63, %c0_64] : memref<1x1x64x128xf32, #tpu.memory_space<vmem>>, vector<1x1x64x128xf32>
      %65 = vector.shape_cast %64 : vector<1x1x64x128xf32> to vector<64x128xf32>
      %66 = vector.shape_cast %59 : vector<64x128xf32> to vector<1x1x64x128xf32>
      tpu.vector_store %arg5[%c0_61, %c0_62, %c0_63, %c0_64], %66 {strides = array<i32>} : memref<1x1x64x128xf32, #tpu.memory_space<vmem>>, vector<1x1x64x128xf32>,
    } else {
    }
    return
  }
  func.func @transform_0(%arg0: i32, %arg1: i32, %arg2: i32) -> (i32, i32, i32, i32, i32) {
    %0 = arith.addi %arg1, %arg2 : i32
    %c0_i32 = arith.constant 0 : i32
    %c0_i32_0 = arith.constant 0 : i32
    %c0_i32_1 = arith.constant 0 : i32
    %c0_i32_2 = arith.constant 0 : i32
    return %arg0, %0, %c0_i32, %c0_i32_0, %c0_i32_1 : i32, i32, i32, i32, i32
  }
  func.func @transform_1(%arg0: i32, %arg1: i32, %arg2: i32) -> (i32, i32, i32, i32, i32) {
    %c0_i32 = arith.constant 0 : i32
    %c0_i32_0 = arith.constant 0 : i32
    %c0_i32_1 = arith.constant 0 : i32
    %c0_i32_2 = arith.constant 0 : i32
    %c0_i32_3 = arith.constant 0 : i32
    return %arg2, %c0_i32, %c0_i32_0, %c0_i32_1, %c0_i32_2 : i32, i32, i32, i32, i32
  }
  func.func @transform_2(%arg0: i32, %arg1: i32, %arg2: i32) -> (i32, i32, i32, i32) {
    %c0_i32 = arith.constant 0 : i32
    %c0_i32_0 = arith.constant 0 : i32
    %c0_i32_1 = arith.constant 0 : i32
    return %arg0, %arg1, %c0_i32, %c0_i32_0 : i32, i32, i32, i32
  }
}

module attributes {stable_mosaic.version = 11 : i64} {
  func.func @_bn_stats_kernel(%arg0: i32, %arg1: memref<512x128xf32, #tpu.memory_space<vmem>>, %arg2: memref<1x128xf32, #tpu.memory_space<vmem>>, %arg3: memref<1x128xf32, #tpu.memory_space<vmem>>) attributes {dimension_semantics = [#tpu.dimension_semantics<arbitrary>], iteration_bounds = array<i64: 2>, scalar_prefetch = 0 : i64, scratch_operands = 0 : i64, tpu.core_type = #tpu.core_type<tc>, window_params = [{transform_indices = @transform_0, window_bounds = array<i64: 512, 128>}, {pipeline_mode = #tpu.pipeline_mode<synchronous>, transform_indices = @transform_1, window_bounds = array<i64: 1, 128>}, {pipeline_mode = #tpu.pipeline_mode<synchronous>, transform_indices = @transform_2, window_bounds = array<i64: 1, 128>}]} {
    %c0_i32 = arith.constant 0 : i32
    %0 = arith.cmpi eq, %arg0, %c0_i32 : i32
    %1 = arith.extui %0 : i1 to i32
    %c0_i32_0 = arith.constant 0 : i32
    %2 = arith.cmpi ne, %1, %c0_i32_0 : i32
    scf.if %2 {
      %cst_11 = arith.constant 0.000000e+00 : f32
      %15 = vector.broadcast %cst_11 : f32 to vector<1x128xf32>
      %c0_12 = arith.constant 0 : index
      %c0_13 = arith.constant 0 : index
      %16 = vector.load %arg2[%c0_12, %c0_13] : memref<1x128xf32, #tpu.memory_space<vmem>>, vector<1x128xf32>
      tpu.vector_store %arg2[%c0_12, %c0_13], %15 {strides = array<i32>} : memref<1x128xf32, #tpu.memory_space<vmem>>, vector<1x128xf32>,
      %cst_14 = arith.constant 0.000000e+00 : f32
      %17 = vector.broadcast %cst_14 : f32 to vector<1x128xf32>
      %c0_15 = arith.constant 0 : index
      %c0_16 = arith.constant 0 : index
      %18 = vector.load %arg3[%c0_15, %c0_16] : memref<1x128xf32, #tpu.memory_space<vmem>>, vector<1x128xf32>
      tpu.vector_store %arg3[%c0_15, %c0_16], %17 {strides = array<i32>} : memref<1x128xf32, #tpu.memory_space<vmem>>, vector<1x128xf32>,
    } else {
    }
    %c0 = arith.constant 0 : index
    %c0_1 = arith.constant 0 : index
    %3 = vector.load %arg1[%c0, %c0_1] : memref<512x128xf32, #tpu.memory_space<vmem>>, vector<512x128xf32>
    %c0_2 = arith.constant 0 : index
    %c0_3 = arith.constant 0 : index
    %4 = vector.load %arg2[%c0_2, %c0_3] : memref<1x128xf32, #tpu.memory_space<vmem>>, vector<1x128xf32>
    %cst = arith.constant dense<0.000000e+00> : vector<128xf32>
    %5 = vector.multi_reduction <add>, %3, %cst [0] : vector<512x128xf32> to vector<128xf32>
    %6 = vector.shape_cast %5 : vector<128xf32> to vector<1x128xf32>
    %7 = arith.addf %4, %6 : vector<1x128xf32>
    %c0_4 = arith.constant 0 : index
    %c0_5 = arith.constant 0 : index
    %8 = vector.load %arg2[%c0_4, %c0_5] : memref<1x128xf32, #tpu.memory_space<vmem>>, vector<1x128xf32>
    tpu.vector_store %arg2[%c0_4, %c0_5], %7 {strides = array<i32>} : memref<1x128xf32, #tpu.memory_space<vmem>>, vector<1x128xf32>,
    %c0_6 = arith.constant 0 : index
    %c0_7 = arith.constant 0 : index
    %9 = vector.load %arg3[%c0_6, %c0_7] : memref<1x128xf32, #tpu.memory_space<vmem>>, vector<1x128xf32>
    %10 = arith.mulf %3, %3 : vector<512x128xf32>
    %cst_8 = arith.constant dense<0.000000e+00> : vector<128xf32>
    %11 = vector.multi_reduction <add>, %10, %cst_8 [0] : vector<512x128xf32> to vector<128xf32>
    %12 = vector.shape_cast %11 : vector<128xf32> to vector<1x128xf32>
    %13 = arith.addf %9, %12 : vector<1x128xf32>
    %c0_9 = arith.constant 0 : index
    %c0_10 = arith.constant 0 : index
    %14 = vector.load %arg3[%c0_9, %c0_10] : memref<1x128xf32, #tpu.memory_space<vmem>>, vector<1x128xf32>
    tpu.vector_store %arg3[%c0_9, %c0_10], %13 {strides = array<i32>} : memref<1x128xf32, #tpu.memory_space<vmem>>, vector<1x128xf32>,
    return
  }
  func.func @transform_0(%arg0: i32) -> (i32, i32) {
    %c0_i32 = arith.constant 0 : i32
    %c0_i32_0 = arith.constant 0 : i32
    return %arg0, %c0_i32 : i32, i32
  }
  func.func @transform_1(%arg0: i32) -> (i32, i32) {
    %c0_i32 = arith.constant 0 : i32
    %c0_i32_0 = arith.constant 0 : i32
    %c0_i32_1 = arith.constant 0 : i32
    return %c0_i32, %c0_i32_0 : i32, i32
  }
  func.func @transform_2(%arg0: i32) -> (i32, i32) {
    %c0_i32 = arith.constant 0 : i32
    %c0_i32_0 = arith.constant 0 : i32
    %c0_i32_1 = arith.constant 0 : i32
    return %c0_i32, %c0_i32_0 : i32, i32
  }
}

module attributes {stable_mosaic.version = 11 : i64} {
  func.func @_scale_shift_relu_kernel(%arg0: i32, %arg1: memref<512x128xf32, #tpu.memory_space<vmem>>, %arg2: memref<1x128xf32, #tpu.memory_space<vmem>>, %arg3: memref<1x128xf32, #tpu.memory_space<vmem>>, %arg4: memref<512x128xbf16, #tpu.memory_space<vmem>>) attributes {dimension_semantics = [#tpu.dimension_semantics<parallel>], iteration_bounds = array<i64: 2>, scalar_prefetch = 0 : i64, scratch_operands = 0 : i64, tpu.core_type = #tpu.core_type<tc>, window_params = [{transform_indices = @transform_0, window_bounds = array<i64: 512, 128>}, {pipeline_mode = #tpu.pipeline_mode<synchronous>, transform_indices = @transform_1, window_bounds = array<i64: 1, 128>}, {pipeline_mode = #tpu.pipeline_mode<synchronous>, transform_indices = @transform_2, window_bounds = array<i64: 1, 128>}, {transform_indices = @transform_3, window_bounds = array<i64: 512, 128>}]} {
    %c0 = arith.constant 0 : index
    %c0_0 = arith.constant 0 : index
    %0 = vector.load %arg1[%c0, %c0_0] : memref<512x128xf32, #tpu.memory_space<vmem>>, vector<512x128xf32>
    %c0_1 = arith.constant 0 : index
    %c0_2 = arith.constant 0 : index
    %1 = vector.load %arg2[%c0_1, %c0_2] : memref<1x128xf32, #tpu.memory_space<vmem>>, vector<1x128xf32>
    %2 = vector.broadcast %1 : vector<1x128xf32> to vector<512x128xf32>
    %3 = arith.mulf %0, %2 : vector<512x128xf32>
    %c0_3 = arith.constant 0 : index
    %c0_4 = arith.constant 0 : index
    %4 = vector.load %arg3[%c0_3, %c0_4] : memref<1x128xf32, #tpu.memory_space<vmem>>, vector<1x128xf32>
    %5 = vector.broadcast %4 : vector<1x128xf32> to vector<512x128xf32>
    %6 = arith.addf %3, %5 : vector<512x128xf32>
    %cst = arith.constant 0.000000e+00 : f32
    %7 = vector.broadcast %cst : f32 to vector<512x128xf32>
    %8 = arith.maximumf %6, %7 : vector<512x128xf32>
    %9 = arith.truncf %8 : vector<512x128xf32> to vector<512x128xbf16>
    %c0_5 = arith.constant 0 : index
    %c0_6 = arith.constant 0 : index
    %10 = vector.load %arg4[%c0_5, %c0_6] : memref<512x128xbf16, #tpu.memory_space<vmem>>, vector<512x128xbf16>
    tpu.vector_store %arg4[%c0_5, %c0_6], %9 {strides = array<i32>} : memref<512x128xbf16, #tpu.memory_space<vmem>>, vector<512x128xbf16>,
    return
  }
  func.func @transform_0(%arg0: i32) -> (i32, i32) {
    %c0_i32 = arith.constant 0 : i32
    %c0_i32_0 = arith.constant 0 : i32
    return %arg0, %c0_i32 : i32, i32
  }
  func.func @transform_1(%arg0: i32) -> (i32, i32) {
    %c0_i32 = arith.constant 0 : i32
    %c0_i32_0 = arith.constant 0 : i32
    %c0_i32_1 = arith.constant 0 : i32
    return %c0_i32, %c0_i32_0 : i32, i32
  }
  func.func @transform_2(%arg0: i32) -> (i32, i32) {
    %c0_i32 = arith.constant 0 : i32
    %c0_i32_0 = arith.constant 0 : i32
    %c0_i32_1 = arith.constant 0 : i32
    return %c0_i32, %c0_i32_0 : i32, i32
  }
  func.func @transform_3(%arg0: i32) -> (i32, i32) {
    %c0_i32 = arith.constant 0 : i32
    %c0_i32_0 = arith.constant 0 : i32
    return %arg0, %c0_i32 : i32, i32
  }
}

module attributes {stable_mosaic.version = 11 : i64} {
  func.func @_conv3x3x3_kernel(%arg0: i32, %arg1: i32, %arg2: i32, %arg3: memref<1x1x10x10x128xbf16, #tpu.memory_space<vmem>>, %arg4: memref<1x3x3x128x128xbf16, #tpu.memory_space<vmem>>, %arg5: memref<1x1x64x128xf32, #tpu.memory_space<vmem>>, %arg6: memref<64x128xf32, #tpu.memory_space<vmem>>) attributes {dimension_semantics = [#tpu.dimension_semantics<parallel>, #tpu.dimension_semantics<parallel>, #tpu.dimension_semantics<arbitrary>], iteration_bounds = array<i64: 2, 8, 3>, scalar_prefetch = 0 : i64, scratch_operands = 1 : i64, tpu.core_type = #tpu.core_type<tc>, window_params = [{transform_indices = @transform_0, window_bounds = array<i64: 1, 1, 10, 10, 128>}, {transform_indices = @transform_1, window_bounds = array<i64: 1, 3, 3, 128, 128>}, {transform_indices = @transform_2, window_bounds = array<i64: 1, 1, 64, 128>}]} {
    %c0_i32 = arith.constant 0 : i32
    %0 = arith.cmpi eq, %arg2, %c0_i32 : i32
    %1 = arith.extui %0 : i1 to i32
    %c0_i32_0 = arith.constant 0 : i32
    %2 = arith.cmpi ne, %1, %c0_i32_0 : i32
    scf.if %2 {
      %cst_61 = arith.constant 0.000000e+00 : f32
      %64 = vector.broadcast %cst_61 : f32 to vector<64x128xf32>
      %c0_62 = arith.constant 0 : index
      %c0_63 = arith.constant 0 : index
      %65 = vector.load %arg6[%c0_62, %c0_63] : memref<64x128xf32, #tpu.memory_space<vmem>>, vector<64x128xf32>
      tpu.vector_store %arg6[%c0_62, %c0_63], %64 {strides = array<i32>} : memref<64x128xf32, #tpu.memory_space<vmem>>, vector<64x128xf32>,
    } else {
    }
    %c0 = arith.constant 0 : index
    %c0_1 = arith.constant 0 : index
    %c0_2 = arith.constant 0 : index
    %c0_3 = arith.constant 0 : index
    %c0_4 = arith.constant 0 : index
    %3 = vector.load %arg3[%c0, %c0_1, %c0_2, %c0_3, %c0_4] : memref<1x1x10x10x128xbf16, #tpu.memory_space<vmem>>, vector<1x1x10x10x128xbf16>
    %4 = vector.shape_cast %3 : vector<1x1x10x10x128xbf16> to vector<10x10x128xbf16>
    %c0_5 = arith.constant 0 : index
    %c0_6 = arith.constant 0 : index
    %5 = vector.load %arg6[%c0_5, %c0_6] : memref<64x128xf32, #tpu.memory_space<vmem>>, vector<64x128xf32>
    %6 = vector.extract_strided_slice %4 {offsets = [0, 0, 0], sizes = [8, 8, 128], strides = [1, 1, 1]} : vector<10x10x128xbf16> to vector<8x8x128xbf16>
    %7 = vector.shape_cast %6 : vector<8x8x128xbf16> to vector<64x128xbf16>
    %c0_7 = arith.constant 0 : index
    %c0_8 = arith.constant 0 : index
    %c0_9 = arith.constant 0 : index
    %c0_10 = arith.constant 0 : index
    %c0_11 = arith.constant 0 : index
    %8 = vector.load %arg4[%c0_7, %c0_8, %c0_9, %c0_10, %c0_11] : memref<1x3x3x128x128xbf16, #tpu.memory_space<vmem>>, vector<1x1x1x128x128xbf16>
    %9 = vector.shape_cast %8 : vector<1x1x1x128x128xbf16> to vector<128x128xbf16>
    %cst = arith.constant dense<0.000000e+00> : vector<64x128xf32>
    %10 = tpu.matmul %7, %9, %cst {dimension_numbers = #tpu.dot_dimension_numbers<[1], [0], [0], [1], [0, 0, 1, 1], [], []>} : vector<64x128xbf16>, vector<128x128xbf16>, vector<64x128xf32> -> vector<64x128xf32>
    %11 = arith.addf %5, %10 : vector<64x128xf32>
    %12 = vector.extract_strided_slice %4 {offsets = [0, 1, 0], sizes = [8, 8, 128], strides = [1, 1, 1]} : vector<10x10x128xbf16> to vector<8x8x128xbf16>
    %13 = vector.shape_cast %12 : vector<8x8x128xbf16> to vector<64x128xbf16>
    %c0_12 = arith.constant 0 : index
    %c0_13 = arith.constant 0 : index
    %c1 = arith.constant 1 : index
    %c0_14 = arith.constant 0 : index
    %c0_15 = arith.constant 0 : index
    %14 = vector.load %arg4[%c0_12, %c0_13, %c1, %c0_14, %c0_15] : memref<1x3x3x128x128xbf16, #tpu.memory_space<vmem>>, vector<1x1x1x128x128xbf16>
    %15 = vector.shape_cast %14 : vector<1x1x1x128x128xbf16> to vector<128x128xbf16>
    %cst_16 = arith.constant dense<0.000000e+00> : vector<64x128xf32>
    %16 = tpu.matmul %13, %15, %cst_16 {dimension_numbers = #tpu.dot_dimension_numbers<[1], [0], [0], [1], [0, 0, 1, 1], [], []>} : vector<64x128xbf16>, vector<128x128xbf16>, vector<64x128xf32> -> vector<64x128xf32>
    %17 = arith.addf %11, %16 : vector<64x128xf32>
    %18 = vector.extract_strided_slice %4 {offsets = [0, 2, 0], sizes = [8, 8, 128], strides = [1, 1, 1]} : vector<10x10x128xbf16> to vector<8x8x128xbf16>
    %19 = vector.shape_cast %18 : vector<8x8x128xbf16> to vector<64x128xbf16>
    %c0_17 = arith.constant 0 : index
    %c0_18 = arith.constant 0 : index
    %c2 = arith.constant 2 : index
    %c0_19 = arith.constant 0 : index
    %c0_20 = arith.constant 0 : index
    %20 = vector.load %arg4[%c0_17, %c0_18, %c2, %c0_19, %c0_20] : memref<1x3x3x128x128xbf16, #tpu.memory_space<vmem>>, vector<1x1x1x128x128xbf16>
    %21 = vector.shape_cast %20 : vector<1x1x1x128x128xbf16> to vector<128x128xbf16>
    %cst_21 = arith.constant dense<0.000000e+00> : vector<64x128xf32>
    %22 = tpu.matmul %19, %21, %cst_21 {dimension_numbers = #tpu.dot_dimension_numbers<[1], [0], [0], [1], [0, 0, 1, 1], [], []>} : vector<64x128xbf16>, vector<128x128xbf16>, vector<64x128xf32> -> vector<64x128xf32>
    %23 = arith.addf %17, %22 : vector<64x128xf32>
    %24 = vector.extract_strided_slice %4 {offsets = [1, 0, 0], sizes = [8, 8, 128], strides = [1, 1, 1]} : vector<10x10x128xbf16> to vector<8x8x128xbf16>
    %25 = vector.shape_cast %24 : vector<8x8x128xbf16> to vector<64x128xbf16>
    %c0_22 = arith.constant 0 : index
    %c1_23 = arith.constant 1 : index
    %c0_24 = arith.constant 0 : index
    %c0_25 = arith.constant 0 : index
    %c0_26 = arith.constant 0 : index
    %26 = vector.load %arg4[%c0_22, %c1_23, %c0_24, %c0_25, %c0_26] : memref<1x3x3x128x128xbf16, #tpu.memory_space<vmem>>, vector<1x1x1x128x128xbf16>
    %27 = vector.shape_cast %26 : vector<1x1x1x128x128xbf16> to vector<128x128xbf16>
    %cst_27 = arith.constant dense<0.000000e+00> : vector<64x128xf32>
    %28 = tpu.matmul %25, %27, %cst_27 {dimension_numbers = #tpu.dot_dimension_numbers<[1], [0], [0], [1], [0, 0, 1, 1], [], []>} : vector<64x128xbf16>, vector<128x128xbf16>, vector<64x128xf32> -> vector<64x128xf32>
    %29 = arith.addf %23, %28 : vector<64x128xf32>
    %30 = vector.extract_strided_slice %4 {offsets = [1, 1, 0], sizes = [8, 8, 128], strides = [1, 1, 1]} : vector<10x10x128xbf16> to vector<8x8x128xbf16>
    %31 = vector.shape_cast %30 : vector<8x8x128xbf16> to vector<64x128xbf16>
    %c0_28 = arith.constant 0 : index
    %c1_29 = arith.constant 1 : index
    %c1_30 = arith.constant 1 : index
    %c0_31 = arith.constant 0 : index
    %c0_32 = arith.constant 0 : index
    %32 = vector.load %arg4[%c0_28, %c1_29, %c1_30, %c0_31, %c0_32] : memref<1x3x3x128x128xbf16, #tpu.memory_space<vmem>>, vector<1x1x1x128x128xbf16>
    %33 = vector.shape_cast %32 : vector<1x1x1x128x128xbf16> to vector<128x128xbf16>
    %cst_33 = arith.constant dense<0.000000e+00> : vector<64x128xf32>
    %34 = tpu.matmul %31, %33, %cst_33 {dimension_numbers = #tpu.dot_dimension_numbers<[1], [0], [0], [1], [0, 0, 1, 1], [], []>} : vector<64x128xbf16>, vector<128x128xbf16>, vector<64x128xf32> -> vector<64x128xf32>
    %35 = arith.addf %29, %34 : vector<64x128xf32>
    %36 = vector.extract_strided_slice %4 {offsets = [1, 2, 0], sizes = [8, 8, 128], strides = [1, 1, 1]} : vector<10x10x128xbf16> to vector<8x8x128xbf16>
    %37 = vector.shape_cast %36 : vector<8x8x128xbf16> to vector<64x128xbf16>
    %c0_34 = arith.constant 0 : index
    %c1_35 = arith.constant 1 : index
    %c2_36 = arith.constant 2 : index
    %c0_37 = arith.constant 0 : index
    %c0_38 = arith.constant 0 : index
    %38 = vector.load %arg4[%c0_34, %c1_35, %c2_36, %c0_37, %c0_38] : memref<1x3x3x128x128xbf16, #tpu.memory_space<vmem>>, vector<1x1x1x128x128xbf16>
    %39 = vector.shape_cast %38 : vector<1x1x1x128x128xbf16> to vector<128x128xbf16>
    %cst_39 = arith.constant dense<0.000000e+00> : vector<64x128xf32>
    %40 = tpu.matmul %37, %39, %cst_39 {dimension_numbers = #tpu.dot_dimension_numbers<[1], [0], [0], [1], [0, 0, 1, 1], [], []>} : vector<64x128xbf16>, vector<128x128xbf16>, vector<64x128xf32> -> vector<64x128xf32>
    %41 = arith.addf %35, %40 : vector<64x128xf32>
    %42 = vector.extract_strided_slice %4 {offsets = [2, 0, 0], sizes = [8, 8, 128], strides = [1, 1, 1]} : vector<10x10x128xbf16> to vector<8x8x128xbf16>
    %43 = vector.shape_cast %42 : vector<8x8x128xbf16> to vector<64x128xbf16>
    %c0_40 = arith.constant 0 : index
    %c2_41 = arith.constant 2 : index
    %c0_42 = arith.constant 0 : index
    %c0_43 = arith.constant 0 : index
    %c0_44 = arith.constant 0 : index
    %44 = vector.load %arg4[%c0_40, %c2_41, %c0_42, %c0_43, %c0_44] : memref<1x3x3x128x128xbf16, #tpu.memory_space<vmem>>, vector<1x1x1x128x128xbf16>
    %45 = vector.shape_cast %44 : vector<1x1x1x128x128xbf16> to vector<128x128xbf16>
    %cst_45 = arith.constant dense<0.000000e+00> : vector<64x128xf32>
    %46 = tpu.matmul %43, %45, %cst_45 {dimension_numbers = #tpu.dot_dimension_numbers<[1], [0], [0], [1], [0, 0, 1, 1], [], []>} : vector<64x128xbf16>, vector<128x128xbf16>, vector<64x128xf32> -> vector<64x128xf32>
    %47 = arith.addf %41, %46 : vector<64x128xf32>
    %48 = vector.extract_strided_slice %4 {offsets = [2, 1, 0], sizes = [8, 8, 128], strides = [1, 1, 1]} : vector<10x10x128xbf16> to vector<8x8x128xbf16>
    %49 = vector.shape_cast %48 : vector<8x8x128xbf16> to vector<64x128xbf16>
    %c0_46 = arith.constant 0 : index
    %c2_47 = arith.constant 2 : index
    %c1_48 = arith.constant 1 : index
    %c0_49 = arith.constant 0 : index
    %c0_50 = arith.constant 0 : index
    %50 = vector.load %arg4[%c0_46, %c2_47, %c1_48, %c0_49, %c0_50] : memref<1x3x3x128x128xbf16, #tpu.memory_space<vmem>>, vector<1x1x1x128x128xbf16>
    %51 = vector.shape_cast %50 : vector<1x1x1x128x128xbf16> to vector<128x128xbf16>
    %cst_51 = arith.constant dense<0.000000e+00> : vector<64x128xf32>
    %52 = tpu.matmul %49, %51, %cst_51 {dimension_numbers = #tpu.dot_dimension_numbers<[1], [0], [0], [1], [0, 0, 1, 1], [], []>} : vector<64x128xbf16>, vector<128x128xbf16>, vector<64x128xf32> -> vector<64x128xf32>
    %53 = arith.addf %47, %52 : vector<64x128xf32>
    %54 = vector.extract_strided_slice %4 {offsets = [2, 2, 0], sizes = [8, 8, 128], strides = [1, 1, 1]} : vector<10x10x128xbf16> to vector<8x8x128xbf16>
    %55 = vector.shape_cast %54 : vector<8x8x128xbf16> to vector<64x128xbf16>
    %c0_52 = arith.constant 0 : index
    %c2_53 = arith.constant 2 : index
    %c2_54 = arith.constant 2 : index
    %c0_55 = arith.constant 0 : index
    %c0_56 = arith.constant 0 : index
    %56 = vector.load %arg4[%c0_52, %c2_53, %c2_54, %c0_55, %c0_56] : memref<1x3x3x128x128xbf16, #tpu.memory_space<vmem>>, vector<1x1x1x128x128xbf16>
    %57 = vector.shape_cast %56 : vector<1x1x1x128x128xbf16> to vector<128x128xbf16>
    %cst_57 = arith.constant dense<0.000000e+00> : vector<64x128xf32>
    %58 = tpu.matmul %55, %57, %cst_57 {dimension_numbers = #tpu.dot_dimension_numbers<[1], [0], [0], [1], [0, 0, 1, 1], [], []>} : vector<64x128xbf16>, vector<128x128xbf16>, vector<64x128xf32> -> vector<64x128xf32>
    %59 = arith.addf %53, %58 : vector<64x128xf32>
    %c0_58 = arith.constant 0 : index
    %c0_59 = arith.constant 0 : index
    %60 = vector.load %arg6[%c0_58, %c0_59] : memref<64x128xf32, #tpu.memory_space<vmem>>, vector<64x128xf32>
    tpu.vector_store %arg6[%c0_58, %c0_59], %59 {strides = array<i32>} : memref<64x128xf32, #tpu.memory_space<vmem>>, vector<64x128xf32>,
    %c2_i32 = arith.constant 2 : i32
    %61 = arith.cmpi eq, %arg2, %c2_i32 : i32
    %62 = arith.extui %61 : i1 to i32
    %c0_i32_60 = arith.constant 0 : i32
    %63 = arith.cmpi ne, %62, %c0_i32_60 : i32
    scf.if %63 {
      %c0_61 = arith.constant 0 : index
      %c0_62 = arith.constant 0 : index
      %c0_63 = arith.constant 0 : index
      %c0_64 = arith.constant 0 : index
      %64 = vector.load %arg5[%c0_61, %c0_62, %c0_63, %c0_64] : memref<1x1x64x128xf32, #tpu.memory_space<vmem>>, vector<1x1x64x128xf32>
      %65 = vector.shape_cast %64 : vector<1x1x64x128xf32> to vector<64x128xf32>
      %66 = vector.shape_cast %59 : vector<64x128xf32> to vector<1x1x64x128xf32>
      tpu.vector_store %arg5[%c0_61, %c0_62, %c0_63, %c0_64], %66 {strides = array<i32>} : memref<1x1x64x128xf32, #tpu.memory_space<vmem>>, vector<1x1x64x128xf32>,
    } else {
    }
    return
  }
  func.func @transform_0(%arg0: i32, %arg1: i32, %arg2: i32) -> (i32, i32, i32, i32, i32) {
    %0 = arith.addi %arg1, %arg2 : i32
    %c0_i32 = arith.constant 0 : i32
    %c0_i32_0 = arith.constant 0 : i32
    %c0_i32_1 = arith.constant 0 : i32
    %c0_i32_2 = arith.constant 0 : i32
    return %arg0, %0, %c0_i32, %c0_i32_0, %c0_i32_1 : i32, i32, i32, i32, i32
  }
  func.func @transform_1(%arg0: i32, %arg1: i32, %arg2: i32) -> (i32, i32, i32, i32, i32) {
    %c0_i32 = arith.constant 0 : i32
    %c0_i32_0 = arith.constant 0 : i32
    %c0_i32_1 = arith.constant 0 : i32
    %c0_i32_2 = arith.constant 0 : i32
    %c0_i32_3 = arith.constant 0 : i32
    return %arg2, %c0_i32, %c0_i32_0, %c0_i32_1, %c0_i32_2 : i32, i32, i32, i32, i32
  }
  func.func @transform_2(%arg0: i32, %arg1: i32, %arg2: i32) -> (i32, i32, i32, i32) {
    %c0_i32 = arith.constant 0 : i32
    %c0_i32_0 = arith.constant 0 : i32
    %c0_i32_1 = arith.constant 0 : i32
    return %arg0, %arg1, %c0_i32, %c0_i32_0 : i32, i32, i32, i32
  }
}

module attributes {stable_mosaic.version = 11 : i64} {
  func.func @_matmul_bias_kernel(%arg0: i32, %arg1: i32, %arg2: i32, %arg3: memref<512x128xbf16, #tpu.memory_space<vmem>>, %arg4: memref<128x128xbf16, #tpu.memory_space<vmem>>, %arg5: memref<1x128xf32, #tpu.memory_space<vmem>>, %arg6: memref<512x128xf32, #tpu.memory_space<vmem>>, %arg7: memref<512x128xf32, #tpu.memory_space<vmem>>) attributes {dimension_semantics = [#tpu.dimension_semantics<parallel>, #tpu.dimension_semantics<parallel>, #tpu.dimension_semantics<arbitrary>], iteration_bounds = array<i64: 2, 1, 1>, scalar_prefetch = 0 : i64, scratch_operands = 1 : i64, tpu.core_type = #tpu.core_type<tc>, window_params = [{transform_indices = @transform_0, window_bounds = array<i64: 512, 128>}, {transform_indices = @transform_1, window_bounds = array<i64: 128, 128>}, {transform_indices = @transform_2, window_bounds = array<i64: 1, 128>}, {transform_indices = @transform_3, window_bounds = array<i64: 512, 128>}]} {
    %c0_i32 = arith.constant 0 : i32
    %0 = arith.cmpi eq, %arg2, %c0_i32 : i32
    %1 = arith.extui %0 : i1 to i32
    %c0_i32_0 = arith.constant 0 : i32
    %2 = arith.cmpi ne, %1, %c0_i32_0 : i32
    scf.if %2 {
      %cst_10 = arith.constant 0.000000e+00 : f32
      %12 = vector.broadcast %cst_10 : f32 to vector<512x128xf32>
      %c0_11 = arith.constant 0 : index
      %c0_12 = arith.constant 0 : index
      %13 = vector.load %arg7[%c0_11, %c0_12] : memref<512x128xf32, #tpu.memory_space<vmem>>, vector<512x128xf32>
      tpu.vector_store %arg7[%c0_11, %c0_12], %12 {strides = array<i32>} : memref<512x128xf32, #tpu.memory_space<vmem>>, vector<512x128xf32>,
    } else {
    }
    %c0 = arith.constant 0 : index
    %c0_1 = arith.constant 0 : index
    %3 = vector.load %arg7[%c0, %c0_1] : memref<512x128xf32, #tpu.memory_space<vmem>>, vector<512x128xf32>
    %c0_2 = arith.constant 0 : index
    %c0_3 = arith.constant 0 : index
    %4 = vector.load %arg3[%c0_2, %c0_3] : memref<512x128xbf16, #tpu.memory_space<vmem>>, vector<512x128xbf16>
    %c0_4 = arith.constant 0 : index
    %c0_5 = arith.constant 0 : index
    %5 = vector.load %arg4[%c0_4, %c0_5] : memref<128x128xbf16, #tpu.memory_space<vmem>>, vector<128x128xbf16>
    %cst = arith.constant dense<0.000000e+00> : vector<512x128xf32>
    %6 = tpu.matmul %4, %5, %cst {dimension_numbers = #tpu.dot_dimension_numbers<[1], [0], [0], [1], [0, 0, 1, 1], [], []>} : vector<512x128xbf16>, vector<128x128xbf16>, vector<512x128xf32> -> vector<512x128xf32>
    %7 = arith.addf %3, %6 : vector<512x128xf32>
    %c0_6 = arith.constant 0 : index
    %c0_7 = arith.constant 0 : index
    %8 = vector.load %arg7[%c0_6, %c0_7] : memref<512x128xf32, #tpu.memory_space<vmem>>, vector<512x128xf32>
    tpu.vector_store %arg7[%c0_6, %c0_7], %7 {strides = array<i32>} : memref<512x128xf32, #tpu.memory_space<vmem>>, vector<512x128xf32>,
    %c0_i32_8 = arith.constant 0 : i32
    %9 = arith.cmpi eq, %arg2, %c0_i32_8 : i32
    %10 = arith.extui %9 : i1 to i32
    %c0_i32_9 = arith.constant 0 : i32
    %11 = arith.cmpi ne, %10, %c0_i32_9 : i32
    scf.if %11 {
      %c0_10 = arith.constant 0 : index
      %c0_11 = arith.constant 0 : index
      %12 = vector.load %arg7[%c0_10, %c0_11] : memref<512x128xf32, #tpu.memory_space<vmem>>, vector<512x128xf32>
      %c0_12 = arith.constant 0 : index
      %c0_13 = arith.constant 0 : index
      %13 = vector.load %arg5[%c0_12, %c0_13] : memref<1x128xf32, #tpu.memory_space<vmem>>, vector<1x128xf32>
      %14 = vector.broadcast %13 : vector<1x128xf32> to vector<512x128xf32>
      %15 = arith.addf %12, %14 : vector<512x128xf32>
      %c0_14 = arith.constant 0 : index
      %c0_15 = arith.constant 0 : index
      %16 = vector.load %arg6[%c0_14, %c0_15] : memref<512x128xf32, #tpu.memory_space<vmem>>, vector<512x128xf32>
      tpu.vector_store %arg6[%c0_14, %c0_15], %15 {strides = array<i32>} : memref<512x128xf32, #tpu.memory_space<vmem>>, vector<512x128xf32>,
    } else {
    }
    return
  }
  func.func @transform_0(%arg0: i32, %arg1: i32, %arg2: i32) -> (i32, i32) {
    %c0_i32 = arith.constant 0 : i32
    return %arg0, %arg2 : i32, i32
  }
  func.func @transform_1(%arg0: i32, %arg1: i32, %arg2: i32) -> (i32, i32) {
    %c0_i32 = arith.constant 0 : i32
    return %arg2, %arg1 : i32, i32
  }
  func.func @transform_2(%arg0: i32, %arg1: i32, %arg2: i32) -> (i32, i32) {
    %c0_i32 = arith.constant 0 : i32
    %c0_i32_0 = arith.constant 0 : i32
    return %c0_i32, %arg1 : i32, i32
  }
  func.func @transform_3(%arg0: i32, %arg1: i32, %arg2: i32) -> (i32, i32) {
    %c0_i32 = arith.constant 0 : i32
    return %arg0, %arg1 : i32, i32
  }
}

</mosaic_0001>

<llo_original>
// kernel: tile.8
$region0: #{tile.8}
  #allocation2 [shape = 's32[1]{0}', space=sflag, size = 0x4, scoped, tag = 'scoped memory for tile.8']
  %s0 = inlined_call_operand.hbm [shape: f32[8], index: 0, kind: input, shape index: {}]
  %s1 = inlined_call_operand.vmem [shape: f32[8,8], index: 1, kind: output, shape index: {}]
  $region1: #{tile.8} parent=0
    #allocation0 [shape = 'u8[512]{0}', space=vmem, size = 0x400, scoped, tag = 'operand span for operand 0']
    #allocation1 [shape = 's32[1]{0}', space=sflag, size = 0x4, scoped, tag = 'scoped memory for tile.8']
    %2 = vsyncpa [#allocation1], 0
    // Predicated region
    $region2: #{tile.8} parent=1 // pred_check
      _
    $region3: #{tile.8} parent=1 // pred_check_branch
      %4 = sbr.rel (0) target = $region5
    $region4: #{tile.8} parent=1 // pred_region
      %s6 = ssub.s32 16, 16
      %7 = vsyncadd [#allocation1], %s6
      %s9 = sshll.u32 [#allocation0], 4
      %s10 = int_to_ptr.vmem [resolvable:$true] %s9
      %12 = dma.hbm_to_vmem [thread:$0]  %s0, 16, %s10, [#allocation1]
    $region5: #{tile.8} parent=1 // pred_fallthru
      _
    // Predicated region
    $region6: #{tile.8} parent=1 // pred_check
      _
    $region7: #{tile.8} parent=1 // pred_check_branch
      %14 = sbr.rel (0) target = $region9
    $region8: #{tile.8} parent=1 // pred_region
      %15 = dma.done [#allocation1], 16
    $region9: #{tile.8} parent=1 // pred_fallthru
      _
    %v16 = vld [vmem:[#allocation0] ss:$0 sm:$0xff]
    %17 = vst [vmem:[%s1] sm:$0xff] %v16
    %18 = vsyncpa [#allocation1], 1

// kernel: tile.9
$region0: #{tile.9}
  %s0 = inlined_call_operand.vmem [shape: f32[8,8], index: 0, kind: input, shape index: {}]
  %s1 = inlined_call_operand.vmem [shape: f32[1,64], index: 1, kind: output, shape index: {}]
  $region1: #{tile.9} parent=0
    #allocation0 [shape = 'u8[4096]{0}', space=vmem, size = 0x1000, scoped, tag = 'scoped mem for output reshape']
    %v2 = vld [vmem:[%s0] sm:$0x1]
    %vm3 = vcmask 64512
    %4 = vst.msk [vmem:[#allocation0] sm:$0x1] %vm3, %v2
    %s5 = scalar_lea.vmem %s0, 7
    %v6 = vld [vmem:[%s5] sm:$0x1]
    %7 = vrot.lane.b32.xlu0 %v6, 56
    %v8 = vpop.permute.xlu0 %7
    %vm9 = vcmask 523712
    %10 = vst.msk [vmem:[#allocation0] sm:$0x1] %vm9, %v8
    %s11 = scalar_lea.vmem %s0, 6
    %v12 = vld [vmem:[%s11] sm:$0x1]
    %13 = vrot.lane.b32.xlu0 %v12, 48
    %v14 = vpop.permute.xlu0 %13
    %vm15 = vcmask 458112
    %16 = vst.msk [vmem:[#allocation0] sm:$0x1] %vm15, %v14
    %s17 = scalar_lea.vmem %s0, 5
    %v18 = vld [vmem:[%s17] sm:$0x1]
    %19 = vrot.lane.b32.xlu0 %v18, 40
    %v20 = vpop.permute.xlu0 %19
    %vm21 = vcmask 392512
    %22 = vst.msk [vmem:[#allocation0] sm:$0x1] %vm21, %v20
    %s23 = scalar_lea.vmem %s0, 4
    %v24 = vld [vmem:[%s23] sm:$0x1]
    %25 = vrot.lane.b32.xlu0 %v24, 32
    %v26 = vpop.permute.xlu0 %25
    %vm27 = vcmask 326912
    %28 = vst.msk [vmem:[#allocation0] sm:$0x1] %vm27, %v26
    %s29 = scalar_lea.vmem %s0, 3
    %v30 = vld [vmem:[%s29] sm:$0x1]
    %31 = vrot.lane.b32.xlu0 %v30, 24
    %v32 = vpop.permute.xlu0 %31
    %vm33 = vcmask 261312
    %34 = vst.msk [vmem:[#allocation0] sm:$0x1] %vm33, %v32
    %s35 = scalar_lea.vmem %s0, 2
    %v36 = vld [vmem:[%s35] sm:$0x1]
    %37 = vrot.lane.b32.xlu0 %v36, 16
    %v38 = vpop.permute.xlu0 %37
    %vm39 = vcmask 195712
    %40 = vst.msk [vmem:[#allocation0] sm:$0x1] %vm39, %v38
    %s41 = scalar_lea.vmem %s0, 1
    %v42 = vld [vmem:[%s41] sm:$0x1]
    %43 = vrot.lane.b32.xlu0 %v42, 8
    %v44 = vpop.permute.xlu0 %43
    %vm45 = vcmask 130112
    %46 = vst.msk [vmem:[#allocation0] sm:$0x1] %vm45, %v44
    %s48 = sshllo.u32 0, 1
    %v50 = vld [vmem:[#allocation0] sm:%s48]
    %s51 = sshllo.u32 0, 1
    %52 = vst [vmem:[%s1] sm:%s51] %v50

// kernel: upconv3d_block_forward.8
$region0: #{upconv3d_block_forward.8}
  #allocation0 [shape = 'u32[]', space=smem, size = 0x4, offset = 0x4, fixed_abs, tag = 'smem constant byte address 0x4 - core index']
  #allocation1 [shape = 'u32[144,128]{1,0:T(1,128)}', space=vmem, size = 0x12000, scoped, tag = 'internal scratch']
  #allocation2 [shape = 'f32[128,128]{1,0:T(8,128)}', space=vmem, size = 0x10000, scoped, tag = 'scratch operand']
  %s0 = inlined_call_operand.vmem [shape: bf16[128,8], index: 0, kind: input, shape index: {}]
  %s1 = inlined_call_operand.vmem [shape: bf16[8,128], index: 1, kind: input, shape index: {}]
  %s2 = inlined_call_operand.vmem [shape: f32[1,128], index: 2, kind: input, shape index: {}]
  %s3 = inlined_call_operand.vmem [shape: bf16[128,128], index: 3, kind: output, shape index: {}]
  %s4 = sld [smem:[#allocation0]]
  $region30: #{upconv3d_block_forward.8} parent=0
    _
  %s6 = ssub.s32 1, %s4
  %s7 = scalar_select 0, %s6, %s4
  // Predicated region
  $region2: #{upconv3d_block_forward.8} parent=0 // pred_check
    _
  $region3: #{upconv3d_block_forward.8} parent=0 // pred_check_branch
    %9 = sbr.rel (0) target = $region5
  $region4: #{upconv3d_block_forward.8} parent=0 // pred_region
    _
  $region5: #{upconv3d_block_forward.8} parent=0 // pred_fallthru
    _
  // Predicated region
  $region6: #{upconv3d_block_forward.8} parent=0 // pred_check
    _
  $region7: #{upconv3d_block_forward.8} parent=0 // pred_check_branch
    %11 = sbr.rel (0) target = $region9
  $region8: #{upconv3d_block_forward.8} parent=0 // pred_region
    _
  $region9: #{upconv3d_block_forward.8} parent=0 // pred_fallthru
    _
  // Predicated region
  $region10: #{upconv3d_block_forward.8} parent=0 // pred_check
    _
  $region11: #{upconv3d_block_forward.8} parent=0 // pred_check_branch
    %13 = sbr.rel (0) target = $region13
  $region12: #{upconv3d_block_forward.8} parent=0 // pred_region
    _
  $region13: #{upconv3d_block_forward.8} parent=0 // pred_fallthru
    _
  %p15 = scmp.eq.s32.totalorder 0, 0
  // Predicated region
  $region14: #{upconv3d_block_forward.8} parent=0 // pred_check
    %p16 = pneg %p15
  $region15: #{upconv3d_block_forward.8} parent=0 // pred_check_branch
    %18 = sbr.rel (%p16) target = $region17
  $region16: #{upconv3d_block_forward.8} parent=0 // pred_region
    %19 = vst [vmem:[#allocation2] sm:$0xff] 0.0
    %20 = vst [vmem:[#allocation2 + $0x8] sm:$0xff] 0.0
    %21 = vst [vmem:[#allocation2 + $0x10] sm:$0xff] 0.0
    %22 = vst [vmem:[#allocation2 + $0x18] sm:$0xff] 0.0
    %23 = vst [vmem:[#allocation2 + $0x20] sm:$0xff] 0.0
    %24 = vst [vmem:[#allocation2 + $0x28] sm:$0xff] 0.0
    %25 = vst [vmem:[#allocation2 + $0x30] sm:$0xff] 0.0
    %26 = vst [vmem:[#allocation2 + $0x38] sm:$0xff] 0.0
    %27 = vst [vmem:[#allocation2 + $0x40] sm:$0xff] 0.0
    %28 = vst [vmem:[#allocation2 + $0x48] sm:$0xff] 0.0
    %29 = vst [vmem:[#allocation2 + $0x50] sm:$0xff] 0.0
    %30 = vst [vmem:[#allocation2 + $0x58] sm:$0xff] 0.0
    %31 = vst [vmem:[#allocation2 + $0x60] sm:$0xff] 0.0
    %32 = vst [vmem:[#allocation2 + $0x68] sm:$0xff] 0.0
    %33 = vst [vmem:[#allocation2 + $0x70] sm:$0xff] 0.0
    %34 = vst [vmem:[#allocation2 + $0x78] sm:$0xff] 0.0
  $region17: #{upconv3d_block_forward.8} parent=0 // pred_fallthru
    _
  %v35 = vld [vmem:[#allocation2] sm:$0xff]
  %v36 = vld [vmem:[#allocation2 + $0x8] sm:$0xff]
  %v37 = vld [vmem:[#allocation2 + $0x10] sm:$0xff]
  %v38 = vld [vmem:[#allocation2 + $0x18] sm:$0xff]
  %v39 = vld [vmem:[#allocation2 + $0x20] sm:$0xff]
  %v40 = vld [vmem:[#allocation2 + $0x28] sm:$0xff]
  %v41 = vld [vmem:[#allocation2 + $0x30] sm:$0xff]
  %v42 = vld [vmem:[#allocation2 + $0x38] sm:$0xff]
  %v43 = vld [vmem:[#allocation2 + $0x40] sm:$0xff]
  %v44 = vld [vmem:[#allocation2 + $0x48] sm:$0xff]
  %v45 = vld [vmem:[#allocation2 + $0x50] sm:$0xff]
  %v46 = vld [vmem:[#allocation2 + $0x58] sm:$0xff]
  %v47 = vld [vmem:[#allocation2 + $0x60] sm:$0xff]
  %v48 = vld [vmem:[#allocation2 + $0x68] sm:$0xff]
  %v49 = vld [vmem:[#allocation2 + $0x70] sm:$0xff]
  %v50 = vld [vmem:[#allocation2 + $0x78] sm:$0xff]
  %v51 = vld [vmem:[%s0] sm:$0xf]
  %v52 = vld [vmem:[%s0 + $0x4] sm:$0xf]
  %v53 = vld [vmem:[%s0 + $0x8] sm:$0xf]
  %v54 = vld [vmem:[%s0 + $0xc] sm:$0xf]
  %v55 = vld [vmem:[%s0 + $0x10] sm:$0xf]
  %v56 = vld [vmem:[%s0 + $0x14] sm:$0xf]
  %v57 = vld [vmem:[%s0 + $0x18] sm:$0xf]
  %v58 = vld [vmem:[%s0 + $0x1c] sm:$0xf]
  %v59 = vld [vmem:[%s0 + $0x20] sm:$0xf]
  %v60 = vld [vmem:[%s0 + $0x24] sm:$0xf]
  %v61 = vld [vmem:[%s0 + $0x28] sm:$0xf]
  %v62 = vld [vmem:[%s0 + $0x2c] sm:$0xf]
  %v63 = vld [vmem:[%s0 + $0x30] sm:$0xf]
  %v64 = vld [vmem:[%s0 + $0x34] sm:$0xf]
  %v65 = vld [vmem:[%s0 + $0x38] sm:$0xf]
  %v66 = vld [vmem:[%s0 + $0x3c] sm:$0xf]
  %v67 = vld [vmem:[%s1] sm:$0xf]
  %v84 = vunpack.c.l.b16 %v51
  %v85 = vunpack.c.l.b16 %v52
  %v86 = vunpack.c.l.b16 %v53
  %v87 = vunpack.c.l.b16 %v54
  %v88 = vunpack.c.l.b16 %v55
  %v89 = vunpack.c.l.b16 %v56
  %v90 = vunpack.c.l.b16 %v57
  %v91 = vunpack.c.l.b16 %v58
  %v92 = vunpack.c.l.b16 %v59
  %v93 = vunpack.c.l.b16 %v60
  %v94 = vunpack.c.l.b16 %v61
  %v95 = vunpack.c.l.b16 %v62
  %v96 = vunpack.c.l.b16 %v63
  %v97 = vunpack.c.l.b16 %v64
  %v98 = vunpack.c.l.b16 %v65
  %v99 = vunpack.c.l.b16 %v66
  %v100 = vpack.c.b16 %v85, %v84
  %v101 = vpack.c.b16 %v87, %v86
  %v102 = vpack.c.b16 %v89, %v88
  %v103 = vpack.c.b16 %v91, %v90
  %v104 = vpack.c.b16 %v93, %v92
  %v105 = vpack.c.b16 %v95, %v94
  %v106 = vpack.c.b16 %v97, %v96
  %v107 = vpack.c.b16 %v99, %v98
  %vm108 = vcmask 64512
  %v110 = vsel %vm108, %v100, 0
  %v113 = vsel %vm108, %v101, 0
  %v116 = vsel %vm108, %v102, 0
  %v119 = vsel %vm108, %v103, 0
  %v122 = vsel %vm108, %v104, 0
  %v125 = vsel %vm108, %v105, 0
  %v128 = vsel %vm108, %v106, 0
  %v131 = vsel %vm108, %v107, 0
  %vm133 = vcmask 1043456
  %v135 = vsel %vm133, %v67, 0
  %137 = vmatprep.subr.bf16.mxu0 0
  %138 = vmatpush1.bf16.msra.mxu0 %v135
  %139 = vmatprep.subr.bf16.mxu0 0
  %140 = vmatpush1.bf16.msra.mxu0 0
  %141 = vmatprep.subr.bf16.mxu0 0
  %142 = vmatpush1.bf16.msra.mxu0 0
  %143 = vmatprep.subr.bf16.mxu0 0
  %144 = vmatpush1.bf16.msra.mxu0 0
  %145 = vmatprep.subr.bf16.mxu0 0
  %146 = vmatpush1.bf16.msra.mxu0 0
  %147 = vmatprep.subr.bf16.mxu0 0
  %148 = vmatpush1.bf16.msra.mxu0 0
  %149 = vmatprep.subr.bf16.mxu0 0
  %150 = vmatpush1.bf16.msra.mxu0 0
  %151 = vmatprep.subr.bf16.mxu0 0
  %152 = vmatpush1.bf16.msra.mxu0 0
  %153 = vmatprep.subr.bf16.mxu0 0
  %154 = vmatpush1.bf16.msra.mxu0 0
  %155 = vmatprep.subr.bf16.mxu0 0
  %156 = vmatpush1.bf16.msra.mxu0 0
  %157 = vmatprep.subr.bf16.mxu0 0
  %158 = vmatpush1.bf16.msra.mxu0 0
  %159 = vmatprep.subr.bf16.mxu0 0
  %160 = vmatpush1.bf16.msra.mxu0 0
  %161 = vmatprep.subr.bf16.mxu0 0
  %162 = vmatpush1.bf16.msra.mxu0 0
  %163 = vmatprep.subr.bf16.mxu0 0
  %164 = vmatpush1.bf16.msra.mxu0 0
  %165 = vmatprep.subr.bf16.mxu0 0
  %166 = vmatpush1.bf16.msra.mxu0 0
  %167 = vmatprep.subr.bf16.mxu0 0
  %168 = vmatpush1.bf16.msra.mxu0 0
  %169 = vmatprep.mubr.bf16.mxu0 0
  %170 = vmatmul.mubr.bf16.gmra.mrb[0].mxu0 %v110
  %v171 = vpop.f32.mrb[0].mxu0
  %v172 = vadd.f32 0.0, %v171
  %v173 = vpop.f32.mrb[0].mxu0
  %v174 = vpop.f32.mrb[0].mxu0
  %v175 = vadd.f32 0.0, %v174
  %v176 = vpop.f32.mrb[0].mxu0
  %177 = vmatprep.mubr.bf16.mxu0 0
  %178 = vmatmul.mubr.bf16.gmra.mrb[0].mxu0 %v113
  %v179 = vpop.f32.mrb[0].mxu0
  %v180 = vadd.f32 0.0, %v179
  %v181 = vpop.f32.mrb[0].mxu0
  %v182 = vpop.f32.mrb[0].mxu0
  %v183 = vadd.f32 0.0, %v182
  %v184 = vpop.f32.mrb[0].mxu0
  %185 = vmatprep.mubr.bf16.mxu0 0
  %186 = vmatmul.mubr.bf16.gmra.mrb[0].mxu0 %v116
  %v187 = vpop.f32.mrb[0].mxu0
  %v188 = vadd.f32 0.0, %v187
  %v189 = vpop.f32.mrb[0].mxu0
  %v190 = vpop.f32.mrb[0].mxu0
  %v191 = vadd.f32 0.0, %v190
  %v192 = vpop.f32.mrb[0].mxu0
  %193 = vmatprep.mubr.bf16.mxu0 0
  %194 = vmatmul.mubr.bf16.gmra.mrb[0].mxu0 %v119
  %v195 = vpop.f32.mrb[0].mxu0
  %v196 = vadd.f32 0.0, %v195
  %v197 = vpop.f32.mrb[0].mxu0
  %v198 = vpop.f32.mrb[0].mxu0
  %v199 = vadd.f32 0.0, %v198
  %v200 = vpop.f32.mrb[0].mxu0
  %201 = vmatprep.mubr.bf16.mxu0 0
  %202 = vmatmul.mubr.bf16.gmra.mrb[0].mxu0 %v122
  %v203 = vpop.f32.mrb[0].mxu0
  %v204 = vadd.f32 0.0, %v203
  %v205 = vpop.f32.mrb[0].mxu0
  %v206 = vpop.f32.mrb[0].mxu0
  %v207 = vadd.f32 0.0, %v206
  %v208 = vpop.f32.mrb[0].mxu0
  %209 = vmatprep.mubr.bf16.mxu0 0
  %210 = vmatmul.mubr.bf16.gmra.mrb[0].mxu0 %v125
  %v211 = vpop.f32.mrb[0].mxu0
  %v212 = vadd.f32 0.0, %v211
  %v213 = vpop.f32.mrb[0].mxu0
  %v214 = vpop.f32.mrb[0].mxu0
  %v215 = vadd.f32 0.0, %v214
  %v216 = vpop.f32.mrb[0].mxu0
  %217 = vmatprep.mubr.bf16.mxu0 0
  %218 = vmatmul.mubr.bf16.gmra.mrb[0].mxu0 %v128
  %v219 = vpop.f32.mrb[0].mxu0
  %v220 = vadd.f32 0.0, %v219
  %v221 = vpop.f32.mrb[0].mxu0
  %v222 = vpop.f32.mrb[0].mxu0
  %v223 = vadd.f32 0.0, %v222
  %v224 = vpop.f32.mrb[0].mxu0
  %225 = vmatprep.mubr.bf16.mxu0 0
  %226 = vmatmul.mubr.bf16.gmra.mrb[0].mxu0 %v131
  %v227 = vpop.f32.mrb[0].mxu0
  %v228 = vadd.f32 0.0, %v227
  %v229 = vpop.f32.mrb[0].mxu0
  %v230 = vpop.f32.mrb[0].mxu0
  %v231 = vadd.f32 0.0, %v230
  %v232 = vpop.f32.mrb[0].mxu0
  %233 = vdwg.mxu0
  %v234 = vadd.f32 %v35, %v172
  %v235 = vadd.f32 %v36, %v175
  %v236 = vadd.f32 %v37, %v180
  %v237 = vadd.f32 %v38, %v183
  %v238 = vadd.f32 %v39, %v188
  %v239 = vadd.f32 %v40, %v191
  %v240 = vadd.f32 %v41, %v196
  %v241 = vadd.f32 %v42, %v199
  %v242 = vadd.f32 %v43, %v204
  %v243 = vadd.f32 %v44, %v207
  %v244 = vadd.f32 %v45, %v212
  %v245 = vadd.f32 %v46, %v215
  %v246 = vadd.f32 %v47, %v220
  %v247 = vadd.f32 %v48, %v223
  %v248 = vadd.f32 %v49, %v228
  %v249 = vadd.f32 %v50, %v231
  %250 = vst [vmem:[#allocation2] sm:$0xff] %v234
  %251 = vst [vmem:[#allocation2 + $0x8] sm:$0xff] %v235
  %252 = vst [vmem:[#allocation2 + $0x10] sm:$0xff] %v236
  %253 = vst [vmem:[#allocation2 + $0x18] sm:$0xff] %v237
  %254 = vst [vmem:[#allocation2 + $0x20] sm:$0xff] %v238
  %255 = vst [vmem:[#allocation2 + $0x28] sm:$0xff] %v239
  %256 = vst [vmem:[#allocation2 + $0x30] sm:$0xff] %v240
  %257 = vst [vmem:[#allocation2 + $0x38] sm:$0xff] %v241
  %258 = vst [vmem:[#allocation2 + $0x40] sm:$0xff] %v242
  %259 = vst [vmem:[#allocation2 + $0x48] sm:$0xff] %v243
  %260 = vst [vmem:[#allocation2 + $0x50] sm:$0xff] %v244
  %261 = vst [vmem:[#allocation2 + $0x58] sm:$0xff] %v245
  %262 = vst [vmem:[#allocation2 + $0x60] sm:$0xff] %v246
  %263 = vst [vmem:[#allocation2 + $0x68] sm:$0xff] %v247
  %264 = vst [vmem:[#allocation2 + $0x70] sm:$0xff] %v248
  %265 = vst [vmem:[#allocation2 + $0x78] sm:$0xff] %v249
  // Predicated region
  $region18: #{upconv3d_block_forward.8} parent=0 // pred_check
    %p266 = pneg %p15
  $region19: #{upconv3d_block_forward.8} parent=0 // pred_check_branch
    %268 = sbr.rel (%p266) target = $region21
  $region20: #{upconv3d_block_forward.8} parent=0 // pred_region
    %v269 = vld [vmem:[#allocation2] sm:$0xff]
    %v270 = vld [vmem:[#allocation2 + $0x8] sm:$0xff]
    %v271 = vld [vmem:[#allocation2 + $0x10] sm:$0xff]
    %v272 = vld [vmem:[#allocation2 + $0x18] sm:$0xff]
    %v273 = vld [vmem:[#allocation2 + $0x20] sm:$0xff]
    %v274 = vld [vmem:[#allocation2 + $0x28] sm:$0xff]
    %v275 = vld [vmem:[#allocation2 + $0x30] sm:$0xff]
    %v276 = vld [vmem:[#allocation2 + $0x38] sm:$0xff]
    %v277 = vld [vmem:[#allocation2 + $0x40] sm:$0xff]
    %v278 = vld [vmem:[#allocation2 + $0x48] sm:$0xff]
    %v279 = vld [vmem:[#allocation2 + $0x50] sm:$0xff]
    %v280 = vld [vmem:[#allocation2 + $0x58] sm:$0xff]
    %v281 = vld [vmem:[#allocation2 + $0x60] sm:$0xff]
    %v282 = vld [vmem:[#allocation2 + $0x68] sm:$0xff]
    %v283 = vld [vmem:[#allocation2 + $0x70] sm:$0xff]
    %v284 = vld [vmem:[#allocation2 + $0x78] sm:$0xff]
    %v285 = vld [vmem:[%s2] sm:$0x1]
    %v287 = vlaneseq
    %v288 = vshrl.u32 %v287, 7
    %v289 = vsub.s32 0, %v288
    %v290 = vrot.slane %v285, %v289
    %v292 = vadd.f32 %v269, %v290
    %v293 = vadd.f32 %v270, %v290
    %v294 = vadd.f32 %v271, %v290
    %v295 = vadd.f32 %v272, %v290
    %v296 = vadd.f32 %v273, %v290
    %v297 = vadd.f32 %v274, %v290
    %v298 = vadd.f32 %v275, %v290
    %v299 = vadd.f32 %v276, %v290
    %v300 = vadd.f32 %v277, %v290
    %v301 = vadd.f32 %v278, %v290
    %v302 = vadd.f32 %v279, %v290
    %v303 = vadd.f32 %v280, %v290
    %v304 = vadd.f32 %v281, %v290
    %v305 = vadd.f32 %v282, %v290
    %v306 = vadd.f32 %v283, %v290
    %v307 = vadd.f32 %v284, %v290
    %v308 = vpack.c.bf16 %v293, %v292
    %v309 = vpack.c.bf16 %v295, %v294
    %v310 = vpack.c.bf16 %v297, %v296
    %v311 = vpack.c.bf16 %v299, %v298
    %v312 = vpack.c.bf16 %v301, %v300
    %v313 = vpack.c.bf16 %v303, %v302
    %v314 = vpack.c.bf16 %v305, %v304
    %v315 = vpack.c.bf16 %v307, %v306
    %v324 = vunpack.c.l.b16 %v308
    %v325 = vunpack.c.h.b16 %v308
    %v326 = vunpack.c.l.b16 %v309
    %v327 = vunpack.c.h.b16 %v309
    %v328 = vunpack.c.l.b16 %v310
    %v329 = vunpack.c.h.b16 %v310
    %v330 = vunpack.c.l.b16 %v311
    %v331 = vunpack.c.h.b16 %v311
    %v332 = vunpack.c.l.b16 %v312
    %v333 = vunpack.c.h.b16 %v312
    %v334 = vunpack.c.l.b16 %v313
    %v335 = vunpack.c.h.b16 %v313
    %v336 = vunpack.c.l.b16 %v314
    %v337 = vunpack.c.h.b16 %v314
    %v338 = vunpack.c.l.b16 %v315
    %v339 = vunpack.c.h.b16 %v315
    %v340 = vpack.c.b16 %v324, %v324
    %v341 = vpack.c.b16 %v325, %v325
    %v342 = vpack.c.b16 %v326, %v326
    %v343 = vpack.c.b16 %v327, %v327
    %v344 = vpack.c.b16 %v328, %v328
    %v345 = vpack.c.b16 %v329, %v329
    %v346 = vpack.c.b16 %v330, %v330
    %v347 = vpack.c.b16 %v331, %v331
    %v348 = vpack.c.b16 %v332, %v332
    %v349 = vpack.c.b16 %v333, %v333
    %v350 = vpack.c.b16 %v334, %v334
    %v351 = vpack.c.b16 %v335, %v335
    %v352 = vpack.c.b16 %v336, %v336
    %v353 = vpack.c.b16 %v337, %v337
    %v354 = vpack.c.b16 %v338, %v338
    %v355 = vpack.c.b16 %v339, %v339
    %372 = vst [vmem:[%s3] sm:$0xf] %v340
    %373 = vst [vmem:[%s3 + $0x4] sm:$0xf] %v341
    %374 = vst [vmem:[%s3 + $0x8] sm:$0xf] %v342
    %375 = vst [vmem:[%s3 + $0xc] sm:$0xf] %v343
    %376 = vst [vmem:[%s3 + $0x10] sm:$0xf] %v344
    %377 = vst [vmem:[%s3 + $0x14] sm:$0xf] %v345
    %378 = vst [vmem:[%s3 + $0x18] sm:$0xf] %v346
    %379 = vst [vmem:[%s3 + $0x1c] sm:$0xf] %v347
    %380 = vst [vmem:[%s3 + $0x20] sm:$0xf] %v348
    %381 = vst [vmem:[%s3 + $0x24] sm:$0xf] %v349
    %382 = vst [vmem:[%s3 + $0x28] sm:$0xf] %v350
    %383 = vst [vmem:[%s3 + $0x2c] sm:$0xf] %v351
    %384 = vst [vmem:[%s3 + $0x30] sm:$0xf] %v352
    %385 = vst [vmem:[%s3 + $0x34] sm:$0xf] %v353
    %386 = vst [vmem:[%s3 + $0x38] sm:$0xf] %v354
    %387 = vst [vmem:[%s3 + $0x3c] sm:$0xf] %v355
  $region21: #{upconv3d_block_forward.8} parent=0 // pred_fallthru
    _
  // Predicated region
  $region22: #{upconv3d_block_forward.8} parent=0 // pred_check
    _
  $region23: #{upconv3d_block_forward.8} parent=0 // pred_check_branch
    %389 = sbr.rel (0) target = $region25
  $region24: #{upconv3d_block_forward.8} parent=0 // pred_region
    _
  $region25: #{upconv3d_block_forward.8} parent=0 // pred_fallthru
    _
  // Predicated region
  $region26: #{upconv3d_block_forward.8} parent=0 // pred_check
    _
  $region27: #{upconv3d_block_forward.8} parent=0 // pred_check_branch
    %391 = sbr.rel (0) target = $region29
  $region28: #{upconv3d_block_forward.8} parent=0 // pred_region
    _
  $region29: #{upconv3d_block_forward.8} parent=0 // pred_fallthru
    _

// kernel: upconv3d_block_forward.9
$region0: #{upconv3d_block_forward.9}
  #allocation0 [shape = 'u32[]', space=smem, size = 0x4, offset = 0x4, fixed_abs, tag = 'smem constant byte address 0x4 - core index']
  #allocation1 [shape = 'u32[144,128]{1,0:T(1,128)}', space=vmem, size = 0x12000, scoped, tag = 'internal scratch']
  #allocation2 [shape = 'f32[64,128]{1,0:T(8,128)}', space=vmem, size = 0x8000, scoped, tag = 'scratch operand']
  %s0 = inlined_call_operand.vmem [shape: bf16[2,10,10,10,16], index: 0, kind: input, shape index: {}]
  %s1 = inlined_call_operand.vmem [shape: bf16[3,3,3,16,128], index: 1, kind: input, shape index: {}]
  %s2 = inlined_call_operand.vmem [shape: f32[2,8,64,128], index: 2, kind: output, shape index: {}]
  %s3 = sld [smem:[#allocation0]]
  $region49: #{upconv3d_block_forward.9} parent=0
    _
  %s5 = ssub.s32 1, %s3
  %s6 = scalar_select 0, %s5, %s3
  loop: start=0, step=1, limit=50
  $region2: #{upconv3d_block_forward.9} parent=0 // loop_pre_header
    _
  $region3: #{upconv3d_block_forward.9} parent=0 // loop_header
    %s8 = sphi 0, %s12
    %p9 = scmp.ge.s32.totalorder %s8, 50
    %s15 = sphi 0, %s34
    %s16 = sphi 0, %s30
    %s17 = sphi 0, %s26
    %s18 = sphi 0, %s15
    %s19 = sphi 0, %s16
    %s20 = sphi 0, %s17
    %s21 = sphi 0, %s18
    %s22 = sphi 0, %s19
    %s23 = sphi 0, %s20
    %s41 = sphi 0, %s43
    %s44 = sphi 0, %s41
    %s45 = sphi 0, %s44
    %s61 = sphi 0, %s45
    %s67 = sphi 0, %s69
    %s70 = sphi 0, %s67
    %s71 = sphi 0, %s70
    %s87 = sphi 0, %s71
    %s95 = sphi 0, %s97
    %s98 = sphi 0, %s95
    %s99 = sphi 0, %s98
    %s115 = sphi 0, %s99
  $region4: #{upconv3d_block_forward.9} parent=0 // loop_header_branch
    %11 = sbr.rel (%p9) target = $region8
  $region5: #{upconv3d_block_forward.9} parent=0 // loop_body
    %s13 = ssub.s32 %s8, 1
    %s14 = ssub.s32 %s8, 2
    %s24 = sadd.s32 1, %s17
    %p25 = scmp.ge.s32.totalorder %s24, 3
    %s26 = scalar_select %p25, 0, %s24
    %s27 = sadd.s32 1, %s16
    %s28 = scalar_select %p25, %s27, %s16
    %p29 = scmp.ge.s32.totalorder %s28, 8
    %s30 = scalar_select %p29, 0, %s28
    %s31 = sadd.s32 1, %s15
    %s32 = scalar_select %p29, %s31, %s15
    %p33 = scmp.ge.s32.totalorder %s32, 2
    %s34 = scalar_select %p33, 0, %s32
    %s35 = sadd.s32 %s16, %s17
    %s36 = sadd.s32 %s30, %s26
    %s37 = ssub.s32 %s15, %s34
    %s38 = ssub.s32 %s35, %s36
    %s39 = sor.u32 %s37, %s38
    %p40 = scmp.eq.s32.totalorder %s39, 0
    %s42 = sadd.s32 %s41, 1
    %s43 = scalar_select %p40, %s41, %s42
    %p46 = pneg %p40
    %p47 = scmp.eq.s32.totalorder %s8, 47
    %p48 = por %p46, %p47
    %p49 = scmp.ne.s32.totalorder %s41, %s44
    %p50 = scmp.eq.s32.totalorder %s8, 0
    %p51 = por %p49, %p50
    %p52 = scmp.ne.s32.totalorder %s41, %s44
    %p53 = scmp.eq.s32.totalorder %s13, 47
    %p54 = por %p52, %p53
    %p55 = scmp.ne.s32.totalorder %s44, %s45
    %p56 = scmp.eq.s32.totalorder %s13, 0
    %p57 = por %p55, %p56
    %p58 = scmp.ne.s32.totalorder %s44, %s45
    %p59 = scmp.eq.s32.totalorder %s14, 47
    %p60 = por %p58, %p59
    %p62 = scmp.ne.s32.totalorder %s45, %s61
    %p63 = scmp.eq.s32.totalorder %s14, 0
    %p64 = por %p62, %p63
    %s65 = ssub.s32 %s17, %s26
    %p66 = scmp.eq.s32.totalorder %s65, 0
    %s68 = sadd.s32 %s67, 1
    %s69 = scalar_select %p66, %s67, %s68
    %p72 = pneg %p66
    %p73 = scmp.eq.s32.totalorder %s8, 47
    %p74 = por %p72, %p73
    %p75 = scmp.ne.s32.totalorder %s67, %s70
    %p76 = scmp.eq.s32.totalorder %s8, 0
    %p77 = por %p75, %p76
    %p78 = scmp.ne.s32.totalorder %s67, %s70
    %p79 = scmp.eq.s32.totalorder %s13, 47
    %p80 = por %p78, %p79
    %p81 = scmp.ne.s32.totalorder %s70, %s71
    %p82 = scmp.eq.s32.totalorder %s13, 0
    %p83 = por %p81, %p82
    %p84 = scmp.ne.s32.totalorder %s70, %s71
    %p85 = scmp.eq.s32.totalorder %s14, 47
    %p86 = por %p84, %p85
    %p88 = scmp.ne.s32.totalorder %s71, %s87
    %p89 = scmp.eq.s32.totalorder %s14, 0
    %p90 = por %p88, %p89
    %s91 = ssub.s32 %s15, %s34
    %s92 = ssub.s32 %s16, %s30
    %s93 = sor.u32 %s91, %s92
    %p94 = scmp.eq.s32.totalorder %s93, 0
    %s96 = sadd.s32 %s95, 1
    %s97 = scalar_select %p94, %s95, %s96
    %p100 = pneg %p94
    %p101 = scmp.eq.s32.totalorder %s8, 47
    %p102 = por %p100, %p101
    %p103 = scmp.ne.s32.totalorder %s95, %s98
    %p104 = scmp.eq.s32.totalorder %s8, 0
    %p105 = por %p103, %p104
    %p106 = scmp.ne.s32.totalorder %s95, %s98
    %p107 = scmp.eq.s32.totalorder %s13, 47
    %p108 = por %p106, %p107
    %p109 = scmp.ne.s32.totalorder %s98, %s99
    %p110 = scmp.eq.s32.totalorder %s13, 0
    %p111 = por %p109, %p110
    %p112 = scmp.ne.s32.totalorder %s98, %s99
    %p113 = scmp.eq.s32.totalorder %s14, 47
    %p114 = por %p112, %p113
    %p116 = scmp.ne.s32.totalorder %s99, %s115
    %p117 = scmp.eq.s32.totalorder %s14, 0
    %p118 = por %p116, %p117
    %p119 = scmp.le.s32.totalorder 1, %s8
    %p120 = scmp.lt.s32.totalorder %s8, 49
    %p121 = pnand %p119, %p120
    %p122 = pneg %p121
    // Predicated region
    $region9: #{upconv3d_block_forward.9} parent=5 // pred_check
      _
    $region10: #{upconv3d_block_forward.9} parent=5 // pred_check_branch
      %124 = sbr.rel (%p121) target = $region12
    $region11: #{upconv3d_block_forward.9} parent=5 // pred_region
      %s125 = ssub.s32 %s8, 1
    $region12: #{upconv3d_block_forward.9} parent=5 // pred_fallthru
      _
    %p126 = scmp.lt.s32.totalorder %s8, 48
    // Predicated region
    $region13: #{upconv3d_block_forward.9} parent=5 // pred_check
      %p127 = pneg %p126
    $region14: #{upconv3d_block_forward.9} parent=5 // pred_check_branch
      %129 = sbr.rel (%p127) target = $region16
    $region15: #{upconv3d_block_forward.9} parent=5 // pred_region
      // Predicated region
      $region17: #{upconv3d_block_forward.9} parent=15 // pred_check
        %p130 = pneg %p51
      $region18: #{upconv3d_block_forward.9} parent=15 // pred_check_branch
        %132 = sbr.rel (%p130) target = $region20
      $region19: #{upconv3d_block_forward.9} parent=15 // pred_region
        %s133 = sadd.s32 %s16, %s17
        %p134 = scmp.lt.s32.totalorder %s15, 1
        %s135 = scalar_select %p134, %s15, 1
        %p136 = scmp.lt.s32.totalorder %s133, 9
        %s137 = scalar_select %p136, %s133, 9
        %s138 = smul.addr %s137, 20
        %s139 = smul.addr %s135, 200
        %s140 = sadd.s32 %s138, %s139
        %s141 = smul.addr %s140, 4
        %s142 = scalar_lea.vmem %s0, %s141
        %s143 = sadd.s32 %s16, %s17
      $region20: #{upconv3d_block_forward.9} parent=15 // pred_fallthru
        _
      // Predicated region
      $region21: #{upconv3d_block_forward.9} parent=15 // pred_check
        %p144 = pneg %p77
      $region22: #{upconv3d_block_forward.9} parent=15 // pred_check_branch
        %146 = sbr.rel (%p144) target = $region24
      $region23: #{upconv3d_block_forward.9} parent=15 // pred_region
        %p147 = scmp.lt.s32.totalorder %s17, 2
        %s148 = scalar_select %p147, %s17, 2
        %s149 = smul.addr %s148, 18
        %s150 = smul.addr %s149, 4
        %s151 = scalar_lea.vmem %s1, %s150
      $region24: #{upconv3d_block_forward.9} parent=15 // pred_fallthru
        _
    $region16: #{upconv3d_block_forward.9} parent=5 // pred_fallthru
      _
    %p152 = scmp.le.s32.totalorder 1, %s8
    %p153 = scmp.lt.s32.totalorder %s8, 49
    %p154 = pnand %p152, %p153
    %p155 = pneg %p154
    // Predicated region
    $region25: #{upconv3d_block_forward.9} parent=5 // pred_check
      _
    $region26: #{upconv3d_block_forward.9} parent=5 // pred_check_branch
      %157 = sbr.rel (%p154) target = $region28
    $region27: #{upconv3d_block_forward.9} parent=5 // pred_region
      %s158 = ssub.s32 %s8, 1
      %s159 = sadd.s32 %s19, %s20
      %p160 = scmp.lt.s32.totalorder %s18, 1
      %s161 = scalar_select %p160, %s18, 1
      %p162 = scmp.lt.s32.totalorder %s159, 9
      %s163 = scalar_select %p162, %s159, 9
      %s164 = smul.addr %s163, 20
      %s165 = smul.addr %s161, 200
      %s166 = sadd.s32 %s164, %s165
      %s167 = smul.addr %s166, 4
      %s168 = scalar_lea.vmem %s0, %s167
      %p169 = pneg %p57
      %p170 = pneg %p54
      %p171 = scmp.lt.s32.totalorder %s20, 2
      %s172 = scalar_select %p171, %s20, 2
      %s173 = smul.addr %s172, 18
      %s174 = smul.addr %s173, 4
      %s175 = scalar_lea.vmem %s1, %s174
      %p176 = pneg %p83
      %p177 = pneg %p80
      %p178 = pneg %p111
      %p179 = pneg %p108
      %p180 = scmp.lt.s32.totalorder %s18, 1
      %s181 = scalar_select %p180, %s18, 1
      %p182 = scmp.lt.s32.totalorder %s19, 7
      %s183 = scalar_select %p182, %s19, 7
      %s184 = smul.addr %s183, 8
      %s185 = smul.addr %s181, 64
      %s186 = sadd.s32 %s184, %s185
      %s187 = smul.addr %s186, 8
      %s188 = scalar_lea.vmem %s2, %s187
      %s189 = sadd.s32 %s19, %s20
      %p190 = scmp.lt.s32.totalorder %s18, 1
      %s191 = scalar_select %p190, %s18, 1
      %p192 = scmp.lt.s32.totalorder %s189, 9
      %s193 = scalar_select %p192, %s189, 9
      %s194 = smul.addr %s193, 20
      %s195 = smul.addr %s191, 200
      %s196 = sadd.s32 %s194, %s195
      %s197 = smul.addr %s196, 4
      %s198 = scalar_lea.vmem %s0, %s197
      %s199 = sadd.s32 %s19, %s20
      %p200 = scmp.lt.s32.totalorder %s20, 2
      %s201 = scalar_select %p200, %s20, 2
      %s202 = smul.addr %s201, 18
      %s203 = smul.addr %s202, 4
      %s204 = scalar_lea.vmem %s1, %s203
      %p205 = scmp.lt.s32.totalorder %s18, 1
      %s206 = scalar_select %p205, %s18, 1
      %p207 = scmp.lt.s32.totalorder %s19, 7
      %s208 = scalar_select %p207, %s19, 7
      %s209 = smul.addr %s208, 8
      %s210 = smul.addr %s206, 64
      %s211 = sadd.s32 %s209, %s210
      %s212 = smul.addr %s211, 8
      %s213 = scalar_lea.vmem %s2, %s212
      %p215 = scmp.eq.s32.totalorder %s20, 0
      // Predicated region
      $region29: #{upconv3d_block_forward.9} parent=27 // pred_check
        %p216 = pneg %p215
      $region30: #{upconv3d_block_forward.9} parent=27 // pred_check_branch
        %218 = sbr.rel (%p216) target = $region32
      $region31: #{upconv3d_block_forward.9} parent=27 // pred_region
        %219 = vst [vmem:[#allocation2] sm:$0xff] 0.0
        %220 = vst [vmem:[#allocation2 + $0x8] sm:$0xff] 0.0
        %221 = vst [vmem:[#allocation2 + $0x10] sm:$0xff] 0.0
        %222 = vst [vmem:[#allocation2 + $0x18] sm:$0xff] 0.0
        %223 = vst [vmem:[#allocation2 + $0x20] sm:$0xff] 0.0
        %224 = vst [vmem:[#allocation2 + $0x28] sm:$0xff] 0.0
        %225 = vst [vmem:[#allocation2 + $0x30] sm:$0xff] 0.0
        %226 = vst [vmem:[#allocation2 + $0x38] sm:$0xff] 0.0
      $region32: #{upconv3d_block_forward.9} parent=27 // pred_fallthru
        _
      %v227 = vld [vmem:[%s198] sm:$0xf]
      %v228 = vld [vmem:[%s198 + $0x4] sm:$0x1]
      %v229 = vld [vmem:[%s198 + $0x8] sm:$0xf]
      %v230 = vld [vmem:[%s198 + $0xc] sm:$0x1]
      %v231 = vld [vmem:[%s198 + $0x10] sm:$0xf]
      %v232 = vld [vmem:[%s198 + $0x14] sm:$0x1]
      %v233 = vld [vmem:[%s198 + $0x18] sm:$0xf]
      %v234 = vld [vmem:[%s198 + $0x1c] sm:$0x1]
      %v235 = vld [vmem:[%s198 + $0x20] sm:$0xf]
      %v236 = vld [vmem:[%s198 + $0x24] sm:$0x1]
      %v237 = vld [vmem:[%s198 + $0x28] sm:$0xf]
      %v238 = vld [vmem:[%s198 + $0x2c] sm:$0x1]
      %v239 = vld [vmem:[%s198 + $0x30] sm:$0xf]
      %v240 = vld [vmem:[%s198 + $0x34] sm:$0x1]
      %v241 = vld [vmem:[%s198 + $0x38] sm:$0xf]
      %v242 = vld [vmem:[%s198 + $0x3c] sm:$0x1]
      %v243 = vld [vmem:[%s198 + $0x40] sm:$0xf]
      %v244 = vld [vmem:[%s198 + $0x44] sm:$0x1]
      %v245 = vld [vmem:[%s198 + $0x48] sm:$0xf]
      %v246 = vld [vmem:[%s198 + $0x4c] sm:$0x1]
      %v247 = vld [vmem:[#allocation2] sm:$0xff]
      %v248 = vld [vmem:[#allocation2 + $0x8] sm:$0xff]
      %v249 = vld [vmem:[#allocation2 + $0x10] sm:$0xff]
      %v250 = vld [vmem:[#allocation2 + $0x18] sm:$0xff]
      %v251 = vld [vmem:[#allocation2 + $0x20] sm:$0xff]
      %v252 = vld [vmem:[#allocation2 + $0x28] sm:$0xff]
      %v253 = vld [vmem:[#allocation2 + $0x30] sm:$0xff]
      %v254 = vld [vmem:[#allocation2 + $0x38] sm:$0xff]
      %v255 = vld [vmem:[%s204] sm:$0xf]
      %v256 = vld [vmem:[%s204 + $0x4] sm:$0xf]
      %v265 = vunpack.c.l.b16 %v227
      %v266 = vunpack.c.l.b16 %v229
      %v267 = vunpack.c.l.b16 %v231
      %v268 = vunpack.c.l.b16 %v233
      %v269 = vunpack.c.l.b16 %v235
      %v270 = vunpack.c.l.b16 %v237
      %v271 = vunpack.c.l.b16 %v239
      %v272 = vunpack.c.l.b16 %v241
      %v273 = vpack.c.b16 %v266, %v265
      %v274 = vpack.c.b16 %v268, %v267
      %v275 = vpack.c.b16 %v270, %v269
      %v276 = vpack.c.b16 %v272, %v271
      %v279 = vunpack.c.l.b16 %v255
      %v280 = vunpack.c.l.b16 %v256
      %v281 = vpack.c.b16 %v280, %v279
      %vm283 = vcmask 130048
      %v285 = vsel %vm283, %v273, 0
      %v288 = vsel %vm283, %v274, 0
      %v291 = vsel %vm283, %v275, 0
      %v294 = vsel %vm283, %v276, 0
      %296 = vmatprep.subr.bf16.mxu0 0
      %297 = vmatpush1.bf16.msra.mxu0 %v281
      %298 = vmatprep.subr.bf16.mxu0 0
      %299 = vmatpush1.bf16.msra.mxu0 0
      %300 = vmatprep.subr.bf16.mxu0 0
      %301 = vmatpush1.bf16.msra.mxu0 0
      %302 = vmatprep.subr.bf16.mxu0 0
      %303 = vmatpush1.bf16.msra.mxu0 0
      %304 = vmatprep.subr.bf16.mxu0 0
      %305 = vmatpush1.bf16.msra.mxu0 0
      %306 = vmatprep.subr.bf16.mxu0 0
      %307 = vmatpush1.bf16.msra.mxu0 0
      %308 = vmatprep.subr.bf16.mxu0 0
      %309 = vmatpush1.bf16.msra.mxu0 0
      %310 = vmatprep.subr.bf16.mxu0 0
      %311 = vmatpush1.bf16.msra.mxu0 0
      %312 = vmatprep.subr.bf16.mxu0 0
      %313 = vmatpush1.bf16.msra.mxu0 0
      %314 = vmatprep.subr.bf16.mxu0 0
      %315 = vmatpush1.bf16.msra.mxu0 0
      %316 = vmatprep.subr.bf16.mxu0 0
      %317 = vmatpush1.bf16.msra.mxu0 0
      %318 = vmatprep.subr.bf16.mxu0 0
      %319 = vmatpush1.bf16.msra.mxu0 0
      %320 = vmatprep.subr.bf16.mxu0 0
      %321 = vmatpush1.bf16.msra.mxu0 0
      %322 = vmatprep.subr.bf16.mxu0 0
      %323 = vmatpush1.bf16.msra.mxu0 0
      %324 = vmatprep.subr.bf16.mxu0 0
      %325 = vmatpush1.bf16.msra.mxu0 0
      %326 = vmatprep.subr.bf16.mxu0 0
      %327 = vmatpush1.bf16.msra.mxu0 0
      %328 = vmatprep.mubr.bf16.mxu0 0
      %329 = vmatmul.mubr.bf16.gmra.mrb[0].mxu0 %v285
      %v330 = vpop.f32.mrb[0].mxu0
      %v331 = vadd.f32 0.0, %v330
      %v332 = vpop.f32.mrb[0].mxu0
      %v333 = vpop.f32.mrb[0].mxu0
      %v334 = vadd.f32 0.0, %v333
      %v335 = vpop.f32.mrb[0].mxu0
      %336 = vmatprep.mubr.bf16.mxu0 0
      %337 = vmatmul.mubr.bf16.gmra.mrb[0].mxu0 %v288
      %v338 = vpop.f32.mrb[0].mxu0
      %v339 = vadd.f32 0.0, %v338
      %v340 = vpop.f32.mrb[0].mxu0
      %v341 = vpop.f32.mrb[0].mxu0
      %v342 = vadd.f32 0.0, %v341
      %v343 = vpop.f32.mrb[0].mxu0
      %344 = vmatprep.mubr.bf16.mxu0 0
      %345 = vmatmul.mubr.bf16.gmra.mrb[0].mxu0 %v291
      %v346 = vpop.f32.mrb[0].mxu0
      %v347 = vadd.f32 0.0, %v346
      %v348 = vpop.f32.mrb[0].mxu0
      %v349 = vpop.f32.mrb[0].mxu0
      %v350 = vadd.f32 0.0, %v349
      %v351 = vpop.f32.mrb[0].mxu0
      %352 = vmatprep.mubr.bf16.mxu0 0
      %353 = vmatmul.mubr.bf16.gmra.mrb[0].mxu0 %v294
      %v354 = vpop.f32.mrb[0].mxu0
      %v355 = vadd.f32 0.0, %v354
      %v356 = vpop.f32.mrb[0].mxu0
      %v357 = vpop.f32.mrb[0].mxu0
      %v358 = vadd.f32 0.0, %v357
      %v359 = vpop.f32.mrb[0].mxu0
      %360 = vdwg.mxu0
      %v361 = vadd.f32 %v247, %v331
      %v362 = vadd.f32 %v248, %v334
      %v363 = vadd.f32 %v249, %v339
      %v364 = vadd.f32 %v250, %v342
      %v365 = vadd.f32 %v251, %v347
      %v366 = vadd.f32 %v252, %v350
      %v367 = vadd.f32 %v253, %v355
      %v368 = vadd.f32 %v254, %v358
      %vm369 = vsmask.f32 3328
      %vm370 = vsmask.f32 7440
      %vm371 = vmor %vm369, %vm370
      %v373 = vshrl.u32 %v227, 16
      %v375 = vrot.slane %v373, 4
      %v376 = vshll.u32 %v227, 16
      %v378 = vrot.slane %v376, 5
      %v379 = vor.u32 %v375, %v378
      %v380 = vrot.slane %v379, 4
      %v382 = vshll.u32 %v228, 16
      %v384 = vrot.slane %v382, 5
      %v385 = vsel %vm371, %v380, %v384
      %v387 = vshrl.u32 %v229, 16
      %v389 = vrot.slane %v387, 4
      %v390 = vshll.u32 %v229, 16
      %v392 = vrot.slane %v390, 5
      %v393 = vor.u32 %v389, %v392
      %v394 = vrot.slane %v393, 4
      %v396 = vshll.u32 %v230, 16
      %v398 = vrot.slane %v396, 5
      %v399 = vsel %vm371, %v394, %v398
      %v401 = vshrl.u32 %v231, 16
      %v403 = vrot.slane %v401, 4
      %v404 = vshll.u32 %v231, 16
      %v406 = vrot.slane %v404, 5
      %v407 = vor.u32 %v403, %v406
      %v408 = vrot.slane %v407, 4
      %v410 = vshll.u32 %v232, 16
      %v412 = vrot.slane %v410, 5
      %v413 = vsel %vm371, %v408, %v412
      %v415 = vshrl.u32 %v233, 16
      %v417 = vrot.slane %v415, 4
      %v418 = vshll.u32 %v233, 16
      %v420 = vrot.slane %v418, 5
      %v421 = vor.u32 %v417, %v420
      %v422 = vrot.slane %v421, 4
      %v424 = vshll.u32 %v234, 16
      %v426 = vrot.slane %v424, 5
      %v427 = vsel %vm371, %v422, %v426
      %v429 = vshrl.u32 %v235, 16
      %v431 = vrot.slane %v429, 4
      %v432 = vshll.u32 %v235, 16
      %v434 = vrot.slane %v432, 5
      %v435 = vor.u32 %v431, %v434
      %v436 = vrot.slane %v435, 4
      %v438 = vshll.u32 %v236, 16
      %v440 = vrot.slane %v438, 5
      %v441 = vsel %vm371, %v436, %v440
      %v443 = vshrl.u32 %v237, 16
      %v445 = vrot.slane %v443, 4
      %v446 = vshll.u32 %v237, 16
      %v448 = vrot.slane %v446, 5
      %v449 = vor.u32 %v445, %v448
      %v450 = vrot.slane %v449, 4
      %v452 = vshll.u32 %v238, 16
      %v454 = vrot.slane %v452, 5
      %v455 = vsel %vm371, %v450, %v454
      %v457 = vshrl.u32 %v239, 16
      %v459 = vrot.slane %v457, 4
      %v460 = vshll.u32 %v239, 16
      %v462 = vrot.slane %v460, 5
      %v463 = vor.u32 %v459, %v462
      %v464 = vrot.slane %v463, 4
      %v466 = vshll.u32 %v240, 16
      %v468 = vrot.slane %v466, 5
      %v469 = vsel %vm371, %v464, %v468
      %v471 = vshrl.u32 %v241, 16
      %v473 = vrot.slane %v471, 4
      %v474 = vshll.u32 %v241, 16
      %v476 = vrot.slane %v474, 5
      %v477 = vor.u32 %v473, %v476
      %v478 = vrot.slane %v477, 4
      %v480 = vshll.u32 %v242, 16
      %v482 = vrot.slane %v480, 5
      %v483 = vsel %vm371, %v478, %v482
      %s484 = scalar_lea.vmem %s204, 8
      %v485 = vld [vmem:[%s484] sm:$0xf]
      %v486 = vld [vmem:[%s484 + $0x4] sm:$0xf]
      %v487 = vunpack.c.l.b16 %v385
      %v488 = vunpack.c.l.b16 %v399
      %v489 = vunpack.c.l.b16 %v413
      %v490 = vunpack.c.l.b16 %v427
      %v491 = vunpack.c.l.b16 %v441
      %v492 = vunpack.c.l.b16 %v455
      %v493 = vunpack.c.l.b16 %v469
      %v494 = vunpack.c.l.b16 %v483
      %v495 = vpack.c.b16 %v488, %v487
      %v496 = vpack.c.b16 %v490, %v489
      %v497 = vpack.c.b16 %v492, %v491
      %v498 = vpack.c.b16 %v494, %v493
      %v501 = vunpack.c.l.b16 %v485
      %v502 = vunpack.c.l.b16 %v486
      %v503 = vpack.c.b16 %v502, %v501
      %v506 = vsel %vm283, %v495, 0
      %v509 = vsel %vm283, %v496, 0
      %v512 = vsel %vm283, %v497, 0
      %v515 = vsel %vm283, %v498, 0
      %517 = vmatprep.subr.bf16.mxu0 0
      %518 = vmatpush1.bf16.msra.mxu0 %v503
      %519 = vmatprep.subr.bf16.mxu0 0
      %520 = vmatpush1.bf16.msra.mxu0 0
      %521 = vmatprep.subr.bf16.mxu0 0
      %522 = vmatpush1.bf16.msra.mxu0 0
      %523 = vmatprep.subr.bf16.mxu0 0
      %524 = vmatpush1.bf16.msra.mxu0 0
      %525 = vmatprep.subr.bf16.mxu0 0
      %526 = vmatpush1.bf16.msra.mxu0 0
      %527 = vmatprep.subr.bf16.mxu0 0
      %528 = vmatpush1.bf16.msra.mxu0 0
      %529 = vmatprep.subr.bf16.mxu0 0
      %530 = vmatpush1.bf16.msra.mxu0 0
      %531 = vmatprep.subr.bf16.mxu0 0
      %532 = vmatpush1.bf16.msra.mxu0 0
      %533 = vmatprep.subr.bf16.mxu0 0
      %534 = vmatpush1.bf16.msra.mxu0 0
      %535 = vmatprep.subr.bf16.mxu0 0
      %536 = vmatpush1.bf16.msra.mxu0 0
      %537 = vmatprep.subr.bf16.mxu0 0
      %538 = vmatpush1.bf16.msra.mxu0 0
      %539 = vmatprep.subr.bf16.mxu0 0
      %540 = vmatpush1.bf16.msra.mxu0 0
      %541 = vmatprep.subr.bf16.mxu0 0
      %542 = vmatpush1.bf16.msra.mxu0 0
      %543 = vmatprep.subr.bf16.mxu0 0
      %544 = vmatpush1.bf16.msra.mxu0 0
      %545 = vmatprep.subr.bf16.mxu0 0
      %546 = vmatpush1.bf16.msra.mxu0 0
      %547 = vmatprep.subr.bf16.mxu0 0
      %548 = vmatpush1.bf16.msra.mxu0 0
      %549 = vmatprep.mubr.bf16.mxu0 0
      %550 = vmatmul.mubr.bf16.gmra.mrb[0].mxu0 %v506
      %v551 = vpop.f32.mrb[0].mxu0
      %v552 = vadd.f32 0.0, %v551
      %v553 = vpop.f32.mrb[0].mxu0
      %v554 = vpop.f32.mrb[0].mxu0
      %v555 = vadd.f32 0.0, %v554
      %v556 = vpop.f32.mrb[0].mxu0
      %557 = vmatprep.mubr.bf16.mxu0 0
      %558 = vmatmul.mubr.bf16.gmra.mrb[0].mxu0 %v509
      %v559 = vpop.f32.mrb[0].mxu0
      %v560 = vadd.f32 0.0, %v559
      %v561 = vpop.f32.mrb[0].mxu0
      %v562 = vpop.f32.mrb[0].mxu0
      %v563 = vadd.f32 0.0, %v562
      %v564 = vpop.f32.mrb[0].mxu0
      %565 = vmatprep.mubr.bf16.mxu0 0
      %566 = vmatmul.mubr.bf16.gmra.mrb[0].mxu0 %v512
      %v567 = vpop.f32.mrb[0].mxu0
      %v568 = vadd.f32 0.0, %v567
      %v569 = vpop.f32.mrb[0].mxu0
      %v570 = vpop.f32.mrb[0].mxu0
      %v571 = vadd.f32 0.0, %v570
      %v572 = vpop.f32.mrb[0].mxu0
      %573 = vmatprep.mubr.bf16.mxu0 0
      %574 = vmatmul.mubr.bf16.gmra.mrb[0].mxu0 %v515
      %v575 = vpop.f32.mrb[0].mxu0
      %v576 = vadd.f32 0.0, %v575
      %v577 = vpop.f32.mrb[0].mxu0
      %v578 = vpop.f32.mrb[0].mxu0
      %v579 = vadd.f32 0.0, %v578
      %v580 = vpop.f32.mrb[0].mxu0
      %581 = vdwg.mxu0
      %v582 = vadd.f32 %v361, %v552
      %v583 = vadd.f32 %v362, %v555
      %v584 = vadd.f32 %v363, %v560
      %v585 = vadd.f32 %v364, %v563
      %v586 = vadd.f32 %v365, %v568
      %v587 = vadd.f32 %v366, %v571
      %v588 = vadd.f32 %v367, %v576
      %v589 = vadd.f32 %v368, %v579
      %vm598 = vcmask 1042432
      %vm599 = vcmask 1046532
      %vm600 = vmor %vm598, %vm599
      %v601 = vrot.slane %v227, 5
      %v602 = vrot.slane %v601, 4
      %v603 = vrot.slane %v228, 5
      %v604 = vsel %vm600, %v602, %v603
      %v605 = vrot.slane %v229, 5
      %v606 = vrot.slane %v605, 4
      %v607 = vrot.slane %v230, 5
      %v608 = vsel %vm600, %v606, %v607
      %v609 = vrot.slane %v231, 5
      %v610 = vrot.slane %v609, 4
      %v611 = vrot.slane %v232, 5
      %v612 = vsel %vm600, %v610, %v611
      %v613 = vrot.slane %v233, 5
      %v614 = vrot.slane %v613, 4
      %v615 = vrot.slane %v234, 5
      %v616 = vsel %vm600, %v614, %v615
      %v617 = vrot.slane %v235, 5
      %v618 = vrot.slane %v617, 4
      %v619 = vrot.slane %v236, 5
      %v620 = vsel %vm600, %v618, %v619
      %v621 = vrot.slane %v237, 5
      %v622 = vrot.slane %v621, 4
      %v623 = vrot.slane %v238, 5
      %v624 = vsel %vm600, %v622, %v623
      %v625 = vrot.slane %v239, 5
      %v626 = vrot.slane %v625, 4
      %v627 = vrot.slane %v240, 5
      %v628 = vsel %vm600, %v626, %v627
      %v629 = vrot.slane %v241, 5
      %v630 = vrot.slane %v629, 4
      %v631 = vrot.slane %v242, 5
      %v632 = vsel %vm600, %v630, %v631
      %s633 = scalar_lea.vmem %s204, 16
      %v634 = vld [vmem:[%s633] sm:$0xf]
      %v635 = vld [vmem:[%s633 + $0x4] sm:$0xf]
      %v636 = vunpack.c.l.b16 %v604
      %v637 = vunpack.c.l.b16 %v608
      %v638 = vunpack.c.l.b16 %v612
      %v639 = vunpack.c.l.b16 %v616
      %v640 = vunpack.c.l.b16 %v620
      %v641 = vunpack.c.l.b16 %v624
      %v642 = vunpack.c.l.b16 %v628
      %v643 = vunpack.c.l.b16 %v632
      %v644 = vpack.c.b16 %v637, %v636
      %v645 = vpack.c.b16 %v639, %v638
      %v646 = vpack.c.b16 %v641, %v640
      %v647 = vpack.c.b16 %v643, %v642
      %v650 = vunpack.c.l.b16 %v634
      %v651 = vunpack.c.l.b16 %v635
      %v652 = vpack.c.b16 %v651, %v650
      %v655 = vsel %vm283, %v644, 0
      %v658 = vsel %vm283, %v645, 0
      %v661 = vsel %vm283, %v646, 0
      %v664 = vsel %vm283, %v647, 0
      %666 = vmatprep.subr.bf16.mxu0 0
      %667 = vmatpush1.bf16.msra.mxu0 %v652
      %668 = vmatprep.subr.bf16.mxu0 0
      %669 = vmatpush1.bf16.msra.mxu0 0
      %670 = vmatprep.subr.bf16.mxu0 0
      %671 = vmatpush1.bf16.msra.mxu0 0
      %672 = vmatprep.subr.bf16.mxu0 0
      %673 = vmatpush1.bf16.msra.mxu0 0
      %674 = vmatprep.subr.bf16.mxu0 0
      %675 = vmatpush1.bf16.msra.mxu0 0
      %676 = vmatprep.subr.bf16.mxu0 0
      %677 = vmatpush1.bf16.msra.mxu0 0
      %678 = vmatprep.subr.bf16.mxu0 0
      %679 = vmatpush1.bf16.msra.mxu0 0
      %680 = vmatprep.subr.bf16.mxu0 0
      %681 = vmatpush1.bf16.msra.mxu0 0
      %682 = vmatprep.subr.bf16.mxu0 0
      %683 = vmatpush1.bf16.msra.mxu0 0
      %684 = vmatprep.subr.bf16.mxu0 0
      %685 = vmatpush1.bf16.msra.mxu0 0
      %686 = vmatprep.subr.bf16.mxu0 0
      %687 = vmatpush1.bf16.msra.mxu0 0
      %688 = vmatprep.subr.bf16.mxu0 0
      %689 = vmatpush1.bf16.msra.mxu0 0
      %690 = vmatprep.subr.bf16.mxu0 0
      %691 = vmatpush1.bf16.msra.mxu0 0
      %692 = vmatprep.subr.bf16.mxu0 0
      %693 = vmatpush1.bf16.msra.mxu0 0
      %694 = vmatprep.subr.bf16.mxu0 0
      %695 = vmatpush1.bf16.msra.mxu0 0
      %696 = vmatprep.subr.bf16.mxu0 0
      %697 = vmatpush1.bf16.msra.mxu0 0
      %698 = vmatprep.mubr.bf16.mxu0 0
      %699 = vmatmul.mubr.bf16.gmra.mrb[0].mxu0 %v655
      %v700 = vpop.f32.mrb[0].mxu0
      %v701 = vadd.f32 0.0, %v700
      %v702 = vpop.f32.mrb[0].mxu0
      %v703 = vpop.f32.mrb[0].mxu0
      %v704 = vadd.f32 0.0, %v703
      %v705 = vpop.f32.mrb[0].mxu0
      %706 = vmatprep.mubr.bf16.mxu0 0
      %707 = vmatmul.mubr.bf16.gmra.mrb[0].mxu0 %v658
      %v708 = vpop.f32.mrb[0].mxu0
      %v709 = vadd.f32 0.0, %v708
      %v710 = vpop.f32.mrb[0].mxu0
      %v711 = vpop.f32.mrb[0].mxu0
      %v712 = vadd.f32 0.0, %v711
      %v713 = vpop.f32.mrb[0].mxu0
      %714 = vmatprep.mubr.bf16.mxu0 0
      %715 = vmatmul.mubr.bf16.gmra.mrb[0].mxu0 %v661
      %v716 = vpop.f32.mrb[0].mxu0
      %v717 = vadd.f32 0.0, %v716
      %v718 = vpop.f32.mrb[0].mxu0
      %v719 = vpop.f32.mrb[0].mxu0
      %v720 = vadd.f32 0.0, %v719
      %v721 = vpop.f32.mrb[0].mxu0
      %722 = vmatprep.mubr.bf16.mxu0 0
      %723 = vmatmul.mubr.bf16.gmra.mrb[0].mxu0 %v664
      %v724 = vpop.f32.mrb[0].mxu0
      %v725 = vadd.f32 0.0, %v724
      %v726 = vpop.f32.mrb[0].mxu0
      %v727 = vpop.f32.mrb[0].mxu0
      %v728 = vadd.f32 0.0, %v727
      %v729 = vpop.f32.mrb[0].mxu0
      %730 = vdwg.mxu0
      %v731 = vadd.f32 %v582, %v701
      %v732 = vadd.f32 %v583, %v704
      %v733 = vadd.f32 %v584, %v709
      %v734 = vadd.f32 %v585, %v712
      %v735 = vadd.f32 %v586, %v717
      %v736 = vadd.f32 %v587, %v720
      %v737 = vadd.f32 %v588, %v725
      %v738 = vadd.f32 %v589, %v728
      %s739 = scalar_lea.vmem %s204, 24
      %v740 = vld [vmem:[%s739] sm:$0xf]
      %v741 = vld [vmem:[%s739 + $0x4] sm:$0xf]
      %v743 = vunpack.c.l.b16 %v243
      %v744 = vpack.c.b16 %v267, %v266
      %v745 = vpack.c.b16 %v269, %v268
      %v746 = vpack.c.b16 %v271, %v270
      %v747 = vpack.c.b16 %v743, %v272
      %v750 = vunpack.c.l.b16 %v740
      %v751 = vunpack.c.l.b16 %v741
      %v752 = vpack.c.b16 %v751, %v750
      %v755 = vsel %vm283, %v744, 0
      %v758 = vsel %vm283, %v745, 0
      %v761 = vsel %vm283, %v746, 0
      %v764 = vsel %vm283, %v747, 0
      %766 = vmatprep.subr.bf16.mxu0 0
      %767 = vmatpush1.bf16.msra.mxu0 %v752
      %768 = vmatprep.subr.bf16.mxu0 0
      %769 = vmatpush1.bf16.msra.mxu0 0
      %770 = vmatprep.subr.bf16.mxu0 0
      %771 = vmatpush1.bf16.msra.mxu0 0
      %772 = vmatprep.subr.bf16.mxu0 0
      %773 = vmatpush1.bf16.msra.mxu0 0
      %774 = vmatprep.subr.bf16.mxu0 0
      %775 = vmatpush1.bf16.msra.mxu0 0
      %776 = vmatprep.subr.bf16.mxu0 0
      %777 = vmatpush1.bf16.msra.mxu0 0
      %778 = vmatprep.subr.bf16.mxu0 0
      %779 = vmatpush1.bf16.msra.mxu0 0
      %780 = vmatprep.subr.bf16.mxu0 0
      %781 = vmatpush1.bf16.msra.mxu0 0
      %782 = vmatprep.subr.bf16.mxu0 0
      %783 = vmatpush1.bf16.msra.mxu0 0
      %784 = vmatprep.subr.bf16.mxu0 0
      %785 = vmatpush1.bf16.msra.mxu0 0
      %786 = vmatprep.subr.bf16.mxu0 0
      %787 = vmatpush1.bf16.msra.mxu0 0
      %788 = vmatprep.subr.bf16.mxu0 0
      %789 = vmatpush1.bf16.msra.mxu0 0
      %790 = vmatprep.subr.bf16.mxu0 0
      %791 = vmatpush1.bf16.msra.mxu0 0
      %792 = vmatprep.subr.bf16.mxu0 0
      %793 = vmatpush1.bf16.msra.mxu0 0
      %794 = vmatprep.subr.bf16.mxu0 0
      %795 = vmatpush1.bf16.msra.mxu0 0
      %796 = vmatprep.subr.bf16.mxu0 0
      %797 = vmatpush1.bf16.msra.mxu0 0
      %798 = vmatprep.mubr.bf16.mxu0 0
      %799 = vmatmul.mubr.bf16.gmra.mrb[0].mxu0 %v755
      %v800 = vpop.f32.mrb[0].mxu0
      %v801 = vadd.f32 0.0, %v800
      %v802 = vpop.f32.mrb[0].mxu0
      %v803 = vpop.f32.mrb[0].mxu0
      %v804 = vadd.f32 0.0, %v803
      %v805 = vpop.f32.mrb[0].mxu0
      %806 = vmatprep.mubr.bf16.mxu0 0
      %807 = vmatmul.mubr.bf16.gmra.mrb[0].mxu0 %v758
      %v808 = vpop.f32.mrb[0].mxu0
      %v809 = vadd.f32 0.0, %v808
      %v810 = vpop.f32.mrb[0].mxu0
      %v811 = vpop.f32.mrb[0].mxu0
      %v812 = vadd.f32 0.0, %v811
      %v813 = vpop.f32.mrb[0].mxu0
      %814 = vmatprep.mubr.bf16.mxu0 0
      %815 = vmatmul.mubr.bf16.gmra.mrb[0].mxu0 %v761
      %v816 = vpop.f32.mrb[0].mxu0
      %v817 = vadd.f32 0.0, %v816
      %v818 = vpop.f32.mrb[0].mxu0
      %v819 = vpop.f32.mrb[0].mxu0
      %v820 = vadd.f32 0.0, %v819
      %v821 = vpop.f32.mrb[0].mxu0
      %822 = vmatprep.mubr.bf16.mxu0 0
      %823 = vmatmul.mubr.bf16.gmra.mrb[0].mxu0 %v764
      %v824 = vpop.f32.mrb[0].mxu0
      %v825 = vadd.f32 0.0, %v824
      %v826 = vpop.f32.mrb[0].mxu0
      %v827 = vpop.f32.mrb[0].mxu0
      %v828 = vadd.f32 0.0, %v827
      %v829 = vpop.f32.mrb[0].mxu0
      %830 = vdwg.mxu0
      %v831 = vadd.f32 %v731, %v801
      %v832 = vadd.f32 %v732, %v804
      %v833 = vadd.f32 %v733, %v809
      %v834 = vadd.f32 %v734, %v812
      %v835 = vadd.f32 %v735, %v817
      %v836 = vadd.f32 %v736, %v820
      %v837 = vadd.f32 %v737, %v825
      %v838 = vadd.f32 %v738, %v828
      %v840 = vshrl.u32 %v243, 16
      %v842 = vrot.slane %v840, 4
      %v843 = vshll.u32 %v243, 16
      %v845 = vrot.slane %v843, 5
      %v846 = vor.u32 %v842, %v845
      %v847 = vrot.slane %v846, 4
      %v849 = vshll.u32 %v244, 16
      %v851 = vrot.slane %v849, 5
      %v852 = vsel %vm371, %v847, %v851
      %s853 = scalar_lea.vmem %s204, 32
      %v854 = vld [vmem:[%s853] sm:$0xf]
      %v855 = vld [vmem:[%s853 + $0x4] sm:$0xf]
      %v856 = vunpack.c.l.b16 %v852
      %v857 = vpack.c.b16 %v489, %v488
      %v858 = vpack.c.b16 %v491, %v490
      %v859 = vpack.c.b16 %v493, %v492
      %v860 = vpack.c.b16 %v856, %v494
      %v863 = vunpack.c.l.b16 %v854
      %v864 = vunpack.c.l.b16 %v855
      %v865 = vpack.c.b16 %v864, %v863
      %v868 = vsel %vm283, %v857, 0
      %v871 = vsel %vm283, %v858, 0
      %v874 = vsel %vm283, %v859, 0
      %v877 = vsel %vm283, %v860, 0
      %879 = vmatprep.subr.bf16.mxu0 0
      %880 = vmatpush1.bf16.msra.mxu0 %v865
      %881 = vmatprep.subr.bf16.mxu0 0
      %882 = vmatpush1.bf16.msra.mxu0 0
      %883 = vmatprep.subr.bf16.mxu0 0
      %884 = vmatpush1.bf16.msra.mxu0 0
      %885 = vmatprep.subr.bf16.mxu0 0
      %886 = vmatpush1.bf16.msra.mxu0 0
      %887 = vmatprep.subr.bf16.mxu0 0
      %888 = vmatpush1.bf16.msra.mxu0 0
      %889 = vmatprep.subr.bf16.mxu0 0
      %890 = vmatpush1.bf16.msra.mxu0 0
      %891 = vmatprep.subr.bf16.mxu0 0
      %892 = vmatpush1.bf16.msra.mxu0 0
      %893 = vmatprep.subr.bf16.mxu0 0
      %894 = vmatpush1.bf16.msra.mxu0 0
      %895 = vmatprep.subr.bf16.mxu0 0
      %896 = vmatpush1.bf16.msra.mxu0 0
      %897 = vmatprep.subr.bf16.mxu0 0
      %898 = vmatpush1.bf16.msra.mxu0 0
      %899 = vmatprep.subr.bf16.mxu0 0
      %900 = vmatpush1.bf16.msra.mxu0 0
      %901 = vmatprep.subr.bf16.mxu0 0
      %902 = vmatpush1.bf16.msra.mxu0 0
      %903 = vmatprep.subr.bf16.mxu0 0
      %904 = vmatpush1.bf16.msra.mxu0 0
      %905 = vmatprep.subr.bf16.mxu0 0
      %906 = vmatpush1.bf16.msra.mxu0 0
      %907 = vmatprep.subr.bf16.mxu0 0
      %908 = vmatpush1.bf16.msra.mxu0 0
      %909 = vmatprep.subr.bf16.mxu0 0
      %910 = vmatpush1.bf16.msra.mxu0 0
      %911 = vmatprep.mubr.bf16.mxu0 0
      %912 = vmatmul.mubr.bf16.gmra.mrb[0].mxu0 %v868
      %v913 = vpop.f32.mrb[0].mxu0
      %v914 = vadd.f32 0.0, %v913
      %v915 = vpop.f32.mrb[0].mxu0
      %v916 = vpop.f32.mrb[0].mxu0
      %v917 = vadd.f32 0.0, %v916
      %v918 = vpop.f32.mrb[0].mxu0
      %919 = vmatprep.mubr.bf16.mxu0 0
      %920 = vmatmul.mubr.bf16.gmra.mrb[0].mxu0 %v871
      %v921 = vpop.f32.mrb[0].mxu0
      %v922 = vadd.f32 0.0, %v921
      %v923 = vpop.f32.mrb[0].mxu0
      %v924 = vpop.f32.mrb[0].mxu0
      %v925 = vadd.f32 0.0, %v924
      %v926 = vpop.f32.mrb[0].mxu0
      %927 = vmatprep.mubr.bf16.mxu0 0
      %928 = vmatmul.mubr.bf16.gmra.mrb[0].mxu0 %v874
      %v929 = vpop.f32.mrb[0].mxu0
      %v930 = vadd.f32 0.0, %v929
      %v931 = vpop.f32.mrb[0].mxu0
      %v932 = vpop.f32.mrb[0].mxu0
      %v933 = vadd.f32 0.0, %v932
      %v934 = vpop.f32.mrb[0].mxu0
      %935 = vmatprep.mubr.bf16.mxu0 0
      %936 = vmatmul.mubr.bf16.gmra.mrb[0].mxu0 %v877
      %v937 = vpop.f32.mrb[0].mxu0
      %v938 = vadd.f32 0.0, %v937
      %v939 = vpop.f32.mrb[0].mxu0
      %v940 = vpop.f32.mrb[0].mxu0
      %v941 = vadd.f32 0.0, %v940
      %v942 = vpop.f32.mrb[0].mxu0
      %943 = vdwg.mxu0
      %v944 = vadd.f32 %v831, %v914
      %v945 = vadd.f32 %v832, %v917
      %v946 = vadd.f32 %v833, %v922
      %v947 = vadd.f32 %v834, %v925
      %v948 = vadd.f32 %v835, %v930
      %v949 = vadd.f32 %v836, %v933
      %v950 = vadd.f32 %v837, %v938
      %v951 = vadd.f32 %v838, %v941
      %v953 = vrot.slane %v243, 5
      %v954 = vrot.slane %v953, 4
      %v955 = vrot.slane %v244, 5
      %v956 = vsel %vm600, %v954, %v955
      %s957 = scalar_lea.vmem %s204, 40
      %v958 = vld [vmem:[%s957] sm:$0xf]
      %v959 = vld [vmem:[%s957 + $0x4] sm:$0xf]
      %v960 = vunpack.c.l.b16 %v956
      %v961 = vpack.c.b16 %v638, %v637
      %v962 = vpack.c.b16 %v640, %v639
      %v963 = vpack.c.b16 %v642, %v641
      %v964 = vpack.c.b16 %v960, %v643
      %v967 = vunpack.c.l.b16 %v958
      %v968 = vunpack.c.l.b16 %v959
      %v969 = vpack.c.b16 %v968, %v967
      %v972 = vsel %vm283, %v961, 0
      %v975 = vsel %vm283, %v962, 0
      %v978 = vsel %vm283, %v963, 0
      %v981 = vsel %vm283, %v964, 0
      %983 = vmatprep.subr.bf16.mxu0 0
      %984 = vmatpush1.bf16.msra.mxu0 %v969
      %985 = vmatprep.subr.bf16.mxu0 0
      %986 = vmatpush1.bf16.msra.mxu0 0
      %987 = vmatprep.subr.bf16.mxu0 0
      %988 = vmatpush1.bf16.msra.mxu0 0
      %989 = vmatprep.subr.bf16.mxu0 0
      %990 = vmatpush1.bf16.msra.mxu0 0
      %991 = vmatprep.subr.bf16.mxu0 0
      %992 = vmatpush1.bf16.msra.mxu0 0
      %993 = vmatprep.subr.bf16.mxu0 0
      %994 = vmatpush1.bf16.msra.mxu0 0
      %995 = vmatprep.subr.bf16.mxu0 0
      %996 = vmatpush1.bf16.msra.mxu0 0
      %997 = vmatprep.subr.bf16.mxu0 0
      %998 = vmatpush1.bf16.msra.mxu0 0
      %999 = vmatprep.subr.bf16.mxu0 0
      %1000 = vmatpush1.bf16.msra.mxu0 0
      %1001 = vmatprep.subr.bf16.mxu0 0
      %1002 = vmatpush1.bf16.msra.mxu0 0
      %1003 = vmatprep.subr.bf16.mxu0 0
      %1004 = vmatpush1.bf16.msra.mxu0 0
      %1005 = vmatprep.subr.bf16.mxu0 0
      %1006 = vmatpush1.bf16.msra.mxu0 0
      %1007 = vmatprep.subr.bf16.mxu0 0
      %1008 = vmatpush1.bf16.msra.mxu0 0
      %1009 = vmatprep.subr.bf16.mxu0 0
      %1010 = vmatpush1.bf16.msra.mxu0 0
      %1011 = vmatprep.subr.bf16.mxu0 0
      %1012 = vmatpush1.bf16.msra.mxu0 0
      %1013 = vmatprep.subr.bf16.mxu0 0
      %1014 = vmatpush1.bf16.msra.mxu0 0
      %1015 = vmatprep.mubr.bf16.mxu0 0
      %1016 = vmatmul.mubr.bf16.gmra.mrb[0].mxu0 %v972
      %v1017 = vpop.f32.mrb[0].mxu0
      %v1018 = vadd.f32 0.0, %v1017
      %v1019 = vpop.f32.mrb[0].mxu0
      %v1020 = vpop.f32.mrb[0].mxu0
      %v1021 = vadd.f32 0.0, %v1020
      %v1022 = vpop.f32.mrb[0].mxu0
      %1023 = vmatprep.mubr.bf16.mxu0 0
      %1024 = vmatmul.mubr.bf16.gmra.mrb[0].mxu0 %v975
      %v1025 = vpop.f32.mrb[0].mxu0
      %v1026 = vadd.f32 0.0, %v1025
      %v1027 = vpop.f32.mrb[0].mxu0
      %v1028 = vpop.f32.mrb[0].mxu0
      %v1029 = vadd.f32 0.0, %v1028
      %v1030 = vpop.f32.mrb[0].mxu0
      %1031 = vmatprep.mubr.bf16.mxu0 0
      %1032 = vmatmul.mubr.bf16.gmra.mrb[0].mxu0 %v978
      %v1033 = vpop.f32.mrb[0].mxu0
      %v1034 = vadd.f32 0.0, %v1033
      %v1035 = vpop.f32.mrb[0].mxu0
      %v1036 = vpop.f32.mrb[0].mxu0
      %v1037 = vadd.f32 0.0, %v1036
      %v1038 = vpop.f32.mrb[0].mxu0
      %1039 = vmatprep.mubr.bf16.mxu0 0
      %1040 = vmatmul.mubr.bf16.gmra.mrb[0].mxu0 %v981
      %v1041 = vpop.f32.mrb[0].mxu0
      %v1042 = vadd.f32 0.0, %v1041
      %v1043 = vpop.f32.mrb[0].mxu0
      %v1044 = vpop.f32.mrb[0].mxu0
      %v1045 = vadd.f32 0.0, %v1044
      %v1046 = vpop.f32.mrb[0].mxu0
      %1047 = vdwg.mxu0
      %v1048 = vadd.f32 %v944, %v1018
      %v1049 = vadd.f32 %v945, %v1021
      %v1050 = vadd.f32 %v946, %v1026
      %v1051 = vadd.f32 %v947, %v1029
      %v1052 = vadd.f32 %v948, %v1034
      %v1053 = vadd.f32 %v949, %v1037
      %v1054 = vadd.f32 %v950, %v1042
      %v1055 = vadd.f32 %v951, %v1045
      %s1056 = scalar_lea.vmem %s204, 48
      %v1057 = vld [vmem:[%s1056] sm:$0xf]
      %v1058 = vld [vmem:[%s1056 + $0x4] sm:$0xf]
      %v1060 = vunpack.c.l.b16 %v245
      %v1061 = vpack.c.b16 %v1060, %v743
      %v1064 = vunpack.c.l.b16 %v1057
      %v1065 = vunpack.c.l.b16 %v1058
      %v1066 = vpack.c.b16 %v1065, %v1064
      %v1069 = vsel %vm283, %v1061, 0
      %1071 = vmatprep.subr.bf16.mxu0 0
      %1072 = vmatpush1.bf16.msra.mxu0 %v1066
      %1073 = vmatprep.subr.bf16.mxu0 0
      %1074 = vmatpush1.bf16.msra.mxu0 0
      %1075 = vmatprep.subr.bf16.mxu0 0
      %1076 = vmatpush1.bf16.msra.mxu0 0
      %1077 = vmatprep.subr.bf16.mxu0 0
      %1078 = vmatpush1.bf16.msra.mxu0 0
      %1079 = vmatprep.subr.bf16.mxu0 0
      %1080 = vmatpush1.bf16.msra.mxu0 0
      %1081 = vmatprep.subr.bf16.mxu0 0
      %1082 = vmatpush1.bf16.msra.mxu0 0
      %1083 = vmatprep.subr.bf16.mxu0 0
      %1084 = vmatpush1.bf16.msra.mxu0 0
      %1085 = vmatprep.subr.bf16.mxu0 0
      %1086 = vmatpush1.bf16.msra.mxu0 0
      %1087 = vmatprep.subr.bf16.mxu0 0
      %1088 = vmatpush1.bf16.msra.mxu0 0
      %1089 = vmatprep.subr.bf16.mxu0 0
      %1090 = vmatpush1.bf16.msra.mxu0 0
      %1091 = vmatprep.subr.bf16.mxu0 0
      %1092 = vmatpush1.bf16.msra.mxu0 0
      %1093 = vmatprep.subr.bf16.mxu0 0
      %1094 = vmatpush1.bf16.msra.mxu0 0
      %1095 = vmatprep.subr.bf16.mxu0 0
      %1096 = vmatpush1.bf16.msra.mxu0 0
      %1097 = vmatprep.subr.bf16.mxu0 0
      %1098 = vmatpush1.bf16.msra.mxu0 0
      %1099 = vmatprep.subr.bf16.mxu0 0
      %1100 = vmatpush1.bf16.msra.mxu0 0
      %1101 = vmatprep.subr.bf16.mxu0 0
      %1102 = vmatpush1.bf16.msra.mxu0 0
      %1103 = vmatprep.mubr.bf16.mxu0 0
      %1104 = vmatmul.mubr.bf16.gmra.mrb[0].mxu0 %v288
      %v1105 = vpop.f32.mrb[0].mxu0
      %v1106 = vadd.f32 0.0, %v1105
      %v1107 = vpop.f32.mrb[0].mxu0
      %v1108 = vpop.f32.mrb[0].mxu0
      %v1109 = vadd.f32 0.0, %v1108
      %v1110 = vpop.f32.mrb[0].mxu0
      %1111 = vmatprep.mubr.bf16.mxu0 0
      %1112 = vmatmul.mubr.bf16.gmra.mrb[0].mxu0 %v291
      %v1113 = vpop.f32.mrb[0].mxu0
      %v1114 = vadd.f32 0.0, %v1113
      %v1115 = vpop.f32.mrb[0].mxu0
      %v1116 = vpop.f32.mrb[0].mxu0
      %v1117 = vadd.f32 0.0, %v1116
      %v1118 = vpop.f32.mrb[0].mxu0
      %1119 = vmatprep.mubr.bf16.mxu0 0
      %1120 = vmatmul.mubr.bf16.gmra.mrb[0].mxu0 %v294
      %v1121 = vpop.f32.mrb[0].mxu0
      %v1122 = vadd.f32 0.0, %v1121
      %v1123 = vpop.f32.mrb[0].mxu0
      %v1124 = vpop.f32.mrb[0].mxu0
      %v1125 = vadd.f32 0.0, %v1124
      %v1126 = vpop.f32.mrb[0].mxu0
      %1127 = vmatprep.mubr.bf16.mxu0 0
      %1128 = vmatmul.mubr.bf16.gmra.mrb[0].mxu0 %v1069
      %v1129 = vpop.f32.mrb[0].mxu0
      %v1130 = vadd.f32 0.0, %v1129
      %v1131 = vpop.f32.mrb[0].mxu0
      %v1132 = vpop.f32.mrb[0].mxu0
      %v1133 = vadd.f32 0.0, %v1132
      %v1134 = vpop.f32.mrb[0].mxu0
      %1135 = vdwg.mxu0
      %v1136 = vadd.f32 %v1048, %v1106
      %v1137 = vadd.f32 %v1049, %v1109
      %v1138 = vadd.f32 %v1050, %v1114
      %v1139 = vadd.f32 %v1051, %v1117
      %v1140 = vadd.f32 %v1052, %v1122
      %v1141 = vadd.f32 %v1053, %v1125
      %v1142 = vadd.f32 %v1054, %v1130
      %v1143 = vadd.f32 %v1055, %v1133
      %v1145 = vshrl.u32 %v245, 16
      %v1147 = vrot.slane %v1145, 4
      %v1148 = vshll.u32 %v245, 16
      %v1150 = vrot.slane %v1148, 5
      %v1151 = vor.u32 %v1147, %v1150
      %v1152 = vrot.slane %v1151, 4
      %v1154 = vshll.u32 %v246, 16
      %v1156 = vrot.slane %v1154, 5
      %v1157 = vsel %vm371, %v1152, %v1156
      %s1158 = scalar_lea.vmem %s204, 56
      %v1159 = vld [vmem:[%s1158] sm:$0xf]
      %v1160 = vld [vmem:[%s1158 + $0x4] sm:$0xf]
      %v1161 = vunpack.c.l.b16 %v1157
      %v1162 = vpack.c.b16 %v1161, %v856
      %v1165 = vunpack.c.l.b16 %v1159
      %v1166 = vunpack.c.l.b16 %v1160
      %v1167 = vpack.c.b16 %v1166, %v1165
      %v1170 = vsel %vm283, %v1162, 0
      %1172 = vmatprep.subr.bf16.mxu0 0
      %1173 = vmatpush1.bf16.msra.mxu0 %v1167
      %1174 = vmatprep.subr.bf16.mxu0 0
      %1175 = vmatpush1.bf16.msra.mxu0 0
      %1176 = vmatprep.subr.bf16.mxu0 0
      %1177 = vmatpush1.bf16.msra.mxu0 0
      %1178 = vmatprep.subr.bf16.mxu0 0
      %1179 = vmatpush1.bf16.msra.mxu0 0
      %1180 = vmatprep.subr.bf16.mxu0 0
      %1181 = vmatpush1.bf16.msra.mxu0 0
      %1182 = vmatprep.subr.bf16.mxu0 0
      %1183 = vmatpush1.bf16.msra.mxu0 0
      %1184 = vmatprep.subr.bf16.mxu0 0
      %1185 = vmatpush1.bf16.msra.mxu0 0
      %1186 = vmatprep.subr.bf16.mxu0 0
      %1187 = vmatpush1.bf16.msra.mxu0 0
      %1188 = vmatprep.subr.bf16.mxu0 0
      %1189 = vmatpush1.bf16.msra.mxu0 0
      %1190 = vmatprep.subr.bf16.mxu0 0
      %1191 = vmatpush1.bf16.msra.mxu0 0
      %1192 = vmatprep.subr.bf16.mxu0 0
      %1193 = vmatpush1.bf16.msra.mxu0 0
      %1194 = vmatprep.subr.bf16.mxu0 0
      %1195 = vmatpush1.bf16.msra.mxu0 0
      %1196 = vmatprep.subr.bf16.mxu0 0
      %1197 = vmatpush1.bf16.msra.mxu0 0
      %1198 = vmatprep.subr.bf16.mxu0 0
      %1199 = vmatpush1.bf16.msra.mxu0 0
      %1200 = vmatprep.subr.bf16.mxu0 0
      %1201 = vmatpush1.bf16.msra.mxu0 0
      %1202 = vmatprep.subr.bf16.mxu0 0
      %1203 = vmatpush1.bf16.msra.mxu0 0
      %1204 = vmatprep.mubr.bf16.mxu0 0
      %1205 = vmatmul.mubr.bf16.gmra.mrb[0].mxu0 %v509
      %v1206 = vpop.f32.mrb[0].mxu0
      %v1207 = vadd.f32 0.0, %v1206
      %v1208 = vpop.f32.mrb[0].mxu0
      %v1209 = vpop.f32.mrb[0].mxu0
      %v1210 = vadd.f32 0.0, %v1209
      %v1211 = vpop.f32.mrb[0].mxu0
      %1212 = vmatprep.mubr.bf16.mxu0 0
      %1213 = vmatmul.mubr.bf16.gmra.mrb[0].mxu0 %v512
      %v1214 = vpop.f32.mrb[0].mxu0
      %v1215 = vadd.f32 0.0, %v1214
      %v1216 = vpop.f32.mrb[0].mxu0
      %v1217 = vpop.f32.mrb[0].mxu0
      %v1218 = vadd.f32 0.0, %v1217
      %v1219 = vpop.f32.mrb[0].mxu0
      %1220 = vmatprep.mubr.bf16.mxu0 0
      %1221 = vmatmul.mubr.bf16.gmra.mrb[0].mxu0 %v515
      %v1222 = vpop.f32.mrb[0].mxu0
      %v1223 = vadd.f32 0.0, %v1222
      %v1224 = vpop.f32.mrb[0].mxu0
      %v1225 = vpop.f32.mrb[0].mxu0
      %v1226 = vadd.f32 0.0, %v1225
      %v1227 = vpop.f32.mrb[0].mxu0
      %1228 = vmatprep.mubr.bf16.mxu0 0
      %1229 = vmatmul.mubr.bf16.gmra.mrb[0].mxu0 %v1170
      %v1230 = vpop.f32.mrb[0].mxu0
      %v1231 = vadd.f32 0.0, %v1230
      %v1232 = vpop.f32.mrb[0].mxu0
      %v1233 = vpop.f32.mrb[0].mxu0
      %v1234 = vadd.f32 0.0, %v1233
      %v1235 = vpop.f32.mrb[0].mxu0
      %1236 = vdwg.mxu0
      %v1237 = vadd.f32 %v1136, %v1207
      %v1238 = vadd.f32 %v1137, %v1210
      %v1239 = vadd.f32 %v1138, %v1215
      %v1240 = vadd.f32 %v1139, %v1218
      %v1241 = vadd.f32 %v1140, %v1223
      %v1242 = vadd.f32 %v1141, %v1226
      %v1243 = vadd.f32 %v1142, %v1231
      %v1244 = vadd.f32 %v1143, %v1234
      %v1246 = vrot.slane %v245, 5
      %v1247 = vrot.slane %v1246, 4
      %v1248 = vrot.slane %v246, 5
      %v1249 = vsel %vm600, %v1247, %v1248
      %s1250 = scalar_lea.vmem %s204, 64
      %v1251 = vld [vmem:[%s1250] sm:$0xf]
      %v1252 = vld [vmem:[%s1250 + $0x4] sm:$0xf]
      %v1253 = vunpack.c.l.b16 %v1249
      %v1254 = vpack.c.b16 %v1253, %v960
      %v1257 = vunpack.c.l.b16 %v1251
      %v1258 = vunpack.c.l.b16 %v1252
      %v1259 = vpack.c.b16 %v1258, %v1257
      %v1262 = vsel %vm283, %v1254, 0
      %1264 = vmatprep.subr.bf16.mxu0 0
      %1265 = vmatpush1.bf16.msra.mxu0 %v1259
      %1266 = vmatprep.subr.bf16.mxu0 0
      %1267 = vmatpush1.bf16.msra.mxu0 0
      %1268 = vmatprep.subr.bf16.mxu0 0
      %1269 = vmatpush1.bf16.msra.mxu0 0
      %1270 = vmatprep.subr.bf16.mxu0 0
      %1271 = vmatpush1.bf16.msra.mxu0 0
      %1272 = vmatprep.subr.bf16.mxu0 0
      %1273 = vmatpush1.bf16.msra.mxu0 0
      %1274 = vmatprep.subr.bf16.mxu0 0
      %1275 = vmatpush1.bf16.msra.mxu0 0
      %1276 = vmatprep.subr.bf16.mxu0 0
      %1277 = vmatpush1.bf16.msra.mxu0 0
      %1278 = vmatprep.subr.bf16.mxu0 0
      %1279 = vmatpush1.bf16.msra.mxu0 0
      %1280 = vmatprep.subr.bf16.mxu0 0
      %1281 = vmatpush1.bf16.msra.mxu0 0
      %1282 = vmatprep.subr.bf16.mxu0 0
      %1283 = vmatpush1.bf16.msra.mxu0 0
      %1284 = vmatprep.subr.bf16.mxu0 0
      %1285 = vmatpush1.bf16.msra.mxu0 0
      %1286 = vmatprep.subr.bf16.mxu0 0
      %1287 = vmatpush1.bf16.msra.mxu0 0
      %1288 = vmatprep.subr.bf16.mxu0 0
      %1289 = vmatpush1.bf16.msra.mxu0 0
      %1290 = vmatprep.subr.bf16.mxu0 0
      %1291 = vmatpush1.bf16.msra.mxu0 0
      %1292 = vmatprep.subr.bf16.mxu0 0
      %1293 = vmatpush1.bf16.msra.mxu0 0
      %1294 = vmatprep.subr.bf16.mxu0 0
      %1295 = vmatpush1.bf16.msra.mxu0 0
      %1296 = vmatprep.mubr.bf16.mxu0 0
      %1297 = vmatmul.mubr.bf16.gmra.mrb[0].mxu0 %v658
      %v1298 = vpop.f32.mrb[0].mxu0
      %v1299 = vadd.f32 0.0, %v1298
      %v1300 = vpop.f32.mrb[0].mxu0
      %v1301 = vpop.f32.mrb[0].mxu0
      %v1302 = vadd.f32 0.0, %v1301
      %v1303 = vpop.f32.mrb[0].mxu0
      %1304 = vmatprep.mubr.bf16.mxu0 0
      %1305 = vmatmul.mubr.bf16.gmra.mrb[0].mxu0 %v661
      %v1306 = vpop.f32.mrb[0].mxu0
      %v1307 = vadd.f32 0.0, %v1306
      %v1308 = vpop.f32.mrb[0].mxu0
      %v1309 = vpop.f32.mrb[0].mxu0
      %v1310 = vadd.f32 0.0, %v1309
      %v1311 = vpop.f32.mrb[0].mxu0
      %1312 = vmatprep.mubr.bf16.mxu0 0
      %1313 = vmatmul.mubr.bf16.gmra.mrb[0].mxu0 %v664
      %v1314 = vpop.f32.mrb[0].mxu0
      %v1315 = vadd.f32 0.0, %v1314
      %v1316 = vpop.f32.mrb[0].mxu0
      %v1317 = vpop.f32.mrb[0].mxu0
      %v1318 = vadd.f32 0.0, %v1317
      %v1319 = vpop.f32.mrb[0].mxu0
      %1320 = vmatprep.mubr.bf16.mxu0 0
      %1321 = vmatmul.mubr.bf16.gmra.mrb[0].mxu0 %v1262
      %v1322 = vpop.f32.mrb[0].mxu0
      %v1323 = vadd.f32 0.0, %v1322
      %v1324 = vpop.f32.mrb[0].mxu0
      %v1325 = vpop.f32.mrb[0].mxu0
      %v1326 = vadd.f32 0.0, %v1325
      %v1327 = vpop.f32.mrb[0].mxu0
      %1328 = vdwg.mxu0
      %v1329 = vadd.f32 %v1237, %v1299
      %v1330 = vadd.f32 %v1238, %v1302
      %v1331 = vadd.f32 %v1239, %v1307
      %v1332 = vadd.f32 %v1240, %v1310
      %v1333 = vadd.f32 %v1241, %v1315
      %v1334 = vadd.f32 %v1242, %v1318
      %v1335 = vadd.f32 %v1243, %v1323
      %v1336 = vadd.f32 %v1244, %v1326
      %1337 = vst [vmem:[#allocation2] sm:$0xff] %v1329
      %1338 = vst [vmem:[#allocation2 + $0x8] sm:$0xff] %v1330
      %1339 = vst [vmem:[#allocation2 + $0x10] sm:$0xff] %v1331
      %1340 = vst [vmem:[#allocation2 + $0x18] sm:$0xff] %v1332
      %1341 = vst [vmem:[#allocation2 + $0x20] sm:$0xff] %v1333
      %1342 = vst [vmem:[#allocation2 + $0x28] sm:$0xff] %v1334
      %1343 = vst [vmem:[#allocation2 + $0x30] sm:$0xff] %v1335
      %1344 = vst [vmem:[#allocation2 + $0x38] sm:$0xff] %v1336
      %p1345 = scmp.eq.s32.totalorder %s20, 2
      // Predicated region
      $region33: #{upconv3d_block_forward.9} parent=27 // pred_check
        %p1346 = pneg %p1345
      $region34: #{upconv3d_block_forward.9} parent=27 // pred_check_branch
        %1348 = sbr.rel (%p1346) target = $region36
      $region35: #{upconv3d_block_forward.9} parent=27 // pred_region
        %1349 = vst [vmem:[%s213] sm:$0xff] %v1329
        %1350 = vst [vmem:[%s213 + $0x8] sm:$0xff] %v1330
        %1351 = vst [vmem:[%s213 + $0x10] sm:$0xff] %v1331
        %1352 = vst [vmem:[%s213 + $0x18] sm:$0xff] %v1332
        %1353 = vst [vmem:[%s213 + $0x20] sm:$0xff] %v1333
        %1354 = vst [vmem:[%s213 + $0x28] sm:$0xff] %v1334
        %1355 = vst [vmem:[%s213 + $0x30] sm:$0xff] %v1335
        %1356 = vst [vmem:[%s213 + $0x38] sm:$0xff] %v1336
      $region36: #{upconv3d_block_forward.9} parent=27 // pred_fallthru
        _
      %p1357 = scmp.lt.s32.totalorder %s18, 1
      %s1358 = scalar_select %p1357, %s18, 1
      %p1359 = scmp.lt.s32.totalorder %s19, 7
      %s1360 = scalar_select %p1359, %s19, 7
      %s1361 = smul.addr %s1360, 8
      %s1362 = smul.addr %s1358, 64
      %s1363 = sadd.s32 %s1361, %s1362
      %s1364 = smul.addr %s1363, 8
      %s1365 = scalar_lea.vmem %s2, %s1364
      // Predicated region
      $region37: #{upconv3d_block_forward.9} parent=27 // pred_check
        %p1366 = pneg %p108
      $region38: #{upconv3d_block_forward.9} parent=27 // pred_check_branch
        %1368 = sbr.rel (%p1366) target = $region40
      $region39: #{upconv3d_block_forward.9} parent=27 // pred_region
        _
      $region40: #{upconv3d_block_forward.9} parent=27 // pred_fallthru
        _
    $region28: #{upconv3d_block_forward.9} parent=5 // pred_fallthru
      _
    %p1369 = scmp.le.s32.totalorder 2, %s8
    // Predicated region
    $region41: #{upconv3d_block_forward.9} parent=5 // pred_check
      %p1370 = pneg %p1369
    $region42: #{upconv3d_block_forward.9} parent=5 // pred_check_branch
      %1372 = sbr.rel (%p1370) target = $region44
    $region43: #{upconv3d_block_forward.9} parent=5 // pred_region
      %s1373 = ssub.s32 %s8, 2
      // Predicated region
      $region45: #{upconv3d_block_forward.9} parent=43 // pred_check
        %p1374 = pneg %p114
      $region46: #{upconv3d_block_forward.9} parent=43 // pred_check_branch
        %1376 = sbr.rel (%p1374) target = $region48
      $region47: #{upconv3d_block_forward.9} parent=43 // pred_region
        %p1377 = scmp.lt.s32.totalorder %s21, 1
        %s1378 = scalar_select %p1377, %s21, 1
        %p1379 = scmp.lt.s32.totalorder %s22, 7
        %s1380 = scalar_select %p1379, %s22, 7
        %s1381 = smul.addr %s1380, 8
        %s1382 = smul.addr %s1378, 64
        %s1383 = sadd.s32 %s1381, %s1382
        %s1384 = smul.addr %s1383, 8
        %s1385 = scalar_lea.vmem %s2, %s1384
      $region48: #{upconv3d_block_forward.9} parent=43 // pred_fallthru
        _
    $region44: #{upconv3d_block_forward.9} parent=5 // pred_fallthru
      _
  $region6: #{upconv3d_block_forward.9} parent=0 // loop_footer
    %s12 = sadd.s32 1, %s8
  $region7: #{upconv3d_block_forward.9} parent=0 // loop_footer_branch
    %7 = sbr.rel target = $region3
  $region8: #{upconv3d_block_forward.9} parent=0 // loop_exit
    _

// kernel: upconv3d_block_forward.10
$region0: #{upconv3d_block_forward.10}
  #allocation0 [shape = 'u32[]', space=smem, size = 0x4, offset = 0x4, fixed_abs, tag = 'smem constant byte address 0x4 - core index']
  #allocation1 [shape = 'u32[144,128]{1,0:T(1,128)}', space=vmem, size = 0x12000, scoped, tag = 'internal scratch']
  %s0 = inlined_call_operand.vmem [shape: f32[1024,128], index: 0, kind: input, shape index: {}]
  %s1 = inlined_call_operand.vmem [shape: f32[1,128], index: 1, kind: output, shape index: {0}]
  %s2 = inlined_call_operand.vmem [shape: f32[1,128], index: 2, kind: output, shape index: {1}]
  %3 = xla_tuple %s1, %s2
  %s4 = sld [smem:[#allocation0]]
  $region49: #{upconv3d_block_forward.10} parent=0
    _
  %s6 = ssub.s32 1, %s4
  %s7 = scalar_select 0, %s6, %s4
  loop: start=0, step=1, limit=4
  $region2: #{upconv3d_block_forward.10} parent=0 // loop_pre_header
    _
  $region3: #{upconv3d_block_forward.10} parent=0 // loop_header
    %s9 = sphi 0, %s13
    %p10 = scmp.ge.s32.totalorder %s9, 4
    %s19 = sphi 0, %s21
    %s22 = sphi 0, %s19
    %s23 = sphi 0, %s22
    %s39 = sphi 0, %s23
    %s43 = sphi 0, %s43
    %s45 = sphi 0, %s43
    %s46 = sphi 0, %s45
    %s60 = sphi 0, %s46
    %s64 = sphi 0, %s64
    %s66 = sphi 0, %s64
    %s67 = sphi 0, %s66
    %s81 = sphi 0, %s67
  $region4: #{upconv3d_block_forward.10} parent=0 // loop_header_branch
    %12 = sbr.rel (%p10) target = $region8
  $region5: #{upconv3d_block_forward.10} parent=0 // loop_body
    %s14 = ssub.s32 %s9, 1
    %s15 = ssub.s32 %s9, 2
    %s16 = sadd.s32 %s9, 1
    %s17 = ssub.s32 %s9, %s16
    %p18 = scmp.eq.s32.totalorder %s17, 0
    %s20 = sadd.s32 %s19, 1
    %s21 = scalar_select %p18, %s19, %s20
    %p24 = pneg %p18
    %p25 = scmp.eq.s32.totalorder %s9, 1
    %p26 = por %p24, %p25
    %p27 = scmp.ne.s32.totalorder %s19, %s22
    %p28 = scmp.eq.s32.totalorder %s9, 0
    %p29 = por %p27, %p28
    %p30 = scmp.ne.s32.totalorder %s19, %s22
    %p31 = scmp.eq.s32.totalorder %s14, 1
    %p32 = por %p30, %p31
    %p33 = scmp.ne.s32.totalorder %s22, %s23
    %p34 = scmp.eq.s32.totalorder %s14, 0
    %p35 = por %p33, %p34
    %p36 = scmp.ne.s32.totalorder %s22, %s23
    %p37 = scmp.eq.s32.totalorder %s15, 1
    %p38 = por %p36, %p37
    %p40 = scmp.ne.s32.totalorder %s23, %s39
    %p41 = scmp.eq.s32.totalorder %s15, 0
    %p42 = por %p40, %p41
    %s44 = sadd.s32 %s43, 1
    %p47 = scmp.eq.s32.totalorder %s9, 1
    %p48 = scmp.ne.s32.totalorder %s43, %s45
    %p49 = scmp.eq.s32.totalorder %s9, 0
    %p50 = por %p48, %p49
    %p51 = scmp.ne.s32.totalorder %s43, %s45
    %p52 = scmp.eq.s32.totalorder %s14, 1
    %p53 = por %p51, %p52
    %p54 = scmp.ne.s32.totalorder %s45, %s46
    %p55 = scmp.eq.s32.totalorder %s14, 0
    %p56 = por %p54, %p55
    %p57 = scmp.ne.s32.totalorder %s45, %s46
    %p58 = scmp.eq.s32.totalorder %s15, 1
    %p59 = por %p57, %p58
    %p61 = scmp.ne.s32.totalorder %s46, %s60
    %p62 = scmp.eq.s32.totalorder %s15, 0
    %p63 = por %p61, %p62
    %s65 = sadd.s32 %s64, 1
    %p68 = scmp.eq.s32.totalorder %s9, 1
    %p69 = scmp.ne.s32.totalorder %s64, %s66
    %p70 = scmp.eq.s32.totalorder %s9, 0
    %p71 = por %p69, %p70
    %p72 = scmp.ne.s32.totalorder %s64, %s66
    %p73 = scmp.eq.s32.totalorder %s14, 1
    %p74 = por %p72, %p73
    %p75 = scmp.ne.s32.totalorder %s66, %s67
    %p76 = scmp.eq.s32.totalorder %s14, 0
    %p77 = por %p75, %p76
    %p78 = scmp.ne.s32.totalorder %s66, %s67
    %p79 = scmp.eq.s32.totalorder %s15, 1
    %p80 = por %p78, %p79
    %p82 = scmp.ne.s32.totalorder %s67, %s81
    %p83 = scmp.eq.s32.totalorder %s15, 0
    %p84 = por %p82, %p83
    %p85 = scmp.le.s32.totalorder 1, %s9
    %p86 = scmp.lt.s32.totalorder %s9, 3
    %p87 = pnand %p85, %p86
    %p88 = pneg %p87
    // Predicated region
    $region9: #{upconv3d_block_forward.10} parent=5 // pred_check
      _
    $region10: #{upconv3d_block_forward.10} parent=5 // pred_check_branch
      %90 = sbr.rel (%p87) target = $region12
    $region11: #{upconv3d_block_forward.10} parent=5 // pred_region
      %s91 = ssub.s32 %s9, 1
    $region12: #{upconv3d_block_forward.10} parent=5 // pred_fallthru
      _
    %p92 = scmp.lt.s32.totalorder %s9, 2
    // Predicated region
    $region13: #{upconv3d_block_forward.10} parent=5 // pred_check
      %p93 = pneg %p92
    $region14: #{upconv3d_block_forward.10} parent=5 // pred_check_branch
      %95 = sbr.rel (%p93) target = $region16
    $region15: #{upconv3d_block_forward.10} parent=5 // pred_region
      // Predicated region
      $region17: #{upconv3d_block_forward.10} parent=15 // pred_check
        %p96 = pneg %p29
      $region18: #{upconv3d_block_forward.10} parent=15 // pred_check_branch
        %98 = sbr.rel (%p96) target = $region20
      $region19: #{upconv3d_block_forward.10} parent=15 // pred_region
        %s99 = smul.u32 64, %s9
        %p100 = scmp.lt.s32.totalorder %s99, 127
        %s101 = scalar_select %p100, %s99, 127
        %s102 = smul.addr %s101, 8
        %s103 = scalar_lea.vmem %s0, %s102
        %s104 = smul.u32 64, %s9
      $region20: #{upconv3d_block_forward.10} parent=15 // pred_fallthru
        _
    $region16: #{upconv3d_block_forward.10} parent=5 // pred_fallthru
      _
    %p105 = scmp.le.s32.totalorder 1, %s9
    %p106 = scmp.lt.s32.totalorder %s9, 3
    %p107 = pnand %p105, %p106
    %p108 = pneg %p107
    // Predicated region
    $region21: #{upconv3d_block_forward.10} parent=5 // pred_check
      _
    $region22: #{upconv3d_block_forward.10} parent=5 // pred_check_branch
      %110 = sbr.rel (%p107) target = $region24
    $region23: #{upconv3d_block_forward.10} parent=5 // pred_region
      %s111 = ssub.s32 %s9, 1
      %s112 = smul.u32 64, %s14
      %p113 = scmp.lt.s32.totalorder %s112, 127
      %s114 = scalar_select %p113, %s112, 127
      %s115 = smul.addr %s114, 8
      %s116 = scalar_lea.vmem %s0, %s115
      %p117 = pneg %p35
      %p118 = pneg %p32
      %p119 = pneg %p56
      %p120 = pneg %p53
      %p121 = pneg %p77
      %p122 = pneg %p74
      %s123 = smul.u32 64, %s14
      %p124 = scmp.lt.s32.totalorder %s123, 127
      %s125 = scalar_select %p124, %s123, 127
      %s126 = smul.addr %s125, 8
      %s127 = scalar_lea.vmem %s0, %s126
      %s128 = smul.u32 64, %s14
      %p129 = scmp.eq.s32.totalorder %s14, 0
      // Predicated region
      $region25: #{upconv3d_block_forward.10} parent=23 // pred_check
        %p130 = pneg %p129
      $region26: #{upconv3d_block_forward.10} parent=23 // pred_check_branch
        %132 = sbr.rel (%p130) target = $region28
      $region27: #{upconv3d_block_forward.10} parent=23 // pred_region
        %133 = vst [vmem:[%s1] sm:$0x1] 0.0
        %134 = vst [vmem:[%s2] sm:$0x1] 0.0
      $region28: #{upconv3d_block_forward.10} parent=23 // pred_fallthru
        _
      %v135 = vld [vmem:[%s127] sm:$0xff]
      %v136 = vld [vmem:[%s127 + $0x8] sm:$0xff]
      %v137 = vld [vmem:[%s127 + $0x10] sm:$0xff]
      %v138 = vld [vmem:[%s127 + $0x18] sm:$0xff]
      %v139 = vld [vmem:[%s127 + $0x20] sm:$0xff]
      %v140 = vld [vmem:[%s127 + $0x28] sm:$0xff]
      %v141 = vld [vmem:[%s127 + $0x30] sm:$0xff]
      %v142 = vld [vmem:[%s127 + $0x38] sm:$0xff]
      %v143 = vld [vmem:[%s127 + $0x40] sm:$0xff]
      %v144 = vld [vmem:[%s127 + $0x48] sm:$0xff]
      %v145 = vld [vmem:[%s127 + $0x50] sm:$0xff]
      %v146 = vld [vmem:[%s127 + $0x58] sm:$0xff]
      %v147 = vld [vmem:[%s127 + $0x60] sm:$0xff]
      %v148 = vld [vmem:[%s127 + $0x68] sm:$0xff]
      %v149 = vld [vmem:[%s127 + $0x70] sm:$0xff]
      %v150 = vld [vmem:[%s127 + $0x78] sm:$0xff]
      %v151 = vld [vmem:[%s127 + $0x80] sm:$0xff]
      %v152 = vld [vmem:[%s127 + $0x88] sm:$0xff]
      %v153 = vld [vmem:[%s127 + $0x90] sm:$0xff]
      %v154 = vld [vmem:[%s127 + $0x98] sm:$0xff]
      %v155 = vld [vmem:[%s127 + $0xa0] sm:$0xff]
      %v156 = vld [vmem:[%s127 + $0xa8] sm:$0xff]
      %v157 = vld [vmem:[%s127 + $0xb0] sm:$0xff]
      %v158 = vld [vmem:[%s127 + $0xb8] sm:$0xff]
      %v159 = vld [vmem:[%s127 + $0xc0] sm:$0xff]
      %v160 = vld [vmem:[%s127 + $0xc8] sm:$0xff]
      %v161 = vld [vmem:[%s127 + $0xd0] sm:$0xff]
      %v162 = vld [vmem:[%s127 + $0xd8] sm:$0xff]
      %v163 = vld [vmem:[%s127 + $0xe0] sm:$0xff]
      %v164 = vld [vmem:[%s127 + $0xe8] sm:$0xff]
      %v165 = vld [vmem:[%s127 + $0xf0] sm:$0xff]
      %v166 = vld [vmem:[%s127 + $0xf8] sm:$0xff]
      %v167 = vld [vmem:[%s127 + $0x100] sm:$0xff]
      %v168 = vld [vmem:[%s127 + $0x108] sm:$0xff]
      %v169 = vld [vmem:[%s127 + $0x110] sm:$0xff]
      %v170 = vld [vmem:[%s127 + $0x118] sm:$0xff]
      %v171 = vld [vmem:[%s127 + $0x120] sm:$0xff]
      %v172 = vld [vmem:[%s127 + $0x128] sm:$0xff]
      %v173 = vld [vmem:[%s127 + $0x130] sm:$0xff]
      %v174 = vld [vmem:[%s127 + $0x138] sm:$0xff]
      %v175 = vld [vmem:[%s127 + $0x140] sm:$0xff]
      %v176 = vld [vmem:[%s127 + $0x148] sm:$0xff]
      %v177 = vld [vmem:[%s127 + $0x150] sm:$0xff]
      %v178 = vld [vmem:[%s127 + $0x158] sm:$0xff]
      %v179 = vld [vmem:[%s127 + $0x160] sm:$0xff]
      %v180 = vld [vmem:[%s127 + $0x168] sm:$0xff]
      %v181 = vld [vmem:[%s127 + $0x170] sm:$0xff]
      %v182 = vld [vmem:[%s127 + $0x178] sm:$0xff]
      %v183 = vld [vmem:[%s127 + $0x180] sm:$0xff]
      %v184 = vld [vmem:[%s127 + $0x188] sm:$0xff]
      %v185 = vld [vmem:[%s127 + $0x190] sm:$0xff]
      %v186 = vld [vmem:[%s127 + $0x198] sm:$0xff]
      %v187 = vld [vmem:[%s127 + $0x1a0] sm:$0xff]
      %v188 = vld [vmem:[%s127 + $0x1a8] sm:$0xff]
      %v189 = vld [vmem:[%s127 + $0x1b0] sm:$0xff]
      %v190 = vld [vmem:[%s127 + $0x1b8] sm:$0xff]
      %v191 = vld [vmem:[%s127 + $0x1c0] sm:$0xff]
      %v192 = vld [vmem:[%s127 + $0x1c8] sm:$0xff]
      %v193 = vld [vmem:[%s127 + $0x1d0] sm:$0xff]
      %v194 = vld [vmem:[%s127 + $0x1d8] sm:$0xff]
      %v195 = vld [vmem:[%s127 + $0x1e0] sm:$0xff]
      %v196 = vld [vmem:[%s127 + $0x1e8] sm:$0xff]
      %v197 = vld [vmem:[%s127 + $0x1f0] sm:$0xff]
      %v198 = vld [vmem:[%s127 + $0x1f8] sm:$0xff]
      %v199 = vld [vmem:[%s1] sm:$0x1]
      %v200 = vadd.f32 %v135, %v136
      %v201 = vadd.f32 %v200, %v137
      %v202 = vadd.f32 %v201, %v138
      %v203 = vadd.f32 %v202, %v139
      %v204 = vadd.f32 %v203, %v140
      %v205 = vadd.f32 %v204, %v141
      %v206 = vadd.f32 %v205, %v142
      %v207 = vadd.f32 %v206, %v143
      %v208 = vadd.f32 %v207, %v144
      %v209 = vadd.f32 %v208, %v145
      %v210 = vadd.f32 %v209, %v146
      %v211 = vadd.f32 %v210, %v147
      %v212 = vadd.f32 %v211, %v148
      %v213 = vadd.f32 %v212, %v149
      %v214 = vadd.f32 %v213, %v150
      %v215 = vadd.f32 %v214, %v151
      %v216 = vadd.f32 %v215, %v152
      %v217 = vadd.f32 %v216, %v153
      %v218 = vadd.f32 %v217, %v154
      %v219 = vadd.f32 %v218, %v155
      %v220 = vadd.f32 %v219, %v156
      %v221 = vadd.f32 %v220, %v157
      %v222 = vadd.f32 %v221, %v158
      %v223 = vadd.f32 %v222, %v159
      %v224 = vadd.f32 %v223, %v160
      %v225 = vadd.f32 %v224, %v161
      %v226 = vadd.f32 %v225, %v162
      %v227 = vadd.f32 %v226, %v163
      %v228 = vadd.f32 %v227, %v164
      %v229 = vadd.f32 %v228, %v165
      %v230 = vadd.f32 %v229, %v166
      %v231 = vadd.f32 %v230, %v167
      %v232 = vadd.f32 %v231, %v168
      %v233 = vadd.f32 %v232, %v169
      %v234 = vadd.f32 %v233, %v170
      %v235 = vadd.f32 %v234, %v171
      %v236 = vadd.f32 %v235, %v172
      %v237 = vadd.f32 %v236, %v173
      %v238 = vadd.f32 %v237, %v174
      %v239 = vadd.f32 %v238, %v175
      %v240 = vadd.f32 %v239, %v176
      %v241 = vadd.f32 %v240, %v177
      %v242 = vadd.f32 %v241, %v178
      %v243 = vadd.f32 %v242, %v179
      %v244 = vadd.f32 %v243, %v180
      %v245 = vadd.f32 %v244, %v181
      %v246 = vadd.f32 %v245, %v182
      %v247 = vadd.f32 %v246, %v183
      %v248 = vadd.f32 %v247, %v184
      %v249 = vadd.f32 %v248, %v185
      %v250 = vadd.f32 %v249, %v186
      %v251 = vadd.f32 %v250, %v187
      %v252 = vadd.f32 %v251, %v188
      %v253 = vadd.f32 %v252, %v189
      %v254 = vadd.f32 %v253, %v190
      %v255 = vadd.f32 %v254, %v191
      %v256 = vadd.f32 %v255, %v192
      %v257 = vadd.f32 %v256, %v193
      %v258 = vadd.f32 %v257, %v194
      %v259 = vadd.f32 %v258, %v195
      %v260 = vadd.f32 %v259, %v196
      %v261 = vadd.f32 %v260, %v197
      %v262 = vadd.f32 %v261, %v198
      %v263 = vrot.slane %v262, 4
      %v264 = vadd.f32 %v262, %v263
      %v265 = vrot.slane %v264, 2
      %v266 = vadd.f32 %v264, %v265
      %v267 = vrot.slane %v266, 1
      %v268 = vadd.f32 %v266, %v267
      %v269 = vadd.f32 %v199, %v268
      %270 = vst [vmem:[%s1] sm:$0x1] %v269
      %v271 = vld [vmem:[%s2] sm:$0x1]
      %v272 = vmul.f32 %v135, %v135
      %v273 = vmul.f32 %v136, %v136
      %v274 = vmul.f32 %v137, %v137
      %v275 = vmul.f32 %v138, %v138
      %v276 = vmul.f32 %v139, %v139
      %v277 = vmul.f32 %v140, %v140
      %v278 = vmul.f32 %v141, %v141
      %v279 = vmul.f32 %v142, %v142
      %v280 = vmul.f32 %v143, %v143
      %v281 = vmul.f32 %v144, %v144
      %v282 = vmul.f32 %v145, %v145
      %v283 = vmul.f32 %v146, %v146
      %v284 = vmul.f32 %v147, %v147
      %v285 = vmul.f32 %v148, %v148
      %v286 = vmul.f32 %v149, %v149
      %v287 = vmul.f32 %v150, %v150
      %v288 = vmul.f32 %v151, %v151
      %v289 = vmul.f32 %v152, %v152
      %v290 = vmul.f32 %v153, %v153
      %v291 = vmul.f32 %v154, %v154
      %v292 = vmul.f32 %v155, %v155
      %v293 = vmul.f32 %v156, %v156
      %v294 = vmul.f32 %v157, %v157
      %v295 = vmul.f32 %v158, %v158
      %v296 = vmul.f32 %v159, %v159
      %v297 = vmul.f32 %v160, %v160
      %v298 = vmul.f32 %v161, %v161
      %v299 = vmul.f32 %v162, %v162
      %v300 = vmul.f32 %v163, %v163
      %v301 = vmul.f32 %v164, %v164
      %v302 = vmul.f32 %v165, %v165
      %v303 = vmul.f32 %v166, %v166
      %v304 = vmul.f32 %v167, %v167
      %v305 = vmul.f32 %v168, %v168
      %v306 = vmul.f32 %v169, %v169
      %v307 = vmul.f32 %v170, %v170
      %v308 = vmul.f32 %v171, %v171
      %v309 = vmul.f32 %v172, %v172
      %v310 = vmul.f32 %v173, %v173
      %v311 = vmul.f32 %v174, %v174
      %v312 = vmul.f32 %v175, %v175
      %v313 = vmul.f32 %v176, %v176
      %v314 = vmul.f32 %v177, %v177
      %v315 = vmul.f32 %v178, %v178
      %v316 = vmul.f32 %v179, %v179
      %v317 = vmul.f32 %v180, %v180
      %v318 = vmul.f32 %v181, %v181
      %v319 = vmul.f32 %v182, %v182
      %v320 = vmul.f32 %v183, %v183
      %v321 = vmul.f32 %v184, %v184
      %v322 = vmul.f32 %v185, %v185
      %v323 = vmul.f32 %v186, %v186
      %v324 = vmul.f32 %v187, %v187
      %v325 = vmul.f32 %v188, %v188
      %v326 = vmul.f32 %v189, %v189
      %v327 = vmul.f32 %v190, %v190
      %v328 = vmul.f32 %v191, %v191
      %v329 = vmul.f32 %v192, %v192
      %v330 = vmul.f32 %v193, %v193
      %v331 = vmul.f32 %v194, %v194
      %v332 = vmul.f32 %v195, %v195
      %v333 = vmul.f32 %v196, %v196
      %v334 = vmul.f32 %v197, %v197
      %v335 = vmul.f32 %v198, %v198
      %v336 = vadd.f32 %v272, %v273
      %v337 = vadd.f32 %v336, %v274
      %v338 = vadd.f32 %v337, %v275
      %v339 = vadd.f32 %v338, %v276
      %v340 = vadd.f32 %v339, %v277
      %v341 = vadd.f32 %v340, %v278
      %v342 = vadd.f32 %v341, %v279
      %v343 = vadd.f32 %v342, %v280
      %v344 = vadd.f32 %v343, %v281
      %v345 = vadd.f32 %v344, %v282
      %v346 = vadd.f32 %v345, %v283
      %v347 = vadd.f32 %v346, %v284
      %v348 = vadd.f32 %v347, %v285
      %v349 = vadd.f32 %v348, %v286
      %v350 = vadd.f32 %v349, %v287
      %v351 = vadd.f32 %v350, %v288
      %v352 = vadd.f32 %v351, %v289
      %v353 = vadd.f32 %v352, %v290
      %v354 = vadd.f32 %v353, %v291
      %v355 = vadd.f32 %v354, %v292
      %v356 = vadd.f32 %v355, %v293
      %v357 = vadd.f32 %v356, %v294
      %v358 = vadd.f32 %v357, %v295
      %v359 = vadd.f32 %v358, %v296
      %v360 = vadd.f32 %v359, %v297
      %v361 = vadd.f32 %v360, %v298
      %v362 = vadd.f32 %v361, %v299
      %v363 = vadd.f32 %v362, %v300
      %v364 = vadd.f32 %v363, %v301
      %v365 = vadd.f32 %v364, %v302
      %v366 = vadd.f32 %v365, %v303
      %v367 = vadd.f32 %v366, %v304
      %v368 = vadd.f32 %v367, %v305
      %v369 = vadd.f32 %v368, %v306
      %v370 = vadd.f32 %v369, %v307
      %v371 = vadd.f32 %v370, %v308
      %v372 = vadd.f32 %v371, %v309
      %v373 = vadd.f32 %v372, %v310
      %v374 = vadd.f32 %v373, %v311
      %v375 = vadd.f32 %v374, %v312
      %v376 = vadd.f32 %v375, %v313
      %v377 = vadd.f32 %v376, %v314
      %v378 = vadd.f32 %v377, %v315
      %v379 = vadd.f32 %v378, %v316
      %v380 = vadd.f32 %v379, %v317
      %v381 = vadd.f32 %v380, %v318
      %v382 = vadd.f32 %v381, %v319
      %v383 = vadd.f32 %v382, %v320
      %v384 = vadd.f32 %v383, %v321
      %v385 = vadd.f32 %v384, %v322
      %v386 = vadd.f32 %v385, %v323
      %v387 = vadd.f32 %v386, %v324
      %v388 = vadd.f32 %v387, %v325
      %v389 = vadd.f32 %v388, %v326
      %v390 = vadd.f32 %v389, %v327
      %v391 = vadd.f32 %v390, %v328
      %v392 = vadd.f32 %v391, %v329
      %v393 = vadd.f32 %v392, %v330
      %v394 = vadd.f32 %v393, %v331
      %v395 = vadd.f32 %v394, %v332
      %v396 = vadd.f32 %v395, %v333
      %v397 = vadd.f32 %v396, %v334
      %v398 = vadd.f32 %v397, %v335
      %v399 = vrot.slane %v398, 4
      %v400 = vadd.f32 %v398, %v399
      %v401 = vrot.slane %v400, 2
      %v402 = vadd.f32 %v400, %v401
      %v403 = vrot.slane %v402, 1
      %v404 = vadd.f32 %v402, %v403
      %v405 = vadd.f32 %v271, %v404
      %406 = vst [vmem:[%s2] sm:$0x1] %v405
      // Predicated region
      $region29: #{upconv3d_block_forward.10} parent=23 // pred_check
        %p407 = pneg %p53
      $region30: #{upconv3d_block_forward.10} parent=23 // pred_check_branch
        %409 = sbr.rel (%p407) target = $region32
      $region31: #{upconv3d_block_forward.10} parent=23 // pred_region
        _
      $region32: #{upconv3d_block_forward.10} parent=23 // pred_fallthru
        _
      // Predicated region
      $region33: #{upconv3d_block_forward.10} parent=23 // pred_check
        %p410 = pneg %p74
      $region34: #{upconv3d_block_forward.10} parent=23 // pred_check_branch
        %412 = sbr.rel (%p410) target = $region36
      $region35: #{upconv3d_block_forward.10} parent=23 // pred_region
        _
      $region36: #{upconv3d_block_forward.10} parent=23 // pred_fallthru
        _
      // Predicated region
      $region37: #{upconv3d_block_forward.10} parent=23 // pred_check
        %p413 = pneg %p53
      $region38: #{upconv3d_block_forward.10} parent=23 // pred_check_branch
        %415 = sbr.rel (%p413) target = $region40
      $region39: #{upconv3d_block_forward.10} parent=23 // pred_region
        _
      $region40: #{upconv3d_block_forward.10} parent=23 // pred_fallthru
        _
      // Predicated region
      $region41: #{upconv3d_block_forward.10} parent=23 // pred_check
        %p416 = pneg %p74
      $region42: #{upconv3d_block_forward.10} parent=23 // pred_check_branch
        %418 = sbr.rel (%p416) target = $region44
      $region43: #{upconv3d_block_forward.10} parent=23 // pred_region
        _
      $region44: #{upconv3d_block_forward.10} parent=23 // pred_fallthru
        _
    $region24: #{upconv3d_block_forward.10} parent=5 // pred_fallthru
      _
    %p419 = scmp.le.s32.totalorder 2, %s9
    // Predicated region
    $region45: #{upconv3d_block_forward.10} parent=5 // pred_check
      %p420 = pneg %p419
    $region46: #{upconv3d_block_forward.10} parent=5 // pred_check_branch
      %422 = sbr.rel (%p420) target = $region48
    $region47: #{upconv3d_block_forward.10} parent=5 // pred_region
      %s423 = ssub.s32 %s9, 2
    $region48: #{upconv3d_block_forward.10} parent=5 // pred_fallthru
      _
  $region6: #{upconv3d_block_forward.10} parent=0 // loop_footer
    %s13 = sadd.s32 1, %s9
  $region7: #{upconv3d_block_forward.10} parent=0 // loop_footer_branch
    %8 = sbr.rel target = $region3
  $region8: #{upconv3d_block_forward.10} parent=0 // loop_exit
    _

// kernel: upconv3d_block_forward.11
$region0: #{upconv3d_block_forward.11}
  #allocation0 [shape = 'u32[]', space=smem, size = 0x4, offset = 0x4, fixed_abs, tag = 'smem constant byte address 0x4 - core index']
  #allocation1 [shape = 'u32[144,128]{1,0:T(1,128)}', space=vmem, size = 0x12000, scoped, tag = 'internal scratch']
  %s0 = inlined_call_operand.vmem [shape: f32[1024,128], index: 0, kind: input, shape index: {}]
  %s1 = inlined_call_operand.vmem [shape: f32[1,128], index: 1, kind: input, shape index: {}]
  %s2 = inlined_call_operand.vmem [shape: f32[1,128], index: 2, kind: input, shape index: {}]
  %s3 = inlined_call_operand.vmem [shape: bf16[1024,128], index: 3, kind: output, shape index: {}]
  %s4 = sld [smem:[#allocation0]]
  $region45: #{upconv3d_block_forward.11} parent=0
    _
  %s6 = ssub.s32 1, %s4
  %s7 = scalar_select 0, %s6, %s4
  loop: start=0, step=1, limit=4
  $region2: #{upconv3d_block_forward.11} parent=0 // loop_pre_header
    _
  $region3: #{upconv3d_block_forward.11} parent=0 // loop_header
    %s9 = sphi 0, %s13
    %p10 = scmp.ge.s32.totalorder %s9, 4
    %s19 = sphi 0, %s21
    %s22 = sphi 0, %s19
    %s23 = sphi 0, %s22
    %s39 = sphi 0, %s23
    %s43 = sphi 0, %s43
    %s45 = sphi 0, %s43
    %s46 = sphi 0, %s45
    %s60 = sphi 0, %s46
    %s64 = sphi 0, %s64
    %s66 = sphi 0, %s64
    %s67 = sphi 0, %s66
    %s81 = sphi 0, %s67
    %s87 = sphi 0, %s89
    %s90 = sphi 0, %s87
    %s91 = sphi 0, %s90
    %s107 = sphi 0, %s91
  $region4: #{upconv3d_block_forward.11} parent=0 // loop_header_branch
    %12 = sbr.rel (%p10) target = $region8
  $region5: #{upconv3d_block_forward.11} parent=0 // loop_body
    %s14 = ssub.s32 %s9, 1
    %s15 = ssub.s32 %s9, 2
    %s16 = sadd.s32 %s9, 1
    %s17 = ssub.s32 %s9, %s16
    %p18 = scmp.eq.s32.totalorder %s17, 0
    %s20 = sadd.s32 %s19, 1
    %s21 = scalar_select %p18, %s19, %s20
    %p24 = pneg %p18
    %p25 = scmp.eq.s32.totalorder %s9, 1
    %p26 = por %p24, %p25
    %p27 = scmp.ne.s32.totalorder %s19, %s22
    %p28 = scmp.eq.s32.totalorder %s9, 0
    %p29 = por %p27, %p28
    %p30 = scmp.ne.s32.totalorder %s19, %s22
    %p31 = scmp.eq.s32.totalorder %s14, 1
    %p32 = por %p30, %p31
    %p33 = scmp.ne.s32.totalorder %s22, %s23
    %p34 = scmp.eq.s32.totalorder %s14, 0
    %p35 = por %p33, %p34
    %p36 = scmp.ne.s32.totalorder %s22, %s23
    %p37 = scmp.eq.s32.totalorder %s15, 1
    %p38 = por %p36, %p37
    %p40 = scmp.ne.s32.totalorder %s23, %s39
    %p41 = scmp.eq.s32.totalorder %s15, 0
    %p42 = por %p40, %p41
    %s44 = sadd.s32 %s43, 1
    %p47 = scmp.eq.s32.totalorder %s9, 1
    %p48 = scmp.ne.s32.totalorder %s43, %s45
    %p49 = scmp.eq.s32.totalorder %s9, 0
    %p50 = por %p48, %p49
    %p51 = scmp.ne.s32.totalorder %s43, %s45
    %p52 = scmp.eq.s32.totalorder %s14, 1
    %p53 = por %p51, %p52
    %p54 = scmp.ne.s32.totalorder %s45, %s46
    %p55 = scmp.eq.s32.totalorder %s14, 0
    %p56 = por %p54, %p55
    %p57 = scmp.ne.s32.totalorder %s45, %s46
    %p58 = scmp.eq.s32.totalorder %s15, 1
    %p59 = por %p57, %p58
    %p61 = scmp.ne.s32.totalorder %s46, %s60
    %p62 = scmp.eq.s32.totalorder %s15, 0
    %p63 = por %p61, %p62
    %s65 = sadd.s32 %s64, 1
    %p68 = scmp.eq.s32.totalorder %s9, 1
    %p69 = scmp.ne.s32.totalorder %s64, %s66
    %p70 = scmp.eq.s32.totalorder %s9, 0
    %p71 = por %p69, %p70
    %p72 = scmp.ne.s32.totalorder %s64, %s66
    %p73 = scmp.eq.s32.totalorder %s14, 1
    %p74 = por %p72, %p73
    %p75 = scmp.ne.s32.totalorder %s66, %s67
    %p76 = scmp.eq.s32.totalorder %s14, 0
    %p77 = por %p75, %p76
    %p78 = scmp.ne.s32.totalorder %s66, %s67
    %p79 = scmp.eq.s32.totalorder %s15, 1
    %p80 = por %p78, %p79
    %p82 = scmp.ne.s32.totalorder %s67, %s81
    %p83 = scmp.eq.s32.totalorder %s15, 0
    %p84 = por %p82, %p83
    %s85 = ssub.s32 %s9, %s16
    %p86 = scmp.eq.s32.totalorder %s85, 0
    %s88 = sadd.s32 %s87, 1
    %s89 = scalar_select %p86, %s87, %s88
    %p92 = pneg %p86
    %p93 = scmp.eq.s32.totalorder %s9, 1
    %p94 = por %p92, %p93
    %p95 = scmp.ne.s32.totalorder %s87, %s90
    %p96 = scmp.eq.s32.totalorder %s9, 0
    %p97 = por %p95, %p96
    %p98 = scmp.ne.s32.totalorder %s87, %s90
    %p99 = scmp.eq.s32.totalorder %s14, 1
    %p100 = por %p98, %p99
    %p101 = scmp.ne.s32.totalorder %s90, %s91
    %p102 = scmp.eq.s32.totalorder %s14, 0
    %p103 = por %p101, %p102
    %p104 = scmp.ne.s32.totalorder %s90, %s91
    %p105 = scmp.eq.s32.totalorder %s15, 1
    %p106 = por %p104, %p105
    %p108 = scmp.ne.s32.totalorder %s91, %s107
    %p109 = scmp.eq.s32.totalorder %s15, 0
    %p110 = por %p108, %p109
    %p111 = scmp.le.s32.totalorder 1, %s9
    %p112 = scmp.lt.s32.totalorder %s9, 3
    %p113 = pnand %p111, %p112
    %p114 = pneg %p113
    // Predicated region
    $region9: #{upconv3d_block_forward.11} parent=5 // pred_check
      _
    $region10: #{upconv3d_block_forward.11} parent=5 // pred_check_branch
      %116 = sbr.rel (%p113) target = $region12
    $region11: #{upconv3d_block_forward.11} parent=5 // pred_region
      %s117 = ssub.s32 %s9, 1
      // Predicated region
      $region13: #{upconv3d_block_forward.11} parent=11 // pred_check
        %p118 = pneg %p56
      $region14: #{upconv3d_block_forward.11} parent=11 // pred_check_branch
        %120 = sbr.rel (%p118) target = $region16
      $region15: #{upconv3d_block_forward.11} parent=11 // pred_region
        _
      $region16: #{upconv3d_block_forward.11} parent=11 // pred_fallthru
        _
      // Predicated region
      $region17: #{upconv3d_block_forward.11} parent=11 // pred_check
        %p121 = pneg %p77
      $region18: #{upconv3d_block_forward.11} parent=11 // pred_check_branch
        %123 = sbr.rel (%p121) target = $region20
      $region19: #{upconv3d_block_forward.11} parent=11 // pred_region
        _
      $region20: #{upconv3d_block_forward.11} parent=11 // pred_fallthru
        _
    $region12: #{upconv3d_block_forward.11} parent=5 // pred_fallthru
      _
    %p124 = scmp.lt.s32.totalorder %s9, 2
    // Predicated region
    $region21: #{upconv3d_block_forward.11} parent=5 // pred_check
      %p125 = pneg %p124
    $region22: #{upconv3d_block_forward.11} parent=5 // pred_check_branch
      %127 = sbr.rel (%p125) target = $region24
    $region23: #{upconv3d_block_forward.11} parent=5 // pred_region
      // Predicated region
      $region25: #{upconv3d_block_forward.11} parent=23 // pred_check
        %p128 = pneg %p29
      $region26: #{upconv3d_block_forward.11} parent=23 // pred_check_branch
        %130 = sbr.rel (%p128) target = $region28
      $region27: #{upconv3d_block_forward.11} parent=23 // pred_region
        %s131 = smul.u32 64, %s9
        %p132 = scmp.lt.s32.totalorder %s131, 127
        %s133 = scalar_select %p132, %s131, 127
        %s134 = smul.addr %s133, 8
        %s135 = scalar_lea.vmem %s0, %s134
        %s136 = smul.u32 64, %s9
      $region28: #{upconv3d_block_forward.11} parent=23 // pred_fallthru
        _
    $region24: #{upconv3d_block_forward.11} parent=5 // pred_fallthru
      _
    %p137 = scmp.le.s32.totalorder 1, %s9
    %p138 = scmp.lt.s32.totalorder %s9, 3
    %p139 = pnand %p137, %p138
    %p140 = pneg %p139
    // Predicated region
    $region29: #{upconv3d_block_forward.11} parent=5 // pred_check
      _
    $region30: #{upconv3d_block_forward.11} parent=5 // pred_check_branch
      %142 = sbr.rel (%p139) target = $region32
    $region31: #{upconv3d_block_forward.11} parent=5 // pred_region
      %s143 = ssub.s32 %s9, 1
      %s144 = smul.u32 64, %s14
      %p145 = scmp.lt.s32.totalorder %s144, 127
      %s146 = scalar_select %p145, %s144, 127
      %s147 = smul.addr %s146, 8
      %s148 = scalar_lea.vmem %s0, %s147
      %p149 = pneg %p35
      %p150 = pneg %p32
      %p151 = pneg %p56
      %p152 = pneg %p53
      %p153 = pneg %p77
      %p154 = pneg %p74
      %p155 = pneg %p103
      %p156 = pneg %p100
      %s157 = smul.u32 64, %s14
      %p158 = scmp.lt.s32.totalorder %s157, 127
      %s159 = scalar_select %p158, %s157, 127
      %s160 = smul.addr %s159, 4
      %s161 = scalar_lea.vmem %s3, %s160
      %s162 = smul.u32 64, %s14
      %p163 = scmp.lt.s32.totalorder %s162, 127
      %s164 = scalar_select %p163, %s162, 127
      %s165 = smul.addr %s164, 8
      %s166 = scalar_lea.vmem %s0, %s165
      %s167 = smul.u32 64, %s14
      %s168 = smul.u32 64, %s14
      %p169 = scmp.lt.s32.totalorder %s168, 127
      %s170 = scalar_select %p169, %s168, 127
      %s171 = smul.addr %s170, 4
      %s172 = scalar_lea.vmem %s3, %s171
      %s173 = smul.u32 64, %s14
      %v174 = vld [vmem:[%s166] sm:$0xff]
      %v175 = vld [vmem:[%s166 + $0x8] sm:$0xff]
      %v176 = vld [vmem:[%s166 + $0x10] sm:$0xff]
      %v177 = vld [vmem:[%s166 + $0x18] sm:$0xff]
      %v178 = vld [vmem:[%s166 + $0x20] sm:$0xff]
      %v179 = vld [vmem:[%s166 + $0x28] sm:$0xff]
      %v180 = vld [vmem:[%s166 + $0x30] sm:$0xff]
      %v181 = vld [vmem:[%s166 + $0x38] sm:$0xff]
      %v182 = vld [vmem:[%s166 + $0x40] sm:$0xff]
      %v183 = vld [vmem:[%s166 + $0x48] sm:$0xff]
      %v184 = vld [vmem:[%s166 + $0x50] sm:$0xff]
      %v185 = vld [vmem:[%s166 + $0x58] sm:$0xff]
      %v186 = vld [vmem:[%s166 + $0x60] sm:$0xff]
      %v187 = vld [vmem:[%s166 + $0x68] sm:$0xff]
      %v188 = vld [vmem:[%s166 + $0x70] sm:$0xff]
      %v189 = vld [vmem:[%s166 + $0x78] sm:$0xff]
      %v190 = vld [vmem:[%s166 + $0x80] sm:$0xff]
      %v191 = vld [vmem:[%s166 + $0x88] sm:$0xff]
      %v192 = vld [vmem:[%s166 + $0x90] sm:$0xff]
      %v193 = vld [vmem:[%s166 + $0x98] sm:$0xff]
      %v194 = vld [vmem:[%s166 + $0xa0] sm:$0xff]
      %v195 = vld [vmem:[%s166 + $0xa8] sm:$0xff]
      %v196 = vld [vmem:[%s166 + $0xb0] sm:$0xff]
      %v197 = vld [vmem:[%s166 + $0xb8] sm:$0xff]
      %v198 = vld [vmem:[%s166 + $0xc0] sm:$0xff]
      %v199 = vld [vmem:[%s166 + $0xc8] sm:$0xff]
      %v200 = vld [vmem:[%s166 + $0xd0] sm:$0xff]
      %v201 = vld [vmem:[%s166 + $0xd8] sm:$0xff]
      %v202 = vld [vmem:[%s166 + $0xe0] sm:$0xff]
      %v203 = vld [vmem:[%s166 + $0xe8] sm:$0xff]
      %v204 = vld [vmem:[%s166 + $0xf0] sm:$0xff]
      %v205 = vld [vmem:[%s166 + $0xf8] sm:$0xff]
      %v206 = vld [vmem:[%s166 + $0x100] sm:$0xff]
      %v207 = vld [vmem:[%s166 + $0x108] sm:$0xff]
      %v208 = vld [vmem:[%s166 + $0x110] sm:$0xff]
      %v209 = vld [vmem:[%s166 + $0x118] sm:$0xff]
      %v210 = vld [vmem:[%s166 + $0x120] sm:$0xff]
      %v211 = vld [vmem:[%s166 + $0x128] sm:$0xff]
      %v212 = vld [vmem:[%s166 + $0x130] sm:$0xff]
      %v213 = vld [vmem:[%s166 + $0x138] sm:$0xff]
      %v214 = vld [vmem:[%s166 + $0x140] sm:$0xff]
      %v215 = vld [vmem:[%s166 + $0x148] sm:$0xff]
      %v216 = vld [vmem:[%s166 + $0x150] sm:$0xff]
      %v217 = vld [vmem:[%s166 + $0x158] sm:$0xff]
      %v218 = vld [vmem:[%s166 + $0x160] sm:$0xff]
      %v219 = vld [vmem:[%s166 + $0x168] sm:$0xff]
      %v220 = vld [vmem:[%s166 + $0x170] sm:$0xff]
      %v221 = vld [vmem:[%s166 + $0x178] sm:$0xff]
      %v222 = vld [vmem:[%s166 + $0x180] sm:$0xff]
      %v223 = vld [vmem:[%s166 + $0x188] sm:$0xff]
      %v224 = vld [vmem:[%s166 + $0x190] sm:$0xff]
      %v225 = vld [vmem:[%s166 + $0x198] sm:$0xff]
      %v226 = vld [vmem:[%s166 + $0x1a0] sm:$0xff]
      %v227 = vld [vmem:[%s166 + $0x1a8] sm:$0xff]
      %v228 = vld [vmem:[%s166 + $0x1b0] sm:$0xff]
      %v229 = vld [vmem:[%s166 + $0x1b8] sm:$0xff]
      %v230 = vld [vmem:[%s166 + $0x1c0] sm:$0xff]
      %v231 = vld [vmem:[%s166 + $0x1c8] sm:$0xff]
      %v232 = vld [vmem:[%s166 + $0x1d0] sm:$0xff]
      %v233 = vld [vmem:[%s166 + $0x1d8] sm:$0xff]
      %v234 = vld [vmem:[%s166 + $0x1e0] sm:$0xff]
      %v235 = vld [vmem:[%s166 + $0x1e8] sm:$0xff]
      %v236 = vld [vmem:[%s166 + $0x1f0] sm:$0xff]
      %v237 = vld [vmem:[%s166 + $0x1f8] sm:$0xff]
      %v238 = vld [vmem:[%s1] sm:$0x1]
      %v240 = vlaneseq
      %v241 = vshrl.u32 %v240, 7
      %v242 = vsub.s32 0, %v241
      %v243 = vrot.slane %v238, %v242
      %v245 = vmul.f32 %v174, %v243
      %v246 = vmul.f32 %v175, %v243
      %v247 = vmul.f32 %v176, %v243
      %v248 = vmul.f32 %v177, %v243
      %v249 = vmul.f32 %v178, %v243
      %v250 = vmul.f32 %v179, %v243
      %v251 = vmul.f32 %v180, %v243
      %v252 = vmul.f32 %v181, %v243
      %v253 = vmul.f32 %v182, %v243
      %v254 = vmul.f32 %v183, %v243
      %v255 = vmul.f32 %v184, %v243
      %v256 = vmul.f32 %v185, %v243
      %v257 = vmul.f32 %v186, %v243
      %v258 = vmul.f32 %v187, %v243
      %v259 = vmul.f32 %v188, %v243
      %v260 = vmul.f32 %v189, %v243
      %v261 = vmul.f32 %v190, %v243
      %v262 = vmul.f32 %v191, %v243
      %v263 = vmul.f32 %v192, %v243
      %v264 = vmul.f32 %v193, %v243
      %v265 = vmul.f32 %v194, %v243
      %v266 = vmul.f32 %v195, %v243
      %v267 = vmul.f32 %v196, %v243
      %v268 = vmul.f32 %v197, %v243
      %v269 = vmul.f32 %v198, %v243
      %v270 = vmul.f32 %v199, %v243
      %v271 = vmul.f32 %v200, %v243
      %v272 = vmul.f32 %v201, %v243
      %v273 = vmul.f32 %v202, %v243
      %v274 = vmul.f32 %v203, %v243
      %v275 = vmul.f32 %v204, %v243
      %v276 = vmul.f32 %v205, %v243
      %v277 = vmul.f32 %v206, %v243
      %v278 = vmul.f32 %v207, %v243
      %v279 = vmul.f32 %v208, %v243
      %v280 = vmul.f32 %v209, %v243
      %v281 = vmul.f32 %v210, %v243
      %v282 = vmul.f32 %v211, %v243
      %v283 = vmul.f32 %v212, %v243
      %v284 = vmul.f32 %v213, %v243
      %v285 = vmul.f32 %v214, %v243
      %v286 = vmul.f32 %v215, %v243
      %v287 = vmul.f32 %v216, %v243
      %v288 = vmul.f32 %v217, %v243
      %v289 = vmul.f32 %v218, %v243
      %v290 = vmul.f32 %v219, %v243
      %v291 = vmul.f32 %v220, %v243
      %v292 = vmul.f32 %v221, %v243
      %v293 = vmul.f32 %v222, %v243
      %v294 = vmul.f32 %v223, %v243
      %v295 = vmul.f32 %v224, %v243
      %v296 = vmul.f32 %v225, %v243
      %v297 = vmul.f32 %v226, %v243
      %v298 = vmul.f32 %v227, %v243
      %v299 = vmul.f32 %v228, %v243
      %v300 = vmul.f32 %v229, %v243
      %v301 = vmul.f32 %v230, %v243
      %v302 = vmul.f32 %v231, %v243
      %v303 = vmul.f32 %v232, %v243
      %v304 = vmul.f32 %v233, %v243
      %v305 = vmul.f32 %v234, %v243
      %v306 = vmul.f32 %v235, %v243
      %v307 = vmul.f32 %v236, %v243
      %v308 = vmul.f32 %v237, %v243
      %v309 = vld [vmem:[%s2] sm:$0x1]
      %v311 = vlaneseq
      %v312 = vshrl.u32 %v311, 7
      %v313 = vsub.s32 0, %v312
      %v314 = vrot.slane %v309, %v313
      %v316 = vadd.f32 %v245, %v314
      %v317 = vadd.f32 %v246, %v314
      %v318 = vadd.f32 %v247, %v314
      %v319 = vadd.f32 %v248, %v314
      %v320 = vadd.f32 %v249, %v314
      %v321 = vadd.f32 %v250, %v314
      %v322 = vadd.f32 %v251, %v314
      %v323 = vadd.f32 %v252, %v314
      %v324 = vadd.f32 %v253, %v314
      %v325 = vadd.f32 %v254, %v314
      %v326 = vadd.f32 %v255, %v314
      %v327 = vadd.f32 %v256, %v314
      %v328 = vadd.f32 %v257, %v314
      %v329 = vadd.f32 %v258, %v314
      %v330 = vadd.f32 %v259, %v314
      %v331 = vadd.f32 %v260, %v314
      %v332 = vadd.f32 %v261, %v314
      %v333 = vadd.f32 %v262, %v314
      %v334 = vadd.f32 %v263, %v314
      %v335 = vadd.f32 %v264, %v314
      %v336 = vadd.f32 %v265, %v314
      %v337 = vadd.f32 %v266, %v314
      %v338 = vadd.f32 %v267, %v314
      %v339 = vadd.f32 %v268, %v314
      %v340 = vadd.f32 %v269, %v314
      %v341 = vadd.f32 %v270, %v314
      %v342 = vadd.f32 %v271, %v314
      %v343 = vadd.f32 %v272, %v314
      %v344 = vadd.f32 %v273, %v314
      %v345 = vadd.f32 %v274, %v314
      %v346 = vadd.f32 %v275, %v314
      %v347 = vadd.f32 %v276, %v314
      %v348 = vadd.f32 %v277, %v314
      %v349 = vadd.f32 %v278, %v314
      %v350 = vadd.f32 %v279, %v314
      %v351 = vadd.f32 %v280, %v314
      %v352 = vadd.f32 %v281, %v314
      %v353 = vadd.f32 %v282, %v314
      %v354 = vadd.f32 %v283, %v314
      %v355 = vadd.f32 %v284, %v314
      %v356 = vadd.f32 %v285, %v314
      %v357 = vadd.f32 %v286, %v314
      %v358 = vadd.f32 %v287, %v314
      %v359 = vadd.f32 %v288, %v314
      %v360 = vadd.f32 %v289, %v314
      %v361 = vadd.f32 %v290, %v314
      %v362 = vadd.f32 %v291, %v314
      %v363 = vadd.f32 %v292, %v314
      %v364 = vadd.f32 %v293, %v314
      %v365 = vadd.f32 %v294, %v314
      %v366 = vadd.f32 %v295, %v314
      %v367 = vadd.f32 %v296, %v314
      %v368 = vadd.f32 %v297, %v314
      %v369 = vadd.f32 %v298, %v314
      %v370 = vadd.f32 %v299, %v314
      %v371 = vadd.f32 %v300, %v314
      %v372 = vadd.f32 %v301, %v314
      %v373 = vadd.f32 %v302, %v314
      %v374 = vadd.f32 %v303, %v314
      %v375 = vadd.f32 %v304, %v314
      %v376 = vadd.f32 %v305, %v314
      %v377 = vadd.f32 %v306, %v314
      %v378 = vadd.f32 %v307, %v314
      %v379 = vadd.f32 %v308, %v314
      %v380 = vmax.f32 %v316, 0.0
      %v381 = vmax.f32 %v317, 0.0
      %v382 = vmax.f32 %v318, 0.0
      %v383 = vmax.f32 %v319, 0.0
      %v384 = vmax.f32 %v320, 0.0
      %v385 = vmax.f32 %v321, 0.0
      %v386 = vmax.f32 %v322, 0.0
      %v387 = vmax.f32 %v323, 0.0
      %v388 = vmax.f32 %v324, 0.0
      %v389 = vmax.f32 %v325, 0.0
      %v390 = vmax.f32 %v326, 0.0
      %v391 = vmax.f32 %v327, 0.0
      %v392 = vmax.f32 %v328, 0.0
      %v393 = vmax.f32 %v329, 0.0
      %v394 = vmax.f32 %v330, 0.0
      %v395 = vmax.f32 %v331, 0.0
      %v396 = vmax.f32 %v332, 0.0
      %v397 = vmax.f32 %v333, 0.0
      %v398 = vmax.f32 %v334, 0.0
      %v399 = vmax.f32 %v335, 0.0
      %v400 = vmax.f32 %v336, 0.0
      %v401 = vmax.f32 %v337, 0.0
      %v402 = vmax.f32 %v338, 0.0
      %v403 = vmax.f32 %v339, 0.0
      %v404 = vmax.f32 %v340, 0.0
      %v405 = vmax.f32 %v341, 0.0
      %v406 = vmax.f32 %v342, 0.0
      %v407 = vmax.f32 %v343, 0.0
      %v408 = vmax.f32 %v344, 0.0
      %v409 = vmax.f32 %v345, 0.0
      %v410 = vmax.f32 %v346, 0.0
      %v411 = vmax.f32 %v347, 0.0
      %v412 = vmax.f32 %v348, 0.0
      %v413 = vmax.f32 %v349, 0.0
      %v414 = vmax.f32 %v350, 0.0
      %v415 = vmax.f32 %v351, 0.0
      %v416 = vmax.f32 %v352, 0.0
      %v417 = vmax.f32 %v353, 0.0
      %v418 = vmax.f32 %v354, 0.0
      %v419 = vmax.f32 %v355, 0.0
      %v420 = vmax.f32 %v356, 0.0
      %v421 = vmax.f32 %v357, 0.0
      %v422 = vmax.f32 %v358, 0.0
      %v423 = vmax.f32 %v359, 0.0
      %v424 = vmax.f32 %v360, 0.0
      %v425 = vmax.f32 %v361, 0.0
      %v426 = vmax.f32 %v362, 0.0
      %v427 = vmax.f32 %v363, 0.0
      %v428 = vmax.f32 %v364, 0.0
      %v429 = vmax.f32 %v365, 0.0
      %v430 = vmax.f32 %v366, 0.0
      %v431 = vmax.f32 %v367, 0.0
      %v432 = vmax.f32 %v368, 0.0
      %v433 = vmax.f32 %v369, 0.0
      %v434 = vmax.f32 %v370, 0.0
      %v435 = vmax.f32 %v371, 0.0
      %v436 = vmax.f32 %v372, 0.0
      %v437 = vmax.f32 %v373, 0.0
      %v438 = vmax.f32 %v374, 0.0
      %v439 = vmax.f32 %v375, 0.0
      %v440 = vmax.f32 %v376, 0.0
      %v441 = vmax.f32 %v377, 0.0
      %v442 = vmax.f32 %v378, 0.0
      %v443 = vmax.f32 %v379, 0.0
      %v444 = vpack.c.bf16 %v381, %v380
      %v445 = vpack.c.bf16 %v383, %v382
      %v446 = vpack.c.bf16 %v385, %v384
      %v447 = vpack.c.bf16 %v387, %v386
      %v448 = vpack.c.bf16 %v389, %v388
      %v449 = vpack.c.bf16 %v391, %v390
      %v450 = vpack.c.bf16 %v393, %v392
      %v451 = vpack.c.bf16 %v395, %v394
      %v452 = vpack.c.bf16 %v397, %v396
      %v453 = vpack.c.bf16 %v399, %v398
      %v454 = vpack.c.bf16 %v401, %v400
      %v455 = vpack.c.bf16 %v403, %v402
      %v456 = vpack.c.bf16 %v405, %v404
      %v457 = vpack.c.bf16 %v407, %v406
      %v458 = vpack.c.bf16 %v409, %v408
      %v459 = vpack.c.bf16 %v411, %v410
      %v460 = vpack.c.bf16 %v413, %v412
      %v461 = vpack.c.bf16 %v415, %v414
      %v462 = vpack.c.bf16 %v417, %v416
      %v463 = vpack.c.bf16 %v419, %v418
      %v464 = vpack.c.bf16 %v421, %v420
      %v465 = vpack.c.bf16 %v423, %v422
      %v466 = vpack.c.bf16 %v425, %v424
      %v467 = vpack.c.bf16 %v427, %v426
      %v468 = vpack.c.bf16 %v429, %v428
      %v469 = vpack.c.bf16 %v431, %v430
      %v470 = vpack.c.bf16 %v433, %v432
      %v471 = vpack.c.bf16 %v435, %v434
      %v472 = vpack.c.bf16 %v437, %v436
      %v473 = vpack.c.bf16 %v439, %v438
      %v474 = vpack.c.bf16 %v441, %v440
      %v475 = vpack.c.bf16 %v443, %v442
      %v508 = vunpack.c.l.b16 %v444
      %v509 = vunpack.c.h.b16 %v444
      %v510 = vunpack.c.l.b16 %v445
      %v511 = vunpack.c.h.b16 %v445
      %v512 = vunpack.c.l.b16 %v446
      %v513 = vunpack.c.h.b16 %v446
      %v514 = vunpack.c.l.b16 %v447
      %v515 = vunpack.c.h.b16 %v447
      %v516 = vunpack.c.l.b16 %v448
      %v517 = vunpack.c.h.b16 %v448
      %v518 = vunpack.c.l.b16 %v449
      %v519 = vunpack.c.h.b16 %v449
      %v520 = vunpack.c.l.b16 %v450
      %v521 = vunpack.c.h.b16 %v450
      %v522 = vunpack.c.l.b16 %v451
      %v523 = vunpack.c.h.b16 %v451
      %v524 = vunpack.c.l.b16 %v452
      %v525 = vunpack.c.h.b16 %v452
      %v526 = vunpack.c.l.b16 %v453
      %v527 = vunpack.c.h.b16 %v453
      %v528 = vunpack.c.l.b16 %v454
      %v529 = vunpack.c.h.b16 %v454
      %v530 = vunpack.c.l.b16 %v455
      %v531 = vunpack.c.h.b16 %v455
      %v532 = vunpack.c.l.b16 %v456
      %v533 = vunpack.c.h.b16 %v456
      %v534 = vunpack.c.l.b16 %v457
      %v535 = vunpack.c.h.b16 %v457
      %v536 = vunpack.c.l.b16 %v458
      %v537 = vunpack.c.h.b16 %v458
      %v538 = vunpack.c.l.b16 %v459
      %v539 = vunpack.c.h.b16 %v459
      %v540 = vunpack.c.l.b16 %v460
      %v541 = vunpack.c.h.b16 %v460
      %v542 = vunpack.c.l.b16 %v461
      %v543 = vunpack.c.h.b16 %v461
      %v544 = vunpack.c.l.b16 %v462
      %v545 = vunpack.c.h.b16 %v462
      %v546 = vunpack.c.l.b16 %v463
      %v547 = vunpack.c.h.b16 %v463
      %v548 = vunpack.c.l.b16 %v464
      %v549 = vunpack.c.h.b16 %v464
      %v550 = vunpack.c.l.b16 %v465
      %v551 = vunpack.c.h.b16 %v465
      %v552 = vunpack.c.l.b16 %v466
      %v553 = vunpack.c.h.b16 %v466
      %v554 = vunpack.c.l.b16 %v467
      %v555 = vunpack.c.h.b16 %v467
      %v556 = vunpack.c.l.b16 %v468
      %v557 = vunpack.c.h.b16 %v468
      %v558 = vunpack.c.l.b16 %v469
      %v559 = vunpack.c.h.b16 %v469
      %v560 = vunpack.c.l.b16 %v470
      %v561 = vunpack.c.h.b16 %v470
      %v562 = vunpack.c.l.b16 %v471
      %v563 = vunpack.c.h.b16 %v471
      %v564 = vunpack.c.l.b16 %v472
      %v565 = vunpack.c.h.b16 %v472
      %v566 = vunpack.c.l.b16 %v473
      %v567 = vunpack.c.h.b16 %v473
      %v568 = vunpack.c.l.b16 %v474
      %v569 = vunpack.c.h.b16 %v474
      %v570 = vunpack.c.l.b16 %v475
      %v571 = vunpack.c.h.b16 %v475
      %v572 = vpack.c.b16 %v508, %v508
      %v573 = vpack.c.b16 %v509, %v509
      %v574 = vpack.c.b16 %v510, %v510
      %v575 = vpack.c.b16 %v511, %v511
      %v576 = vpack.c.b16 %v512, %v512
      %v577 = vpack.c.b16 %v513, %v513
      %v578 = vpack.c.b16 %v514, %v514
      %v579 = vpack.c.b16 %v515, %v515
      %v580 = vpack.c.b16 %v516, %v516
      %v581 = vpack.c.b16 %v517, %v517
      %v582 = vpack.c.b16 %v518, %v518
      %v583 = vpack.c.b16 %v519, %v519
      %v584 = vpack.c.b16 %v520, %v520
      %v585 = vpack.c.b16 %v521, %v521
      %v586 = vpack.c.b16 %v522, %v522
      %v587 = vpack.c.b16 %v523, %v523
      %v588 = vpack.c.b16 %v524, %v524
      %v589 = vpack.c.b16 %v525, %v525
      %v590 = vpack.c.b16 %v526, %v526
      %v591 = vpack.c.b16 %v527, %v527
      %v592 = vpack.c.b16 %v528, %v528
      %v593 = vpack.c.b16 %v529, %v529
      %v594 = vpack.c.b16 %v530, %v530
      %v595 = vpack.c.b16 %v531, %v531
      %v596 = vpack.c.b16 %v532, %v532
      %v597 = vpack.c.b16 %v533, %v533
      %v598 = vpack.c.b16 %v534, %v534
      %v599 = vpack.c.b16 %v535, %v535
      %v600 = vpack.c.b16 %v536, %v536
      %v601 = vpack.c.b16 %v537, %v537
      %v602 = vpack.c.b16 %v538, %v538
      %v603 = vpack.c.b16 %v539, %v539
      %v604 = vpack.c.b16 %v540, %v540
      %v605 = vpack.c.b16 %v541, %v541
      %v606 = vpack.c.b16 %v542, %v542
      %v607 = vpack.c.b16 %v543, %v543
      %v608 = vpack.c.b16 %v544, %v544
      %v609 = vpack.c.b16 %v545, %v545
      %v610 = vpack.c.b16 %v546, %v546
      %v611 = vpack.c.b16 %v547, %v547
      %v612 = vpack.c.b16 %v548, %v548
      %v613 = vpack.c.b16 %v549, %v549
      %v614 = vpack.c.b16 %v550, %v550
      %v615 = vpack.c.b16 %v551, %v551
      %v616 = vpack.c.b16 %v552, %v552
      %v617 = vpack.c.b16 %v553, %v553
      %v618 = vpack.c.b16 %v554, %v554
      %v619 = vpack.c.b16 %v555, %v555
      %v620 = vpack.c.b16 %v556, %v556
      %v621 = vpack.c.b16 %v557, %v557
      %v622 = vpack.c.b16 %v558, %v558
      %v623 = vpack.c.b16 %v559, %v559
      %v624 = vpack.c.b16 %v560, %v560
      %v625 = vpack.c.b16 %v561, %v561
      %v626 = vpack.c.b16 %v562, %v562
      %v627 = vpack.c.b16 %v563, %v563
      %v628 = vpack.c.b16 %v564, %v564
      %v629 = vpack.c.b16 %v565, %v565
      %v630 = vpack.c.b16 %v566, %v566
      %v631 = vpack.c.b16 %v567, %v567
      %v632 = vpack.c.b16 %v568, %v568
      %v633 = vpack.c.b16 %v569, %v569
      %v634 = vpack.c.b16 %v570, %v570
      %v635 = vpack.c.b16 %v571, %v571
      %700 = vst [vmem:[%s172] sm:$0xf] %v572
      %701 = vst [vmem:[%s172 + $0x4] sm:$0xf] %v573
      %702 = vst [vmem:[%s172 + $0x8] sm:$0xf] %v574
      %703 = vst [vmem:[%s172 + $0xc] sm:$0xf] %v575
      %704 = vst [vmem:[%s172 + $0x10] sm:$0xf] %v576
      %705 = vst [vmem:[%s172 + $0x14] sm:$0xf] %v577
      %706 = vst [vmem:[%s172 + $0x18] sm:$0xf] %v578
      %707 = vst [vmem:[%s172 + $0x1c] sm:$0xf] %v579
      %708 = vst [vmem:[%s172 + $0x20] sm:$0xf] %v580
      %709 = vst [vmem:[%s172 + $0x24] sm:$0xf] %v581
      %710 = vst [vmem:[%s172 + $0x28] sm:$0xf] %v582
      %711 = vst [vmem:[%s172 + $0x2c] sm:$0xf] %v583
      %712 = vst [vmem:[%s172 + $0x30] sm:$0xf] %v584
      %713 = vst [vmem:[%s172 + $0x34] sm:$0xf] %v585
      %714 = vst [vmem:[%s172 + $0x38] sm:$0xf] %v586
      %715 = vst [vmem:[%s172 + $0x3c] sm:$0xf] %v587
      %716 = vst [vmem:[%s172 + $0x40] sm:$0xf] %v588
      %717 = vst [vmem:[%s172 + $0x44] sm:$0xf] %v589
      %718 = vst [vmem:[%s172 + $0x48] sm:$0xf] %v590
      %719 = vst [vmem:[%s172 + $0x4c] sm:$0xf] %v591
      %720 = vst [vmem:[%s172 + $0x50] sm:$0xf] %v592
      %721 = vst [vmem:[%s172 + $0x54] sm:$0xf] %v593
      %722 = vst [vmem:[%s172 + $0x58] sm:$0xf] %v594
      %723 = vst [vmem:[%s172 + $0x5c] sm:$0xf] %v595
      %724 = vst [vmem:[%s172 + $0x60] sm:$0xf] %v596
      %725 = vst [vmem:[%s172 + $0x64] sm:$0xf] %v597
      %726 = vst [vmem:[%s172 + $0x68] sm:$0xf] %v598
      %727 = vst [vmem:[%s172 + $0x6c] sm:$0xf] %v599
      %728 = vst [vmem:[%s172 + $0x70] sm:$0xf] %v600
      %729 = vst [vmem:[%s172 + $0x74] sm:$0xf] %v601
      %730 = vst [vmem:[%s172 + $0x78] sm:$0xf] %v602
      %731 = vst [vmem:[%s172 + $0x7c] sm:$0xf] %v603
      %732 = vst [vmem:[%s172 + $0x80] sm:$0xf] %v604
      %733 = vst [vmem:[%s172 + $0x84] sm:$0xf] %v605
      %734 = vst [vmem:[%s172 + $0x88] sm:$0xf] %v606
      %735 = vst [vmem:[%s172 + $0x8c] sm:$0xf] %v607
      %736 = vst [vmem:[%s172 + $0x90] sm:$0xf] %v608
      %737 = vst [vmem:[%s172 + $0x94] sm:$0xf] %v609
      %738 = vst [vmem:[%s172 + $0x98] sm:$0xf] %v610
      %739 = vst [vmem:[%s172 + $0x9c] sm:$0xf] %v611
      %740 = vst [vmem:[%s172 + $0xa0] sm:$0xf] %v612
      %741 = vst [vmem:[%s172 + $0xa4] sm:$0xf] %v613
      %742 = vst [vmem:[%s172 + $0xa8] sm:$0xf] %v614
      %743 = vst [vmem:[%s172 + $0xac] sm:$0xf] %v615
      %744 = vst [vmem:[%s172 + $0xb0] sm:$0xf] %v616
      %745 = vst [vmem:[%s172 + $0xb4] sm:$0xf] %v617
      %746 = vst [vmem:[%s172 + $0xb8] sm:$0xf] %v618
      %747 = vst [vmem:[%s172 + $0xbc] sm:$0xf] %v619
      %748 = vst [vmem:[%s172 + $0xc0] sm:$0xf] %v620
      %749 = vst [vmem:[%s172 + $0xc4] sm:$0xf] %v621
      %750 = vst [vmem:[%s172 + $0xc8] sm:$0xf] %v622
      %751 = vst [vmem:[%s172 + $0xcc] sm:$0xf] %v623
      %752 = vst [vmem:[%s172 + $0xd0] sm:$0xf] %v624
      %753 = vst [vmem:[%s172 + $0xd4] sm:$0xf] %v625
      %754 = vst [vmem:[%s172 + $0xd8] sm:$0xf] %v626
      %755 = vst [vmem:[%s172 + $0xdc] sm:$0xf] %v627
      %756 = vst [vmem:[%s172 + $0xe0] sm:$0xf] %v628
      %757 = vst [vmem:[%s172 + $0xe4] sm:$0xf] %v629
      %758 = vst [vmem:[%s172 + $0xe8] sm:$0xf] %v630
      %759 = vst [vmem:[%s172 + $0xec] sm:$0xf] %v631
      %760 = vst [vmem:[%s172 + $0xf0] sm:$0xf] %v632
      %761 = vst [vmem:[%s172 + $0xf4] sm:$0xf] %v633
      %762 = vst [vmem:[%s172 + $0xf8] sm:$0xf] %v634
      %763 = vst [vmem:[%s172 + $0xfc] sm:$0xf] %v635
      %s764 = smul.u32 64, %s14
      %p765 = scmp.lt.s32.totalorder %s764, 127
      %s766 = scalar_select %p765, %s764, 127
      %s767 = smul.addr %s766, 4
      %s768 = scalar_lea.vmem %s3, %s767
      // Predicated region
      $region33: #{upconv3d_block_forward.11} parent=31 // pred_check
        %p769 = pneg %p100
      $region34: #{upconv3d_block_forward.11} parent=31 // pred_check_branch
        %771 = sbr.rel (%p769) target = $region36
      $region35: #{upconv3d_block_forward.11} parent=31 // pred_region
        %s772 = smul.u32 64, %s14
      $region36: #{upconv3d_block_forward.11} parent=31 // pred_fallthru
        _
    $region32: #{upconv3d_block_forward.11} parent=5 // pred_fallthru
      _
    %p773 = scmp.le.s32.totalorder 2, %s9
    // Predicated region
    $region37: #{upconv3d_block_forward.11} parent=5 // pred_check
      %p774 = pneg %p773
    $region38: #{upconv3d_block_forward.11} parent=5 // pred_check_branch
      %776 = sbr.rel (%p774) target = $region40
    $region39: #{upconv3d_block_forward.11} parent=5 // pred_region
      %s777 = ssub.s32 %s9, 2
      // Predicated region
      $region41: #{upconv3d_block_forward.11} parent=39 // pred_check
        %p778 = pneg %p106
      $region42: #{upconv3d_block_forward.11} parent=39 // pred_check_branch
        %780 = sbr.rel (%p778) target = $region44
      $region43: #{upconv3d_block_forward.11} parent=39 // pred_region
        %s781 = smul.u32 64, %s15
        %p782 = scmp.lt.s32.totalorder %s781, 127
        %s783 = scalar_select %p782, %s781, 127
        %s784 = smul.addr %s783, 4
        %s785 = scalar_lea.vmem %s3, %s784
      $region44: #{upconv3d_block_forward.11} parent=39 // pred_fallthru
        _
    $region40: #{upconv3d_block_forward.11} parent=5 // pred_fallthru
      _
  $region6: #{upconv3d_block_forward.11} parent=0 // loop_footer
    %s13 = sadd.s32 1, %s9
  $region7: #{upconv3d_block_forward.11} parent=0 // loop_footer_branch
    %8 = sbr.rel target = $region3
  $region8: #{upconv3d_block_forward.11} parent=0 // loop_exit
    _

// kernel: upconv3d_block_forward.12
$region0: #{upconv3d_block_forward.12}
  #allocation0 [shape = 'u32[]', space=smem, size = 0x4, offset = 0x4, fixed_abs, tag = 'smem constant byte address 0x4 - core index']
  #allocation1 [shape = 'u32[144,128]{1,0:T(1,128)}', space=vmem, size = 0x12000, scoped, tag = 'internal scratch']
  #allocation2 [shape = 'f32[64,128]{1,0:T(8,128)}', space=vmem, size = 0x8000, scoped, tag = 'scratch operand']
  %s0 = inlined_call_operand.vmem [shape: bf16[2,10,10,10,128], index: 0, kind: input, shape index: {}]
  %s1 = inlined_call_operand.vmem [shape: bf16[3,3,3,128,128], index: 1, kind: input, shape index: {}]
  %s2 = inlined_call_operand.vmem [shape: f32[2,8,64,128], index: 2, kind: output, shape index: {}]
  %s3 = sld [smem:[#allocation0]]
  $region49: #{upconv3d_block_forward.12} parent=0
    _
  %s5 = ssub.s32 1, %s3
  %s6 = scalar_select 0, %s5, %s3
  loop: start=0, step=1, limit=50
  $region2: #{upconv3d_block_forward.12} parent=0 // loop_pre_header
    _
  $region3: #{upconv3d_block_forward.12} parent=0 // loop_header
    %s8 = sphi 0, %s12
    %p9 = scmp.ge.s32.totalorder %s8, 50
    %s15 = sphi 0, %s34
    %s16 = sphi 0, %s30
    %s17 = sphi 0, %s26
    %s18 = sphi 0, %s15
    %s19 = sphi 0, %s16
    %s20 = sphi 0, %s17
    %s21 = sphi 0, %s18
    %s22 = sphi 0, %s19
    %s23 = sphi 0, %s20
    %s41 = sphi 0, %s43
    %s44 = sphi 0, %s41
    %s45 = sphi 0, %s44
    %s61 = sphi 0, %s45
    %s67 = sphi 0, %s69
    %s70 = sphi 0, %s67
    %s71 = sphi 0, %s70
    %s87 = sphi 0, %s71
    %s95 = sphi 0, %s97
    %s98 = sphi 0, %s95
    %s99 = sphi 0, %s98
    %s115 = sphi 0, %s99
  $region4: #{upconv3d_block_forward.12} parent=0 // loop_header_branch
    %11 = sbr.rel (%p9) target = $region8
  $region5: #{upconv3d_block_forward.12} parent=0 // loop_body
    %s13 = ssub.s32 %s8, 1
    %s14 = ssub.s32 %s8, 2
    %s24 = sadd.s32 1, %s17
    %p25 = scmp.ge.s32.totalorder %s24, 3
    %s26 = scalar_select %p25, 0, %s24
    %s27 = sadd.s32 1, %s16
    %s28 = scalar_select %p25, %s27, %s16
    %p29 = scmp.ge.s32.totalorder %s28, 8
    %s30 = scalar_select %p29, 0, %s28
    %s31 = sadd.s32 1, %s15
    %s32 = scalar_select %p29, %s31, %s15
    %p33 = scmp.ge.s32.totalorder %s32, 2
    %s34 = scalar_select %p33, 0, %s32
    %s35 = sadd.s32 %s16, %s17
    %s36 = sadd.s32 %s30, %s26
    %s37 = ssub.s32 %s15, %s34
    %s38 = ssub.s32 %s35, %s36
    %s39 = sor.u32 %s37, %s38
    %p40 = scmp.eq.s32.totalorder %s39, 0
    %s42 = sadd.s32 %s41, 1
    %s43 = scalar_select %p40, %s41, %s42
    %p46 = pneg %p40
    %p47 = scmp.eq.s32.totalorder %s8, 47
    %p48 = por %p46, %p47
    %p49 = scmp.ne.s32.totalorder %s41, %s44
    %p50 = scmp.eq.s32.totalorder %s8, 0
    %p51 = por %p49, %p50
    %p52 = scmp.ne.s32.totalorder %s41, %s44
    %p53 = scmp.eq.s32.totalorder %s13, 47
    %p54 = por %p52, %p53
    %p55 = scmp.ne.s32.totalorder %s44, %s45
    %p56 = scmp.eq.s32.totalorder %s13, 0
    %p57 = por %p55, %p56
    %p58 = scmp.ne.s32.totalorder %s44, %s45
    %p59 = scmp.eq.s32.totalorder %s14, 47
    %p60 = por %p58, %p59
    %p62 = scmp.ne.s32.totalorder %s45, %s61
    %p63 = scmp.eq.s32.totalorder %s14, 0
    %p64 = por %p62, %p63
    %s65 = ssub.s32 %s17, %s26
    %p66 = scmp.eq.s32.totalorder %s65, 0
    %s68 = sadd.s32 %s67, 1
    %s69 = scalar_select %p66, %s67, %s68
    %p72 = pneg %p66
    %p73 = scmp.eq.s32.totalorder %s8, 47
    %p74 = por %p72, %p73
    %p75 = scmp.ne.s32.totalorder %s67, %s70
    %p76 = scmp.eq.s32.totalorder %s8, 0
    %p77 = por %p75, %p76
    %p78 = scmp.ne.s32.totalorder %s67, %s70
    %p79 = scmp.eq.s32.totalorder %s13, 47
    %p80 = por %p78, %p79
    %p81 = scmp.ne.s32.totalorder %s70, %s71
    %p82 = scmp.eq.s32.totalorder %s13, 0
    %p83 = por %p81, %p82
    %p84 = scmp.ne.s32.totalorder %s70, %s71
    %p85 = scmp.eq.s32.totalorder %s14, 47
    %p86 = por %p84, %p85
    %p88 = scmp.ne.s32.totalorder %s71, %s87
    %p89 = scmp.eq.s32.totalorder %s14, 0
    %p90 = por %p88, %p89
    %s91 = ssub.s32 %s15, %s34
    %s92 = ssub.s32 %s16, %s30
    %s93 = sor.u32 %s91, %s92
    %p94 = scmp.eq.s32.totalorder %s93, 0
    %s96 = sadd.s32 %s95, 1
    %s97 = scalar_select %p94, %s95, %s96
    %p100 = pneg %p94
    %p101 = scmp.eq.s32.totalorder %s8, 47
    %p102 = por %p100, %p101
    %p103 = scmp.ne.s32.totalorder %s95, %s98
    %p104 = scmp.eq.s32.totalorder %s8, 0
    %p105 = por %p103, %p104
    %p106 = scmp.ne.s32.totalorder %s95, %s98
    %p107 = scmp.eq.s32.totalorder %s13, 47
    %p108 = por %p106, %p107
    %p109 = scmp.ne.s32.totalorder %s98, %s99
    %p110 = scmp.eq.s32.totalorder %s13, 0
    %p111 = por %p109, %p110
    %p112 = scmp.ne.s32.totalorder %s98, %s99
    %p113 = scmp.eq.s32.totalorder %s14, 47
    %p114 = por %p112, %p113
    %p116 = scmp.ne.s32.totalorder %s99, %s115
    %p117 = scmp.eq.s32.totalorder %s14, 0
    %p118 = por %p116, %p117
    %p119 = scmp.le.s32.totalorder 1, %s8
    %p120 = scmp.lt.s32.totalorder %s8, 49
    %p121 = pnand %p119, %p120
    %p122 = pneg %p121
    // Predicated region
    $region9: #{upconv3d_block_forward.12} parent=5 // pred_check
      _
    $region10: #{upconv3d_block_forward.12} parent=5 // pred_check_branch
      %124 = sbr.rel (%p121) target = $region12
    $region11: #{upconv3d_block_forward.12} parent=5 // pred_region
      %s125 = ssub.s32 %s8, 1
    $region12: #{upconv3d_block_forward.12} parent=5 // pred_fallthru
      _
    %p126 = scmp.lt.s32.totalorder %s8, 48
    // Predicated region
    $region13: #{upconv3d_block_forward.12} parent=5 // pred_check
      %p127 = pneg %p126
    $region14: #{upconv3d_block_forward.12} parent=5 // pred_check_branch
      %129 = sbr.rel (%p127) target = $region16
    $region15: #{upconv3d_block_forward.12} parent=5 // pred_region
      // Predicated region
      $region17: #{upconv3d_block_forward.12} parent=15 // pred_check
        %p130 = pneg %p51
      $region18: #{upconv3d_block_forward.12} parent=15 // pred_check_branch
        %132 = sbr.rel (%p130) target = $region20
      $region19: #{upconv3d_block_forward.12} parent=15 // pred_region
        %s133 = sadd.s32 %s16, %s17
        %p134 = scmp.lt.s32.totalorder %s15, 1
        %s135 = scalar_select %p134, %s15, 1
        %p136 = scmp.lt.s32.totalorder %s133, 9
        %s137 = scalar_select %p136, %s133, 9
        %s138 = smul.addr %s137, 20
        %s139 = smul.addr %s135, 200
        %s140 = sadd.s32 %s138, %s139
        %s141 = smul.addr %s140, 4
        %s142 = scalar_lea.vmem %s0, %s141
        %s143 = sadd.s32 %s16, %s17
      $region20: #{upconv3d_block_forward.12} parent=15 // pred_fallthru
        _
      // Predicated region
      $region21: #{upconv3d_block_forward.12} parent=15 // pred_check
        %p144 = pneg %p77
      $region22: #{upconv3d_block_forward.12} parent=15 // pred_check_branch
        %146 = sbr.rel (%p144) target = $region24
      $region23: #{upconv3d_block_forward.12} parent=15 // pred_region
        %p147 = scmp.lt.s32.totalorder %s17, 2
        %s148 = scalar_select %p147, %s17, 2
        %s149 = smul.addr %s148, 144
        %s150 = smul.addr %s149, 4
        %s151 = scalar_lea.vmem %s1, %s150
      $region24: #{upconv3d_block_forward.12} parent=15 // pred_fallthru
        _
    $region16: #{upconv3d_block_forward.12} parent=5 // pred_fallthru
      _
    %p152 = scmp.le.s32.totalorder 1, %s8
    %p153 = scmp.lt.s32.totalorder %s8, 49
    %p154 = pnand %p152, %p153
    %p155 = pneg %p154
    // Predicated region
    $region25: #{upconv3d_block_forward.12} parent=5 // pred_check
      _
    $region26: #{upconv3d_block_forward.12} parent=5 // pred_check_branch
      %157 = sbr.rel (%p154) target = $region28
    $region27: #{upconv3d_block_forward.12} parent=5 // pred_region
      %s158 = ssub.s32 %s8, 1
      %s159 = sadd.s32 %s19, %s20
      %p160 = scmp.lt.s32.totalorder %s18, 1
      %s161 = scalar_select %p160, %s18, 1
      %p162 = scmp.lt.s32.totalorder %s159, 9
      %s163 = scalar_select %p162, %s159, 9
      %s164 = smul.addr %s163, 20
      %s165 = smul.addr %s161, 200
      %s166 = sadd.s32 %s164, %s165
      %s167 = smul.addr %s166, 4
      %s168 = scalar_lea.vmem %s0, %s167
      %p169 = pneg %p57
      %p170 = pneg %p54
      %p171 = scmp.lt.s32.totalorder %s20, 2
      %s172 = scalar_select %p171, %s20, 2
      %s173 = smul.addr %s172, 144
      %s174 = smul.addr %s173, 4
      %s175 = scalar_lea.vmem %s1, %s174
      %p176 = pneg %p83
      %p177 = pneg %p80
      %p178 = pneg %p111
      %p179 = pneg %p108
      %p180 = scmp.lt.s32.totalorder %s18, 1
      %s181 = scalar_select %p180, %s18, 1
      %p182 = scmp.lt.s32.totalorder %s19, 7
      %s183 = scalar_select %p182, %s19, 7
      %s184 = smul.addr %s183, 8
      %s185 = smul.addr %s181, 64
      %s186 = sadd.s32 %s184, %s185
      %s187 = smul.addr %s186, 8
      %s188 = scalar_lea.vmem %s2, %s187
      %s189 = sadd.s32 %s19, %s20
      %p190 = scmp.lt.s32.totalorder %s18, 1
      %s191 = scalar_select %p190, %s18, 1
      %p192 = scmp.lt.s32.totalorder %s189, 9
      %s193 = scalar_select %p192, %s189, 9
      %s194 = smul.addr %s193, 20
      %s195 = smul.addr %s191, 200
      %s196 = sadd.s32 %s194, %s195
      %s197 = smul.addr %s196, 4
      %s198 = scalar_lea.vmem %s0, %s197
      %s199 = sadd.s32 %s19, %s20
      %p200 = scmp.lt.s32.totalorder %s20, 2
      %s201 = scalar_select %p200, %s20, 2
      %s202 = smul.addr %s201, 144
      %s203 = smul.addr %s202, 4
      %s204 = scalar_lea.vmem %s1, %s203
      %p205 = scmp.lt.s32.totalorder %s18, 1
      %s206 = scalar_select %p205, %s18, 1
      %p207 = scmp.lt.s32.totalorder %s19, 7
      %s208 = scalar_select %p207, %s19, 7
      %s209 = smul.addr %s208, 8
      %s210 = smul.addr %s206, 64
      %s211 = sadd.s32 %s209, %s210
      %s212 = smul.addr %s211, 8
      %s213 = scalar_lea.vmem %s2, %s212
      %p215 = scmp.eq.s32.totalorder %s20, 0
      // Predicated region
      $region29: #{upconv3d_block_forward.12} parent=27 // pred_check
        %p216 = pneg %p215
      $region30: #{upconv3d_block_forward.12} parent=27 // pred_check_branch
        %218 = sbr.rel (%p216) target = $region32
      $region31: #{upconv3d_block_forward.12} parent=27 // pred_region
        %219 = vst [vmem:[#allocation2] sm:$0xff] 0.0
        %220 = vst [vmem:[#allocation2 + $0x8] sm:$0xff] 0.0
        %221 = vst [vmem:[#allocation2 + $0x10] sm:$0xff] 0.0
        %222 = vst [vmem:[#allocation2 + $0x18] sm:$0xff] 0.0
        %223 = vst [vmem:[#allocation2 + $0x20] sm:$0xff] 0.0
        %224 = vst [vmem:[#allocation2 + $0x28] sm:$0xff] 0.0
        %225 = vst [vmem:[#allocation2 + $0x30] sm:$0xff] 0.0
        %226 = vst [vmem:[#allocation2 + $0x38] sm:$0xff] 0.0
      $region32: #{upconv3d_block_forward.12} parent=27 // pred_fallthru
        _
      %v227 = vld [vmem:[%s198] sm:$0xf]
      %v228 = vld [vmem:[%s198 + $0x4] sm:$0x1]
      %v229 = vld [vmem:[%s198 + $0x8] sm:$0xf]
      %v230 = vld [vmem:[%s198 + $0xc] sm:$0x1]
      %v231 = vld [vmem:[%s198 + $0x10] sm:$0xf]
      %v232 = vld [vmem:[%s198 + $0x14] sm:$0x1]
      %v233 = vld [vmem:[%s198 + $0x18] sm:$0xf]
      %v234 = vld [vmem:[%s198 + $0x1c] sm:$0x1]
      %v235 = vld [vmem:[%s198 + $0x20] sm:$0xf]
      %v236 = vld [vmem:[%s198 + $0x24] sm:$0x1]
      %v237 = vld [vmem:[%s198 + $0x28] sm:$0xf]
      %v238 = vld [vmem:[%s198 + $0x2c] sm:$0x1]
      %v239 = vld [vmem:[%s198 + $0x30] sm:$0xf]
      %v240 = vld [vmem:[%s198 + $0x34] sm:$0x1]
      %v241 = vld [vmem:[%s198 + $0x38] sm:$0xf]
      %v242 = vld [vmem:[%s198 + $0x3c] sm:$0x1]
      %v243 = vld [vmem:[%s198 + $0x40] sm:$0xf]
      %v244 = vld [vmem:[%s198 + $0x44] sm:$0x1]
      %v245 = vld [vmem:[%s198 + $0x48] sm:$0xf]
      %v246 = vld [vmem:[%s198 + $0x4c] sm:$0x1]
      %v247 = vld [vmem:[#allocation2] sm:$0xff]
      %v248 = vld [vmem:[#allocation2 + $0x8] sm:$0xff]
      %v249 = vld [vmem:[#allocation2 + $0x10] sm:$0xff]
      %v250 = vld [vmem:[#allocation2 + $0x18] sm:$0xff]
      %v251 = vld [vmem:[#allocation2 + $0x20] sm:$0xff]
      %v252 = vld [vmem:[#allocation2 + $0x28] sm:$0xff]
      %v253 = vld [vmem:[#allocation2 + $0x30] sm:$0xff]
      %v254 = vld [vmem:[#allocation2 + $0x38] sm:$0xff]
      %v255 = vld [vmem:[%s204] sm:$0xf]
      %v256 = vld [vmem:[%s204 + $0x4] sm:$0xf]
      %v257 = vld [vmem:[%s204 + $0x8] sm:$0xf]
      %v258 = vld [vmem:[%s204 + $0xc] sm:$0xf]
      %v259 = vld [vmem:[%s204 + $0x10] sm:$0xf]
      %v260 = vld [vmem:[%s204 + $0x14] sm:$0xf]
      %v261 = vld [vmem:[%s204 + $0x18] sm:$0xf]
      %v262 = vld [vmem:[%s204 + $0x1c] sm:$0xf]
      %v263 = vld [vmem:[%s204 + $0x20] sm:$0xf]
      %v264 = vld [vmem:[%s204 + $0x24] sm:$0xf]
      %v265 = vld [vmem:[%s204 + $0x28] sm:$0xf]
      %v266 = vld [vmem:[%s204 + $0x2c] sm:$0xf]
      %v267 = vld [vmem:[%s204 + $0x30] sm:$0xf]
      %v268 = vld [vmem:[%s204 + $0x34] sm:$0xf]
      %v269 = vld [vmem:[%s204 + $0x38] sm:$0xf]
      %v270 = vld [vmem:[%s204 + $0x3c] sm:$0xf]
      %v279 = vunpack.c.l.b16 %v227
      %v280 = vunpack.c.l.b16 %v229
      %v281 = vunpack.c.l.b16 %v231
      %v282 = vunpack.c.l.b16 %v233
      %v283 = vunpack.c.l.b16 %v235
      %v284 = vunpack.c.l.b16 %v237
      %v285 = vunpack.c.l.b16 %v239
      %v286 = vunpack.c.l.b16 %v241
      %v287 = vpack.c.b16 %v280, %v279
      %v288 = vpack.c.b16 %v282, %v281
      %v289 = vpack.c.b16 %v284, %v283
      %v290 = vpack.c.b16 %v286, %v285
      %v311 = vunpack.c.l.b16 %v255
      %v312 = vunpack.c.l.b16 %v256
      %v313 = vunpack.c.l.b16 %v257
      %v314 = vunpack.c.l.b16 %v258
      %v315 = vunpack.c.l.b16 %v259
      %v316 = vunpack.c.l.b16 %v260
      %v317 = vunpack.c.l.b16 %v261
      %v318 = vunpack.c.l.b16 %v262
      %v319 = vunpack.c.l.b16 %v263
      %v320 = vunpack.c.l.b16 %v264
      %v321 = vunpack.c.l.b16 %v265
      %v322 = vunpack.c.l.b16 %v266
      %v323 = vunpack.c.l.b16 %v267
      %v324 = vunpack.c.l.b16 %v268
      %v325 = vunpack.c.l.b16 %v269
      %v326 = vunpack.c.l.b16 %v270
      %v327 = vpack.c.b16 %v312, %v311
      %v328 = vpack.c.b16 %v314, %v313
      %v329 = vpack.c.b16 %v316, %v315
      %v330 = vpack.c.b16 %v318, %v317
      %v331 = vpack.c.b16 %v320, %v319
      %v332 = vpack.c.b16 %v322, %v321
      %v333 = vpack.c.b16 %v324, %v323
      %v334 = vpack.c.b16 %v326, %v325
      %343 = vmatprep.subr.bf16.mxu0 0
      %344 = vmatpush1.bf16.msra.mxu0 %v327
      %345 = vmatprep.subr.bf16.mxu0 0
      %346 = vmatpush1.bf16.msra.mxu0 %v328
      %347 = vmatprep.subr.bf16.mxu0 0
      %348 = vmatpush1.bf16.msra.mxu0 %v329
      %349 = vmatprep.subr.bf16.mxu0 0
      %350 = vmatpush1.bf16.msra.mxu0 %v330
      %351 = vmatprep.subr.bf16.mxu0 0
      %352 = vmatpush1.bf16.msra.mxu0 %v331
      %353 = vmatprep.subr.bf16.mxu0 0
      %354 = vmatpush1.bf16.msra.mxu0 %v332
      %355 = vmatprep.subr.bf16.mxu0 0
      %356 = vmatpush1.bf16.msra.mxu0 %v333
      %357 = vmatprep.subr.bf16.mxu0 0
      %358 = vmatpush1.bf16.msra.mxu0 %v334
      %359 = vmatprep.subr.bf16.mxu0 0
      %360 = vmatpush1.bf16.msra.mxu0 0
      %361 = vmatprep.subr.bf16.mxu0 0
      %362 = vmatpush1.bf16.msra.mxu0 0
      %363 = vmatprep.subr.bf16.mxu0 0
      %364 = vmatpush1.bf16.msra.mxu0 0
      %365 = vmatprep.subr.bf16.mxu0 0
      %366 = vmatpush1.bf16.msra.mxu0 0
      %367 = vmatprep.subr.bf16.mxu0 0
      %368 = vmatpush1.bf16.msra.mxu0 0
      %369 = vmatprep.subr.bf16.mxu0 0
      %370 = vmatpush1.bf16.msra.mxu0 0
      %371 = vmatprep.subr.bf16.mxu0 0
      %372 = vmatpush1.bf16.msra.mxu0 0
      %373 = vmatprep.subr.bf16.mxu0 0
      %374 = vmatpush1.bf16.msra.mxu0 0
      %375 = vmatprep.mubr.bf16.mxu0 0
      %376 = vmatmul.mubr.bf16.gmra.mrb[0].mxu0 %v287
      %v377 = vpop.f32.mrb[0].mxu0
      %v378 = vadd.f32 0.0, %v377
      %v379 = vpop.f32.mrb[0].mxu0
      %v380 = vpop.f32.mrb[0].mxu0
      %v381 = vadd.f32 0.0, %v380
      %v382 = vpop.f32.mrb[0].mxu0
      %383 = vmatprep.mubr.bf16.mxu0 0
      %384 = vmatmul.mubr.bf16.gmra.mrb[0].mxu0 %v288
      %v385 = vpop.f32.mrb[0].mxu0
      %v386 = vadd.f32 0.0, %v385
      %v387 = vpop.f32.mrb[0].mxu0
      %v388 = vpop.f32.mrb[0].mxu0
      %v389 = vadd.f32 0.0, %v388
      %v390 = vpop.f32.mrb[0].mxu0
      %391 = vmatprep.mubr.bf16.mxu0 0
      %392 = vmatmul.mubr.bf16.gmra.mrb[0].mxu0 %v289
      %v393 = vpop.f32.mrb[0].mxu0
      %v394 = vadd.f32 0.0, %v393
      %v395 = vpop.f32.mrb[0].mxu0
      %v396 = vpop.f32.mrb[0].mxu0
      %v397 = vadd.f32 0.0, %v396
      %v398 = vpop.f32.mrb[0].mxu0
      %399 = vmatprep.mubr.bf16.mxu0 0
      %400 = vmatmul.mubr.bf16.gmra.mrb[0].mxu0 %v290
      %v401 = vpop.f32.mrb[0].mxu0
      %v402 = vadd.f32 0.0, %v401
      %v403 = vpop.f32.mrb[0].mxu0
      %v404 = vpop.f32.mrb[0].mxu0
      %v405 = vadd.f32 0.0, %v404
      %v406 = vpop.f32.mrb[0].mxu0
      %407 = vdwg.mxu0
      %v408 = vadd.f32 %v247, %v378
      %v409 = vadd.f32 %v248, %v381
      %v410 = vadd.f32 %v249, %v386
      %v411 = vadd.f32 %v250, %v389
      %v412 = vadd.f32 %v251, %v394
      %v413 = vadd.f32 %v252, %v397
      %v414 = vadd.f32 %v253, %v402
      %v415 = vadd.f32 %v254, %v405
      %vm416 = vsmask.f32 3328
      %vm417 = vsmask.f32 7440
      %vm418 = vmor %vm416, %vm417
      %v420 = vshrl.u32 %v227, 16
      %v422 = vrot.slane %v420, 4
      %v423 = vshll.u32 %v227, 16
      %v425 = vrot.slane %v423, 5
      %v426 = vor.u32 %v422, %v425
      %v427 = vrot.slane %v426, 4
      %v429 = vshll.u32 %v228, 16
      %v431 = vrot.slane %v429, 5
      %v432 = vsel %vm418, %v427, %v431
      %v434 = vshrl.u32 %v229, 16
      %v436 = vrot.slane %v434, 4
      %v437 = vshll.u32 %v229, 16
      %v439 = vrot.slane %v437, 5
      %v440 = vor.u32 %v436, %v439
      %v441 = vrot.slane %v440, 4
      %v443 = vshll.u32 %v230, 16
      %v445 = vrot.slane %v443, 5
      %v446 = vsel %vm418, %v441, %v445
      %v448 = vshrl.u32 %v231, 16
      %v450 = vrot.slane %v448, 4
      %v451 = vshll.u32 %v231, 16
      %v453 = vrot.slane %v451, 5
      %v454 = vor.u32 %v450, %v453
      %v455 = vrot.slane %v454, 4
      %v457 = vshll.u32 %v232, 16
      %v459 = vrot.slane %v457, 5
      %v460 = vsel %vm418, %v455, %v459
      %v462 = vshrl.u32 %v233, 16
      %v464 = vrot.slane %v462, 4
      %v465 = vshll.u32 %v233, 16
      %v467 = vrot.slane %v465, 5
      %v468 = vor.u32 %v464, %v467
      %v469 = vrot.slane %v468, 4
      %v471 = vshll.u32 %v234, 16
      %v473 = vrot.slane %v471, 5
      %v474 = vsel %vm418, %v469, %v473
      %v476 = vshrl.u32 %v235, 16
      %v478 = vrot.slane %v476, 4
      %v479 = vshll.u32 %v235, 16
      %v481 = vrot.slane %v479, 5
      %v482 = vor.u32 %v478, %v481
      %v483 = vrot.slane %v482, 4
      %v485 = vshll.u32 %v236, 16
      %v487 = vrot.slane %v485, 5
      %v488 = vsel %vm418, %v483, %v487
      %v490 = vshrl.u32 %v237, 16
      %v492 = vrot.slane %v490, 4
      %v493 = vshll.u32 %v237, 16
      %v495 = vrot.slane %v493, 5
      %v496 = vor.u32 %v492, %v495
      %v497 = vrot.slane %v496, 4
      %v499 = vshll.u32 %v238, 16
      %v501 = vrot.slane %v499, 5
      %v502 = vsel %vm418, %v497, %v501
      %v504 = vshrl.u32 %v239, 16
      %v506 = vrot.slane %v504, 4
      %v507 = vshll.u32 %v239, 16
      %v509 = vrot.slane %v507, 5
      %v510 = vor.u32 %v506, %v509
      %v511 = vrot.slane %v510, 4
      %v513 = vshll.u32 %v240, 16
      %v515 = vrot.slane %v513, 5
      %v516 = vsel %vm418, %v511, %v515
      %v518 = vshrl.u32 %v241, 16
      %v520 = vrot.slane %v518, 4
      %v521 = vshll.u32 %v241, 16
      %v523 = vrot.slane %v521, 5
      %v524 = vor.u32 %v520, %v523
      %v525 = vrot.slane %v524, 4
      %v527 = vshll.u32 %v242, 16
      %v529 = vrot.slane %v527, 5
      %v530 = vsel %vm418, %v525, %v529
      %s531 = scalar_lea.vmem %s204, 64
      %v532 = vld [vmem:[%s531] sm:$0xf]
      %v533 = vld [vmem:[%s531 + $0x4] sm:$0xf]
      %v534 = vld [vmem:[%s531 + $0x8] sm:$0xf]
      %v535 = vld [vmem:[%s531 + $0xc] sm:$0xf]
      %v536 = vld [vmem:[%s531 + $0x10] sm:$0xf]
      %v537 = vld [vmem:[%s531 + $0x14] sm:$0xf]
      %v538 = vld [vmem:[%s531 + $0x18] sm:$0xf]
      %v539 = vld [vmem:[%s531 + $0x1c] sm:$0xf]
      %v540 = vld [vmem:[%s531 + $0x20] sm:$0xf]
      %v541 = vld [vmem:[%s531 + $0x24] sm:$0xf]
      %v542 = vld [vmem:[%s531 + $0x28] sm:$0xf]
      %v543 = vld [vmem:[%s531 + $0x2c] sm:$0xf]
      %v544 = vld [vmem:[%s531 + $0x30] sm:$0xf]
      %v545 = vld [vmem:[%s531 + $0x34] sm:$0xf]
      %v546 = vld [vmem:[%s531 + $0x38] sm:$0xf]
      %v547 = vld [vmem:[%s531 + $0x3c] sm:$0xf]
      %v548 = vunpack.c.l.b16 %v432
      %v549 = vunpack.c.l.b16 %v446
      %v550 = vunpack.c.l.b16 %v460
      %v551 = vunpack.c.l.b16 %v474
      %v552 = vunpack.c.l.b16 %v488
      %v553 = vunpack.c.l.b16 %v502
      %v554 = vunpack.c.l.b16 %v516
      %v555 = vunpack.c.l.b16 %v530
      %v556 = vpack.c.b16 %v549, %v548
      %v557 = vpack.c.b16 %v551, %v550
      %v558 = vpack.c.b16 %v553, %v552
      %v559 = vpack.c.b16 %v555, %v554
      %v580 = vunpack.c.l.b16 %v532
      %v581 = vunpack.c.l.b16 %v533
      %v582 = vunpack.c.l.b16 %v534
      %v583 = vunpack.c.l.b16 %v535
      %v584 = vunpack.c.l.b16 %v536
      %v585 = vunpack.c.l.b16 %v537
      %v586 = vunpack.c.l.b16 %v538
      %v587 = vunpack.c.l.b16 %v539
      %v588 = vunpack.c.l.b16 %v540
      %v589 = vunpack.c.l.b16 %v541
      %v590 = vunpack.c.l.b16 %v542
      %v591 = vunpack.c.l.b16 %v543
      %v592 = vunpack.c.l.b16 %v544
      %v593 = vunpack.c.l.b16 %v545
      %v594 = vunpack.c.l.b16 %v546
      %v595 = vunpack.c.l.b16 %v547
      %v596 = vpack.c.b16 %v581, %v580
      %v597 = vpack.c.b16 %v583, %v582
      %v598 = vpack.c.b16 %v585, %v584
      %v599 = vpack.c.b16 %v587, %v586
      %v600 = vpack.c.b16 %v589, %v588
      %v601 = vpack.c.b16 %v591, %v590
      %v602 = vpack.c.b16 %v593, %v592
      %v603 = vpack.c.b16 %v595, %v594
      %612 = vmatprep.subr.bf16.mxu0 0
      %613 = vmatpush1.bf16.msra.mxu0 %v596
      %614 = vmatprep.subr.bf16.mxu0 0
      %615 = vmatpush1.bf16.msra.mxu0 %v597
      %616 = vmatprep.subr.bf16.mxu0 0
      %617 = vmatpush1.bf16.msra.mxu0 %v598
      %618 = vmatprep.subr.bf16.mxu0 0
      %619 = vmatpush1.bf16.msra.mxu0 %v599
      %620 = vmatprep.subr.bf16.mxu0 0
      %621 = vmatpush1.bf16.msra.mxu0 %v600
      %622 = vmatprep.subr.bf16.mxu0 0
      %623 = vmatpush1.bf16.msra.mxu0 %v601
      %624 = vmatprep.subr.bf16.mxu0 0
      %625 = vmatpush1.bf16.msra.mxu0 %v602
      %626 = vmatprep.subr.bf16.mxu0 0
      %627 = vmatpush1.bf16.msra.mxu0 %v603
      %628 = vmatprep.subr.bf16.mxu0 0
      %629 = vmatpush1.bf16.msra.mxu0 0
      %630 = vmatprep.subr.bf16.mxu0 0
      %631 = vmatpush1.bf16.msra.mxu0 0
      %632 = vmatprep.subr.bf16.mxu0 0
      %633 = vmatpush1.bf16.msra.mxu0 0
      %634 = vmatprep.subr.bf16.mxu0 0
      %635 = vmatpush1.bf16.msra.mxu0 0
      %636 = vmatprep.subr.bf16.mxu0 0
      %637 = vmatpush1.bf16.msra.mxu0 0
      %638 = vmatprep.subr.bf16.mxu0 0
      %639 = vmatpush1.bf16.msra.mxu0 0
      %640 = vmatprep.subr.bf16.mxu0 0
      %641 = vmatpush1.bf16.msra.mxu0 0
      %642 = vmatprep.subr.bf16.mxu0 0
      %643 = vmatpush1.bf16.msra.mxu0 0
      %644 = vmatprep.mubr.bf16.mxu0 0
      %645 = vmatmul.mubr.bf16.gmra.mrb[0].mxu0 %v556
      %v646 = vpop.f32.mrb[0].mxu0
      %v647 = vadd.f32 0.0, %v646
      %v648 = vpop.f32.mrb[0].mxu0
      %v649 = vpop.f32.mrb[0].mxu0
      %v650 = vadd.f32 0.0, %v649
      %v651 = vpop.f32.mrb[0].mxu0
      %652 = vmatprep.mubr.bf16.mxu0 0
      %653 = vmatmul.mubr.bf16.gmra.mrb[0].mxu0 %v557
      %v654 = vpop.f32.mrb[0].mxu0
      %v655 = vadd.f32 0.0, %v654
      %v656 = vpop.f32.mrb[0].mxu0
      %v657 = vpop.f32.mrb[0].mxu0
      %v658 = vadd.f32 0.0, %v657
      %v659 = vpop.f32.mrb[0].mxu0
      %660 = vmatprep.mubr.bf16.mxu0 0
      %661 = vmatmul.mubr.bf16.gmra.mrb[0].mxu0 %v558
      %v662 = vpop.f32.mrb[0].mxu0
      %v663 = vadd.f32 0.0, %v662
      %v664 = vpop.f32.mrb[0].mxu0
      %v665 = vpop.f32.mrb[0].mxu0
      %v666 = vadd.f32 0.0, %v665
      %v667 = vpop.f32.mrb[0].mxu0
      %668 = vmatprep.mubr.bf16.mxu0 0
      %669 = vmatmul.mubr.bf16.gmra.mrb[0].mxu0 %v559
      %v670 = vpop.f32.mrb[0].mxu0
      %v671 = vadd.f32 0.0, %v670
      %v672 = vpop.f32.mrb[0].mxu0
      %v673 = vpop.f32.mrb[0].mxu0
      %v674 = vadd.f32 0.0, %v673
      %v675 = vpop.f32.mrb[0].mxu0
      %676 = vdwg.mxu0
      %v677 = vadd.f32 %v408, %v647
      %v678 = vadd.f32 %v409, %v650
      %v679 = vadd.f32 %v410, %v655
      %v680 = vadd.f32 %v411, %v658
      %v681 = vadd.f32 %v412, %v663
      %v682 = vadd.f32 %v413, %v666
      %v683 = vadd.f32 %v414, %v671
      %v684 = vadd.f32 %v415, %v674
      %vm693 = vcmask 1042432
      %vm694 = vcmask 1046532
      %vm695 = vmor %vm693, %vm694
      %v696 = vrot.slane %v227, 5
      %v697 = vrot.slane %v696, 4
      %v698 = vrot.slane %v228, 5
      %v699 = vsel %vm695, %v697, %v698
      %v700 = vrot.slane %v229, 5
      %v701 = vrot.slane %v700, 4
      %v702 = vrot.slane %v230, 5
      %v703 = vsel %vm695, %v701, %v702
      %v704 = vrot.slane %v231, 5
      %v705 = vrot.slane %v704, 4
      %v706 = vrot.slane %v232, 5
      %v707 = vsel %vm695, %v705, %v706
      %v708 = vrot.slane %v233, 5
      %v709 = vrot.slane %v708, 4
      %v710 = vrot.slane %v234, 5
      %v711 = vsel %vm695, %v709, %v710
      %v712 = vrot.slane %v235, 5
      %v713 = vrot.slane %v712, 4
      %v714 = vrot.slane %v236, 5
      %v715 = vsel %vm695, %v713, %v714
      %v716 = vrot.slane %v237, 5
      %v717 = vrot.slane %v716, 4
      %v718 = vrot.slane %v238, 5
      %v719 = vsel %vm695, %v717, %v718
      %v720 = vrot.slane %v239, 5
      %v721 = vrot.slane %v720, 4
      %v722 = vrot.slane %v240, 5
      %v723 = vsel %vm695, %v721, %v722
      %v724 = vrot.slane %v241, 5
      %v725 = vrot.slane %v724, 4
      %v726 = vrot.slane %v242, 5
      %v727 = vsel %vm695, %v725, %v726
      %s728 = scalar_lea.vmem %s204, 128
      %v729 = vld [vmem:[%s728] sm:$0xf]
      %v730 = vld [vmem:[%s728 + $0x4] sm:$0xf]
      %v731 = vld [vmem:[%s728 + $0x8] sm:$0xf]
      %v732 = vld [vmem:[%s728 + $0xc] sm:$0xf]
      %v733 = vld [vmem:[%s728 + $0x10] sm:$0xf]
      %v734 = vld [vmem:[%s728 + $0x14] sm:$0xf]
      %v735 = vld [vmem:[%s728 + $0x18] sm:$0xf]
      %v736 = vld [vmem:[%s728 + $0x1c] sm:$0xf]
      %v737 = vld [vmem:[%s728 + $0x20] sm:$0xf]
      %v738 = vld [vmem:[%s728 + $0x24] sm:$0xf]
      %v739 = vld [vmem:[%s728 + $0x28] sm:$0xf]
      %v740 = vld [vmem:[%s728 + $0x2c] sm:$0xf]
      %v741 = vld [vmem:[%s728 + $0x30] sm:$0xf]
      %v742 = vld [vmem:[%s728 + $0x34] sm:$0xf]
      %v743 = vld [vmem:[%s728 + $0x38] sm:$0xf]
      %v744 = vld [vmem:[%s728 + $0x3c] sm:$0xf]
      %v745 = vunpack.c.l.b16 %v699
      %v746 = vunpack.c.l.b16 %v703
      %v747 = vunpack.c.l.b16 %v707
      %v748 = vunpack.c.l.b16 %v711
      %v749 = vunpack.c.l.b16 %v715
      %v750 = vunpack.c.l.b16 %v719
      %v751 = vunpack.c.l.b16 %v723
      %v752 = vunpack.c.l.b16 %v727
      %v753 = vpack.c.b16 %v746, %v745
      %v754 = vpack.c.b16 %v748, %v747
      %v755 = vpack.c.b16 %v750, %v749
      %v756 = vpack.c.b16 %v752, %v751
      %v777 = vunpack.c.l.b16 %v729
      %v778 = vunpack.c.l.b16 %v730
      %v779 = vunpack.c.l.b16 %v731
      %v780 = vunpack.c.l.b16 %v732
      %v781 = vunpack.c.l.b16 %v733
      %v782 = vunpack.c.l.b16 %v734
      %v783 = vunpack.c.l.b16 %v735
      %v784 = vunpack.c.l.b16 %v736
      %v785 = vunpack.c.l.b16 %v737
      %v786 = vunpack.c.l.b16 %v738
      %v787 = vunpack.c.l.b16 %v739
      %v788 = vunpack.c.l.b16 %v740
      %v789 = vunpack.c.l.b16 %v741
      %v790 = vunpack.c.l.b16 %v742
      %v791 = vunpack.c.l.b16 %v743
      %v792 = vunpack.c.l.b16 %v744
      %v793 = vpack.c.b16 %v778, %v777
      %v794 = vpack.c.b16 %v780, %v779
      %v795 = vpack.c.b16 %v782, %v781
      %v796 = vpack.c.b16 %v784, %v783
      %v797 = vpack.c.b16 %v786, %v785
      %v798 = vpack.c.b16 %v788, %v787
      %v799 = vpack.c.b16 %v790, %v789
      %v800 = vpack.c.b16 %v792, %v791
      %809 = vmatprep.subr.bf16.mxu0 0
      %810 = vmatpush1.bf16.msra.mxu0 %v793
      %811 = vmatprep.subr.bf16.mxu0 0
      %812 = vmatpush1.bf16.msra.mxu0 %v794
      %813 = vmatprep.subr.bf16.mxu0 0
      %814 = vmatpush1.bf16.msra.mxu0 %v795
      %815 = vmatprep.subr.bf16.mxu0 0
      %816 = vmatpush1.bf16.msra.mxu0 %v796
      %817 = vmatprep.subr.bf16.mxu0 0
      %818 = vmatpush1.bf16.msra.mxu0 %v797
      %819 = vmatprep.subr.bf16.mxu0 0
      %820 = vmatpush1.bf16.msra.mxu0 %v798
      %821 = vmatprep.subr.bf16.mxu0 0
      %822 = vmatpush1.bf16.msra.mxu0 %v799
      %823 = vmatprep.subr.bf16.mxu0 0
      %824 = vmatpush1.bf16.msra.mxu0 %v800
      %825 = vmatprep.subr.bf16.mxu0 0
      %826 = vmatpush1.bf16.msra.mxu0 0
      %827 = vmatprep.subr.bf16.mxu0 0
      %828 = vmatpush1.bf16.msra.mxu0 0
      %829 = vmatprep.subr.bf16.mxu0 0
      %830 = vmatpush1.bf16.msra.mxu0 0
      %831 = vmatprep.subr.bf16.mxu0 0
      %832 = vmatpush1.bf16.msra.mxu0 0
      %833 = vmatprep.subr.bf16.mxu0 0
      %834 = vmatpush1.bf16.msra.mxu0 0
      %835 = vmatprep.subr.bf16.mxu0 0
      %836 = vmatpush1.bf16.msra.mxu0 0
      %837 = vmatprep.subr.bf16.mxu0 0
      %838 = vmatpush1.bf16.msra.mxu0 0
      %839 = vmatprep.subr.bf16.mxu0 0
      %840 = vmatpush1.bf16.msra.mxu0 0
      %841 = vmatprep.mubr.bf16.mxu0 0
      %842 = vmatmul.mubr.bf16.gmra.mrb[0].mxu0 %v753
      %v843 = vpop.f32.mrb[0].mxu0
      %v844 = vadd.f32 0.0, %v843
      %v845 = vpop.f32.mrb[0].mxu0
      %v846 = vpop.f32.mrb[0].mxu0
      %v847 = vadd.f32 0.0, %v846
      %v848 = vpop.f32.mrb[0].mxu0
      %849 = vmatprep.mubr.bf16.mxu0 0
      %850 = vmatmul.mubr.bf16.gmra.mrb[0].mxu0 %v754
      %v851 = vpop.f32.mrb[0].mxu0
      %v852 = vadd.f32 0.0, %v851
      %v853 = vpop.f32.mrb[0].mxu0
      %v854 = vpop.f32.mrb[0].mxu0
      %v855 = vadd.f32 0.0, %v854
      %v856 = vpop.f32.mrb[0].mxu0
      %857 = vmatprep.mubr.bf16.mxu0 0
      %858 = vmatmul.mubr.bf16.gmra.mrb[0].mxu0 %v755
      %v859 = vpop.f32.mrb[0].mxu0
      %v860 = vadd.f32 0.0, %v859
      %v861 = vpop.f32.mrb[0].mxu0
      %v862 = vpop.f32.mrb[0].mxu0
      %v863 = vadd.f32 0.0, %v862
      %v864 = vpop.f32.mrb[0].mxu0
      %865 = vmatprep.mubr.bf16.mxu0 0
      %866 = vmatmul.mubr.bf16.gmra.mrb[0].mxu0 %v756
      %v867 = vpop.f32.mrb[0].mxu0
      %v868 = vadd.f32 0.0, %v867
      %v869 = vpop.f32.mrb[0].mxu0
      %v870 = vpop.f32.mrb[0].mxu0
      %v871 = vadd.f32 0.0, %v870
      %v872 = vpop.f32.mrb[0].mxu0
      %873 = vdwg.mxu0
      %v874 = vadd.f32 %v677, %v844
      %v875 = vadd.f32 %v678, %v847
      %v876 = vadd.f32 %v679, %v852
      %v877 = vadd.f32 %v680, %v855
      %v878 = vadd.f32 %v681, %v860
      %v879 = vadd.f32 %v682, %v863
      %v880 = vadd.f32 %v683, %v868
      %v881 = vadd.f32 %v684, %v871
      %s882 = scalar_lea.vmem %s204, 192
      %v883 = vld [vmem:[%s882] sm:$0xf]
      %v884 = vld [vmem:[%s882 + $0x4] sm:$0xf]
      %v885 = vld [vmem:[%s882 + $0x8] sm:$0xf]
      %v886 = vld [vmem:[%s882 + $0xc] sm:$0xf]
      %v887 = vld [vmem:[%s882 + $0x10] sm:$0xf]
      %v888 = vld [vmem:[%s882 + $0x14] sm:$0xf]
      %v889 = vld [vmem:[%s882 + $0x18] sm:$0xf]
      %v890 = vld [vmem:[%s882 + $0x1c] sm:$0xf]
      %v891 = vld [vmem:[%s882 + $0x20] sm:$0xf]
      %v892 = vld [vmem:[%s882 + $0x24] sm:$0xf]
      %v893 = vld [vmem:[%s882 + $0x28] sm:$0xf]
      %v894 = vld [vmem:[%s882 + $0x2c] sm:$0xf]
      %v895 = vld [vmem:[%s882 + $0x30] sm:$0xf]
      %v896 = vld [vmem:[%s882 + $0x34] sm:$0xf]
      %v897 = vld [vmem:[%s882 + $0x38] sm:$0xf]
      %v898 = vld [vmem:[%s882 + $0x3c] sm:$0xf]
      %v900 = vunpack.c.l.b16 %v243
      %v901 = vpack.c.b16 %v281, %v280
      %v902 = vpack.c.b16 %v283, %v282
      %v903 = vpack.c.b16 %v285, %v284
      %v904 = vpack.c.b16 %v900, %v286
      %v925 = vunpack.c.l.b16 %v883
      %v926 = vunpack.c.l.b16 %v884
      %v927 = vunpack.c.l.b16 %v885
      %v928 = vunpack.c.l.b16 %v886
      %v929 = vunpack.c.l.b16 %v887
      %v930 = vunpack.c.l.b16 %v888
      %v931 = vunpack.c.l.b16 %v889
      %v932 = vunpack.c.l.b16 %v890
      %v933 = vunpack.c.l.b16 %v891
      %v934 = vunpack.c.l.b16 %v892
      %v935 = vunpack.c.l.b16 %v893
      %v936 = vunpack.c.l.b16 %v894
      %v937 = vunpack.c.l.b16 %v895
      %v938 = vunpack.c.l.b16 %v896
      %v939 = vunpack.c.l.b16 %v897
      %v940 = vunpack.c.l.b16 %v898
      %v941 = vpack.c.b16 %v926, %v925
      %v942 = vpack.c.b16 %v928, %v927
      %v943 = vpack.c.b16 %v930, %v929
      %v944 = vpack.c.b16 %v932, %v931
      %v945 = vpack.c.b16 %v934, %v933
      %v946 = vpack.c.b16 %v936, %v935
      %v947 = vpack.c.b16 %v938, %v937
      %v948 = vpack.c.b16 %v940, %v939
      %957 = vmatprep.subr.bf16.mxu0 0
      %958 = vmatpush1.bf16.msra.mxu0 %v941
      %959 = vmatprep.subr.bf16.mxu0 0
      %960 = vmatpush1.bf16.msra.mxu0 %v942
      %961 = vmatprep.subr.bf16.mxu0 0
      %962 = vmatpush1.bf16.msra.mxu0 %v943
      %963 = vmatprep.subr.bf16.mxu0 0
      %964 = vmatpush1.bf16.msra.mxu0 %v944
      %965 = vmatprep.subr.bf16.mxu0 0
      %966 = vmatpush1.bf16.msra.mxu0 %v945
      %967 = vmatprep.subr.bf16.mxu0 0
      %968 = vmatpush1.bf16.msra.mxu0 %v946
      %969 = vmatprep.subr.bf16.mxu0 0
      %970 = vmatpush1.bf16.msra.mxu0 %v947
      %971 = vmatprep.subr.bf16.mxu0 0
      %972 = vmatpush1.bf16.msra.mxu0 %v948
      %973 = vmatprep.subr.bf16.mxu0 0
      %974 = vmatpush1.bf16.msra.mxu0 0
      %975 = vmatprep.subr.bf16.mxu0 0
      %976 = vmatpush1.bf16.msra.mxu0 0
      %977 = vmatprep.subr.bf16.mxu0 0
      %978 = vmatpush1.bf16.msra.mxu0 0
      %979 = vmatprep.subr.bf16.mxu0 0
      %980 = vmatpush1.bf16.msra.mxu0 0
      %981 = vmatprep.subr.bf16.mxu0 0
      %982 = vmatpush1.bf16.msra.mxu0 0
      %983 = vmatprep.subr.bf16.mxu0 0
      %984 = vmatpush1.bf16.msra.mxu0 0
      %985 = vmatprep.subr.bf16.mxu0 0
      %986 = vmatpush1.bf16.msra.mxu0 0
      %987 = vmatprep.subr.bf16.mxu0 0
      %988 = vmatpush1.bf16.msra.mxu0 0
      %989 = vmatprep.mubr.bf16.mxu0 0
      %990 = vmatmul.mubr.bf16.gmra.mrb[0].mxu0 %v901
      %v991 = vpop.f32.mrb[0].mxu0
      %v992 = vadd.f32 0.0, %v991
      %v993 = vpop.f32.mrb[0].mxu0
      %v994 = vpop.f32.mrb[0].mxu0
      %v995 = vadd.f32 0.0, %v994
      %v996 = vpop.f32.mrb[0].mxu0
      %997 = vmatprep.mubr.bf16.mxu0 0
      %998 = vmatmul.mubr.bf16.gmra.mrb[0].mxu0 %v902
      %v999 = vpop.f32.mrb[0].mxu0
      %v1000 = vadd.f32 0.0, %v999
      %v1001 = vpop.f32.mrb[0].mxu0
      %v1002 = vpop.f32.mrb[0].mxu0
      %v1003 = vadd.f32 0.0, %v1002
      %v1004 = vpop.f32.mrb[0].mxu0
      %1005 = vmatprep.mubr.bf16.mxu0 0
      %1006 = vmatmul.mubr.bf16.gmra.mrb[0].mxu0 %v903
      %v1007 = vpop.f32.mrb[0].mxu0
      %v1008 = vadd.f32 0.0, %v1007
      %v1009 = vpop.f32.mrb[0].mxu0
      %v1010 = vpop.f32.mrb[0].mxu0
      %v1011 = vadd.f32 0.0, %v1010
      %v1012 = vpop.f32.mrb[0].mxu0
      %1013 = vmatprep.mubr.bf16.mxu0 0
      %1014 = vmatmul.mubr.bf16.gmra.mrb[0].mxu0 %v904
      %v1015 = vpop.f32.mrb[0].mxu0
      %v1016 = vadd.f32 0.0, %v1015
      %v1017 = vpop.f32.mrb[0].mxu0
      %v1018 = vpop.f32.mrb[0].mxu0
      %v1019 = vadd.f32 0.0, %v1018
      %v1020 = vpop.f32.mrb[0].mxu0
      %1021 = vdwg.mxu0
      %v1022 = vadd.f32 %v874, %v992
      %v1023 = vadd.f32 %v875, %v995
      %v1024 = vadd.f32 %v876, %v1000
      %v1025 = vadd.f32 %v877, %v1003
      %v1026 = vadd.f32 %v878, %v1008
      %v1027 = vadd.f32 %v879, %v1011
      %v1028 = vadd.f32 %v880, %v1016
      %v1029 = vadd.f32 %v881, %v1019
      %v1031 = vshrl.u32 %v243, 16
      %v1033 = vrot.slane %v1031, 4
      %v1034 = vshll.u32 %v243, 16
      %v1036 = vrot.slane %v1034, 5
      %v1037 = vor.u32 %v1033, %v1036
      %v1038 = vrot.slane %v1037, 4
      %v1040 = vshll.u32 %v244, 16
      %v1042 = vrot.slane %v1040, 5
      %v1043 = vsel %vm418, %v1038, %v1042
      %s1044 = scalar_lea.vmem %s204, 256
      %v1045 = vld [vmem:[%s1044] sm:$0xf]
      %v1046 = vld [vmem:[%s1044 + $0x4] sm:$0xf]
      %v1047 = vld [vmem:[%s1044 + $0x8] sm:$0xf]
      %v1048 = vld [vmem:[%s1044 + $0xc] sm:$0xf]
      %v1049 = vld [vmem:[%s1044 + $0x10] sm:$0xf]
      %v1050 = vld [vmem:[%s1044 + $0x14] sm:$0xf]
      %v1051 = vld [vmem:[%s1044 + $0x18] sm:$0xf]
      %v1052 = vld [vmem:[%s1044 + $0x1c] sm:$0xf]
      %v1053 = vld [vmem:[%s1044 + $0x20] sm:$0xf]
      %v1054 = vld [vmem:[%s1044 + $0x24] sm:$0xf]
      %v1055 = vld [vmem:[%s1044 + $0x28] sm:$0xf]
      %v1056 = vld [vmem:[%s1044 + $0x2c] sm:$0xf]
      %v1057 = vld [vmem:[%s1044 + $0x30] sm:$0xf]
      %v1058 = vld [vmem:[%s1044 + $0x34] sm:$0xf]
      %v1059 = vld [vmem:[%s1044 + $0x38] sm:$0xf]
      %v1060 = vld [vmem:[%s1044 + $0x3c] sm:$0xf]
      %v1061 = vunpack.c.l.b16 %v1043
      %v1062 = vpack.c.b16 %v550, %v549
      %v1063 = vpack.c.b16 %v552, %v551
      %v1064 = vpack.c.b16 %v554, %v553
      %v1065 = vpack.c.b16 %v1061, %v555
      %v1086 = vunpack.c.l.b16 %v1045
      %v1087 = vunpack.c.l.b16 %v1046
      %v1088 = vunpack.c.l.b16 %v1047
      %v1089 = vunpack.c.l.b16 %v1048
      %v1090 = vunpack.c.l.b16 %v1049
      %v1091 = vunpack.c.l.b16 %v1050
      %v1092 = vunpack.c.l.b16 %v1051
      %v1093 = vunpack.c.l.b16 %v1052
      %v1094 = vunpack.c.l.b16 %v1053
      %v1095 = vunpack.c.l.b16 %v1054
      %v1096 = vunpack.c.l.b16 %v1055
      %v1097 = vunpack.c.l.b16 %v1056
      %v1098 = vunpack.c.l.b16 %v1057
      %v1099 = vunpack.c.l.b16 %v1058
      %v1100 = vunpack.c.l.b16 %v1059
      %v1101 = vunpack.c.l.b16 %v1060
      %v1102 = vpack.c.b16 %v1087, %v1086
      %v1103 = vpack.c.b16 %v1089, %v1088
      %v1104 = vpack.c.b16 %v1091, %v1090
      %v1105 = vpack.c.b16 %v1093, %v1092
      %v1106 = vpack.c.b16 %v1095, %v1094
      %v1107 = vpack.c.b16 %v1097, %v1096
      %v1108 = vpack.c.b16 %v1099, %v1098
      %v1109 = vpack.c.b16 %v1101, %v1100
      %1118 = vmatprep.subr.bf16.mxu0 0
      %1119 = vmatpush1.bf16.msra.mxu0 %v1102
      %1120 = vmatprep.subr.bf16.mxu0 0
      %1121 = vmatpush1.bf16.msra.mxu0 %v1103
      %1122 = vmatprep.subr.bf16.mxu0 0
      %1123 = vmatpush1.bf16.msra.mxu0 %v1104
      %1124 = vmatprep.subr.bf16.mxu0 0
      %1125 = vmatpush1.bf16.msra.mxu0 %v1105
      %1126 = vmatprep.subr.bf16.mxu0 0
      %1127 = vmatpush1.bf16.msra.mxu0 %v1106
      %1128 = vmatprep.subr.bf16.mxu0 0
      %1129 = vmatpush1.bf16.msra.mxu0 %v1107
      %1130 = vmatprep.subr.bf16.mxu0 0
      %1131 = vmatpush1.bf16.msra.mxu0 %v1108
      %1132 = vmatprep.subr.bf16.mxu0 0
      %1133 = vmatpush1.bf16.msra.mxu0 %v1109
      %1134 = vmatprep.subr.bf16.mxu0 0
      %1135 = vmatpush1.bf16.msra.mxu0 0
      %1136 = vmatprep.subr.bf16.mxu0 0
      %1137 = vmatpush1.bf16.msra.mxu0 0
      %1138 = vmatprep.subr.bf16.mxu0 0
      %1139 = vmatpush1.bf16.msra.mxu0 0
      %1140 = vmatprep.subr.bf16.mxu0 0
      %1141 = vmatpush1.bf16.msra.mxu0 0
      %1142 = vmatprep.subr.bf16.mxu0 0
      %1143 = vmatpush1.bf16.msra.mxu0 0
      %1144 = vmatprep.subr.bf16.mxu0 0
      %1145 = vmatpush1.bf16.msra.mxu0 0
      %1146 = vmatprep.subr.bf16.mxu0 0
      %1147 = vmatpush1.bf16.msra.mxu0 0
      %1148 = vmatprep.subr.bf16.mxu0 0
      %1149 = vmatpush1.bf16.msra.mxu0 0
      %1150 = vmatprep.mubr.bf16.mxu0 0
      %1151 = vmatmul.mubr.bf16.gmra.mrb[0].mxu0 %v1062
      %v1152 = vpop.f32.mrb[0].mxu0
      %v1153 = vadd.f32 0.0, %v1152
      %v1154 = vpop.f32.mrb[0].mxu0
      %v1155 = vpop.f32.mrb[0].mxu0
      %v1156 = vadd.f32 0.0, %v1155
      %v1157 = vpop.f32.mrb[0].mxu0
      %1158 = vmatprep.mubr.bf16.mxu0 0
      %1159 = vmatmul.mubr.bf16.gmra.mrb[0].mxu0 %v1063
      %v1160 = vpop.f32.mrb[0].mxu0
      %v1161 = vadd.f32 0.0, %v1160
      %v1162 = vpop.f32.mrb[0].mxu0
      %v1163 = vpop.f32.mrb[0].mxu0
      %v1164 = vadd.f32 0.0, %v1163
      %v1165 = vpop.f32.mrb[0].mxu0
      %1166 = vmatprep.mubr.bf16.mxu0 0
      %1167 = vmatmul.mubr.bf16.gmra.mrb[0].mxu0 %v1064
      %v1168 = vpop.f32.mrb[0].mxu0
      %v1169 = vadd.f32 0.0, %v1168
      %v1170 = vpop.f32.mrb[0].mxu0
      %v1171 = vpop.f32.mrb[0].mxu0
      %v1172 = vadd.f32 0.0, %v1171
      %v1173 = vpop.f32.mrb[0].mxu0
      %1174 = vmatprep.mubr.bf16.mxu0 0
      %1175 = vmatmul.mubr.bf16.gmra.mrb[0].mxu0 %v1065
      %v1176 = vpop.f32.mrb[0].mxu0
      %v1177 = vadd.f32 0.0, %v1176
      %v1178 = vpop.f32.mrb[0].mxu0
      %v1179 = vpop.f32.mrb[0].mxu0
      %v1180 = vadd.f32 0.0, %v1179
      %v1181 = vpop.f32.mrb[0].mxu0
      %1182 = vdwg.mxu0
      %v1183 = vadd.f32 %v1022, %v1153
      %v1184 = vadd.f32 %v1023, %v1156
      %v1185 = vadd.f32 %v1024, %v1161
      %v1186 = vadd.f32 %v1025, %v1164
      %v1187 = vadd.f32 %v1026, %v1169
      %v1188 = vadd.f32 %v1027, %v1172
      %v1189 = vadd.f32 %v1028, %v1177
      %v1190 = vadd.f32 %v1029, %v1180
      %v1192 = vrot.slane %v243, 5
      %v1193 = vrot.slane %v1192, 4
      %v1194 = vrot.slane %v244, 5
      %v1195 = vsel %vm695, %v1193, %v1194
      %s1196 = scalar_lea.vmem %s204, 320
      %v1197 = vld [vmem:[%s1196] sm:$0xf]
      %v1198 = vld [vmem:[%s1196 + $0x4] sm:$0xf]
      %v1199 = vld [vmem:[%s1196 + $0x8] sm:$0xf]
      %v1200 = vld [vmem:[%s1196 + $0xc] sm:$0xf]
      %v1201 = vld [vmem:[%s1196 + $0x10] sm:$0xf]
      %v1202 = vld [vmem:[%s1196 + $0x14] sm:$0xf]
      %v1203 = vld [vmem:[%s1196 + $0x18] sm:$0xf]
      %v1204 = vld [vmem:[%s1196 + $0x1c] sm:$0xf]
      %v1205 = vld [vmem:[%s1196 + $0x20] sm:$0xf]
      %v1206 = vld [vmem:[%s1196 + $0x24] sm:$0xf]
      %v1207 = vld [vmem:[%s1196 + $0x28] sm:$0xf]
      %v1208 = vld [vmem:[%s1196 + $0x2c] sm:$0xf]
      %v1209 = vld [vmem:[%s1196 + $0x30] sm:$0xf]
      %v1210 = vld [vmem:[%s1196 + $0x34] sm:$0xf]
      %v1211 = vld [vmem:[%s1196 + $0x38] sm:$0xf]
      %v1212 = vld [vmem:[%s1196 + $0x3c] sm:$0xf]
      %v1213 = vunpack.c.l.b16 %v1195
      %v1214 = vpack.c.b16 %v747, %v746
      %v1215 = vpack.c.b16 %v749, %v748
      %v1216 = vpack.c.b16 %v751, %v750
      %v1217 = vpack.c.b16 %v1213, %v752
      %v1238 = vunpack.c.l.b16 %v1197
      %v1239 = vunpack.c.l.b16 %v1198
      %v1240 = vunpack.c.l.b16 %v1199
      %v1241 = vunpack.c.l.b16 %v1200
      %v1242 = vunpack.c.l.b16 %v1201
      %v1243 = vunpack.c.l.b16 %v1202
      %v1244 = vunpack.c.l.b16 %v1203
      %v1245 = vunpack.c.l.b16 %v1204
      %v1246 = vunpack.c.l.b16 %v1205
      %v1247 = vunpack.c.l.b16 %v1206
      %v1248 = vunpack.c.l.b16 %v1207
      %v1249 = vunpack.c.l.b16 %v1208
      %v1250 = vunpack.c.l.b16 %v1209
      %v1251 = vunpack.c.l.b16 %v1210
      %v1252 = vunpack.c.l.b16 %v1211
      %v1253 = vunpack.c.l.b16 %v1212
      %v1254 = vpack.c.b16 %v1239, %v1238
      %v1255 = vpack.c.b16 %v1241, %v1240
      %v1256 = vpack.c.b16 %v1243, %v1242
      %v1257 = vpack.c.b16 %v1245, %v1244
      %v1258 = vpack.c.b16 %v1247, %v1246
      %v1259 = vpack.c.b16 %v1249, %v1248
      %v1260 = vpack.c.b16 %v1251, %v1250
      %v1261 = vpack.c.b16 %v1253, %v1252
      %1270 = vmatprep.subr.bf16.mxu0 0
      %1271 = vmatpush1.bf16.msra.mxu0 %v1254
      %1272 = vmatprep.subr.bf16.mxu0 0
      %1273 = vmatpush1.bf16.msra.mxu0 %v1255
      %1274 = vmatprep.subr.bf16.mxu0 0
      %1275 = vmatpush1.bf16.msra.mxu0 %v1256
      %1276 = vmatprep.subr.bf16.mxu0 0
      %1277 = vmatpush1.bf16.msra.mxu0 %v1257
      %1278 = vmatprep.subr.bf16.mxu0 0
      %1279 = vmatpush1.bf16.msra.mxu0 %v1258
      %1280 = vmatprep.subr.bf16.mxu0 0
      %1281 = vmatpush1.bf16.msra.mxu0 %v1259
      %1282 = vmatprep.subr.bf16.mxu0 0
      %1283 = vmatpush1.bf16.msra.mxu0 %v1260
      %1284 = vmatprep.subr.bf16.mxu0 0
      %1285 = vmatpush1.bf16.msra.mxu0 %v1261
      %1286 = vmatprep.subr.bf16.mxu0 0
      %1287 = vmatpush1.bf16.msra.mxu0 0
      %1288 = vmatprep.subr.bf16.mxu0 0
      %1289 = vmatpush1.bf16.msra.mxu0 0
      %1290 = vmatprep.subr.bf16.mxu0 0
      %1291 = vmatpush1.bf16.msra.mxu0 0
      %1292 = vmatprep.subr.bf16.mxu0 0
      %1293 = vmatpush1.bf16.msra.mxu0 0
      %1294 = vmatprep.subr.bf16.mxu0 0
      %1295 = vmatpush1.bf16.msra.mxu0 0
      %1296 = vmatprep.subr.bf16.mxu0 0
      %1297 = vmatpush1.bf16.msra.mxu0 0
      %1298 = vmatprep.subr.bf16.mxu0 0
      %1299 = vmatpush1.bf16.msra.mxu0 0
      %1300 = vmatprep.subr.bf16.mxu0 0
      %1301 = vmatpush1.bf16.msra.mxu0 0
      %1302 = vmatprep.mubr.bf16.mxu0 0
      %1303 = vmatmul.mubr.bf16.gmra.mrb[0].mxu0 %v1214
      %v1304 = vpop.f32.mrb[0].mxu0
      %v1305 = vadd.f32 0.0, %v1304
      %v1306 = vpop.f32.mrb[0].mxu0
      %v1307 = vpop.f32.mrb[0].mxu0
      %v1308 = vadd.f32 0.0, %v1307
      %v1309 = vpop.f32.mrb[0].mxu0
      %1310 = vmatprep.mubr.bf16.mxu0 0
      %1311 = vmatmul.mubr.bf16.gmra.mrb[0].mxu0 %v1215
      %v1312 = vpop.f32.mrb[0].mxu0
      %v1313 = vadd.f32 0.0, %v1312
      %v1314 = vpop.f32.mrb[0].mxu0
      %v1315 = vpop.f32.mrb[0].mxu0
      %v1316 = vadd.f32 0.0, %v1315
      %v1317 = vpop.f32.mrb[0].mxu0
      %1318 = vmatprep.mubr.bf16.mxu0 0
      %1319 = vmatmul.mubr.bf16.gmra.mrb[0].mxu0 %v1216
      %v1320 = vpop.f32.mrb[0].mxu0
      %v1321 = vadd.f32 0.0, %v1320
      %v1322 = vpop.f32.mrb[0].mxu0
      %v1323 = vpop.f32.mrb[0].mxu0
      %v1324 = vadd.f32 0.0, %v1323
      %v1325 = vpop.f32.mrb[0].mxu0
      %1326 = vmatprep.mubr.bf16.mxu0 0
      %1327 = vmatmul.mubr.bf16.gmra.mrb[0].mxu0 %v1217
      %v1328 = vpop.f32.mrb[0].mxu0
      %v1329 = vadd.f32 0.0, %v1328
      %v1330 = vpop.f32.mrb[0].mxu0
      %v1331 = vpop.f32.mrb[0].mxu0
      %v1332 = vadd.f32 0.0, %v1331
      %v1333 = vpop.f32.mrb[0].mxu0
      %1334 = vdwg.mxu0
      %v1335 = vadd.f32 %v1183, %v1305
      %v1336 = vadd.f32 %v1184, %v1308
      %v1337 = vadd.f32 %v1185, %v1313
      %v1338 = vadd.f32 %v1186, %v1316
      %v1339 = vadd.f32 %v1187, %v1321
      %v1340 = vadd.f32 %v1188, %v1324
      %v1341 = vadd.f32 %v1189, %v1329
      %v1342 = vadd.f32 %v1190, %v1332
      %s1343 = scalar_lea.vmem %s204, 384
      %v1344 = vld [vmem:[%s1343] sm:$0xf]
      %v1345 = vld [vmem:[%s1343 + $0x4] sm:$0xf]
      %v1346 = vld [vmem:[%s1343 + $0x8] sm:$0xf]
      %v1347 = vld [vmem:[%s1343 + $0xc] sm:$0xf]
      %v1348 = vld [vmem:[%s1343 + $0x10] sm:$0xf]
      %v1349 = vld [vmem:[%s1343 + $0x14] sm:$0xf]
      %v1350 = vld [vmem:[%s1343 + $0x18] sm:$0xf]
      %v1351 = vld [vmem:[%s1343 + $0x1c] sm:$0xf]
      %v1352 = vld [vmem:[%s1343 + $0x20] sm:$0xf]
      %v1353 = vld [vmem:[%s1343 + $0x24] sm:$0xf]
      %v1354 = vld [vmem:[%s1343 + $0x28] sm:$0xf]
      %v1355 = vld [vmem:[%s1343 + $0x2c] sm:$0xf]
      %v1356 = vld [vmem:[%s1343 + $0x30] sm:$0xf]
      %v1357 = vld [vmem:[%s1343 + $0x34] sm:$0xf]
      %v1358 = vld [vmem:[%s1343 + $0x38] sm:$0xf]
      %v1359 = vld [vmem:[%s1343 + $0x3c] sm:$0xf]
      %v1361 = vunpack.c.l.b16 %v245
      %v1362 = vpack.c.b16 %v1361, %v900
      %v1380 = vunpack.c.l.b16 %v1344
      %v1381 = vunpack.c.l.b16 %v1345
      %v1382 = vunpack.c.l.b16 %v1346
      %v1383 = vunpack.c.l.b16 %v1347
      %v1384 = vunpack.c.l.b16 %v1348
      %v1385 = vunpack.c.l.b16 %v1349
      %v1386 = vunpack.c.l.b16 %v1350
      %v1387 = vunpack.c.l.b16 %v1351
      %v1388 = vunpack.c.l.b16 %v1352
      %v1389 = vunpack.c.l.b16 %v1353
      %v1390 = vunpack.c.l.b16 %v1354
      %v1391 = vunpack.c.l.b16 %v1355
      %v1392 = vunpack.c.l.b16 %v1356
      %v1393 = vunpack.c.l.b16 %v1357
      %v1394 = vunpack.c.l.b16 %v1358
      %v1395 = vunpack.c.l.b16 %v1359
      %v1396 = vpack.c.b16 %v1381, %v1380
      %v1397 = vpack.c.b16 %v1383, %v1382
      %v1398 = vpack.c.b16 %v1385, %v1384
      %v1399 = vpack.c.b16 %v1387, %v1386
      %v1400 = vpack.c.b16 %v1389, %v1388
      %v1401 = vpack.c.b16 %v1391, %v1390
      %v1402 = vpack.c.b16 %v1393, %v1392
      %v1403 = vpack.c.b16 %v1395, %v1394
      %1412 = vmatprep.subr.bf16.mxu0 0
      %1413 = vmatpush1.bf16.msra.mxu0 %v1396
      %1414 = vmatprep.subr.bf16.mxu0 0
      %1415 = vmatpush1.bf16.msra.mxu0 %v1397
      %1416 = vmatprep.subr.bf16.mxu0 0
      %1417 = vmatpush1.bf16.msra.mxu0 %v1398
      %1418 = vmatprep.subr.bf16.mxu0 0
      %1419 = vmatpush1.bf16.msra.mxu0 %v1399
      %1420 = vmatprep.subr.bf16.mxu0 0
      %1421 = vmatpush1.bf16.msra.mxu0 %v1400
      %1422 = vmatprep.subr.bf16.mxu0 0
      %1423 = vmatpush1.bf16.msra.mxu0 %v1401
      %1424 = vmatprep.subr.bf16.mxu0 0
      %1425 = vmatpush1.bf16.msra.mxu0 %v1402
      %1426 = vmatprep.subr.bf16.mxu0 0
      %1427 = vmatpush1.bf16.msra.mxu0 %v1403
      %1428 = vmatprep.subr.bf16.mxu0 0
      %1429 = vmatpush1.bf16.msra.mxu0 0
      %1430 = vmatprep.subr.bf16.mxu0 0
      %1431 = vmatpush1.bf16.msra.mxu0 0
      %1432 = vmatprep.subr.bf16.mxu0 0
      %1433 = vmatpush1.bf16.msra.mxu0 0
      %1434 = vmatprep.subr.bf16.mxu0 0
      %1435 = vmatpush1.bf16.msra.mxu0 0
      %1436 = vmatprep.subr.bf16.mxu0 0
      %1437 = vmatpush1.bf16.msra.mxu0 0
      %1438 = vmatprep.subr.bf16.mxu0 0
      %1439 = vmatpush1.bf16.msra.mxu0 0
      %1440 = vmatprep.subr.bf16.mxu0 0
      %1441 = vmatpush1.bf16.msra.mxu0 0
      %1442 = vmatprep.subr.bf16.mxu0 0
      %1443 = vmatpush1.bf16.msra.mxu0 0
      %1444 = vmatprep.mubr.bf16.mxu0 0
      %1445 = vmatmul.mubr.bf16.gmra.mrb[0].mxu0 %v288
      %v1446 = vpop.f32.mrb[0].mxu0
      %v1447 = vadd.f32 0.0, %v1446
      %v1448 = vpop.f32.mrb[0].mxu0
      %v1449 = vpop.f32.mrb[0].mxu0
      %v1450 = vadd.f32 0.0, %v1449
      %v1451 = vpop.f32.mrb[0].mxu0
      %1452 = vmatprep.mubr.bf16.mxu0 0
      %1453 = vmatmul.mubr.bf16.gmra.mrb[0].mxu0 %v289
      %v1454 = vpop.f32.mrb[0].mxu0
      %v1455 = vadd.f32 0.0, %v1454
      %v1456 = vpop.f32.mrb[0].mxu0
      %v1457 = vpop.f32.mrb[0].mxu0
      %v1458 = vadd.f32 0.0, %v1457
      %v1459 = vpop.f32.mrb[0].mxu0
      %1460 = vmatprep.mubr.bf16.mxu0 0
      %1461 = vmatmul.mubr.bf16.gmra.mrb[0].mxu0 %v290
      %v1462 = vpop.f32.mrb[0].mxu0
      %v1463 = vadd.f32 0.0, %v1462
      %v1464 = vpop.f32.mrb[0].mxu0
      %v1465 = vpop.f32.mrb[0].mxu0
      %v1466 = vadd.f32 0.0, %v1465
      %v1467 = vpop.f32.mrb[0].mxu0
      %1468 = vmatprep.mubr.bf16.mxu0 0
      %1469 = vmatmul.mubr.bf16.gmra.mrb[0].mxu0 %v1362
      %v1470 = vpop.f32.mrb[0].mxu0
      %v1471 = vadd.f32 0.0, %v1470
      %v1472 = vpop.f32.mrb[0].mxu0
      %v1473 = vpop.f32.mrb[0].mxu0
      %v1474 = vadd.f32 0.0, %v1473
      %v1475 = vpop.f32.mrb[0].mxu0
      %1476 = vdwg.mxu0
      %v1477 = vadd.f32 %v1335, %v1447
      %v1478 = vadd.f32 %v1336, %v1450
      %v1479 = vadd.f32 %v1337, %v1455
      %v1480 = vadd.f32 %v1338, %v1458
      %v1481 = vadd.f32 %v1339, %v1463
      %v1482 = vadd.f32 %v1340, %v1466
      %v1483 = vadd.f32 %v1341, %v1471
      %v1484 = vadd.f32 %v1342, %v1474
      %v1486 = vshrl.u32 %v245, 16
      %v1488 = vrot.slane %v1486, 4
      %v1489 = vshll.u32 %v245, 16
      %v1491 = vrot.slane %v1489, 5
      %v1492 = vor.u32 %v1488, %v1491
      %v1493 = vrot.slane %v1492, 4
      %v1495 = vshll.u32 %v246, 16
      %v1497 = vrot.slane %v1495, 5
      %v1498 = vsel %vm418, %v1493, %v1497
      %s1499 = scalar_lea.vmem %s204, 448
      %v1500 = vld [vmem:[%s1499] sm:$0xf]
      %v1501 = vld [vmem:[%s1499 + $0x4] sm:$0xf]
      %v1502 = vld [vmem:[%s1499 + $0x8] sm:$0xf]
      %v1503 = vld [vmem:[%s1499 + $0xc] sm:$0xf]
      %v1504 = vld [vmem:[%s1499 + $0x10] sm:$0xf]
      %v1505 = vld [vmem:[%s1499 + $0x14] sm:$0xf]
      %v1506 = vld [vmem:[%s1499 + $0x18] sm:$0xf]
      %v1507 = vld [vmem:[%s1499 + $0x1c] sm:$0xf]
      %v1508 = vld [vmem:[%s1499 + $0x20] sm:$0xf]
      %v1509 = vld [vmem:[%s1499 + $0x24] sm:$0xf]
      %v1510 = vld [vmem:[%s1499 + $0x28] sm:$0xf]
      %v1511 = vld [vmem:[%s1499 + $0x2c] sm:$0xf]
      %v1512 = vld [vmem:[%s1499 + $0x30] sm:$0xf]
      %v1513 = vld [vmem:[%s1499 + $0x34] sm:$0xf]
      %v1514 = vld [vmem:[%s1499 + $0x38] sm:$0xf]
      %v1515 = vld [vmem:[%s1499 + $0x3c] sm:$0xf]
      %v1516 = vunpack.c.l.b16 %v1498
      %v1517 = vpack.c.b16 %v1516, %v1061
      %v1535 = vunpack.c.l.b16 %v1500
      %v1536 = vunpack.c.l.b16 %v1501
      %v1537 = vunpack.c.l.b16 %v1502
      %v1538 = vunpack.c.l.b16 %v1503
      %v1539 = vunpack.c.l.b16 %v1504
      %v1540 = vunpack.c.l.b16 %v1505
      %v1541 = vunpack.c.l.b16 %v1506
      %v1542 = vunpack.c.l.b16 %v1507
      %v1543 = vunpack.c.l.b16 %v1508
      %v1544 = vunpack.c.l.b16 %v1509
      %v1545 = vunpack.c.l.b16 %v1510
      %v1546 = vunpack.c.l.b16 %v1511
      %v1547 = vunpack.c.l.b16 %v1512
      %v1548 = vunpack.c.l.b16 %v1513
      %v1549 = vunpack.c.l.b16 %v1514
      %v1550 = vunpack.c.l.b16 %v1515
      %v1551 = vpack.c.b16 %v1536, %v1535
      %v1552 = vpack.c.b16 %v1538, %v1537
      %v1553 = vpack.c.b16 %v1540, %v1539
      %v1554 = vpack.c.b16 %v1542, %v1541
      %v1555 = vpack.c.b16 %v1544, %v1543
      %v1556 = vpack.c.b16 %v1546, %v1545
      %v1557 = vpack.c.b16 %v1548, %v1547
      %v1558 = vpack.c.b16 %v1550, %v1549
      %1567 = vmatprep.subr.bf16.mxu0 0
      %1568 = vmatpush1.bf16.msra.mxu0 %v1551
      %1569 = vmatprep.subr.bf16.mxu0 0
      %1570 = vmatpush1.bf16.msra.mxu0 %v1552
      %1571 = vmatprep.subr.bf16.mxu0 0
      %1572 = vmatpush1.bf16.msra.mxu0 %v1553
      %1573 = vmatprep.subr.bf16.mxu0 0
      %1574 = vmatpush1.bf16.msra.mxu0 %v1554
      %1575 = vmatprep.subr.bf16.mxu0 0
      %1576 = vmatpush1.bf16.msra.mxu0 %v1555
      %1577 = vmatprep.subr.bf16.mxu0 0
      %1578 = vmatpush1.bf16.msra.mxu0 %v1556
      %1579 = vmatprep.subr.bf16.mxu0 0
      %1580 = vmatpush1.bf16.msra.mxu0 %v1557
      %1581 = vmatprep.subr.bf16.mxu0 0
      %1582 = vmatpush1.bf16.msra.mxu0 %v1558
      %1583 = vmatprep.subr.bf16.mxu0 0
      %1584 = vmatpush1.bf16.msra.mxu0 0
      %1585 = vmatprep.subr.bf16.mxu0 0
      %1586 = vmatpush1.bf16.msra.mxu0 0
      %1587 = vmatprep.subr.bf16.mxu0 0
      %1588 = vmatpush1.bf16.msra.mxu0 0
      %1589 = vmatprep.subr.bf16.mxu0 0
      %1590 = vmatpush1.bf16.msra.mxu0 0
      %1591 = vmatprep.subr.bf16.mxu0 0
      %1592 = vmatpush1.bf16.msra.mxu0 0
      %1593 = vmatprep.subr.bf16.mxu0 0
      %1594 = vmatpush1.bf16.msra.mxu0 0
      %1595 = vmatprep.subr.bf16.mxu0 0
      %1596 = vmatpush1.bf16.msra.mxu0 0
      %1597 = vmatprep.subr.bf16.mxu0 0
      %1598 = vmatpush1.bf16.msra.mxu0 0
      %1599 = vmatprep.mubr.bf16.mxu0 0
      %1600 = vmatmul.mubr.bf16.gmra.mrb[0].mxu0 %v557
      %v1601 = vpop.f32.mrb[0].mxu0
      %v1602 = vadd.f32 0.0, %v1601
      %v1603 = vpop.f32.mrb[0].mxu0
      %v1604 = vpop.f32.mrb[0].mxu0
      %v1605 = vadd.f32 0.0, %v1604
      %v1606 = vpop.f32.mrb[0].mxu0
      %1607 = vmatprep.mubr.bf16.mxu0 0
      %1608 = vmatmul.mubr.bf16.gmra.mrb[0].mxu0 %v558
      %v1609 = vpop.f32.mrb[0].mxu0
      %v1610 = vadd.f32 0.0, %v1609
      %v1611 = vpop.f32.mrb[0].mxu0
      %v1612 = vpop.f32.mrb[0].mxu0
      %v1613 = vadd.f32 0.0, %v1612
      %v1614 = vpop.f32.mrb[0].mxu0
      %1615 = vmatprep.mubr.bf16.mxu0 0
      %1616 = vmatmul.mubr.bf16.gmra.mrb[0].mxu0 %v559
      %v1617 = vpop.f32.mrb[0].mxu0
      %v1618 = vadd.f32 0.0, %v1617
      %v1619 = vpop.f32.mrb[0].mxu0
      %v1620 = vpop.f32.mrb[0].mxu0
      %v1621 = vadd.f32 0.0, %v1620
      %v1622 = vpop.f32.mrb[0].mxu0
      %1623 = vmatprep.mubr.bf16.mxu0 0
      %1624 = vmatmul.mubr.bf16.gmra.mrb[0].mxu0 %v1517
      %v1625 = vpop.f32.mrb[0].mxu0
      %v1626 = vadd.f32 0.0, %v1625
      %v1627 = vpop.f32.mrb[0].mxu0
      %v1628 = vpop.f32.mrb[0].mxu0
      %v1629 = vadd.f32 0.0, %v1628
      %v1630 = vpop.f32.mrb[0].mxu0
      %1631 = vdwg.mxu0
      %v1632 = vadd.f32 %v1477, %v1602
      %v1633 = vadd.f32 %v1478, %v1605
      %v1634 = vadd.f32 %v1479, %v1610
      %v1635 = vadd.f32 %v1480, %v1613
      %v1636 = vadd.f32 %v1481, %v1618
      %v1637 = vadd.f32 %v1482, %v1621
      %v1638 = vadd.f32 %v1483, %v1626
      %v1639 = vadd.f32 %v1484, %v1629
      %v1641 = vrot.slane %v245, 5
      %v1642 = vrot.slane %v1641, 4
      %v1643 = vrot.slane %v246, 5
      %v1644 = vsel %vm695, %v1642, %v1643
      %s1645 = scalar_lea.vmem %s204, 512
      %v1646 = vld [vmem:[%s1645] sm:$0xf]
      %v1647 = vld [vmem:[%s1645 + $0x4] sm:$0xf]
      %v1648 = vld [vmem:[%s1645 + $0x8] sm:$0xf]
      %v1649 = vld [vmem:[%s1645 + $0xc] sm:$0xf]
      %v1650 = vld [vmem:[%s1645 + $0x10] sm:$0xf]
      %v1651 = vld [vmem:[%s1645 + $0x14] sm:$0xf]
      %v1652 = vld [vmem:[%s1645 + $0x18] sm:$0xf]
      %v1653 = vld [vmem:[%s1645 + $0x1c] sm:$0xf]
      %v1654 = vld [vmem:[%s1645 + $0x20] sm:$0xf]
      %v1655 = vld [vmem:[%s1645 + $0x24] sm:$0xf]
      %v1656 = vld [vmem:[%s1645 + $0x28] sm:$0xf]
      %v1657 = vld [vmem:[%s1645 + $0x2c] sm:$0xf]
      %v1658 = vld [vmem:[%s1645 + $0x30] sm:$0xf]
      %v1659 = vld [vmem:[%s1645 + $0x34] sm:$0xf]
      %v1660 = vld [vmem:[%s1645 + $0x38] sm:$0xf]
      %v1661 = vld [vmem:[%s1645 + $0x3c] sm:$0xf]
      %v1662 = vunpack.c.l.b16 %v1644
      %v1663 = vpack.c.b16 %v1662, %v1213
      %v1681 = vunpack.c.l.b16 %v1646
      %v1682 = vunpack.c.l.b16 %v1647
      %v1683 = vunpack.c.l.b16 %v1648
      %v1684 = vunpack.c.l.b16 %v1649
      %v1685 = vunpack.c.l.b16 %v1650
      %v1686 = vunpack.c.l.b16 %v1651
      %v1687 = vunpack.c.l.b16 %v1652
      %v1688 = vunpack.c.l.b16 %v1653
      %v1689 = vunpack.c.l.b16 %v1654
      %v1690 = vunpack.c.l.b16 %v1655
      %v1691 = vunpack.c.l.b16 %v1656
      %v1692 = vunpack.c.l.b16 %v1657
      %v1693 = vunpack.c.l.b16 %v1658
      %v1694 = vunpack.c.l.b16 %v1659
      %v1695 = vunpack.c.l.b16 %v1660
      %v1696 = vunpack.c.l.b16 %v1661
      %v1697 = vpack.c.b16 %v1682, %v1681
      %v1698 = vpack.c.b16 %v1684, %v1683
      %v1699 = vpack.c.b16 %v1686, %v1685
      %v1700 = vpack.c.b16 %v1688, %v1687
      %v1701 = vpack.c.b16 %v1690, %v1689
      %v1702 = vpack.c.b16 %v1692, %v1691
      %v1703 = vpack.c.b16 %v1694, %v1693
      %v1704 = vpack.c.b16 %v1696, %v1695
      %1713 = vmatprep.subr.bf16.mxu0 0
      %1714 = vmatpush1.bf16.msra.mxu0 %v1697
      %1715 = vmatprep.subr.bf16.mxu0 0
      %1716 = vmatpush1.bf16.msra.mxu0 %v1698
      %1717 = vmatprep.subr.bf16.mxu0 0
      %1718 = vmatpush1.bf16.msra.mxu0 %v1699
      %1719 = vmatprep.subr.bf16.mxu0 0
      %1720 = vmatpush1.bf16.msra.mxu0 %v1700
      %1721 = vmatprep.subr.bf16.mxu0 0
      %1722 = vmatpush1.bf16.msra.mxu0 %v1701
      %1723 = vmatprep.subr.bf16.mxu0 0
      %1724 = vmatpush1.bf16.msra.mxu0 %v1702
      %1725 = vmatprep.subr.bf16.mxu0 0
      %1726 = vmatpush1.bf16.msra.mxu0 %v1703
      %1727 = vmatprep.subr.bf16.mxu0 0
      %1728 = vmatpush1.bf16.msra.mxu0 %v1704
      %1729 = vmatprep.subr.bf16.mxu0 0
      %1730 = vmatpush1.bf16.msra.mxu0 0
      %1731 = vmatprep.subr.bf16.mxu0 0
      %1732 = vmatpush1.bf16.msra.mxu0 0
      %1733 = vmatprep.subr.bf16.mxu0 0
      %1734 = vmatpush1.bf16.msra.mxu0 0
      %1735 = vmatprep.subr.bf16.mxu0 0
      %1736 = vmatpush1.bf16.msra.mxu0 0
      %1737 = vmatprep.subr.bf16.mxu0 0
      %1738 = vmatpush1.bf16.msra.mxu0 0
      %1739 = vmatprep.subr.bf16.mxu0 0
      %1740 = vmatpush1.bf16.msra.mxu0 0
      %1741 = vmatprep.subr.bf16.mxu0 0
      %1742 = vmatpush1.bf16.msra.mxu0 0
      %1743 = vmatprep.subr.bf16.mxu0 0
      %1744 = vmatpush1.bf16.msra.mxu0 0
      %1745 = vmatprep.mubr.bf16.mxu0 0
      %1746 = vmatmul.mubr.bf16.gmra.mrb[0].mxu0 %v754
      %v1747 = vpop.f32.mrb[0].mxu0
      %v1748 = vadd.f32 0.0, %v1747
      %v1749 = vpop.f32.mrb[0].mxu0
      %v1750 = vpop.f32.mrb[0].mxu0
      %v1751 = vadd.f32 0.0, %v1750
      %v1752 = vpop.f32.mrb[0].mxu0
      %1753 = vmatprep.mubr.bf16.mxu0 0
      %1754 = vmatmul.mubr.bf16.gmra.mrb[0].mxu0 %v755
      %v1755 = vpop.f32.mrb[0].mxu0
      %v1756 = vadd.f32 0.0, %v1755
      %v1757 = vpop.f32.mrb[0].mxu0
      %v1758 = vpop.f32.mrb[0].mxu0
      %v1759 = vadd.f32 0.0, %v1758
      %v1760 = vpop.f32.mrb[0].mxu0
      %1761 = vmatprep.mubr.bf16.mxu0 0
      %1762 = vmatmul.mubr.bf16.gmra.mrb[0].mxu0 %v756
      %v1763 = vpop.f32.mrb[0].mxu0
      %v1764 = vadd.f32 0.0, %v1763
      %v1765 = vpop.f32.mrb[0].mxu0
      %v1766 = vpop.f32.mrb[0].mxu0
      %v1767 = vadd.f32 0.0, %v1766
      %v1768 = vpop.f32.mrb[0].mxu0
      %1769 = vmatprep.mubr.bf16.mxu0 0
      %1770 = vmatmul.mubr.bf16.gmra.mrb[0].mxu0 %v1663
      %v1771 = vpop.f32.mrb[0].mxu0
      %v1772 = vadd.f32 0.0, %v1771
      %v1773 = vpop.f32.mrb[0].mxu0
      %v1774 = vpop.f32.mrb[0].mxu0
      %v1775 = vadd.f32 0.0, %v1774
      %v1776 = vpop.f32.mrb[0].mxu0
      %1777 = vdwg.mxu0
      %v1778 = vadd.f32 %v1632, %v1748
      %v1779 = vadd.f32 %v1633, %v1751
      %v1780 = vadd.f32 %v1634, %v1756
      %v1781 = vadd.f32 %v1635, %v1759
      %v1782 = vadd.f32 %v1636, %v1764
      %v1783 = vadd.f32 %v1637, %v1767
      %v1784 = vadd.f32 %v1638, %v1772
      %v1785 = vadd.f32 %v1639, %v1775
      %1786 = vst [vmem:[#allocation2] sm:$0xff] %v1778
      %1787 = vst [vmem:[#allocation2 + $0x8] sm:$0xff] %v1779
      %1788 = vst [vmem:[#allocation2 + $0x10] sm:$0xff] %v1780
      %1789 = vst [vmem:[#allocation2 + $0x18] sm:$0xff] %v1781
      %1790 = vst [vmem:[#allocation2 + $0x20] sm:$0xff] %v1782
      %1791 = vst [vmem:[#allocation2 + $0x28] sm:$0xff] %v1783
      %1792 = vst [vmem:[#allocation2 + $0x30] sm:$0xff] %v1784
      %1793 = vst [vmem:[#allocation2 + $0x38] sm:$0xff] %v1785
      %p1794 = scmp.eq.s32.totalorder %s20, 2
      // Predicated region
      $region33: #{upconv3d_block_forward.12} parent=27 // pred_check
        %p1795 = pneg %p1794
      $region34: #{upconv3d_block_forward.12} parent=27 // pred_check_branch
        %1797 = sbr.rel (%p1795) target = $region36
      $region35: #{upconv3d_block_forward.12} parent=27 // pred_region
        %1798 = vst [vmem:[%s213] sm:$0xff] %v1778
        %1799 = vst [vmem:[%s213 + $0x8] sm:$0xff] %v1779
        %1800 = vst [vmem:[%s213 + $0x10] sm:$0xff] %v1780
        %1801 = vst [vmem:[%s213 + $0x18] sm:$0xff] %v1781
        %1802 = vst [vmem:[%s213 + $0x20] sm:$0xff] %v1782
        %1803 = vst [vmem:[%s213 + $0x28] sm:$0xff] %v1783
        %1804 = vst [vmem:[%s213 + $0x30] sm:$0xff] %v1784
        %1805 = vst [vmem:[%s213 + $0x38] sm:$0xff] %v1785
      $region36: #{upconv3d_block_forward.12} parent=27 // pred_fallthru
        _
      %p1806 = scmp.lt.s32.totalorder %s18, 1
      %s1807 = scalar_select %p1806, %s18, 1
      %p1808 = scmp.lt.s32.totalorder %s19, 7
      %s1809 = scalar_select %p1808, %s19, 7
      %s1810 = smul.addr %s1809, 8
      %s1811 = smul.addr %s1807, 64
      %s1812 = sadd.s32 %s1810, %s1811
      %s1813 = smul.addr %s1812, 8
      %s1814 = scalar_lea.vmem %s2, %s1813
      // Predicated region
      $region37: #{upconv3d_block_forward.12} parent=27 // pred_check
        %p1815 = pneg %p108
      $region38: #{upconv3d_block_forward.12} parent=27 // pred_check_branch
        %1817 = sbr.rel (%p1815) target = $region40
      $region39: #{upconv3d_block_forward.12} parent=27 // pred_region
        _
      $region40: #{upconv3d_block_forward.12} parent=27 // pred_fallthru
        _
    $region28: #{upconv3d_block_forward.12} parent=5 // pred_fallthru
      _
    %p1818 = scmp.le.s32.totalorder 2, %s8
    // Predicated region
    $region41: #{upconv3d_block_forward.12} parent=5 // pred_check
      %p1819 = pneg %p1818
    $region42: #{upconv3d_block_forward.12} parent=5 // pred_check_branch
      %1821 = sbr.rel (%p1819) target = $region44
    $region43: #{upconv3d_block_forward.12} parent=5 // pred_region
      %s1822 = ssub.s32 %s8, 2
      // Predicated region
      $region45: #{upconv3d_block_forward.12} parent=43 // pred_check
        %p1823 = pneg %p114
      $region46: #{upconv3d_block_forward.12} parent=43 // pred_check_branch
        %1825 = sbr.rel (%p1823) target = $region48
      $region47: #{upconv3d_block_forward.12} parent=43 // pred_region
        %p1826 = scmp.lt.s32.totalorder %s21, 1
        %s1827 = scalar_select %p1826, %s21, 1
        %p1828 = scmp.lt.s32.totalorder %s22, 7
        %s1829 = scalar_select %p1828, %s22, 7
        %s1830 = smul.addr %s1829, 8
        %s1831 = smul.addr %s1827, 64
        %s1832 = sadd.s32 %s1830, %s1831
        %s1833 = smul.addr %s1832, 8
        %s1834 = scalar_lea.vmem %s2, %s1833
      $region48: #{upconv3d_block_forward.12} parent=43 // pred_fallthru
        _
    $region44: #{upconv3d_block_forward.12} parent=5 // pred_fallthru
      _
  $region6: #{upconv3d_block_forward.12} parent=0 // loop_footer
    %s12 = sadd.s32 1, %s8
  $region7: #{upconv3d_block_forward.12} parent=0 // loop_footer_branch
    %7 = sbr.rel target = $region3
  $region8: #{upconv3d_block_forward.12} parent=0 // loop_exit
    _

// kernel: upconv3d_block_forward.15
$region0: #{upconv3d_block_forward.15}
  #allocation0 [shape = 'u32[]', space=smem, size = 0x4, offset = 0x4, fixed_abs, tag = 'smem constant byte address 0x4 - core index']
  #allocation1 [shape = 'u32[144,128]{1,0:T(1,128)}', space=vmem, size = 0x12000, scoped, tag = 'internal scratch']
  #allocation2 [shape = 'f32[512,128]{1,0:T(8,128)}', space=vmem, size = 0x40000, scoped, tag = 'scratch operand']
  %s0 = inlined_call_operand.vmem [shape: bf16[1024,128], index: 0, kind: input, shape index: {}]
  %s1 = inlined_call_operand.vmem [shape: bf16[128,128], index: 1, kind: input, shape index: {}]
  %s2 = inlined_call_operand.vmem [shape: f32[1,128], index: 2, kind: input, shape index: {}]
  %s3 = inlined_call_operand.vmem [shape: f32[1024,128], index: 3, kind: output, shape index: {}]
  %s4 = sld [smem:[#allocation0]]
  $region53: #{upconv3d_block_forward.15} parent=0
    _
  %s6 = ssub.s32 1, %s4
  %s7 = scalar_select 0, %s6, %s4
  loop: start=0, step=1, limit=4
  $region2: #{upconv3d_block_forward.15} parent=0 // loop_pre_header
    _
  $region3: #{upconv3d_block_forward.15} parent=0 // loop_header
    %s9 = sphi 0, %s13
    %p10 = scmp.ge.s32.totalorder %s9, 4
    %s16 = sphi 0, %s35
    %s17 = sphi 0, %s31
    %s18 = sphi 0, %s27
    %s19 = sphi 0, %s16
    %s20 = sphi 0, %s17
    %s21 = sphi 0, %s18
    %s22 = sphi 0, %s19
    %s23 = sphi 0, %s20
    %s24 = sphi 0, %s21
    %s40 = sphi 0, %s42
    %s43 = sphi 0, %s40
    %s44 = sphi 0, %s43
    %s60 = sphi 0, %s44
    %s68 = sphi 0, %s70
    %s71 = sphi 0, %s68
    %s72 = sphi 0, %s71
    %s88 = sphi 0, %s72
    %s94 = sphi 0, %s96
    %s97 = sphi 0, %s94
    %s98 = sphi 0, %s97
    %s114 = sphi 0, %s98
    %s122 = sphi 0, %s124
    %s125 = sphi 0, %s122
    %s126 = sphi 0, %s125
    %s142 = sphi 0, %s126
  $region4: #{upconv3d_block_forward.15} parent=0 // loop_header_branch
    %12 = sbr.rel (%p10) target = $region8
  $region5: #{upconv3d_block_forward.15} parent=0 // loop_body
    %s14 = ssub.s32 %s9, 1
    %s15 = ssub.s32 %s9, 2
    %s25 = sadd.s32 1, %s18
    %p26 = scmp.ge.s32.totalorder %s25, 1
    %s27 = scalar_select %p26, 0, %s25
    %s28 = sadd.s32 1, %s17
    %s29 = scalar_select %p26, %s28, %s17
    %p30 = scmp.ge.s32.totalorder %s29, 1
    %s31 = scalar_select %p30, 0, %s29
    %s32 = sadd.s32 1, %s16
    %s33 = scalar_select %p30, %s32, %s16
    %p34 = scmp.ge.s32.totalorder %s33, 2
    %s35 = scalar_select %p34, 0, %s33
    %s36 = ssub.s32 %s16, %s35
    %s37 = ssub.s32 %s18, %s27
    %s38 = sor.u32 %s36, %s37
    %p39 = scmp.eq.s32.totalorder %s38, 0
    %s41 = sadd.s32 %s40, 1
    %s42 = scalar_select %p39, %s40, %s41
    %p45 = pneg %p39
    %p46 = scmp.eq.s32.totalorder %s9, 1
    %p47 = por %p45, %p46
    %p48 = scmp.ne.s32.totalorder %s40, %s43
    %p49 = scmp.eq.s32.totalorder %s9, 0
    %p50 = por %p48, %p49
    %p51 = scmp.ne.s32.totalorder %s40, %s43
    %p52 = scmp.eq.s32.totalorder %s14, 1
    %p53 = por %p51, %p52
    %p54 = scmp.ne.s32.totalorder %s43, %s44
    %p55 = scmp.eq.s32.totalorder %s14, 0
    %p56 = por %p54, %p55
    %p57 = scmp.ne.s32.totalorder %s43, %s44
    %p58 = scmp.eq.s32.totalorder %s15, 1
    %p59 = por %p57, %p58
    %p61 = scmp.ne.s32.totalorder %s44, %s60
    %p62 = scmp.eq.s32.totalorder %s15, 0
    %p63 = por %p61, %p62
    %s64 = ssub.s32 %s18, %s27
    %s65 = ssub.s32 %s17, %s31
    %s66 = sor.u32 %s64, %s65
    %p67 = scmp.eq.s32.totalorder %s66, 0
    %s69 = sadd.s32 %s68, 1
    %s70 = scalar_select %p67, %s68, %s69
    %p73 = pneg %p67
    %p74 = scmp.eq.s32.totalorder %s9, 1
    %p75 = por %p73, %p74
    %p76 = scmp.ne.s32.totalorder %s68, %s71
    %p77 = scmp.eq.s32.totalorder %s9, 0
    %p78 = por %p76, %p77
    %p79 = scmp.ne.s32.totalorder %s68, %s71
    %p80 = scmp.eq.s32.totalorder %s14, 1
    %p81 = por %p79, %p80
    %p82 = scmp.ne.s32.totalorder %s71, %s72
    %p83 = scmp.eq.s32.totalorder %s14, 0
    %p84 = por %p82, %p83
    %p85 = scmp.ne.s32.totalorder %s71, %s72
    %p86 = scmp.eq.s32.totalorder %s15, 1
    %p87 = por %p85, %p86
    %p89 = scmp.ne.s32.totalorder %s72, %s88
    %p90 = scmp.eq.s32.totalorder %s15, 0
    %p91 = por %p89, %p90
    %s92 = ssub.s32 %s17, %s31
    %p93 = scmp.eq.s32.totalorder %s92, 0
    %s95 = sadd.s32 %s94, 1
    %s96 = scalar_select %p93, %s94, %s95
    %p99 = pneg %p93
    %p100 = scmp.eq.s32.totalorder %s9, 1
    %p101 = por %p99, %p100
    %p102 = scmp.ne.s32.totalorder %s94, %s97
    %p103 = scmp.eq.s32.totalorder %s9, 0
    %p104 = por %p102, %p103
    %p105 = scmp.ne.s32.totalorder %s94, %s97
    %p106 = scmp.eq.s32.totalorder %s14, 1
    %p107 = por %p105, %p106
    %p108 = scmp.ne.s32.totalorder %s97, %s98
    %p109 = scmp.eq.s32.totalorder %s14, 0
    %p110 = por %p108, %p109
    %p111 = scmp.ne.s32.totalorder %s97, %s98
    %p112 = scmp.eq.s32.totalorder %s15, 1
    %p113 = por %p111, %p112
    %p115 = scmp.ne.s32.totalorder %s98, %s114
    %p116 = scmp.eq.s32.totalorder %s15, 0
    %p117 = por %p115, %p116
    %s118 = ssub.s32 %s16, %s35
    %s119 = ssub.s32 %s17, %s31
    %s120 = sor.u32 %s118, %s119
    %p121 = scmp.eq.s32.totalorder %s120, 0
    %s123 = sadd.s32 %s122, 1
    %s124 = scalar_select %p121, %s122, %s123
    %p127 = pneg %p121
    %p128 = scmp.eq.s32.totalorder %s9, 1
    %p129 = por %p127, %p128
    %p130 = scmp.ne.s32.totalorder %s122, %s125
    %p131 = scmp.eq.s32.totalorder %s9, 0
    %p132 = por %p130, %p131
    %p133 = scmp.ne.s32.totalorder %s122, %s125
    %p134 = scmp.eq.s32.totalorder %s14, 1
    %p135 = por %p133, %p134
    %p136 = scmp.ne.s32.totalorder %s125, %s126
    %p137 = scmp.eq.s32.totalorder %s14, 0
    %p138 = por %p136, %p137
    %p139 = scmp.ne.s32.totalorder %s125, %s126
    %p140 = scmp.eq.s32.totalorder %s15, 1
    %p141 = por %p139, %p140
    %p143 = scmp.ne.s32.totalorder %s126, %s142
    %p144 = scmp.eq.s32.totalorder %s15, 0
    %p145 = por %p143, %p144
    %p146 = scmp.le.s32.totalorder 1, %s9
    %p147 = scmp.lt.s32.totalorder %s9, 3
    %p148 = pnand %p146, %p147
    %p149 = pneg %p148
    // Predicated region
    $region9: #{upconv3d_block_forward.15} parent=5 // pred_check
      _
    $region10: #{upconv3d_block_forward.15} parent=5 // pred_check_branch
      %151 = sbr.rel (%p148) target = $region12
    $region11: #{upconv3d_block_forward.15} parent=5 // pred_region
      %s152 = ssub.s32 %s9, 1
      // Predicated region
      $region13: #{upconv3d_block_forward.15} parent=11 // pred_check
        %p153 = pneg %p84
      $region14: #{upconv3d_block_forward.15} parent=11 // pred_check_branch
        %155 = sbr.rel (%p153) target = $region16
      $region15: #{upconv3d_block_forward.15} parent=11 // pred_region
        %s156 = smul.u32 16, %s21
        %p157 = scmp.lt.s32.totalorder %s156, 15
        %s158 = scalar_select %p157, %s156, 15
        %p159 = scmp.lt.s32.totalorder %s20, 0
        %s160 = scalar_select %p159, %s20, 0
        %s161 = sadd.s32 %s160, %s158
        %s162 = smul.addr %s161, 4
        %s163 = scalar_lea.vmem %s1, %s162
        %s164 = smul.u32 16, %s21
      $region16: #{upconv3d_block_forward.15} parent=11 // pred_fallthru
        _
      // Predicated region
      $region17: #{upconv3d_block_forward.15} parent=11 // pred_check
        %p165 = pneg %p110
      $region18: #{upconv3d_block_forward.15} parent=11 // pred_check_branch
        %167 = sbr.rel (%p165) target = $region20
      $region19: #{upconv3d_block_forward.15} parent=11 // pred_region
        %p168 = scmp.lt.s32.totalorder %s20, 0
        %s169 = scalar_select %p168, %s20, 0
        %s170 = scalar_lea.vmem %s2, %s169
      $region20: #{upconv3d_block_forward.15} parent=11 // pred_fallthru
        _
    $region12: #{upconv3d_block_forward.15} parent=5 // pred_fallthru
      _
    %p171 = scmp.lt.s32.totalorder %s9, 2
    // Predicated region
    $region21: #{upconv3d_block_forward.15} parent=5 // pred_check
      %p172 = pneg %p171
    $region22: #{upconv3d_block_forward.15} parent=5 // pred_check_branch
      %174 = sbr.rel (%p172) target = $region24
    $region23: #{upconv3d_block_forward.15} parent=5 // pred_region
      // Predicated region
      $region25: #{upconv3d_block_forward.15} parent=23 // pred_check
        %p175 = pneg %p50
      $region26: #{upconv3d_block_forward.15} parent=23 // pred_check_branch
        %177 = sbr.rel (%p175) target = $region28
      $region27: #{upconv3d_block_forward.15} parent=23 // pred_region
        %s178 = smul.u32 64, %s16
        %p179 = scmp.lt.s32.totalorder %s178, 127
        %s180 = scalar_select %p179, %s178, 127
        %p181 = scmp.lt.s32.totalorder %s18, 0
        %s182 = scalar_select %p181, %s18, 0
        %s183 = sadd.s32 %s182, %s180
        %s184 = smul.addr %s183, 4
        %s185 = scalar_lea.vmem %s0, %s184
        %s186 = smul.u32 64, %s16
      $region28: #{upconv3d_block_forward.15} parent=23 // pred_fallthru
        _
    $region24: #{upconv3d_block_forward.15} parent=5 // pred_fallthru
      _
    %p187 = scmp.le.s32.totalorder 1, %s9
    %p188 = scmp.lt.s32.totalorder %s9, 3
    %p189 = pnand %p187, %p188
    %p190 = pneg %p189
    // Predicated region
    $region29: #{upconv3d_block_forward.15} parent=5 // pred_check
      _
    $region30: #{upconv3d_block_forward.15} parent=5 // pred_check_branch
      %192 = sbr.rel (%p189) target = $region32
    $region31: #{upconv3d_block_forward.15} parent=5 // pred_region
      %s193 = ssub.s32 %s9, 1
      %s194 = smul.u32 64, %s19
      %p195 = scmp.lt.s32.totalorder %s194, 127
      %s196 = scalar_select %p195, %s194, 127
      %p197 = scmp.lt.s32.totalorder %s21, 0
      %s198 = scalar_select %p197, %s21, 0
      %s199 = sadd.s32 %s198, %s196
      %s200 = smul.addr %s199, 4
      %s201 = scalar_lea.vmem %s0, %s200
      %p202 = pneg %p56
      %p203 = pneg %p53
      %s204 = smul.u32 16, %s21
      %p205 = scmp.lt.s32.totalorder %s204, 15
      %s206 = scalar_select %p205, %s204, 15
      %p207 = scmp.lt.s32.totalorder %s20, 0
      %s208 = scalar_select %p207, %s20, 0
      %s209 = sadd.s32 %s208, %s206
      %s210 = smul.addr %s209, 4
      %s211 = scalar_lea.vmem %s1, %s210
      %p212 = pneg %p84
      %p213 = pneg %p81
      %p214 = scmp.lt.s32.totalorder %s20, 0
      %s215 = scalar_select %p214, %s20, 0
      %s216 = scalar_lea.vmem %s2, %s215
      %p217 = pneg %p110
      %p218 = pneg %p107
      %p219 = pneg %p138
      %p220 = pneg %p135
      %s221 = smul.u32 64, %s19
      %p222 = scmp.lt.s32.totalorder %s221, 127
      %s223 = scalar_select %p222, %s221, 127
      %p224 = scmp.lt.s32.totalorder %s20, 0
      %s225 = scalar_select %p224, %s20, 0
      %s226 = sadd.s32 %s225, %s223
      %s227 = smul.addr %s226, 8
      %s228 = scalar_lea.vmem %s3, %s227
      %s229 = smul.u32 64, %s19
      %p230 = scmp.lt.s32.totalorder %s229, 127
      %s231 = scalar_select %p230, %s229, 127
      %p232 = scmp.lt.s32.totalorder %s21, 0
      %s233 = scalar_select %p232, %s21, 0
      %s234 = sadd.s32 %s233, %s231
      %s235 = smul.addr %s234, 4
      %s236 = scalar_lea.vmem %s0, %s235
      %s237 = smul.u32 64, %s19
      %s238 = smul.u32 16, %s21
      %p239 = scmp.lt.s32.totalorder %s238, 15
      %s240 = scalar_select %p239, %s238, 15
      %p241 = scmp.lt.s32.totalorder %s20, 0
      %s242 = scalar_select %p241, %s20, 0
      %s243 = sadd.s32 %s242, %s240
      %s244 = smul.addr %s243, 4
      %s245 = scalar_lea.vmem %s1, %s244
      %s246 = smul.u32 16, %s21
      %p247 = scmp.lt.s32.totalorder %s20, 0
      %s248 = scalar_select %p247, %s20, 0
      %s249 = scalar_lea.vmem %s2, %s248
      %s250 = smul.u32 64, %s19
      %p251 = scmp.lt.s32.totalorder %s250, 127
      %s252 = scalar_select %p251, %s250, 127
      %p253 = scmp.lt.s32.totalorder %s20, 0
      %s254 = scalar_select %p253, %s20, 0
      %s255 = sadd.s32 %s254, %s252
      %s256 = smul.addr %s255, 8
      %s257 = scalar_lea.vmem %s3, %s256
      %s258 = smul.u32 64, %s19
      %p260 = scmp.eq.s32.totalorder %s21, 0
      // Predicated region
      $region33: #{upconv3d_block_forward.15} parent=31 // pred_check
        %p261 = pneg %p260
      $region34: #{upconv3d_block_forward.15} parent=31 // pred_check_branch
        %263 = sbr.rel (%p261) target = $region36
      $region35: #{upconv3d_block_forward.15} parent=31 // pred_region
        %264 = vst [vmem:[#allocation2] sm:$0xff] 0.0
        %265 = vst [vmem:[#allocation2 + $0x8] sm:$0xff] 0.0
        %266 = vst [vmem:[#allocation2 + $0x10] sm:$0xff] 0.0
        %267 = vst [vmem:[#allocation2 + $0x18] sm:$0xff] 0.0
        %268 = vst [vmem:[#allocation2 + $0x20] sm:$0xff] 0.0
        %269 = vst [vmem:[#allocation2 + $0x28] sm:$0xff] 0.0
        %270 = vst [vmem:[#allocation2 + $0x30] sm:$0xff] 0.0
        %271 = vst [vmem:[#allocation2 + $0x38] sm:$0xff] 0.0
        %272 = vst [vmem:[#allocation2 + $0x40] sm:$0xff] 0.0
        %273 = vst [vmem:[#allocation2 + $0x48] sm:$0xff] 0.0
        %274 = vst [vmem:[#allocation2 + $0x50] sm:$0xff] 0.0
        %275 = vst [vmem:[#allocation2 + $0x58] sm:$0xff] 0.0
        %276 = vst [vmem:[#allocation2 + $0x60] sm:$0xff] 0.0
        %277 = vst [vmem:[#allocation2 + $0x68] sm:$0xff] 0.0
        %278 = vst [vmem:[#allocation2 + $0x70] sm:$0xff] 0.0
        %279 = vst [vmem:[#allocation2 + $0x78] sm:$0xff] 0.0
        %280 = vst [vmem:[#allocation2 + $0x80] sm:$0xff] 0.0
        %281 = vst [vmem:[#allocation2 + $0x88] sm:$0xff] 0.0
        %282 = vst [vmem:[#allocation2 + $0x90] sm:$0xff] 0.0
        %283 = vst [vmem:[#allocation2 + $0x98] sm:$0xff] 0.0
        %284 = vst [vmem:[#allocation2 + $0xa0] sm:$0xff] 0.0
        %285 = vst [vmem:[#allocation2 + $0xa8] sm:$0xff] 0.0
        %286 = vst [vmem:[#allocation2 + $0xb0] sm:$0xff] 0.0
        %287 = vst [vmem:[#allocation2 + $0xb8] sm:$0xff] 0.0
        %288 = vst [vmem:[#allocation2 + $0xc0] sm:$0xff] 0.0
        %289 = vst [vmem:[#allocation2 + $0xc8] sm:$0xff] 0.0
        %290 = vst [vmem:[#allocation2 + $0xd0] sm:$0xff] 0.0
        %291 = vst [vmem:[#allocation2 + $0xd8] sm:$0xff] 0.0
        %292 = vst [vmem:[#allocation2 + $0xe0] sm:$0xff] 0.0
        %293 = vst [vmem:[#allocation2 + $0xe8] sm:$0xff] 0.0
        %294 = vst [vmem:[#allocation2 + $0xf0] sm:$0xff] 0.0
        %295 = vst [vmem:[#allocation2 + $0xf8] sm:$0xff] 0.0
        %296 = vst [vmem:[#allocation2 + $0x100] sm:$0xff] 0.0
        %297 = vst [vmem:[#allocation2 + $0x108] sm:$0xff] 0.0
        %298 = vst [vmem:[#allocation2 + $0x110] sm:$0xff] 0.0
        %299 = vst [vmem:[#allocation2 + $0x118] sm:$0xff] 0.0
        %300 = vst [vmem:[#allocation2 + $0x120] sm:$0xff] 0.0
        %301 = vst [vmem:[#allocation2 + $0x128] sm:$0xff] 0.0
        %302 = vst [vmem:[#allocation2 + $0x130] sm:$0xff] 0.0
        %303 = vst [vmem:[#allocation2 + $0x138] sm:$0xff] 0.0
        %304 = vst [vmem:[#allocation2 + $0x140] sm:$0xff] 0.0
        %305 = vst [vmem:[#allocation2 + $0x148] sm:$0xff] 0.0
        %306 = vst [vmem:[#allocation2 + $0x150] sm:$0xff] 0.0
        %307 = vst [vmem:[#allocation2 + $0x158] sm:$0xff] 0.0
        %308 = vst [vmem:[#allocation2 + $0x160] sm:$0xff] 0.0
        %309 = vst [vmem:[#allocation2 + $0x168] sm:$0xff] 0.0
        %310 = vst [vmem:[#allocation2 + $0x170] sm:$0xff] 0.0
        %311 = vst [vmem:[#allocation2 + $0x178] sm:$0xff] 0.0
        %312 = vst [vmem:[#allocation2 + $0x180] sm:$0xff] 0.0
        %313 = vst [vmem:[#allocation2 + $0x188] sm:$0xff] 0.0
        %314 = vst [vmem:[#allocation2 + $0x190] sm:$0xff] 0.0
        %315 = vst [vmem:[#allocation2 + $0x198] sm:$0xff] 0.0
        %316 = vst [vmem:[#allocation2 + $0x1a0] sm:$0xff] 0.0
        %317 = vst [vmem:[#allocation2 + $0x1a8] sm:$0xff] 0.0
        %318 = vst [vmem:[#allocation2 + $0x1b0] sm:$0xff] 0.0
        %319 = vst [vmem:[#allocation2 + $0x1b8] sm:$0xff] 0.0
        %320 = vst [vmem:[#allocation2 + $0x1c0] sm:$0xff] 0.0
        %321 = vst [vmem:[#allocation2 + $0x1c8] sm:$0xff] 0.0
        %322 = vst [vmem:[#allocation2 + $0x1d0] sm:$0xff] 0.0
        %323 = vst [vmem:[#allocation2 + $0x1d8] sm:$0xff] 0.0
        %324 = vst [vmem:[#allocation2 + $0x1e0] sm:$0xff] 0.0
        %325 = vst [vmem:[#allocation2 + $0x1e8] sm:$0xff] 0.0
        %326 = vst [vmem:[#allocation2 + $0x1f0] sm:$0xff] 0.0
        %327 = vst [vmem:[#allocation2 + $0x1f8] sm:$0xff] 0.0
      $region36: #{upconv3d_block_forward.15} parent=31 // pred_fallthru
        _
      %v328 = vld [vmem:[#allocation2] sm:$0xff]
      %v329 = vld [vmem:[#allocation2 + $0x8] sm:$0xff]
      %v330 = vld [vmem:[#allocation2 + $0x10] sm:$0xff]
      %v331 = vld [vmem:[#allocation2 + $0x18] sm:$0xff]
      %v332 = vld [vmem:[#allocation2 + $0x20] sm:$0xff]
      %v333 = vld [vmem:[#allocation2 + $0x28] sm:$0xff]
      %v334 = vld [vmem:[#allocation2 + $0x30] sm:$0xff]
      %v335 = vld [vmem:[#allocation2 + $0x38] sm:$0xff]
      %v336 = vld [vmem:[#allocation2 + $0x40] sm:$0xff]
      %v337 = vld [vmem:[#allocation2 + $0x48] sm:$0xff]
      %v338 = vld [vmem:[#allocation2 + $0x50] sm:$0xff]
      %v339 = vld [vmem:[#allocation2 + $0x58] sm:$0xff]
      %v340 = vld [vmem:[#allocation2 + $0x60] sm:$0xff]
      %v341 = vld [vmem:[#allocation2 + $0x68] sm:$0xff]
      %v342 = vld [vmem:[#allocation2 + $0x70] sm:$0xff]
      %v343 = vld [vmem:[#allocation2 + $0x78] sm:$0xff]
      %v344 = vld [vmem:[#allocation2 + $0x80] sm:$0xff]
      %v345 = vld [vmem:[#allocation2 + $0x88] sm:$0xff]
      %v346 = vld [vmem:[#allocation2 + $0x90] sm:$0xff]
      %v347 = vld [vmem:[#allocation2 + $0x98] sm:$0xff]
      %v348 = vld [vmem:[#allocation2 + $0xa0] sm:$0xff]
      %v349 = vld [vmem:[#allocation2 + $0xa8] sm:$0xff]
      %v350 = vld [vmem:[#allocation2 + $0xb0] sm:$0xff]
      %v351 = vld [vmem:[#allocation2 + $0xb8] sm:$0xff]
      %v352 = vld [vmem:[#allocation2 + $0xc0] sm:$0xff]
      %v353 = vld [vmem:[#allocation2 + $0xc8] sm:$0xff]
      %v354 = vld [vmem:[#allocation2 + $0xd0] sm:$0xff]
      %v355 = vld [vmem:[#allocation2 + $0xd8] sm:$0xff]
      %v356 = vld [vmem:[#allocation2 + $0xe0] sm:$0xff]
      %v357 = vld [vmem:[#allocation2 + $0xe8] sm:$0xff]
      %v358 = vld [vmem:[#allocation2 + $0xf0] sm:$0xff]
      %v359 = vld [vmem:[#allocation2 + $0xf8] sm:$0xff]
      %v360 = vld [vmem:[#allocation2 + $0x100] sm:$0xff]
      %v361 = vld [vmem:[#allocation2 + $0x108] sm:$0xff]
      %v362 = vld [vmem:[#allocation2 + $0x110] sm:$0xff]
      %v363 = vld [vmem:[#allocation2 + $0x118] sm:$0xff]
      %v364 = vld [vmem:[#allocation2 + $0x120] sm:$0xff]
      %v365 = vld [vmem:[#allocation2 + $0x128] sm:$0xff]
      %v366 = vld [vmem:[#allocation2 + $0x130] sm:$0xff]
      %v367 = vld [vmem:[#allocation2 + $0x138] sm:$0xff]
      %v368 = vld [vmem:[#allocation2 + $0x140] sm:$0xff]
      %v369 = vld [vmem:[#allocation2 + $0x148] sm:$0xff]
      %v370 = vld [vmem:[#allocation2 + $0x150] sm:$0xff]
      %v371 = vld [vmem:[#allocation2 + $0x158] sm:$0xff]
      %v372 = vld [vmem:[#allocation2 + $0x160] sm:$0xff]
      %v373 = vld [vmem:[#allocation2 + $0x168] sm:$0xff]
      %v374 = vld [vmem:[#allocation2 + $0x170] sm:$0xff]
      %v375 = vld [vmem:[#allocation2 + $0x178] sm:$0xff]
      %v376 = vld [vmem:[#allocation2 + $0x180] sm:$0xff]
      %v377 = vld [vmem:[#allocation2 + $0x188] sm:$0xff]
      %v378 = vld [vmem:[#allocation2 + $0x190] sm:$0xff]
      %v379 = vld [vmem:[#allocation2 + $0x198] sm:$0xff]
      %v380 = vld [vmem:[#allocation2 + $0x1a0] sm:$0xff]
      %v381 = vld [vmem:[#allocation2 + $0x1a8] sm:$0xff]
      %v382 = vld [vmem:[#allocation2 + $0x1b0] sm:$0xff]
      %v383 = vld [vmem:[#allocation2 + $0x1b8] sm:$0xff]
      %v384 = vld [vmem:[#allocation2 + $0x1c0] sm:$0xff]
      %v385 = vld [vmem:[#allocation2 + $0x1c8] sm:$0xff]
      %v386 = vld [vmem:[#allocation2 + $0x1d0] sm:$0xff]
      %v387 = vld [vmem:[#allocation2 + $0x1d8] sm:$0xff]
      %v388 = vld [vmem:[#allocation2 + $0x1e0] sm:$0xff]
      %v389 = vld [vmem:[#allocation2 + $0x1e8] sm:$0xff]
      %v390 = vld [vmem:[#allocation2 + $0x1f0] sm:$0xff]
      %v391 = vld [vmem:[#allocation2 + $0x1f8] sm:$0xff]
      %v392 = vld [vmem:[%s236] sm:$0xf]
      %v393 = vld [vmem:[%s236 + $0x4] sm:$0xf]
      %v394 = vld [vmem:[%s236 + $0x8] sm:$0xf]
      %v395 = vld [vmem:[%s236 + $0xc] sm:$0xf]
      %v396 = vld [vmem:[%s236 + $0x10] sm:$0xf]
      %v397 = vld [vmem:[%s236 + $0x14] sm:$0xf]
      %v398 = vld [vmem:[%s236 + $0x18] sm:$0xf]
      %v399 = vld [vmem:[%s236 + $0x1c] sm:$0xf]
      %v400 = vld [vmem:[%s236 + $0x20] sm:$0xf]
      %v401 = vld [vmem:[%s236 + $0x24] sm:$0xf]
      %v402 = vld [vmem:[%s236 + $0x28] sm:$0xf]
      %v403 = vld [vmem:[%s236 + $0x2c] sm:$0xf]
      %v404 = vld [vmem:[%s236 + $0x30] sm:$0xf]
      %v405 = vld [vmem:[%s236 + $0x34] sm:$0xf]
      %v406 = vld [vmem:[%s236 + $0x38] sm:$0xf]
      %v407 = vld [vmem:[%s236 + $0x3c] sm:$0xf]
      %v408 = vld [vmem:[%s236 + $0x40] sm:$0xf]
      %v409 = vld [vmem:[%s236 + $0x44] sm:$0xf]
      %v410 = vld [vmem:[%s236 + $0x48] sm:$0xf]
      %v411 = vld [vmem:[%s236 + $0x4c] sm:$0xf]
      %v412 = vld [vmem:[%s236 + $0x50] sm:$0xf]
      %v413 = vld [vmem:[%s236 + $0x54] sm:$0xf]
      %v414 = vld [vmem:[%s236 + $0x58] sm:$0xf]
      %v415 = vld [vmem:[%s236 + $0x5c] sm:$0xf]
      %v416 = vld [vmem:[%s236 + $0x60] sm:$0xf]
      %v417 = vld [vmem:[%s236 + $0x64] sm:$0xf]
      %v418 = vld [vmem:[%s236 + $0x68] sm:$0xf]
      %v419 = vld [vmem:[%s236 + $0x6c] sm:$0xf]
      %v420 = vld [vmem:[%s236 + $0x70] sm:$0xf]
      %v421 = vld [vmem:[%s236 + $0x74] sm:$0xf]
      %v422 = vld [vmem:[%s236 + $0x78] sm:$0xf]
      %v423 = vld [vmem:[%s236 + $0x7c] sm:$0xf]
      %v424 = vld [vmem:[%s236 + $0x80] sm:$0xf]
      %v425 = vld [vmem:[%s236 + $0x84] sm:$0xf]
      %v426 = vld [vmem:[%s236 + $0x88] sm:$0xf]
      %v427 = vld [vmem:[%s236 + $0x8c] sm:$0xf]
      %v428 = vld [vmem:[%s236 + $0x90] sm:$0xf]
      %v429 = vld [vmem:[%s236 + $0x94] sm:$0xf]
      %v430 = vld [vmem:[%s236 + $0x98] sm:$0xf]
      %v431 = vld [vmem:[%s236 + $0x9c] sm:$0xf]
      %v432 = vld [vmem:[%s236 + $0xa0] sm:$0xf]
      %v433 = vld [vmem:[%s236 + $0xa4] sm:$0xf]
      %v434 = vld [vmem:[%s236 + $0xa8] sm:$0xf]
      %v435 = vld [vmem:[%s236 + $0xac] sm:$0xf]
      %v436 = vld [vmem:[%s236 + $0xb0] sm:$0xf]
      %v437 = vld [vmem:[%s236 + $0xb4] sm:$0xf]
      %v438 = vld [vmem:[%s236 + $0xb8] sm:$0xf]
      %v439 = vld [vmem:[%s236 + $0xbc] sm:$0xf]
      %v440 = vld [vmem:[%s236 + $0xc0] sm:$0xf]
      %v441 = vld [vmem:[%s236 + $0xc4] sm:$0xf]
      %v442 = vld [vmem:[%s236 + $0xc8] sm:$0xf]
      %v443 = vld [vmem:[%s236 + $0xcc] sm:$0xf]
      %v444 = vld [vmem:[%s236 + $0xd0] sm:$0xf]
      %v445 = vld [vmem:[%s236 + $0xd4] sm:$0xf]
      %v446 = vld [vmem:[%s236 + $0xd8] sm:$0xf]
      %v447 = vld [vmem:[%s236 + $0xdc] sm:$0xf]
      %v448 = vld [vmem:[%s236 + $0xe0] sm:$0xf]
      %v449 = vld [vmem:[%s236 + $0xe4] sm:$0xf]
      %v450 = vld [vmem:[%s236 + $0xe8] sm:$0xf]
      %v451 = vld [vmem:[%s236 + $0xec] sm:$0xf]
      %v452 = vld [vmem:[%s236 + $0xf0] sm:$0xf]
      %v453 = vld [vmem:[%s236 + $0xf4] sm:$0xf]
      %v454 = vld [vmem:[%s236 + $0xf8] sm:$0xf]
      %v455 = vld [vmem:[%s236 + $0xfc] sm:$0xf]
      %v456 = vld [vmem:[%s245] sm:$0xf]
      %v457 = vld [vmem:[%s245 + $0x4] sm:$0xf]
      %v458 = vld [vmem:[%s245 + $0x8] sm:$0xf]
      %v459 = vld [vmem:[%s245 + $0xc] sm:$0xf]
      %v460 = vld [vmem:[%s245 + $0x10] sm:$0xf]
      %v461 = vld [vmem:[%s245 + $0x14] sm:$0xf]
      %v462 = vld [vmem:[%s245 + $0x18] sm:$0xf]
      %v463 = vld [vmem:[%s245 + $0x1c] sm:$0xf]
      %v464 = vld [vmem:[%s245 + $0x20] sm:$0xf]
      %v465 = vld [vmem:[%s245 + $0x24] sm:$0xf]
      %v466 = vld [vmem:[%s245 + $0x28] sm:$0xf]
      %v467 = vld [vmem:[%s245 + $0x2c] sm:$0xf]
      %v468 = vld [vmem:[%s245 + $0x30] sm:$0xf]
      %v469 = vld [vmem:[%s245 + $0x34] sm:$0xf]
      %v470 = vld [vmem:[%s245 + $0x38] sm:$0xf]
      %v471 = vld [vmem:[%s245 + $0x3c] sm:$0xf]
      %v536 = vunpack.c.l.b16 %v392
      %v537 = vunpack.c.l.b16 %v393
      %v538 = vunpack.c.l.b16 %v394
      %v539 = vunpack.c.l.b16 %v395
      %v540 = vunpack.c.l.b16 %v396
      %v541 = vunpack.c.l.b16 %v397
      %v542 = vunpack.c.l.b16 %v398
      %v543 = vunpack.c.l.b16 %v399
      %v544 = vunpack.c.l.b16 %v400
      %v545 = vunpack.c.l.b16 %v401
      %v546 = vunpack.c.l.b16 %v402
      %v547 = vunpack.c.l.b16 %v403
      %v548 = vunpack.c.l.b16 %v404
      %v549 = vunpack.c.l.b16 %v405
      %v550 = vunpack.c.l.b16 %v406
      %v551 = vunpack.c.l.b16 %v407
      %v552 = vunpack.c.l.b16 %v408
      %v553 = vunpack.c.l.b16 %v409
      %v554 = vunpack.c.l.b16 %v410
      %v555 = vunpack.c.l.b16 %v411
      %v556 = vunpack.c.l.b16 %v412
      %v557 = vunpack.c.l.b16 %v413
      %v558 = vunpack.c.l.b16 %v414
      %v559 = vunpack.c.l.b16 %v415
      %v560 = vunpack.c.l.b16 %v416
      %v561 = vunpack.c.l.b16 %v417
      %v562 = vunpack.c.l.b16 %v418
      %v563 = vunpack.c.l.b16 %v419
      %v564 = vunpack.c.l.b16 %v420
      %v565 = vunpack.c.l.b16 %v421
      %v566 = vunpack.c.l.b16 %v422
      %v567 = vunpack.c.l.b16 %v423
      %v568 = vunpack.c.l.b16 %v424
      %v569 = vunpack.c.l.b16 %v425
      %v570 = vunpack.c.l.b16 %v426
      %v571 = vunpack.c.l.b16 %v427
      %v572 = vunpack.c.l.b16 %v428
      %v573 = vunpack.c.l.b16 %v429
      %v574 = vunpack.c.l.b16 %v430
      %v575 = vunpack.c.l.b16 %v431
      %v576 = vunpack.c.l.b16 %v432
      %v577 = vunpack.c.l.b16 %v433
      %v578 = vunpack.c.l.b16 %v434
      %v579 = vunpack.c.l.b16 %v435
      %v580 = vunpack.c.l.b16 %v436
      %v581 = vunpack.c.l.b16 %v437
      %v582 = vunpack.c.l.b16 %v438
      %v583 = vunpack.c.l.b16 %v439
      %v584 = vunpack.c.l.b16 %v440
      %v585 = vunpack.c.l.b16 %v441
      %v586 = vunpack.c.l.b16 %v442
      %v587 = vunpack.c.l.b16 %v443
      %v588 = vunpack.c.l.b16 %v444
      %v589 = vunpack.c.l.b16 %v445
      %v590 = vunpack.c.l.b16 %v446
      %v591 = vunpack.c.l.b16 %v447
      %v592 = vunpack.c.l.b16 %v448
      %v593 = vunpack.c.l.b16 %v449
      %v594 = vunpack.c.l.b16 %v450
      %v595 = vunpack.c.l.b16 %v451
      %v596 = vunpack.c.l.b16 %v452
      %v597 = vunpack.c.l.b16 %v453
      %v598 = vunpack.c.l.b16 %v454
      %v599 = vunpack.c.l.b16 %v455
      %v600 = vpack.c.b16 %v537, %v536
      %v601 = vpack.c.b16 %v539, %v538
      %v602 = vpack.c.b16 %v541, %v540
      %v603 = vpack.c.b16 %v543, %v542
      %v604 = vpack.c.b16 %v545, %v544
      %v605 = vpack.c.b16 %v547, %v546
      %v606 = vpack.c.b16 %v549, %v548
      %v607 = vpack.c.b16 %v551, %v550
      %v608 = vpack.c.b16 %v553, %v552
      %v609 = vpack.c.b16 %v555, %v554
      %v610 = vpack.c.b16 %v557, %v556
      %v611 = vpack.c.b16 %v559, %v558
      %v612 = vpack.c.b16 %v561, %v560
      %v613 = vpack.c.b16 %v563, %v562
      %v614 = vpack.c.b16 %v565, %v564
      %v615 = vpack.c.b16 %v567, %v566
      %v616 = vpack.c.b16 %v569, %v568
      %v617 = vpack.c.b16 %v571, %v570
      %v618 = vpack.c.b16 %v573, %v572
      %v619 = vpack.c.b16 %v575, %v574
      %v620 = vpack.c.b16 %v577, %v576
      %v621 = vpack.c.b16 %v579, %v578
      %v622 = vpack.c.b16 %v581, %v580
      %v623 = vpack.c.b16 %v583, %v582
      %v624 = vpack.c.b16 %v585, %v584
      %v625 = vpack.c.b16 %v587, %v586
      %v626 = vpack.c.b16 %v589, %v588
      %v627 = vpack.c.b16 %v591, %v590
      %v628 = vpack.c.b16 %v593, %v592
      %v629 = vpack.c.b16 %v595, %v594
      %v630 = vpack.c.b16 %v597, %v596
      %v631 = vpack.c.b16 %v599, %v598
      %v680 = vunpack.c.l.b16 %v456
      %v681 = vunpack.c.l.b16 %v457
      %v682 = vunpack.c.l.b16 %v458
      %v683 = vunpack.c.l.b16 %v459
      %v684 = vunpack.c.l.b16 %v460
      %v685 = vunpack.c.l.b16 %v461
      %v686 = vunpack.c.l.b16 %v462
      %v687 = vunpack.c.l.b16 %v463
      %v688 = vunpack.c.l.b16 %v464
      %v689 = vunpack.c.l.b16 %v465
      %v690 = vunpack.c.l.b16 %v466
      %v691 = vunpack.c.l.b16 %v467
      %v692 = vunpack.c.l.b16 %v468
      %v693 = vunpack.c.l.b16 %v469
      %v694 = vunpack.c.l.b16 %v470
      %v695 = vunpack.c.l.b16 %v471
      %v696 = vpack.c.b16 %v681, %v680
      %v697 = vpack.c.b16 %v683, %v682
      %v698 = vpack.c.b16 %v685, %v684
      %v699 = vpack.c.b16 %v687, %v686
      %v700 = vpack.c.b16 %v689, %v688
      %v701 = vpack.c.b16 %v691, %v690
      %v702 = vpack.c.b16 %v693, %v692
      %v703 = vpack.c.b16 %v695, %v694
      %712 = vmatprep.subr.bf16.mxu0 0
      %713 = vmatpush1.bf16.msra.mxu0 %v696
      %714 = vmatprep.subr.bf16.mxu0 0
      %715 = vmatpush1.bf16.msra.mxu0 %v697
      %716 = vmatprep.subr.bf16.mxu0 0
      %717 = vmatpush1.bf16.msra.mxu0 %v698
      %718 = vmatprep.subr.bf16.mxu0 0
      %719 = vmatpush1.bf16.msra.mxu0 %v699
      %720 = vmatprep.subr.bf16.mxu0 0
      %721 = vmatpush1.bf16.msra.mxu0 %v700
      %722 = vmatprep.subr.bf16.mxu0 0
      %723 = vmatpush1.bf16.msra.mxu0 %v701
      %724 = vmatprep.subr.bf16.mxu0 0
      %725 = vmatpush1.bf16.msra.mxu0 %v702
      %726 = vmatprep.subr.bf16.mxu0 0
      %727 = vmatpush1.bf16.msra.mxu0 %v703
      %728 = vmatprep.subr.bf16.mxu0 0
      %729 = vmatpush1.bf16.msra.mxu0 0
      %730 = vmatprep.subr.bf16.mxu0 0
      %731 = vmatpush1.bf16.msra.mxu0 0
      %732 = vmatprep.subr.bf16.mxu0 0
      %733 = vmatpush1.bf16.msra.mxu0 0
      %734 = vmatprep.subr.bf16.mxu0 0
      %735 = vmatpush1.bf16.msra.mxu0 0
      %736 = vmatprep.subr.bf16.mxu0 0
      %737 = vmatpush1.bf16.msra.mxu0 0
      %738 = vmatprep.subr.bf16.mxu0 0
      %739 = vmatpush1.bf16.msra.mxu0 0
      %740 = vmatprep.subr.bf16.mxu0 0
      %741 = vmatpush1.bf16.msra.mxu0 0
      %742 = vmatprep.subr.bf16.mxu0 0
      %743 = vmatpush1.bf16.msra.mxu0 0
      %744 = vmatprep.mubr.bf16.mxu0 0
      %745 = vmatmul.mubr.bf16.gmra.mrb[0].mxu0 %v600
      %v746 = vpop.f32.mrb[0].mxu0
      %v747 = vadd.f32 0.0, %v746
      %v748 = vpop.f32.mrb[0].mxu0
      %v749 = vpop.f32.mrb[0].mxu0
      %v750 = vadd.f32 0.0, %v749
      %v751 = vpop.f32.mrb[0].mxu0
      %752 = vmatprep.mubr.bf16.mxu0 0
      %753 = vmatmul.mubr.bf16.gmra.mrb[0].mxu0 %v601
      %v754 = vpop.f32.mrb[0].mxu0
      %v755 = vadd.f32 0.0, %v754
      %v756 = vpop.f32.mrb[0].mxu0
      %v757 = vpop.f32.mrb[0].mxu0
      %v758 = vadd.f32 0.0, %v757
      %v759 = vpop.f32.mrb[0].mxu0
      %760 = vmatprep.mubr.bf16.mxu0 0
      %761 = vmatmul.mubr.bf16.gmra.mrb[0].mxu0 %v602
      %v762 = vpop.f32.mrb[0].mxu0
      %v763 = vadd.f32 0.0, %v762
      %v764 = vpop.f32.mrb[0].mxu0
      %v765 = vpop.f32.mrb[0].mxu0
      %v766 = vadd.f32 0.0, %v765
      %v767 = vpop.f32.mrb[0].mxu0
      %768 = vmatprep.mubr.bf16.mxu0 0
      %769 = vmatmul.mubr.bf16.gmra.mrb[0].mxu0 %v603
      %v770 = vpop.f32.mrb[0].mxu0
      %v771 = vadd.f32 0.0, %v770
      %v772 = vpop.f32.mrb[0].mxu0
      %v773 = vpop.f32.mrb[0].mxu0
      %v774 = vadd.f32 0.0, %v773
      %v775 = vpop.f32.mrb[0].mxu0
      %776 = vmatprep.mubr.bf16.mxu0 0
      %777 = vmatmul.mubr.bf16.gmra.mrb[0].mxu0 %v604
      %v778 = vpop.f32.mrb[0].mxu0
      %v779 = vadd.f32 0.0, %v778
      %v780 = vpop.f32.mrb[0].mxu0
      %v781 = vpop.f32.mrb[0].mxu0
      %v782 = vadd.f32 0.0, %v781
      %v783 = vpop.f32.mrb[0].mxu0
      %784 = vmatprep.mubr.bf16.mxu0 0
      %785 = vmatmul.mubr.bf16.gmra.mrb[0].mxu0 %v605
      %v786 = vpop.f32.mrb[0].mxu0
      %v787 = vadd.f32 0.0, %v786
      %v788 = vpop.f32.mrb[0].mxu0
      %v789 = vpop.f32.mrb[0].mxu0
      %v790 = vadd.f32 0.0, %v789
      %v791 = vpop.f32.mrb[0].mxu0
      %792 = vmatprep.mubr.bf16.mxu0 0
      %793 = vmatmul.mubr.bf16.gmra.mrb[0].mxu0 %v606
      %v794 = vpop.f32.mrb[0].mxu0
      %v795 = vadd.f32 0.0, %v794
      %v796 = vpop.f32.mrb[0].mxu0
      %v797 = vpop.f32.mrb[0].mxu0
      %v798 = vadd.f32 0.0, %v797
      %v799 = vpop.f32.mrb[0].mxu0
      %800 = vmatprep.mubr.bf16.mxu0 0
      %801 = vmatmul.mubr.bf16.gmra.mrb[0].mxu0 %v607
      %v802 = vpop.f32.mrb[0].mxu0
      %v803 = vadd.f32 0.0, %v802
      %v804 = vpop.f32.mrb[0].mxu0
      %v805 = vpop.f32.mrb[0].mxu0
      %v806 = vadd.f32 0.0, %v805
      %v807 = vpop.f32.mrb[0].mxu0
      %808 = vmatprep.mubr.bf16.mxu0 0
      %809 = vmatmul.mubr.bf16.gmra.mrb[0].mxu0 %v608
      %v810 = vpop.f32.mrb[0].mxu0
      %v811 = vadd.f32 0.0, %v810
      %v812 = vpop.f32.mrb[0].mxu0
      %v813 = vpop.f32.mrb[0].mxu0
      %v814 = vadd.f32 0.0, %v813
      %v815 = vpop.f32.mrb[0].mxu0
      %816 = vmatprep.mubr.bf16.mxu0 0
      %817 = vmatmul.mubr.bf16.gmra.mrb[0].mxu0 %v609
      %v818 = vpop.f32.mrb[0].mxu0
      %v819 = vadd.f32 0.0, %v818
      %v820 = vpop.f32.mrb[0].mxu0
      %v821 = vpop.f32.mrb[0].mxu0
      %v822 = vadd.f32 0.0, %v821
      %v823 = vpop.f32.mrb[0].mxu0
      %824 = vmatprep.mubr.bf16.mxu0 0
      %825 = vmatmul.mubr.bf16.gmra.mrb[0].mxu0 %v610
      %v826 = vpop.f32.mrb[0].mxu0
      %v827 = vadd.f32 0.0, %v826
      %v828 = vpop.f32.mrb[0].mxu0
      %v829 = vpop.f32.mrb[0].mxu0
      %v830 = vadd.f32 0.0, %v829
      %v831 = vpop.f32.mrb[0].mxu0
      %832 = vmatprep.mubr.bf16.mxu0 0
      %833 = vmatmul.mubr.bf16.gmra.mrb[0].mxu0 %v611
      %v834 = vpop.f32.mrb[0].mxu0
      %v835 = vadd.f32 0.0, %v834
      %v836 = vpop.f32.mrb[0].mxu0
      %v837 = vpop.f32.mrb[0].mxu0
      %v838 = vadd.f32 0.0, %v837
      %v839 = vpop.f32.mrb[0].mxu0
      %840 = vmatprep.mubr.bf16.mxu0 0
      %841 = vmatmul.mubr.bf16.gmra.mrb[0].mxu0 %v612
      %v842 = vpop.f32.mrb[0].mxu0
      %v843 = vadd.f32 0.0, %v842
      %v844 = vpop.f32.mrb[0].mxu0
      %v845 = vpop.f32.mrb[0].mxu0
      %v846 = vadd.f32 0.0, %v845
      %v847 = vpop.f32.mrb[0].mxu0
      %848 = vmatprep.mubr.bf16.mxu0 0
      %849 = vmatmul.mubr.bf16.gmra.mrb[0].mxu0 %v613
      %v850 = vpop.f32.mrb[0].mxu0
      %v851 = vadd.f32 0.0, %v850
      %v852 = vpop.f32.mrb[0].mxu0
      %v853 = vpop.f32.mrb[0].mxu0
      %v854 = vadd.f32 0.0, %v853
      %v855 = vpop.f32.mrb[0].mxu0
      %856 = vmatprep.mubr.bf16.mxu0 0
      %857 = vmatmul.mubr.bf16.gmra.mrb[0].mxu0 %v614
      %v858 = vpop.f32.mrb[0].mxu0
      %v859 = vadd.f32 0.0, %v858
      %v860 = vpop.f32.mrb[0].mxu0
      %v861 = vpop.f32.mrb[0].mxu0
      %v862 = vadd.f32 0.0, %v861
      %v863 = vpop.f32.mrb[0].mxu0
      %864 = vmatprep.mubr.bf16.mxu0 0
      %865 = vmatmul.mubr.bf16.gmra.mrb[0].mxu0 %v615
      %v866 = vpop.f32.mrb[0].mxu0
      %v867 = vadd.f32 0.0, %v866
      %v868 = vpop.f32.mrb[0].mxu0
      %v869 = vpop.f32.mrb[0].mxu0
      %v870 = vadd.f32 0.0, %v869
      %v871 = vpop.f32.mrb[0].mxu0
      %872 = vmatprep.mubr.bf16.mxu0 0
      %873 = vmatmul.mubr.bf16.gmra.mrb[0].mxu0 %v616
      %v874 = vpop.f32.mrb[0].mxu0
      %v875 = vadd.f32 0.0, %v874
      %v876 = vpop.f32.mrb[0].mxu0
      %v877 = vpop.f32.mrb[0].mxu0
      %v878 = vadd.f32 0.0, %v877
      %v879 = vpop.f32.mrb[0].mxu0
      %880 = vmatprep.mubr.bf16.mxu0 0
      %881 = vmatmul.mubr.bf16.gmra.mrb[0].mxu0 %v617
      %v882 = vpop.f32.mrb[0].mxu0
      %v883 = vadd.f32 0.0, %v882
      %v884 = vpop.f32.mrb[0].mxu0
      %v885 = vpop.f32.mrb[0].mxu0
      %v886 = vadd.f32 0.0, %v885
      %v887 = vpop.f32.mrb[0].mxu0
      %888 = vmatprep.mubr.bf16.mxu0 0
      %889 = vmatmul.mubr.bf16.gmra.mrb[0].mxu0 %v618
      %v890 = vpop.f32.mrb[0].mxu0
      %v891 = vadd.f32 0.0, %v890
      %v892 = vpop.f32.mrb[0].mxu0
      %v893 = vpop.f32.mrb[0].mxu0
      %v894 = vadd.f32 0.0, %v893
      %v895 = vpop.f32.mrb[0].mxu0
      %896 = vmatprep.mubr.bf16.mxu0 0
      %897 = vmatmul.mubr.bf16.gmra.mrb[0].mxu0 %v619
      %v898 = vpop.f32.mrb[0].mxu0
      %v899 = vadd.f32 0.0, %v898
      %v900 = vpop.f32.mrb[0].mxu0
      %v901 = vpop.f32.mrb[0].mxu0
      %v902 = vadd.f32 0.0, %v901
      %v903 = vpop.f32.mrb[0].mxu0
      %904 = vmatprep.mubr.bf16.mxu0 0
      %905 = vmatmul.mubr.bf16.gmra.mrb[0].mxu0 %v620
      %v906 = vpop.f32.mrb[0].mxu0
      %v907 = vadd.f32 0.0, %v906
      %v908 = vpop.f32.mrb[0].mxu0
      %v909 = vpop.f32.mrb[0].mxu0
      %v910 = vadd.f32 0.0, %v909
      %v911 = vpop.f32.mrb[0].mxu0
      %912 = vmatprep.mubr.bf16.mxu0 0
      %913 = vmatmul.mubr.bf16.gmra.mrb[0].mxu0 %v621
      %v914 = vpop.f32.mrb[0].mxu0
      %v915 = vadd.f32 0.0, %v914
      %v916 = vpop.f32.mrb[0].mxu0
      %v917 = vpop.f32.mrb[0].mxu0
      %v918 = vadd.f32 0.0, %v917
      %v919 = vpop.f32.mrb[0].mxu0
      %920 = vmatprep.mubr.bf16.mxu0 0
      %921 = vmatmul.mubr.bf16.gmra.mrb[0].mxu0 %v622
      %v922 = vpop.f32.mrb[0].mxu0
      %v923 = vadd.f32 0.0, %v922
      %v924 = vpop.f32.mrb[0].mxu0
      %v925 = vpop.f32.mrb[0].mxu0
      %v926 = vadd.f32 0.0, %v925
      %v927 = vpop.f32.mrb[0].mxu0
      %928 = vmatprep.mubr.bf16.mxu0 0
      %929 = vmatmul.mubr.bf16.gmra.mrb[0].mxu0 %v623
      %v930 = vpop.f32.mrb[0].mxu0
      %v931 = vadd.f32 0.0, %v930
      %v932 = vpop.f32.mrb[0].mxu0
      %v933 = vpop.f32.mrb[0].mxu0
      %v934 = vadd.f32 0.0, %v933
      %v935 = vpop.f32.mrb[0].mxu0
      %936 = vmatprep.mubr.bf16.mxu0 0
      %937 = vmatmul.mubr.bf16.gmra.mrb[0].mxu0 %v624
      %v938 = vpop.f32.mrb[0].mxu0
      %v939 = vadd.f32 0.0, %v938
      %v940 = vpop.f32.mrb[0].mxu0
      %v941 = vpop.f32.mrb[0].mxu0
      %v942 = vadd.f32 0.0, %v941
      %v943 = vpop.f32.mrb[0].mxu0
      %944 = vmatprep.mubr.bf16.mxu0 0
      %945 = vmatmul.mubr.bf16.gmra.mrb[0].mxu0 %v625
      %v946 = vpop.f32.mrb[0].mxu0
      %v947 = vadd.f32 0.0, %v946
      %v948 = vpop.f32.mrb[0].mxu0
      %v949 = vpop.f32.mrb[0].mxu0
      %v950 = vadd.f32 0.0, %v949
      %v951 = vpop.f32.mrb[0].mxu0
      %952 = vmatprep.mubr.bf16.mxu0 0
      %953 = vmatmul.mubr.bf16.gmra.mrb[0].mxu0 %v626
      %v954 = vpop.f32.mrb[0].mxu0
      %v955 = vadd.f32 0.0, %v954
      %v956 = vpop.f32.mrb[0].mxu0
      %v957 = vpop.f32.mrb[0].mxu0
      %v958 = vadd.f32 0.0, %v957
      %v959 = vpop.f32.mrb[0].mxu0
      %960 = vmatprep.mubr.bf16.mxu0 0
      %961 = vmatmul.mubr.bf16.gmra.mrb[0].mxu0 %v627
      %v962 = vpop.f32.mrb[0].mxu0
      %v963 = vadd.f32 0.0, %v962
      %v964 = vpop.f32.mrb[0].mxu0
      %v965 = vpop.f32.mrb[0].mxu0
      %v966 = vadd.f32 0.0, %v965
      %v967 = vpop.f32.mrb[0].mxu0
      %968 = vmatprep.mubr.bf16.mxu0 0
      %969 = vmatmul.mubr.bf16.gmra.mrb[0].mxu0 %v628
      %v970 = vpop.f32.mrb[0].mxu0
      %v971 = vadd.f32 0.0, %v970
      %v972 = vpop.f32.mrb[0].mxu0
      %v973 = vpop.f32.mrb[0].mxu0
      %v974 = vadd.f32 0.0, %v973
      %v975 = vpop.f32.mrb[0].mxu0
      %976 = vmatprep.mubr.bf16.mxu0 0
      %977 = vmatmul.mubr.bf16.gmra.mrb[0].mxu0 %v629
      %v978 = vpop.f32.mrb[0].mxu0
      %v979 = vadd.f32 0.0, %v978
      %v980 = vpop.f32.mrb[0].mxu0
      %v981 = vpop.f32.mrb[0].mxu0
      %v982 = vadd.f32 0.0, %v981
      %v983 = vpop.f32.mrb[0].mxu0
      %984 = vmatprep.mubr.bf16.mxu0 0
      %985 = vmatmul.mubr.bf16.gmra.mrb[0].mxu0 %v630
      %v986 = vpop.f32.mrb[0].mxu0
      %v987 = vadd.f32 0.0, %v986
      %v988 = vpop.f32.mrb[0].mxu0
      %v989 = vpop.f32.mrb[0].mxu0
      %v990 = vadd.f32 0.0, %v989
      %v991 = vpop.f32.mrb[0].mxu0
      %992 = vmatprep.mubr.bf16.mxu0 0
      %993 = vmatmul.mubr.bf16.gmra.mrb[0].mxu0 %v631
      %v994 = vpop.f32.mrb[0].mxu0
      %v995 = vadd.f32 0.0, %v994
      %v996 = vpop.f32.mrb[0].mxu0
      %v997 = vpop.f32.mrb[0].mxu0
      %v998 = vadd.f32 0.0, %v997
      %v999 = vpop.f32.mrb[0].mxu0
      %1000 = vdwg.mxu0
      %v1001 = vadd.f32 %v328, %v747
      %v1002 = vadd.f32 %v329, %v750
      %v1003 = vadd.f32 %v330, %v755
      %v1004 = vadd.f32 %v331, %v758
      %v1005 = vadd.f32 %v332, %v763
      %v1006 = vadd.f32 %v333, %v766
      %v1007 = vadd.f32 %v334, %v771
      %v1008 = vadd.f32 %v335, %v774
      %v1009 = vadd.f32 %v336, %v779
      %v1010 = vadd.f32 %v337, %v782
      %v1011 = vadd.f32 %v338, %v787
      %v1012 = vadd.f32 %v339, %v790
      %v1013 = vadd.f32 %v340, %v795
      %v1014 = vadd.f32 %v341, %v798
      %v1015 = vadd.f32 %v342, %v803
      %v1016 = vadd.f32 %v343, %v806
      %v1017 = vadd.f32 %v344, %v811
      %v1018 = vadd.f32 %v345, %v814
      %v1019 = vadd.f32 %v346, %v819
      %v1020 = vadd.f32 %v347, %v822
      %v1021 = vadd.f32 %v348, %v827
      %v1022 = vadd.f32 %v349, %v830
      %v1023 = vadd.f32 %v350, %v835
      %v1024 = vadd.f32 %v351, %v838
      %v1025 = vadd.f32 %v352, %v843
      %v1026 = vadd.f32 %v353, %v846
      %v1027 = vadd.f32 %v354, %v851
      %v1028 = vadd.f32 %v355, %v854
      %v1029 = vadd.f32 %v356, %v859
      %v1030 = vadd.f32 %v357, %v862
      %v1031 = vadd.f32 %v358, %v867
      %v1032 = vadd.f32 %v359, %v870
      %v1033 = vadd.f32 %v360, %v875
      %v1034 = vadd.f32 %v361, %v878
      %v1035 = vadd.f32 %v362, %v883
      %v1036 = vadd.f32 %v363, %v886
      %v1037 = vadd.f32 %v364, %v891
      %v1038 = vadd.f32 %v365, %v894
      %v1039 = vadd.f32 %v366, %v899
      %v1040 = vadd.f32 %v367, %v902
      %v1041 = vadd.f32 %v368, %v907
      %v1042 = vadd.f32 %v369, %v910
      %v1043 = vadd.f32 %v370, %v915
      %v1044 = vadd.f32 %v371, %v918
      %v1045 = vadd.f32 %v372, %v923
      %v1046 = vadd.f32 %v373, %v926
      %v1047 = vadd.f32 %v374, %v931
      %v1048 = vadd.f32 %v375, %v934
      %v1049 = vadd.f32 %v376, %v939
      %v1050 = vadd.f32 %v377, %v942
      %v1051 = vadd.f32 %v378, %v947
      %v1052 = vadd.f32 %v379, %v950
      %v1053 = vadd.f32 %v380, %v955
      %v1054 = vadd.f32 %v381, %v958
      %v1055 = vadd.f32 %v382, %v963
      %v1056 = vadd.f32 %v383, %v966
      %v1057 = vadd.f32 %v384, %v971
      %v1058 = vadd.f32 %v385, %v974
      %v1059 = vadd.f32 %v386, %v979
      %v1060 = vadd.f32 %v387, %v982
      %v1061 = vadd.f32 %v388, %v987
      %v1062 = vadd.f32 %v389, %v990
      %v1063 = vadd.f32 %v390, %v995
      %v1064 = vadd.f32 %v391, %v998
      %1065 = vst [vmem:[#allocation2] sm:$0xff] %v1001
      %1066 = vst [vmem:[#allocation2 + $0x8] sm:$0xff] %v1002
      %1067 = vst [vmem:[#allocation2 + $0x10] sm:$0xff] %v1003
      %1068 = vst [vmem:[#allocation2 + $0x18] sm:$0xff] %v1004
      %1069 = vst [vmem:[#allocation2 + $0x20] sm:$0xff] %v1005
      %1070 = vst [vmem:[#allocation2 + $0x28] sm:$0xff] %v1006
      %1071 = vst [vmem:[#allocation2 + $0x30] sm:$0xff] %v1007
      %1072 = vst [vmem:[#allocation2 + $0x38] sm:$0xff] %v1008
      %1073 = vst [vmem:[#allocation2 + $0x40] sm:$0xff] %v1009
      %1074 = vst [vmem:[#allocation2 + $0x48] sm:$0xff] %v1010
      %1075 = vst [vmem:[#allocation2 + $0x50] sm:$0xff] %v1011
      %1076 = vst [vmem:[#allocation2 + $0x58] sm:$0xff] %v1012
      %1077 = vst [vmem:[#allocation2 + $0x60] sm:$0xff] %v1013
      %1078 = vst [vmem:[#allocation2 + $0x68] sm:$0xff] %v1014
      %1079 = vst [vmem:[#allocation2 + $0x70] sm:$0xff] %v1015
      %1080 = vst [vmem:[#allocation2 + $0x78] sm:$0xff] %v1016
      %1081 = vst [vmem:[#allocation2 + $0x80] sm:$0xff] %v1017
      %1082 = vst [vmem:[#allocation2 + $0x88] sm:$0xff] %v1018
      %1083 = vst [vmem:[#allocation2 + $0x90] sm:$0xff] %v1019
      %1084 = vst [vmem:[#allocation2 + $0x98] sm:$0xff] %v1020
      %1085 = vst [vmem:[#allocation2 + $0xa0] sm:$0xff] %v1021
      %1086 = vst [vmem:[#allocation2 + $0xa8] sm:$0xff] %v1022
      %1087 = vst [vmem:[#allocation2 + $0xb0] sm:$0xff] %v1023
      %1088 = vst [vmem:[#allocation2 + $0xb8] sm:$0xff] %v1024
      %1089 = vst [vmem:[#allocation2 + $0xc0] sm:$0xff] %v1025
      %1090 = vst [vmem:[#allocation2 + $0xc8] sm:$0xff] %v1026
      %1091 = vst [vmem:[#allocation2 + $0xd0] sm:$0xff] %v1027
      %1092 = vst [vmem:[#allocation2 + $0xd8] sm:$0xff] %v1028
      %1093 = vst [vmem:[#allocation2 + $0xe0] sm:$0xff] %v1029
      %1094 = vst [vmem:[#allocation2 + $0xe8] sm:$0xff] %v1030
      %1095 = vst [vmem:[#allocation2 + $0xf0] sm:$0xff] %v1031
      %1096 = vst [vmem:[#allocation2 + $0xf8] sm:$0xff] %v1032
      %1097 = vst [vmem:[#allocation2 + $0x100] sm:$0xff] %v1033
      %1098 = vst [vmem:[#allocation2 + $0x108] sm:$0xff] %v1034
      %1099 = vst [vmem:[#allocation2 + $0x110] sm:$0xff] %v1035
      %1100 = vst [vmem:[#allocation2 + $0x118] sm:$0xff] %v1036
      %1101 = vst [vmem:[#allocation2 + $0x120] sm:$0xff] %v1037
      %1102 = vst [vmem:[#allocation2 + $0x128] sm:$0xff] %v1038
      %1103 = vst [vmem:[#allocation2 + $0x130] sm:$0xff] %v1039
      %1104 = vst [vmem:[#allocation2 + $0x138] sm:$0xff] %v1040
      %1105 = vst [vmem:[#allocation2 + $0x140] sm:$0xff] %v1041
      %1106 = vst [vmem:[#allocation2 + $0x148] sm:$0xff] %v1042
      %1107 = vst [vmem:[#allocation2 + $0x150] sm:$0xff] %v1043
      %1108 = vst [vmem:[#allocation2 + $0x158] sm:$0xff] %v1044
      %1109 = vst [vmem:[#allocation2 + $0x160] sm:$0xff] %v1045
      %1110 = vst [vmem:[#allocation2 + $0x168] sm:$0xff] %v1046
      %1111 = vst [vmem:[#allocation2 + $0x170] sm:$0xff] %v1047
      %1112 = vst [vmem:[#allocation2 + $0x178] sm:$0xff] %v1048
      %1113 = vst [vmem:[#allocation2 + $0x180] sm:$0xff] %v1049
      %1114 = vst [vmem:[#allocation2 + $0x188] sm:$0xff] %v1050
      %1115 = vst [vmem:[#allocation2 + $0x190] sm:$0xff] %v1051
      %1116 = vst [vmem:[#allocation2 + $0x198] sm:$0xff] %v1052
      %1117 = vst [vmem:[#allocation2 + $0x1a0] sm:$0xff] %v1053
      %1118 = vst [vmem:[#allocation2 + $0x1a8] sm:$0xff] %v1054
      %1119 = vst [vmem:[#allocation2 + $0x1b0] sm:$0xff] %v1055
      %1120 = vst [vmem:[#allocation2 + $0x1b8] sm:$0xff] %v1056
      %1121 = vst [vmem:[#allocation2 + $0x1c0] sm:$0xff] %v1057
      %1122 = vst [vmem:[#allocation2 + $0x1c8] sm:$0xff] %v1058
      %1123 = vst [vmem:[#allocation2 + $0x1d0] sm:$0xff] %v1059
      %1124 = vst [vmem:[#allocation2 + $0x1d8] sm:$0xff] %v1060
      %1125 = vst [vmem:[#allocation2 + $0x1e0] sm:$0xff] %v1061
      %1126 = vst [vmem:[#allocation2 + $0x1e8] sm:$0xff] %v1062
      %1127 = vst [vmem:[#allocation2 + $0x1f0] sm:$0xff] %v1063
      %1128 = vst [vmem:[#allocation2 + $0x1f8] sm:$0xff] %v1064
      // Predicated region
      $region37: #{upconv3d_block_forward.15} parent=31 // pred_check
        %p1129 = pneg %p260
      $region38: #{upconv3d_block_forward.15} parent=31 // pred_check_branch
        %1131 = sbr.rel (%p1129) target = $region40
      $region39: #{upconv3d_block_forward.15} parent=31 // pred_region
        %v1132 = vld [vmem:[#allocation2] sm:$0xff]
        %v1133 = vld [vmem:[#allocation2 + $0x8] sm:$0xff]
        %v1134 = vld [vmem:[#allocation2 + $0x10] sm:$0xff]
        %v1135 = vld [vmem:[#allocation2 + $0x18] sm:$0xff]
        %v1136 = vld [vmem:[#allocation2 + $0x20] sm:$0xff]
        %v1137 = vld [vmem:[#allocation2 + $0x28] sm:$0xff]
        %v1138 = vld [vmem:[#allocation2 + $0x30] sm:$0xff]
        %v1139 = vld [vmem:[#allocation2 + $0x38] sm:$0xff]
        %v1140 = vld [vmem:[#allocation2 + $0x40] sm:$0xff]
        %v1141 = vld [vmem:[#allocation2 + $0x48] sm:$0xff]
        %v1142 = vld [vmem:[#allocation2 + $0x50] sm:$0xff]
        %v1143 = vld [vmem:[#allocation2 + $0x58] sm:$0xff]
        %v1144 = vld [vmem:[#allocation2 + $0x60] sm:$0xff]
        %v1145 = vld [vmem:[#allocation2 + $0x68] sm:$0xff]
        %v1146 = vld [vmem:[#allocation2 + $0x70] sm:$0xff]
        %v1147 = vld [vmem:[#allocation2 + $0x78] sm:$0xff]
        %v1148 = vld [vmem:[#allocation2 + $0x80] sm:$0xff]
        %v1149 = vld [vmem:[#allocation2 + $0x88] sm:$0xff]
        %v1150 = vld [vmem:[#allocation2 + $0x90] sm:$0xff]
        %v1151 = vld [vmem:[#allocation2 + $0x98] sm:$0xff]
        %v1152 = vld [vmem:[#allocation2 + $0xa0] sm:$0xff]
        %v1153 = vld [vmem:[#allocation2 + $0xa8] sm:$0xff]
        %v1154 = vld [vmem:[#allocation2 + $0xb0] sm:$0xff]
        %v1155 = vld [vmem:[#allocation2 + $0xb8] sm:$0xff]
        %v1156 = vld [vmem:[#allocation2 + $0xc0] sm:$0xff]
        %v1157 = vld [vmem:[#allocation2 + $0xc8] sm:$0xff]
        %v1158 = vld [vmem:[#allocation2 + $0xd0] sm:$0xff]
        %v1159 = vld [vmem:[#allocation2 + $0xd8] sm:$0xff]
        %v1160 = vld [vmem:[#allocation2 + $0xe0] sm:$0xff]
        %v1161 = vld [vmem:[#allocation2 + $0xe8] sm:$0xff]
        %v1162 = vld [vmem:[#allocation2 + $0xf0] sm:$0xff]
        %v1163 = vld [vmem:[#allocation2 + $0xf8] sm:$0xff]
        %v1164 = vld [vmem:[#allocation2 + $0x100] sm:$0xff]
        %v1165 = vld [vmem:[#allocation2 + $0x108] sm:$0xff]
        %v1166 = vld [vmem:[#allocation2 + $0x110] sm:$0xff]
        %v1167 = vld [vmem:[#allocation2 + $0x118] sm:$0xff]
        %v1168 = vld [vmem:[#allocation2 + $0x120] sm:$0xff]
        %v1169 = vld [vmem:[#allocation2 + $0x128] sm:$0xff]
        %v1170 = vld [vmem:[#allocation2 + $0x130] sm:$0xff]
        %v1171 = vld [vmem:[#allocation2 + $0x138] sm:$0xff]
        %v1172 = vld [vmem:[#allocation2 + $0x140] sm:$0xff]
        %v1173 = vld [vmem:[#allocation2 + $0x148] sm:$0xff]
        %v1174 = vld [vmem:[#allocation2 + $0x150] sm:$0xff]
        %v1175 = vld [vmem:[#allocation2 + $0x158] sm:$0xff]
        %v1176 = vld [vmem:[#allocation2 + $0x160] sm:$0xff]
        %v1177 = vld [vmem:[#allocation2 + $0x168] sm:$0xff]
        %v1178 = vld [vmem:[#allocation2 + $0x170] sm:$0xff]
        %v1179 = vld [vmem:[#allocation2 + $0x178] sm:$0xff]
        %v1180 = vld [vmem:[#allocation2 + $0x180] sm:$0xff]
        %v1181 = vld [vmem:[#allocation2 + $0x188] sm:$0xff]
        %v1182 = vld [vmem:[#allocation2 + $0x190] sm:$0xff]
        %v1183 = vld [vmem:[#allocation2 + $0x198] sm:$0xff]
        %v1184 = vld [vmem:[#allocation2 + $0x1a0] sm:$0xff]
        %v1185 = vld [vmem:[#allocation2 + $0x1a8] sm:$0xff]
        %v1186 = vld [vmem:[#allocation2 + $0x1b0] sm:$0xff]
        %v1187 = vld [vmem:[#allocation2 + $0x1b8] sm:$0xff]
        %v1188 = vld [vmem:[#allocation2 + $0x1c0] sm:$0xff]
        %v1189 = vld [vmem:[#allocation2 + $0x1c8] sm:$0xff]
        %v1190 = vld [vmem:[#allocation2 + $0x1d0] sm:$0xff]
        %v1191 = vld [vmem:[#allocation2 + $0x1d8] sm:$0xff]
        %v1192 = vld [vmem:[#allocation2 + $0x1e0] sm:$0xff]
        %v1193 = vld [vmem:[#allocation2 + $0x1e8] sm:$0xff]
        %v1194 = vld [vmem:[#allocation2 + $0x1f0] sm:$0xff]
        %v1195 = vld [vmem:[#allocation2 + $0x1f8] sm:$0xff]
        %v1196 = vld [vmem:[%s249] sm:$0x1]
        %v1198 = vlaneseq
        %v1199 = vshrl.u32 %v1198, 7
        %v1200 = vsub.s32 0, %v1199
        %v1201 = vrot.slane %v1196, %v1200
        %v1203 = vadd.f32 %v1132, %v1201
        %v1204 = vadd.f32 %v1133, %v1201
        %v1205 = vadd.f32 %v1134, %v1201
        %v1206 = vadd.f32 %v1135, %v1201
        %v1207 = vadd.f32 %v1136, %v1201
        %v1208 = vadd.f32 %v1137, %v1201
        %v1209 = vadd.f32 %v1138, %v1201
        %v1210 = vadd.f32 %v1139, %v1201
        %v1211 = vadd.f32 %v1140, %v1201
        %v1212 = vadd.f32 %v1141, %v1201
        %v1213 = vadd.f32 %v1142, %v1201
        %v1214 = vadd.f32 %v1143, %v1201
        %v1215 = vadd.f32 %v1144, %v1201
        %v1216 = vadd.f32 %v1145, %v1201
        %v1217 = vadd.f32 %v1146, %v1201
        %v1218 = vadd.f32 %v1147, %v1201
        %v1219 = vadd.f32 %v1148, %v1201
        %v1220 = vadd.f32 %v1149, %v1201
        %v1221 = vadd.f32 %v1150, %v1201
        %v1222 = vadd.f32 %v1151, %v1201
        %v1223 = vadd.f32 %v1152, %v1201
        %v1224 = vadd.f32 %v1153, %v1201
        %v1225 = vadd.f32 %v1154, %v1201
        %v1226 = vadd.f32 %v1155, %v1201
        %v1227 = vadd.f32 %v1156, %v1201
        %v1228 = vadd.f32 %v1157, %v1201
        %v1229 = vadd.f32 %v1158, %v1201
        %v1230 = vadd.f32 %v1159, %v1201
        %v1231 = vadd.f32 %v1160, %v1201
        %v1232 = vadd.f32 %v1161, %v1201
        %v1233 = vadd.f32 %v1162, %v1201
        %v1234 = vadd.f32 %v1163, %v1201
        %v1235 = vadd.f32 %v1164, %v1201
        %v1236 = vadd.f32 %v1165, %v1201
        %v1237 = vadd.f32 %v1166, %v1201
        %v1238 = vadd.f32 %v1167, %v1201
        %v1239 = vadd.f32 %v1168, %v1201
        %v1240 = vadd.f32 %v1169, %v1201
        %v1241 = vadd.f32 %v1170, %v1201
        %v1242 = vadd.f32 %v1171, %v1201
        %v1243 = vadd.f32 %v1172, %v1201
        %v1244 = vadd.f32 %v1173, %v1201
        %v1245 = vadd.f32 %v1174, %v1201
        %v1246 = vadd.f32 %v1175, %v1201
        %v1247 = vadd.f32 %v1176, %v1201
        %v1248 = vadd.f32 %v1177, %v1201
        %v1249 = vadd.f32 %v1178, %v1201
        %v1250 = vadd.f32 %v1179, %v1201
        %v1251 = vadd.f32 %v1180, %v1201
        %v1252 = vadd.f32 %v1181, %v1201
        %v1253 = vadd.f32 %v1182, %v1201
        %v1254 = vadd.f32 %v1183, %v1201
        %v1255 = vadd.f32 %v1184, %v1201
        %v1256 = vadd.f32 %v1185, %v1201
        %v1257 = vadd.f32 %v1186, %v1201
        %v1258 = vadd.f32 %v1187, %v1201
        %v1259 = vadd.f32 %v1188, %v1201
        %v1260 = vadd.f32 %v1189, %v1201
        %v1261 = vadd.f32 %v1190, %v1201
        %v1262 = vadd.f32 %v1191, %v1201
        %v1263 = vadd.f32 %v1192, %v1201
        %v1264 = vadd.f32 %v1193, %v1201
        %v1265 = vadd.f32 %v1194, %v1201
        %v1266 = vadd.f32 %v1195, %v1201
        %1267 = vst [vmem:[%s257] sm:$0xff] %v1203
        %1268 = vst [vmem:[%s257 + $0x8] sm:$0xff] %v1204
        %1269 = vst [vmem:[%s257 + $0x10] sm:$0xff] %v1205
        %1270 = vst [vmem:[%s257 + $0x18] sm:$0xff] %v1206
        %1271 = vst [vmem:[%s257 + $0x20] sm:$0xff] %v1207
        %1272 = vst [vmem:[%s257 + $0x28] sm:$0xff] %v1208
        %1273 = vst [vmem:[%s257 + $0x30] sm:$0xff] %v1209
        %1274 = vst [vmem:[%s257 + $0x38] sm:$0xff] %v1210
        %1275 = vst [vmem:[%s257 + $0x40] sm:$0xff] %v1211
        %1276 = vst [vmem:[%s257 + $0x48] sm:$0xff] %v1212
        %1277 = vst [vmem:[%s257 + $0x50] sm:$0xff] %v1213
        %1278 = vst [vmem:[%s257 + $0x58] sm:$0xff] %v1214
        %1279 = vst [vmem:[%s257 + $0x60] sm:$0xff] %v1215
        %1280 = vst [vmem:[%s257 + $0x68] sm:$0xff] %v1216
        %1281 = vst [vmem:[%s257 + $0x70] sm:$0xff] %v1217
        %1282 = vst [vmem:[%s257 + $0x78] sm:$0xff] %v1218
        %1283 = vst [vmem:[%s257 + $0x80] sm:$0xff] %v1219
        %1284 = vst [vmem:[%s257 + $0x88] sm:$0xff] %v1220
        %1285 = vst [vmem:[%s257 + $0x90] sm:$0xff] %v1221
        %1286 = vst [vmem:[%s257 + $0x98] sm:$0xff] %v1222
        %1287 = vst [vmem:[%s257 + $0xa0] sm:$0xff] %v1223
        %1288 = vst [vmem:[%s257 + $0xa8] sm:$0xff] %v1224
        %1289 = vst [vmem:[%s257 + $0xb0] sm:$0xff] %v1225
        %1290 = vst [vmem:[%s257 + $0xb8] sm:$0xff] %v1226
        %1291 = vst [vmem:[%s257 + $0xc0] sm:$0xff] %v1227
        %1292 = vst [vmem:[%s257 + $0xc8] sm:$0xff] %v1228
        %1293 = vst [vmem:[%s257 + $0xd0] sm:$0xff] %v1229
        %1294 = vst [vmem:[%s257 + $0xd8] sm:$0xff] %v1230
        %1295 = vst [vmem:[%s257 + $0xe0] sm:$0xff] %v1231
        %1296 = vst [vmem:[%s257 + $0xe8] sm:$0xff] %v1232
        %1297 = vst [vmem:[%s257 + $0xf0] sm:$0xff] %v1233
        %1298 = vst [vmem:[%s257 + $0xf8] sm:$0xff] %v1234
        %1299 = vst [vmem:[%s257 + $0x100] sm:$0xff] %v1235
        %1300 = vst [vmem:[%s257 + $0x108] sm:$0xff] %v1236
        %1301 = vst [vmem:[%s257 + $0x110] sm:$0xff] %v1237
        %1302 = vst [vmem:[%s257 + $0x118] sm:$0xff] %v1238
        %1303 = vst [vmem:[%s257 + $0x120] sm:$0xff] %v1239
        %1304 = vst [vmem:[%s257 + $0x128] sm:$0xff] %v1240
        %1305 = vst [vmem:[%s257 + $0x130] sm:$0xff] %v1241
        %1306 = vst [vmem:[%s257 + $0x138] sm:$0xff] %v1242
        %1307 = vst [vmem:[%s257 + $0x140] sm:$0xff] %v1243
        %1308 = vst [vmem:[%s257 + $0x148] sm:$0xff] %v1244
        %1309 = vst [vmem:[%s257 + $0x150] sm:$0xff] %v1245
        %1310 = vst [vmem:[%s257 + $0x158] sm:$0xff] %v1246
        %1311 = vst [vmem:[%s257 + $0x160] sm:$0xff] %v1247
        %1312 = vst [vmem:[%s257 + $0x168] sm:$0xff] %v1248
        %1313 = vst [vmem:[%s257 + $0x170] sm:$0xff] %v1249
        %1314 = vst [vmem:[%s257 + $0x178] sm:$0xff] %v1250
        %1315 = vst [vmem:[%s257 + $0x180] sm:$0xff] %v1251
        %1316 = vst [vmem:[%s257 + $0x188] sm:$0xff] %v1252
        %1317 = vst [vmem:[%s257 + $0x190] sm:$0xff] %v1253
        %1318 = vst [vmem:[%s257 + $0x198] sm:$0xff] %v1254
        %1319 = vst [vmem:[%s257 + $0x1a0] sm:$0xff] %v1255
        %1320 = vst [vmem:[%s257 + $0x1a8] sm:$0xff] %v1256
        %1321 = vst [vmem:[%s257 + $0x1b0] sm:$0xff] %v1257
        %1322 = vst [vmem:[%s257 + $0x1b8] sm:$0xff] %v1258
        %1323 = vst [vmem:[%s257 + $0x1c0] sm:$0xff] %v1259
        %1324 = vst [vmem:[%s257 + $0x1c8] sm:$0xff] %v1260
        %1325 = vst [vmem:[%s257 + $0x1d0] sm:$0xff] %v1261
        %1326 = vst [vmem:[%s257 + $0x1d8] sm:$0xff] %v1262
        %1327 = vst [vmem:[%s257 + $0x1e0] sm:$0xff] %v1263
        %1328 = vst [vmem:[%s257 + $0x1e8] sm:$0xff] %v1264
        %1329 = vst [vmem:[%s257 + $0x1f0] sm:$0xff] %v1265
        %1330 = vst [vmem:[%s257 + $0x1f8] sm:$0xff] %v1266
      $region40: #{upconv3d_block_forward.15} parent=31 // pred_fallthru
        _
      %s1331 = smul.u32 64, %s19
      %p1332 = scmp.lt.s32.totalorder %s1331, 127
      %s1333 = scalar_select %p1332, %s1331, 127
      %p1334 = scmp.lt.s32.totalorder %s20, 0
      %s1335 = scalar_select %p1334, %s20, 0
      %s1336 = sadd.s32 %s1335, %s1333
      %s1337 = smul.addr %s1336, 8
      %s1338 = scalar_lea.vmem %s3, %s1337
      // Predicated region
      $region41: #{upconv3d_block_forward.15} parent=31 // pred_check
        %p1339 = pneg %p135
      $region42: #{upconv3d_block_forward.15} parent=31 // pred_check_branch
        %1341 = sbr.rel (%p1339) target = $region44
      $region43: #{upconv3d_block_forward.15} parent=31 // pred_region
        %s1342 = smul.u32 64, %s19
      $region44: #{upconv3d_block_forward.15} parent=31 // pred_fallthru
        _
    $region32: #{upconv3d_block_forward.15} parent=5 // pred_fallthru
      _
    %p1343 = scmp.le.s32.totalorder 2, %s9
    // Predicated region
    $region45: #{upconv3d_block_forward.15} parent=5 // pred_check
      %p1344 = pneg %p1343
    $region46: #{upconv3d_block_forward.15} parent=5 // pred_check_branch
      %1346 = sbr.rel (%p1344) target = $region48
    $region47: #{upconv3d_block_forward.15} parent=5 // pred_region
      %s1347 = ssub.s32 %s9, 2
      // Predicated region
      $region49: #{upconv3d_block_forward.15} parent=47 // pred_check
        %p1348 = pneg %p141
      $region50: #{upconv3d_block_forward.15} parent=47 // pred_check_branch
        %1350 = sbr.rel (%p1348) target = $region52
      $region51: #{upconv3d_block_forward.15} parent=47 // pred_region
        %s1351 = smul.u32 64, %s22
        %p1352 = scmp.lt.s32.totalorder %s1351, 127
        %s1353 = scalar_select %p1352, %s1351, 127
        %p1354 = scmp.lt.s32.totalorder %s23, 0
        %s1355 = scalar_select %p1354, %s23, 0
        %s1356 = sadd.s32 %s1355, %s1353
        %s1357 = smul.addr %s1356, 8
        %s1358 = scalar_lea.vmem %s3, %s1357
      $region52: #{upconv3d_block_forward.15} parent=47 // pred_fallthru
        _
    $region48: #{upconv3d_block_forward.15} parent=5 // pred_fallthru
      _
  $region6: #{upconv3d_block_forward.15} parent=0 // loop_footer
    %s13 = sadd.s32 1, %s9
  $region7: #{upconv3d_block_forward.15} parent=0 // loop_footer_branch
    %8 = sbr.rel target = $region3
  $region8: #{upconv3d_block_forward.15} parent=0 // loop_exit
    _

</llo_original>
